<compile_context>
chip_gen: v7x
topology: tpu7x:2x2x1
jax: 0.10.0
libtpu: 0.0.40
codegen_flags: <defaults>
</compile_context>

<pallas_src>
import jax
import jax.numpy as jnp
from jax import lax
from jax.experimental import pallas as pl
from jax.experimental.pallas import tpu as pltpu


# --------------------------------------------------------------------------------------
# Kernel
# --------------------------------------------------------------------------------------
def _make_kernel(H, W, cin, cout, head, k_att, k_conv):
    head_dim = cout // head
    pad_a = (k_att - 1) // 2              # reflection pad for the attention window (3)
    pad_c = (k_conv - 1) // 2             # zero pad for dep_conv (1)
    F = k_conv * k_conv * head_dim        # f_all channels per pixel (18)
    WC, WCin, WF = W * cout, W * cin, W * F
    n_tap = k_att * k_att                 # 49
    WPC = (W + 2 * pad_a) * cout          # horizontally padded k/v width (176)
    KVSEG = -(-WPC // 128) * 128          # lane-aligned segment width for k/v (256)
    WPC_C = (W + 2 * pad_c) * F           # zero-padded f_all width (324)

    # fused-matmul output column layout (all segment starts lane-aligned to 128)
    OFF_Q = 0
    OFF_K = WC
    OFF_V = WC + KVSEG
    OFF_X = WC + 2 * KVSEG
    OFF_F = 2 * WC + 2 * KVSEG

    def kernel(x_ref, wbig_ref, pe_ref, pair_ref, mtap_ref, wtail_ref, rows_ref, scal_ref,
               o_ref, kpad_ref, vpad_ref, fpad_ref, slab_ref, prod_ref, logit_ref):
        # ---- ONE fused bf16 matmul for everything that consumes x --------------------
        xb = x_ref[...].astype(jnp.bfloat16)                                 # (H, W*cin)
        fused = jnp.dot(xb, wbig_ref[0:WCin, :], preferred_element_type=jnp.float32)
        fused = fused + wbig_ref[WCin:WCin + 1, :].astype(jnp.float32)       # bias row
        q2d = fused[:, OFF_Q:OFF_Q + WC]          # q * head_dim^-0.5 (scaling folded)
        kp = fused[:, OFF_K:OFF_K + WPC]          # k, already horizontally reflect-padded
        vp = fused[:, OFF_V:OFF_V + WPC]          # v, already horizontally reflect-padded
        xres = fused[:, OFF_X:OFF_X + WC]         # deconv3(x) residual
        f2d = fused[:, OFF_F:OFF_F + WF]          # fc folded through conv1/2/3 -> f_all

        # ---- vertical reflection pad of k / v (horizontal fold done on the host) -----
        def vreflect(dst, src):
            dst[pad_a:pad_a + H, :] = src
            for j in range(1, pad_a + 1):
                dst[pad_a - j:pad_a - j + 1, :] = src[j:j + 1, :]
                dst[pad_a + H - 1 + j:pad_a + H + j, :] = src[H - 1 - j:H - j, :]

        vreflect(kpad_ref, kp)
        vreflect(vpad_ref, vp)

        pe_c = pe_ref[pad_a:pad_a + H, pad_a * cout:pad_a * cout + WC]

        # ---- attention pass 1: stage per-tap products, ONE big MXU pass over `pair` --
        for t in range(n_tap):
            dh, dw = divmod(t, k_att)
            ks = kpad_ref[dh:dh + H, dw * cout:dw * cout + WC]
            pes = pe_ref[dh:dh + H, dw * cout:dw * cout + WC]
            prod = q2d * (ks + pe_c - pes)        # q_att * (unfold_k + q_pe - unfold_rpe)
            prod_ref[t * H:(t + 1) * H, :] = prod.astype(jnp.bfloat16)
        logit_ref[...] = jnp.dot(prod_ref[...], pair_ref[...],
                                 preferred_element_type=jnp.float32)

        # ---- attention pass 2: softmax over the 49-tap window + weighted sum of v ----
        m = logit_ref[0:H, :]
        for t in range(1, n_tap):
            m = jnp.maximum(m, logit_ref[t * H:(t + 1) * H, :])
        l = jnp.zeros((H, WC), jnp.float32)
        acc = jnp.zeros((H, WC), jnp.float32)
        for t in range(n_tap):
            dh, dw = divmod(t, k_att)
            e = jnp.exp(logit_ref[t * H:(t + 1) * H, :] - m)
            l = l + e
            acc = acc + e * vpad_ref[dh:dh + H, dw * cout:dw * cout + WC]
        out_att = acc * pl.reciprocal(l, approx=True)

        # ---- ACmix conv branch: zero-pad f_all, im2col slab, ONE deep-K MXU pass -----
        fpad_ref[...] = jnp.zeros((H + 2 * pad_c, WPC_C), jnp.bfloat16)
        fpad_ref[pad_c:pad_c + H, pad_c * F:(pad_c + W) * F] = f2d.astype(jnp.bfloat16)
        for t in range(k_conv * k_conv):
            kh, kw = divmod(t, k_conv)
            slab_ref[:, t * WF:(t + 1) * WF] = fpad_ref[kh:kh + H, kw * F:kw * F + WF]
        out_conv = jnp.dot(slab_ref[...], mtap_ref[...],
                           preferred_element_type=jnp.float32) + rows_ref[3:4, :]

        # ---- combine branches, then GDN1 -> PReLU -> deconv2 -> GDN2 -> +res -> PReLU
        rate1 = scal_ref[0]
        rate2 = scal_ref[1]
        a_pr = scal_ref[2]
        out = rate1 * out_att + rate2 * out_conv

        g1 = wtail_ref[0:WC, :]
        w2d = wtail_ref[WC:2 * WC, :]
        g2 = wtail_ref[2 * WC:3 * WC, :]

        norm1 = jnp.dot(out * out, g1, preferred_element_type=jnp.float32) + rows_ref[0:1, :]
        y = out * lax.rsqrt(jnp.maximum(norm1, 1e-9))
        y = jnp.where(y > 0, y, a_pr * y)
        y = jnp.dot(y, w2d, preferred_element_type=jnp.float32) + rows_ref[1:2, :]
        norm2 = jnp.dot(y * y, g2, preferred_element_type=jnp.float32) + rows_ref[2:3, :]
        y = y * lax.rsqrt(jnp.maximum(norm2, 1e-9))
        y = y + xres
        y = jnp.where(y > 0, y, a_pr * y)
        o_ref[...] = y

    return kernel


# --------------------------------------------------------------------------------------
# Wrapper
# --------------------------------------------------------------------------------------
def decoder_stage_acmix(x_nchw, packed, cout, head=4, k_att=7, k_conv=3):
    """x_nchw: (B, Cin, H, W) float32 (PyTorch layout). Returns (B, Cout, H, W)."""
    B, cin, H, W = x_nchw.shape
    WC = W * cout
    pad_a = (k_att - 1) // 2
    pad_c = (k_conv - 1) // 2
    F = k_conv * k_conv * (cout // head)
    WF = W * F
    WPC = (W + 2 * pad_a) * cout
    n_tap = k_att * k_att

    # lane-dense NHWC-flat activation layout: (B, H, W*Cin)
    x2d = jnp.transpose(x_nchw, (0, 2, 3, 1)).reshape(B, H, W * cin)

    vmem_weights = [packed["wbig_p"], packed["pe_pad2d"], packed["pair"],
                    packed["mtap"], packed["wtail"], packed["rows"]]
    in_specs = [pl.BlockSpec((None, H, W * cin), lambda b: (b, 0, 0))]
    for wgt in vmem_weights:
        in_specs.append(pl.BlockSpec(wgt.shape, lambda b, nd=wgt.ndim: (0,) * nd))
    in_specs.append(pl.BlockSpec(memory_space=pltpu.MemorySpace.SMEM))   # rate1/rate2/prelu_a

    out2d = pl.pallas_call(
        _make_kernel(H, W, cin, cout, head, k_att, k_conv),
        out_shape=jax.ShapeDtypeStruct((B, H, WC), jnp.float32),
        grid=(B,),
        in_specs=in_specs,
        out_specs=pl.BlockSpec((None, H, WC), lambda b: (b, 0, 0)),
        scratch_shapes=[
            pltpu.VMEM((H + 2 * pad_a, WPC), jnp.float32),                   # k vertical reflect pad
            pltpu.VMEM((H + 2 * pad_a, WPC), jnp.float32),                   # v vertical reflect pad
            pltpu.VMEM((H + 2 * pad_c, (W + 2 * pad_c) * F), jnp.bfloat16),  # f_all zero-pad
            pltpu.VMEM((H, k_conv * k_conv * WF), jnp.bfloat16),             # dep_conv im2col slab
            pltpu.VMEM((n_tap * H, WC), jnp.bfloat16),                       # per-tap q*(k+pe) products
            pltpu.VMEM((n_tap * H, WC), jnp.float32),                        # attention logits
        ],
        compiler_params=pltpu.CompilerParams(
            dimension_semantics=("parallel",),
            vmem_limit_bytes=32 * 1024 * 1024,
        ),
    )(x2d, *vmem_weights, packed["scal"])

    return jnp.transpose(out2d.reshape(B, H, W, cout), (0, 3, 1, 2))


# --------------------------------------------------------------------------------------
# Parameter creation / host-side packing (constant folding of layouts & fused weights)
# --------------------------------------------------------------------------------------
def init_params(key, cin, cout, head=4, k_att=7, k_conv=3):
    head_dim = cout // head
    ks = jax.random.split(key, 14)

    def nrm(k, shape, s=0.2):
        return s * jax.random.normal(k, shape, jnp.float32)

    p = dict(
        acmix_w1=nrm(ks[0], (cout, cin)), acmix_b1=nrm(ks[1], (cout,), 0.05),
        acmix_w2=nrm(ks[2], (cout, cin)), acmix_b2=nrm(ks[3], (cout,), 0.05),
        acmix_w3=nrm(ks[4], (cout, cin)), acmix_b3=nrm(ks[5], (cout,), 0.05),
        acmix_wp=nrm(ks[6], (head_dim, 2)), acmix_bp=nrm(ks[7], (head_dim,), 0.05),
        acmix_wfc=nrm(ks[8], (k_conv * k_conv, 3 * head)),
        acmix_bdep=jnp.zeros((cout,), jnp.float32),          # init_rate_0
        rate1=jnp.float32(0.5), rate2=jnp.float32(0.5),      # init_rate_half
        prelu_a=jnp.float32(0.25),
        deconv2_w=nrm(ks[9], (cout, cout)),
        deconv2_b=0.01 * jnp.ones((cout,), jnp.float32),
        deconv3_w=nrm(ks[10], (cin, cout)),
        deconv3_b=-0.01 * jnp.ones((cout,), jnp.float32),
        gdn1_beta=jnp.ones((cout,), jnp.float32),
        gdn2_beta=jnp.ones((cout,), jnp.float32),
    )
    p["gdn1_gamma"] = 0.1 * jnp.eye(cout, dtype=jnp.float32) + \
        0.01 * jnp.abs(jax.random.normal(ks[11], (cout, cout), jnp.float32))
    p["gdn2_gamma"] = 0.1 * jnp.eye(cout, dtype=jnp.float32) + \
        0.01 * jnp.abs(jax.random.normal(ks[12], (cout, cout), jnp.float32))

    # dep_conv weight: ACmix's shift-kernel init + small perturbation (learnable weight)
    shift = jnp.zeros((k_conv * k_conv, k_conv, k_conv), jnp.float32)
    for i in range(k_conv * k_conv):
        shift = shift.at[i, i // k_conv, i % k_conv].set(1.0)
    p["acmix_wdep"] = jnp.tile(shift[None], (cout, 1, 1, 1)) + \
        nrm(ks[13], (cout, k_conv * k_conv, k_conv, k_conv), 0.05)
    return p


def pack_params(p, H, W, cin, cout, head=4, k_att=7, k_conv=3):
    head_dim = cout // head
    pad_a = (k_att - 1) // 2
    F = k_conv * k_conv * head_dim
    scaling = float(head_dim) ** -0.5
    WC = W * cout
    W_pad = W + 2 * pad_a
    WPC = W_pad * cout
    KVSEG = -(-WPC // 128) * 128
    eye_w = jnp.eye(W, dtype=jnp.float32)

    def blk(a):  # per-pixel linear map -> block-diagonal lane->lane matrix
        return jnp.kron(eye_w, a.astype(jnp.float32))

    # horizontal-reflection selection matrix: sel[src(wp), wp] = 1
    sel = jnp.zeros((W, W_pad), jnp.float32)
    for wp in range(W_pad):
        s = wp - pad_a
        if s < 0:
            s = -s
        elif s >= W:
            s = 2 * (W - 1) - s
        sel = sel.at[s, wp].set(1.0)

    def blk_hpad(a):   # per-pixel map -> horizontally reflect-padded, lane-aligned block matrix
        m = jnp.kron(sel, a.astype(jnp.float32))
        return jnp.pad(m, ((0, 0), (0, KVSEG - WPC)))

    def bias_hpad(b):
        return jnp.pad(jnp.tile(b, W_pad), (0, KVSEG - WPC))

    w1, b1 = p["acmix_w1"], p["acmix_b1"]
    w2, b2 = p["acmix_w2"], p["acmix_b2"]
    w3, b3 = p["acmix_w3"], p["acmix_b3"]

    # fold ACmix fc (1x1, no bias) through conv1/2/3 -> direct x -> f_all map
    # (f_conv channel r = d*k_conv^2 + t, matching f_all.permute(0, 2, 1, 3))
    wsrc = jnp.stack([w1, w2, w3], 0).reshape(3, head, head_dim, cin)
    bsrc = jnp.stack([b1, b2, b3], 0).reshape(3, head, head_dim)
    wfc = p["acmix_wfc"].reshape(k_conv * k_conv, 3, head)
    wf = jnp.einsum("tsg,sgdi->dti", wfc, wsrc).reshape(F, cin)
    bf = jnp.einsum("tsg,sgd->dt", wfc, bsrc).reshape(F)

    # fused weight (bf16 MXU operand): [q | k_hpad | v_hpad | deconv3 | f_all], + bias row
    wbig = jnp.concatenate([
        blk((scaling * w1).T), blk_hpad(w2.T), blk_hpad(w3.T),
        blk(p["deconv3_w"]), blk(wf.T)], axis=1)
    bbig = jnp.concatenate([
        jnp.tile(scaling * b1, W), bias_hpad(b2), bias_hpad(b3),
        jnp.tile(p["deconv3_b"], W), jnp.tile(bf, W)])[None, :]
    wbig_p = jnp.concatenate([wbig, bbig], axis=0).astype(jnp.bfloat16)

    # positional encoding conv_p(position(H, W)), reflect-padded both dims, tiled over heads
    loc_h = jnp.tile(jnp.linspace(-1.0, 1.0, H)[:, None], (1, W))
    loc_w = jnp.tile(jnp.linspace(-1.0, 1.0, W)[None, :], (H, 1))
    loc = jnp.stack([loc_h, loc_w], 0)
    pe = jnp.einsum("dc,chw->dhw", p["acmix_wp"], loc) + p["acmix_bp"][:, None, None]
    pe_pad = jnp.pad(pe, ((0, 0), (pad_a, pad_a), (pad_a, pad_a)), mode="reflect")
    pe_pad = jnp.transpose(pe_pad, (1, 2, 0))[:, :, None, :]
    pe_pad2d = jnp.tile(pe_pad, (1, 1, head, 1)).reshape(H + 2 * pad_a, WPC)

    # per-(pixel, head) lane-membership matrix (host precomputed, bf16 MXU operand)
    lane_head = jnp.arange(WC) // head_dim
    pair = (lane_head[:, None] == lane_head[None, :]).astype(jnp.bfloat16)

    # dep_conv (3x3, groups=head_dim) -> ONE deep-K matrix: taps stacked along K
    wdep = p["acmix_wdep"]
    mtaps = []
    for t in range(k_conv * k_conv):
        kh, kw = divmod(t, k_conv)
        a = jnp.zeros((F, cout), jnp.float32)
        for o in range(cout):
            d = o // (cout // head_dim)
            a = a.at[d * k_conv * k_conv:(d + 1) * k_conv * k_conv, o].set(
                wdep[o, :, kh, kw])
        mtaps.append(blk(a))
    mtap = jnp.concatenate(mtaps, axis=0).astype(jnp.bfloat16)     # (9*W*F, W*cout)

    # tail (GDN1 / deconv2 / GDN2) block-diagonal weights (f32) + packed per-channel rows
    wtail = jnp.concatenate([blk(p["gdn1_gamma"].T), blk(p["deconv2_w"]),
                             blk(p["gdn2_gamma"].T)], axis=0)
    rows = jnp.zeros((4, WC), jnp.float32)
    rows = rows.at[0].set(jnp.tile(p["gdn1_beta"], W))
    rows = rows.at[1].set(jnp.tile(p["deconv2_b"], W))
    rows = rows.at[2].set(jnp.tile(p["gdn2_beta"], W))
    rows = rows.at[3].set(jnp.tile(p["acmix_bdep"], W))

    scal = jnp.array([p["rate1"], p["rate2"], p["prelu_a"]], jnp.float32)

    return dict(wbig_p=wbig_p, pe_pad2d=pe_pad2d, pair=pair, mtap=mtap,
                wtail=wtail, rows=rows, scal=scal)


# --------------------------------------------------------------------------------------
if __name__ == "__main__":
    B, Cin, Cout, H, W = 2, 4, 8, 16, 16      # use_deconv1x1=True (Cin != Cout), stride=1
    key = jax.random.PRNGKey(0)
    kx, kp = jax.random.split(key)

    x = jax.random.normal(kx, (B, Cin, H, W), jnp.float32)   # PyTorch NCHW input
    params = init_params(kp, Cin, Cout)
    packed = pack_params(params, H, W, Cin, Cout)

    out = decoder_stage_acmix(x, packed, Cout)
    out = jax.block_until_ready(out)

    assert out.shape == (B, Cout, H, W), out.shape
    assert bool(jnp.all(jnp.isfinite(out)))
    print("KERNEL_OK")
</pallas_src>

<mosaic_0001>
module attributes {stable_mosaic.version = 11 : i64} {
  func.func @kernel(%arg0: i32, %arg1: memref<1x16x64xf32, #tpu.memory_space<vmem>>, %arg2: memref<65x1056xbf16, #tpu.memory_space<vmem>>, %arg3: memref<22x176xf32, #tpu.memory_space<vmem>>, %arg4: memref<128x128xbf16, #tpu.memory_space<vmem>>, %arg5: memref<2592x128xbf16, #tpu.memory_space<vmem>>, %arg6: memref<384x128xf32, #tpu.memory_space<vmem>>, %arg7: memref<4x128xf32, #tpu.memory_space<vmem>>, %arg8: memref<3xf32, #tpu.memory_space<smem>>, %arg9: memref<1x16x128xf32, #tpu.memory_space<vmem>>, %arg10: memref<22x176xf32, #tpu.memory_space<vmem>>, %arg11: memref<22x176xf32, #tpu.memory_space<vmem>>, %arg12: memref<18x324xbf16, #tpu.memory_space<vmem>>, %arg13: memref<16x2592xbf16, #tpu.memory_space<vmem>>, %arg14: memref<784x128xbf16, #tpu.memory_space<vmem>>, %arg15: memref<784x128xf32, #tpu.memory_space<vmem>>) attributes {dimension_semantics = [#tpu.dimension_semantics<parallel>], iteration_bounds = array<i64: 2>, scalar_prefetch = 0 : i64, scratch_operands = 6 : i64, tpu.core_type = #tpu.core_type<tc>, window_params = [{transform_indices = @transform_0, window_bounds = array<i64: 1, 16, 64>}, {pipeline_mode = #tpu.pipeline_mode<synchronous>, transform_indices = @transform_1, window_bounds = array<i64: 65, 1056>}, {pipeline_mode = #tpu.pipeline_mode<synchronous>, transform_indices = @transform_2, window_bounds = array<i64: 22, 176>}, {pipeline_mode = #tpu.pipeline_mode<synchronous>, transform_indices = @transform_3, window_bounds = array<i64: 128, 128>}, {pipeline_mode = #tpu.pipeline_mode<synchronous>, transform_indices = @transform_4, window_bounds = array<i64: 2592, 128>}, {pipeline_mode = #tpu.pipeline_mode<synchronous>, transform_indices = @transform_5, window_bounds = array<i64: 384, 128>}, {pipeline_mode = #tpu.pipeline_mode<synchronous>, transform_indices = @transform_6, window_bounds = array<i64: 4, 128>}, {transform_indices = @transform_7, window_bounds = array<i64: 3>}, {transform_indices = @transform_8, window_bounds = array<i64: 1, 16, 128>}]} {
    %c0 = arith.constant 0 : index
    %c0_0 = arith.constant 0 : index
    %c0_1 = arith.constant 0 : index
    %0 = vector.load %arg1[%c0, %c0_0, %c0_1] : memref<1x16x64xf32, #tpu.memory_space<vmem>>, vector<1x16x64xf32>
    %1 = vector.shape_cast %0 : vector<1x16x64xf32> to vector<16x64xf32>
    %2 = arith.truncf %1 : vector<16x64xf32> to vector<16x64xbf16>
    %c0_2 = arith.constant 0 : index
    %c0_3 = arith.constant 0 : index
    %3 = vector.load %arg2[%c0_2, %c0_3] : memref<65x1056xbf16, #tpu.memory_space<vmem>>, vector<64x1056xbf16>
    %cst = arith.constant dense<0.000000e+00> : vector<16x1056xf32>
    %4 = tpu.matmul %2, %3, %cst {dimension_numbers = #tpu.dot_dimension_numbers<[1], [0], [0], [1], [0, 0, 1, 1], [], []>} : vector<16x64xbf16>, vector<64x1056xbf16>, vector<16x1056xf32> -> vector<16x1056xf32>
    %c64 = arith.constant 64 : index
    %c0_4 = arith.constant 0 : index
    %5 = vector.load %arg2[%c64, %c0_4] : memref<65x1056xbf16, #tpu.memory_space<vmem>>, vector<1x1056xbf16>
    %6 = arith.extf %5 : vector<1x1056xbf16> to vector<1x1056xf32>
    %7 = vector.broadcast %6 : vector<1x1056xf32> to vector<16x1056xf32>
    %8 = arith.addf %4, %7 : vector<16x1056xf32>
    %9 = vector.extract_strided_slice %8 {offsets = [0, 0], sizes = [16, 128], strides = [1, 1]} : vector<16x1056xf32> to vector<16x128xf32>
    %10 = vector.extract_strided_slice %8 {offsets = [0, 128], sizes = [16, 176], strides = [1, 1]} : vector<16x1056xf32> to vector<16x176xf32>
    %11 = vector.extract_strided_slice %8 {offsets = [0, 384], sizes = [16, 176], strides = [1, 1]} : vector<16x1056xf32> to vector<16x176xf32>
    %12 = vector.extract_strided_slice %8 {offsets = [0, 640], sizes = [16, 128], strides = [1, 1]} : vector<16x1056xf32> to vector<16x128xf32>
    %13 = vector.extract_strided_slice %8 {offsets = [0, 768], sizes = [16, 288], strides = [1, 1]} : vector<16x1056xf32> to vector<16x288xf32>
    %c3 = arith.constant 3 : index
    %c0_5 = arith.constant 0 : index
    %14 = vector.load %arg10[%c3, %c0_5] : memref<22x176xf32, #tpu.memory_space<vmem>>, vector<16x176xf32>
    tpu.vector_store %arg10[%c3, %c0_5], %10 {strides = array<i32>} : memref<22x176xf32, #tpu.memory_space<vmem>>, vector<16x176xf32>,
    %15 = vector.extract_strided_slice %10 {offsets = [1, 0], sizes = [1, 176], strides = [1, 1]} : vector<16x176xf32> to vector<1x176xf32>
    %c2 = arith.constant 2 : index
    %c0_6 = arith.constant 0 : index
    %16 = vector.load %arg10[%c2, %c0_6] : memref<22x176xf32, #tpu.memory_space<vmem>>, vector<1x176xf32>
    tpu.vector_store %arg10[%c2, %c0_6], %15 {strides = array<i32>} : memref<22x176xf32, #tpu.memory_space<vmem>>, vector<1x176xf32>,
    %17 = vector.extract_strided_slice %10 {offsets = [14, 0], sizes = [1, 176], strides = [1, 1]} : vector<16x176xf32> to vector<1x176xf32>
    %c19 = arith.constant 19 : index
    %c0_7 = arith.constant 0 : index
    %18 = vector.load %arg10[%c19, %c0_7] : memref<22x176xf32, #tpu.memory_space<vmem>>, vector<1x176xf32>
    tpu.vector_store %arg10[%c19, %c0_7], %17 {strides = array<i32>} : memref<22x176xf32, #tpu.memory_space<vmem>>, vector<1x176xf32>,
    %19 = vector.extract_strided_slice %10 {offsets = [2, 0], sizes = [1, 176], strides = [1, 1]} : vector<16x176xf32> to vector<1x176xf32>
    %c1 = arith.constant 1 : index
    %c0_8 = arith.constant 0 : index
    %20 = vector.load %arg10[%c1, %c0_8] : memref<22x176xf32, #tpu.memory_space<vmem>>, vector<1x176xf32>
    tpu.vector_store %arg10[%c1, %c0_8], %19 {strides = array<i32>} : memref<22x176xf32, #tpu.memory_space<vmem>>, vector<1x176xf32>,
    %21 = vector.extract_strided_slice %10 {offsets = [13, 0], sizes = [1, 176], strides = [1, 1]} : vector<16x176xf32> to vector<1x176xf32>
    %c20 = arith.constant 20 : index
    %c0_9 = arith.constant 0 : index
    %22 = vector.load %arg10[%c20, %c0_9] : memref<22x176xf32, #tpu.memory_space<vmem>>, vector<1x176xf32>
    tpu.vector_store %arg10[%c20, %c0_9], %21 {strides = array<i32>} : memref<22x176xf32, #tpu.memory_space<vmem>>, vector<1x176xf32>,
    %23 = vector.extract_strided_slice %10 {offsets = [3, 0], sizes = [1, 176], strides = [1, 1]} : vector<16x176xf32> to vector<1x176xf32>
    %c0_10 = arith.constant 0 : index
    %c0_11 = arith.constant 0 : index
    %24 = vector.load %arg10[%c0_10, %c0_11] : memref<22x176xf32, #tpu.memory_space<vmem>>, vector<1x176xf32>
    tpu.vector_store %arg10[%c0_10, %c0_11], %23 {strides = array<i32>} : memref<22x176xf32, #tpu.memory_space<vmem>>, vector<1x176xf32>,
    %25 = vector.extract_strided_slice %10 {offsets = [12, 0], sizes = [1, 176], strides = [1, 1]} : vector<16x176xf32> to vector<1x176xf32>
    %c21 = arith.constant 21 : index
    %c0_12 = arith.constant 0 : index
    %26 = vector.load %arg10[%c21, %c0_12] : memref<22x176xf32, #tpu.memory_space<vmem>>, vector<1x176xf32>
    tpu.vector_store %arg10[%c21, %c0_12], %25 {strides = array<i32>} : memref<22x176xf32, #tpu.memory_space<vmem>>, vector<1x176xf32>,
    %c3_13 = arith.constant 3 : index
    %c0_14 = arith.constant 0 : index
    %27 = vector.load %arg11[%c3_13, %c0_14] : memref<22x176xf32, #tpu.memory_space<vmem>>, vector<16x176xf32>
    tpu.vector_store %arg11[%c3_13, %c0_14], %11 {strides = array<i32>} : memref<22x176xf32, #tpu.memory_space<vmem>>, vector<16x176xf32>,
    %28 = vector.extract_strided_slice %11 {offsets = [1, 0], sizes = [1, 176], strides = [1, 1]} : vector<16x176xf32> to vector<1x176xf32>
    %c2_15 = arith.constant 2 : index
    %c0_16 = arith.constant 0 : index
    %29 = vector.load %arg11[%c2_15, %c0_16] : memref<22x176xf32, #tpu.memory_space<vmem>>, vector<1x176xf32>
    tpu.vector_store %arg11[%c2_15, %c0_16], %28 {strides = array<i32>} : memref<22x176xf32, #tpu.memory_space<vmem>>, vector<1x176xf32>,
    %30 = vector.extract_strided_slice %11 {offsets = [14, 0], sizes = [1, 176], strides = [1, 1]} : vector<16x176xf32> to vector<1x176xf32>
    %c19_17 = arith.constant 19 : index
    %c0_18 = arith.constant 0 : index
    %31 = vector.load %arg11[%c19_17, %c0_18] : memref<22x176xf32, #tpu.memory_space<vmem>>, vector<1x176xf32>
    tpu.vector_store %arg11[%c19_17, %c0_18], %30 {strides = array<i32>} : memref<22x176xf32, #tpu.memory_space<vmem>>, vector<1x176xf32>,
    %32 = vector.extract_strided_slice %11 {offsets = [2, 0], sizes = [1, 176], strides = [1, 1]} : vector<16x176xf32> to vector<1x176xf32>
    %c1_19 = arith.constant 1 : index
    %c0_20 = arith.constant 0 : index
    %33 = vector.load %arg11[%c1_19, %c0_20] : memref<22x176xf32, #tpu.memory_space<vmem>>, vector<1x176xf32>
    tpu.vector_store %arg11[%c1_19, %c0_20], %32 {strides = array<i32>} : memref<22x176xf32, #tpu.memory_space<vmem>>, vector<1x176xf32>,
    %34 = vector.extract_strided_slice %11 {offsets = [13, 0], sizes = [1, 176], strides = [1, 1]} : vector<16x176xf32> to vector<1x176xf32>
    %c20_21 = arith.constant 20 : index
    %c0_22 = arith.constant 0 : index
    %35 = vector.load %arg11[%c20_21, %c0_22] : memref<22x176xf32, #tpu.memory_space<vmem>>, vector<1x176xf32>
    tpu.vector_store %arg11[%c20_21, %c0_22], %34 {strides = array<i32>} : memref<22x176xf32, #tpu.memory_space<vmem>>, vector<1x176xf32>,
    %36 = vector.extract_strided_slice %11 {offsets = [3, 0], sizes = [1, 176], strides = [1, 1]} : vector<16x176xf32> to vector<1x176xf32>
    %c0_23 = arith.constant 0 : index
    %c0_24 = arith.constant 0 : index
    %37 = vector.load %arg11[%c0_23, %c0_24] : memref<22x176xf32, #tpu.memory_space<vmem>>, vector<1x176xf32>
    tpu.vector_store %arg11[%c0_23, %c0_24], %36 {strides = array<i32>} : memref<22x176xf32, #tpu.memory_space<vmem>>, vector<1x176xf32>,
    %38 = vector.extract_strided_slice %11 {offsets = [12, 0], sizes = [1, 176], strides = [1, 1]} : vector<16x176xf32> to vector<1x176xf32>
    %c21_25 = arith.constant 21 : index
    %c0_26 = arith.constant 0 : index
    %39 = vector.load %arg11[%c21_25, %c0_26] : memref<22x176xf32, #tpu.memory_space<vmem>>, vector<1x176xf32>
    tpu.vector_store %arg11[%c21_25, %c0_26], %38 {strides = array<i32>} : memref<22x176xf32, #tpu.memory_space<vmem>>, vector<1x176xf32>,
    %c3_27 = arith.constant 3 : index
    %c24 = arith.constant 24 : index
    %40 = vector.load %arg3[%c3_27, %c24] : memref<22x176xf32, #tpu.memory_space<vmem>>, vector<16x128xf32>
    %c0_28 = arith.constant 0 : index
    %c0_29 = arith.constant 0 : index
    %41 = vector.load %arg10[%c0_28, %c0_29] : memref<22x176xf32, #tpu.memory_space<vmem>>, vector<16x128xf32>
    %c0_30 = arith.constant 0 : index
    %c0_31 = arith.constant 0 : index
    %42 = vector.load %arg3[%c0_30, %c0_31] : memref<22x176xf32, #tpu.memory_space<vmem>>, vector<16x128xf32>
    %43 = arith.addf %41, %40 : vector<16x128xf32>
    %44 = arith.subf %43, %42 : vector<16x128xf32>
    %45 = arith.mulf %9, %44 : vector<16x128xf32>
    %46 = arith.truncf %45 : vector<16x128xf32> to vector<16x128xbf16>
    %c0_32 = arith.constant 0 : index
    %c0_33 = arith.constant 0 : index
    %47 = vector.load %arg14[%c0_32, %c0_33] : memref<784x128xbf16, #tpu.memory_space<vmem>>, vector<16x128xbf16>
    tpu.vector_store %arg14[%c0_32, %c0_33], %46 {strides = array<i32>} : memref<784x128xbf16, #tpu.memory_space<vmem>>, vector<16x128xbf16>,
    %c0_34 = arith.constant 0 : index
    %c8 = arith.constant 8 : index
    %48 = vector.load %arg10[%c0_34, %c8] : memref<22x176xf32, #tpu.memory_space<vmem>>, vector<16x128xf32>
    %c0_35 = arith.constant 0 : index
    %c8_36 = arith.constant 8 : index
    %49 = vector.load %arg3[%c0_35, %c8_36] : memref<22x176xf32, #tpu.memory_space<vmem>>, vector<16x128xf32>
    %50 = arith.addf %48, %40 : vector<16x128xf32>
    %51 = arith.subf %50, %49 : vector<16x128xf32>
    %52 = arith.mulf %9, %51 : vector<16x128xf32>
    %53 = arith.truncf %52 : vector<16x128xf32> to vector<16x128xbf16>
    %c16 = arith.constant 16 : index
    %c0_37 = arith.constant 0 : index
    %54 = vector.load %arg14[%c16, %c0_37] : memref<784x128xbf16, #tpu.memory_space<vmem>>, vector<16x128xbf16>
    tpu.vector_store %arg14[%c16, %c0_37], %53 {strides = array<i32>} : memref<784x128xbf16, #tpu.memory_space<vmem>>, vector<16x128xbf16>,
    %c0_38 = arith.constant 0 : index
    %c16_39 = arith.constant 16 : index
    %55 = vector.load %arg10[%c0_38, %c16_39] : memref<22x176xf32, #tpu.memory_space<vmem>>, vector<16x128xf32>
    %c0_40 = arith.constant 0 : index
    %c16_41 = arith.constant 16 : index
    %56 = vector.load %arg3[%c0_40, %c16_41] : memref<22x176xf32, #tpu.memory_space<vmem>>, vector<16x128xf32>
    %57 = arith.addf %55, %40 : vector<16x128xf32>
    %58 = arith.subf %57, %56 : vector<16x128xf32>
    %59 = arith.mulf %9, %58 : vector<16x128xf32>
    %60 = arith.truncf %59 : vector<16x128xf32> to vector<16x128xbf16>
    %c32 = arith.constant 32 : index
    %c0_42 = arith.constant 0 : index
    %61 = vector.load %arg14[%c32, %c0_42] : memref<784x128xbf16, #tpu.memory_space<vmem>>, vector<16x128xbf16>
    tpu.vector_store %arg14[%c32, %c0_42], %60 {strides = array<i32>} : memref<784x128xbf16, #tpu.memory_space<vmem>>, vector<16x128xbf16>,
    %c0_43 = arith.constant 0 : index
    %c24_44 = arith.constant 24 : index
    %62 = vector.load %arg10[%c0_43, %c24_44] : memref<22x176xf32, #tpu.memory_space<vmem>>, vector<16x128xf32>
    %c0_45 = arith.constant 0 : index
    %c24_46 = arith.constant 24 : index
    %63 = vector.load %arg3[%c0_45, %c24_46] : memref<22x176xf32, #tpu.memory_space<vmem>>, vector<16x128xf32>
    %64 = arith.addf %62, %40 : vector<16x128xf32>
    %65 = arith.subf %64, %63 : vector<16x128xf32>
    %66 = arith.mulf %9, %65 : vector<16x128xf32>
    %67 = arith.truncf %66 : vector<16x128xf32> to vector<16x128xbf16>
    %c48 = arith.constant 48 : index
    %c0_47 = arith.constant 0 : index
    %68 = vector.load %arg14[%c48, %c0_47] : memref<784x128xbf16, #tpu.memory_space<vmem>>, vector<16x128xbf16>
    tpu.vector_store %arg14[%c48, %c0_47], %67 {strides = array<i32>} : memref<784x128xbf16, #tpu.memory_space<vmem>>, vector<16x128xbf16>,
    %c0_48 = arith.constant 0 : index
    %c32_49 = arith.constant 32 : index
    %69 = vector.load %arg10[%c0_48, %c32_49] : memref<22x176xf32, #tpu.memory_space<vmem>>, vector<16x128xf32>
    %c0_50 = arith.constant 0 : index
    %c32_51 = arith.constant 32 : index
    %70 = vector.load %arg3[%c0_50, %c32_51] : memref<22x176xf32, #tpu.memory_space<vmem>>, vector<16x128xf32>
    %71 = arith.addf %69, %40 : vector<16x128xf32>
    %72 = arith.subf %71, %70 : vector<16x128xf32>
    %73 = arith.mulf %9, %72 : vector<16x128xf32>
    %74 = arith.truncf %73 : vector<16x128xf32> to vector<16x128xbf16>
    %c64_52 = arith.constant 64 : index
    %c0_53 = arith.constant 0 : index
    %75 = vector.load %arg14[%c64_52, %c0_53] : memref<784x128xbf16, #tpu.memory_space<vmem>>, vector<16x128xbf16>
    tpu.vector_store %arg14[%c64_52, %c0_53], %74 {strides = array<i32>} : memref<784x128xbf16, #tpu.memory_space<vmem>>, vector<16x128xbf16>,
    %c0_54 = arith.constant 0 : index
    %c40 = arith.constant 40 : index
    %76 = vector.load %arg10[%c0_54, %c40] : memref<22x176xf32, #tpu.memory_space<vmem>>, vector<16x128xf32>
    %c0_55 = arith.constant 0 : index
    %c40_56 = arith.constant 40 : index
    %77 = vector.load %arg3[%c0_55, %c40_56] : memref<22x176xf32, #tpu.memory_space<vmem>>, vector<16x128xf32>
    %78 = arith.addf %76, %40 : vector<16x128xf32>
    %79 = arith.subf %78, %77 : vector<16x128xf32>
    %80 = arith.mulf %9, %79 : vector<16x128xf32>
    %81 = arith.truncf %80 : vector<16x128xf32> to vector<16x128xbf16>
    %c80 = arith.constant 80 : index
    %c0_57 = arith.constant 0 : index
    %82 = vector.load %arg14[%c80, %c0_57] : memref<784x128xbf16, #tpu.memory_space<vmem>>, vector<16x128xbf16>
    tpu.vector_store %arg14[%c80, %c0_57], %81 {strides = array<i32>} : memref<784x128xbf16, #tpu.memory_space<vmem>>, vector<16x128xbf16>,
    %c0_58 = arith.constant 0 : index
    %c48_59 = arith.constant 48 : index
    %83 = vector.load %arg10[%c0_58, %c48_59] : memref<22x176xf32, #tpu.memory_space<vmem>>, vector<16x128xf32>
    %c0_60 = arith.constant 0 : index
    %c48_61 = arith.constant 48 : index
    %84 = vector.load %arg3[%c0_60, %c48_61] : memref<22x176xf32, #tpu.memory_space<vmem>>, vector<16x128xf32>
    %85 = arith.addf %83, %40 : vector<16x128xf32>
    %86 = arith.subf %85, %84 : vector<16x128xf32>
    %87 = arith.mulf %9, %86 : vector<16x128xf32>
    %88 = arith.truncf %87 : vector<16x128xf32> to vector<16x128xbf16>
    %c96 = arith.constant 96 : index
    %c0_62 = arith.constant 0 : index
    %89 = vector.load %arg14[%c96, %c0_62] : memref<784x128xbf16, #tpu.memory_space<vmem>>, vector<16x128xbf16>
    tpu.vector_store %arg14[%c96, %c0_62], %88 {strides = array<i32>} : memref<784x128xbf16, #tpu.memory_space<vmem>>, vector<16x128xbf16>,
    %c1_63 = arith.constant 1 : index
    %c0_64 = arith.constant 0 : index
    %90 = vector.load %arg10[%c1_63, %c0_64] : memref<22x176xf32, #tpu.memory_space<vmem>>, vector<16x128xf32>
    %c1_65 = arith.constant 1 : index
    %c0_66 = arith.constant 0 : index
    %91 = vector.load %arg3[%c1_65, %c0_66] : memref<22x176xf32, #tpu.memory_space<vmem>>, vector<16x128xf32>
    %92 = arith.addf %90, %40 : vector<16x128xf32>
    %93 = arith.subf %92, %91 : vector<16x128xf32>
    %94 = arith.mulf %9, %93 : vector<16x128xf32>
    %95 = arith.truncf %94 : vector<16x128xf32> to vector<16x128xbf16>
    %c112 = arith.constant 112 : index
    %c0_67 = arith.constant 0 : index
    %96 = vector.load %arg14[%c112, %c0_67] : memref<784x128xbf16, #tpu.memory_space<vmem>>, vector<16x128xbf16>
    tpu.vector_store %arg14[%c112, %c0_67], %95 {strides = array<i32>} : memref<784x128xbf16, #tpu.memory_space<vmem>>, vector<16x128xbf16>,
    %c1_68 = arith.constant 1 : index
    %c8_69 = arith.constant 8 : index
    %97 = vector.load %arg10[%c1_68, %c8_69] : memref<22x176xf32, #tpu.memory_space<vmem>>, vector<16x128xf32>
    %c1_70 = arith.constant 1 : index
    %c8_71 = arith.constant 8 : index
    %98 = vector.load %arg3[%c1_70, %c8_71] : memref<22x176xf32, #tpu.memory_space<vmem>>, vector<16x128xf32>
    %99 = arith.addf %97, %40 : vector<16x128xf32>
    %100 = arith.subf %99, %98 : vector<16x128xf32>
    %101 = arith.mulf %9, %100 : vector<16x128xf32>
    %102 = arith.truncf %101 : vector<16x128xf32> to vector<16x128xbf16>
    %c128 = arith.constant 128 : index
    %c0_72 = arith.constant 0 : index
    %103 = vector.load %arg14[%c128, %c0_72] : memref<784x128xbf16, #tpu.memory_space<vmem>>, vector<16x128xbf16>
    tpu.vector_store %arg14[%c128, %c0_72], %102 {strides = array<i32>} : memref<784x128xbf16, #tpu.memory_space<vmem>>, vector<16x128xbf16>,
    %c1_73 = arith.constant 1 : index
    %c16_74 = arith.constant 16 : index
    %104 = vector.load %arg10[%c1_73, %c16_74] : memref<22x176xf32, #tpu.memory_space<vmem>>, vector<16x128xf32>
    %c1_75 = arith.constant 1 : index
    %c16_76 = arith.constant 16 : index
    %105 = vector.load %arg3[%c1_75, %c16_76] : memref<22x176xf32, #tpu.memory_space<vmem>>, vector<16x128xf32>
    %106 = arith.addf %104, %40 : vector<16x128xf32>
    %107 = arith.subf %106, %105 : vector<16x128xf32>
    %108 = arith.mulf %9, %107 : vector<16x128xf32>
    %109 = arith.truncf %108 : vector<16x128xf32> to vector<16x128xbf16>
    %c144 = arith.constant 144 : index
    %c0_77 = arith.constant 0 : index
    %110 = vector.load %arg14[%c144, %c0_77] : memref<784x128xbf16, #tpu.memory_space<vmem>>, vector<16x128xbf16>
    tpu.vector_store %arg14[%c144, %c0_77], %109 {strides = array<i32>} : memref<784x128xbf16, #tpu.memory_space<vmem>>, vector<16x128xbf16>,
    %c1_78 = arith.constant 1 : index
    %c24_79 = arith.constant 24 : index
    %111 = vector.load %arg10[%c1_78, %c24_79] : memref<22x176xf32, #tpu.memory_space<vmem>>, vector<16x128xf32>
    %c1_80 = arith.constant 1 : index
    %c24_81 = arith.constant 24 : index
    %112 = vector.load %arg3[%c1_80, %c24_81] : memref<22x176xf32, #tpu.memory_space<vmem>>, vector<16x128xf32>
    %113 = arith.addf %111, %40 : vector<16x128xf32>
    %114 = arith.subf %113, %112 : vector<16x128xf32>
    %115 = arith.mulf %9, %114 : vector<16x128xf32>
    %116 = arith.truncf %115 : vector<16x128xf32> to vector<16x128xbf16>
    %c160 = arith.constant 160 : index
    %c0_82 = arith.constant 0 : index
    %117 = vector.load %arg14[%c160, %c0_82] : memref<784x128xbf16, #tpu.memory_space<vmem>>, vector<16x128xbf16>
    tpu.vector_store %arg14[%c160, %c0_82], %116 {strides = array<i32>} : memref<784x128xbf16, #tpu.memory_space<vmem>>, vector<16x128xbf16>,
    %c1_83 = arith.constant 1 : index
    %c32_84 = arith.constant 32 : index
    %118 = vector.load %arg10[%c1_83, %c32_84] : memref<22x176xf32, #tpu.memory_space<vmem>>, vector<16x128xf32>
    %c1_85 = arith.constant 1 : index
    %c32_86 = arith.constant 32 : index
    %119 = vector.load %arg3[%c1_85, %c32_86] : memref<22x176xf32, #tpu.memory_space<vmem>>, vector<16x128xf32>
    %120 = arith.addf %118, %40 : vector<16x128xf32>
    %121 = arith.subf %120, %119 : vector<16x128xf32>
    %122 = arith.mulf %9, %121 : vector<16x128xf32>
    %123 = arith.truncf %122 : vector<16x128xf32> to vector<16x128xbf16>
    %c176 = arith.constant 176 : index
    %c0_87 = arith.constant 0 : index
    %124 = vector.load %arg14[%c176, %c0_87] : memref<784x128xbf16, #tpu.memory_space<vmem>>, vector<16x128xbf16>
    tpu.vector_store %arg14[%c176, %c0_87], %123 {strides = array<i32>} : memref<784x128xbf16, #tpu.memory_space<vmem>>, vector<16x128xbf16>,
    %c1_88 = arith.constant 1 : index
    %c40_89 = arith.constant 40 : index
    %125 = vector.load %arg10[%c1_88, %c40_89] : memref<22x176xf32, #tpu.memory_space<vmem>>, vector<16x128xf32>
    %c1_90 = arith.constant 1 : index
    %c40_91 = arith.constant 40 : index
    %126 = vector.load %arg3[%c1_90, %c40_91] : memref<22x176xf32, #tpu.memory_space<vmem>>, vector<16x128xf32>
    %127 = arith.addf %125, %40 : vector<16x128xf32>
    %128 = arith.subf %127, %126 : vector<16x128xf32>
    %129 = arith.mulf %9, %128 : vector<16x128xf32>
    %130 = arith.truncf %129 : vector<16x128xf32> to vector<16x128xbf16>
    %c192 = arith.constant 192 : index
    %c0_92 = arith.constant 0 : index
    %131 = vector.load %arg14[%c192, %c0_92] : memref<784x128xbf16, #tpu.memory_space<vmem>>, vector<16x128xbf16>
    tpu.vector_store %arg14[%c192, %c0_92], %130 {strides = array<i32>} : memref<784x128xbf16, #tpu.memory_space<vmem>>, vector<16x128xbf16>,
    %c1_93 = arith.constant 1 : index
    %c48_94 = arith.constant 48 : index
    %132 = vector.load %arg10[%c1_93, %c48_94] : memref<22x176xf32, #tpu.memory_space<vmem>>, vector<16x128xf32>
    %c1_95 = arith.constant 1 : index
    %c48_96 = arith.constant 48 : index
    %133 = vector.load %arg3[%c1_95, %c48_96] : memref<22x176xf32, #tpu.memory_space<vmem>>, vector<16x128xf32>
    %134 = arith.addf %132, %40 : vector<16x128xf32>
    %135 = arith.subf %134, %133 : vector<16x128xf32>
    %136 = arith.mulf %9, %135 : vector<16x128xf32>
    %137 = arith.truncf %136 : vector<16x128xf32> to vector<16x128xbf16>
    %c208 = arith.constant 208 : index
    %c0_97 = arith.constant 0 : index
    %138 = vector.load %arg14[%c208, %c0_97] : memref<784x128xbf16, #tpu.memory_space<vmem>>, vector<16x128xbf16>
    tpu.vector_store %arg14[%c208, %c0_97], %137 {strides = array<i32>} : memref<784x128xbf16, #tpu.memory_space<vmem>>, vector<16x128xbf16>,
    %c2_98 = arith.constant 2 : index
    %c0_99 = arith.constant 0 : index
    %139 = vector.load %arg10[%c2_98, %c0_99] : memref<22x176xf32, #tpu.memory_space<vmem>>, vector<16x128xf32>
    %c2_100 = arith.constant 2 : index
    %c0_101 = arith.constant 0 : index
    %140 = vector.load %arg3[%c2_100, %c0_101] : memref<22x176xf32, #tpu.memory_space<vmem>>, vector<16x128xf32>
    %141 = arith.addf %139, %40 : vector<16x128xf32>
    %142 = arith.subf %141, %140 : vector<16x128xf32>
    %143 = arith.mulf %9, %142 : vector<16x128xf32>
    %144 = arith.truncf %143 : vector<16x128xf32> to vector<16x128xbf16>
    %c224 = arith.constant 224 : index
    %c0_102 = arith.constant 0 : index
    %145 = vector.load %arg14[%c224, %c0_102] : memref<784x128xbf16, #tpu.memory_space<vmem>>, vector<16x128xbf16>
    tpu.vector_store %arg14[%c224, %c0_102], %144 {strides = array<i32>} : memref<784x128xbf16, #tpu.memory_space<vmem>>, vector<16x128xbf16>,
    %c2_103 = arith.constant 2 : index
    %c8_104 = arith.constant 8 : index
    %146 = vector.load %arg10[%c2_103, %c8_104] : memref<22x176xf32, #tpu.memory_space<vmem>>, vector<16x128xf32>
    %c2_105 = arith.constant 2 : index
    %c8_106 = arith.constant 8 : index
    %147 = vector.load %arg3[%c2_105, %c8_106] : memref<22x176xf32, #tpu.memory_space<vmem>>, vector<16x128xf32>
    %148 = arith.addf %146, %40 : vector<16x128xf32>
    %149 = arith.subf %148, %147 : vector<16x128xf32>
    %150 = arith.mulf %9, %149 : vector<16x128xf32>
    %151 = arith.truncf %150 : vector<16x128xf32> to vector<16x128xbf16>
    %c240 = arith.constant 240 : index
    %c0_107 = arith.constant 0 : index
    %152 = vector.load %arg14[%c240, %c0_107] : memref<784x128xbf16, #tpu.memory_space<vmem>>, vector<16x128xbf16>
    tpu.vector_store %arg14[%c240, %c0_107], %151 {strides = array<i32>} : memref<784x128xbf16, #tpu.memory_space<vmem>>, vector<16x128xbf16>,
    %c2_108 = arith.constant 2 : index
    %c16_109 = arith.constant 16 : index
    %153 = vector.load %arg10[%c2_108, %c16_109] : memref<22x176xf32, #tpu.memory_space<vmem>>, vector<16x128xf32>
    %c2_110 = arith.constant 2 : index
    %c16_111 = arith.constant 16 : index
    %154 = vector.load %arg3[%c2_110, %c16_111] : memref<22x176xf32, #tpu.memory_space<vmem>>, vector<16x128xf32>
    %155 = arith.addf %153, %40 : vector<16x128xf32>
    %156 = arith.subf %155, %154 : vector<16x128xf32>
    %157 = arith.mulf %9, %156 : vector<16x128xf32>
    %158 = arith.truncf %157 : vector<16x128xf32> to vector<16x128xbf16>
    %c256 = arith.constant 256 : index
    %c0_112 = arith.constant 0 : index
    %159 = vector.load %arg14[%c256, %c0_112] : memref<784x128xbf16, #tpu.memory_space<vmem>>, vector<16x128xbf16>
    tpu.vector_store %arg14[%c256, %c0_112], %158 {strides = array<i32>} : memref<784x128xbf16, #tpu.memory_space<vmem>>, vector<16x128xbf16>,
    %c2_113 = arith.constant 2 : index
    %c24_114 = arith.constant 24 : index
    %160 = vector.load %arg10[%c2_113, %c24_114] : memref<22x176xf32, #tpu.memory_space<vmem>>, vector<16x128xf32>
    %c2_115 = arith.constant 2 : index
    %c24_116 = arith.constant 24 : index
    %161 = vector.load %arg3[%c2_115, %c24_116] : memref<22x176xf32, #tpu.memory_space<vmem>>, vector<16x128xf32>
    %162 = arith.addf %160, %40 : vector<16x128xf32>
    %163 = arith.subf %162, %161 : vector<16x128xf32>
    %164 = arith.mulf %9, %163 : vector<16x128xf32>
    %165 = arith.truncf %164 : vector<16x128xf32> to vector<16x128xbf16>
    %c272 = arith.constant 272 : index
    %c0_117 = arith.constant 0 : index
    %166 = vector.load %arg14[%c272, %c0_117] : memref<784x128xbf16, #tpu.memory_space<vmem>>, vector<16x128xbf16>
    tpu.vector_store %arg14[%c272, %c0_117], %165 {strides = array<i32>} : memref<784x128xbf16, #tpu.memory_space<vmem>>, vector<16x128xbf16>,
    %c2_118 = arith.constant 2 : index
    %c32_119 = arith.constant 32 : index
    %167 = vector.load %arg10[%c2_118, %c32_119] : memref<22x176xf32, #tpu.memory_space<vmem>>, vector<16x128xf32>
    %c2_120 = arith.constant 2 : index
    %c32_121 = arith.constant 32 : index
    %168 = vector.load %arg3[%c2_120, %c32_121] : memref<22x176xf32, #tpu.memory_space<vmem>>, vector<16x128xf32>
    %169 = arith.addf %167, %40 : vector<16x128xf32>
    %170 = arith.subf %169, %168 : vector<16x128xf32>
    %171 = arith.mulf %9, %170 : vector<16x128xf32>
    %172 = arith.truncf %171 : vector<16x128xf32> to vector<16x128xbf16>
    %c288 = arith.constant 288 : index
    %c0_122 = arith.constant 0 : index
    %173 = vector.load %arg14[%c288, %c0_122] : memref<784x128xbf16, #tpu.memory_space<vmem>>, vector<16x128xbf16>
    tpu.vector_store %arg14[%c288, %c0_122], %172 {strides = array<i32>} : memref<784x128xbf16, #tpu.memory_space<vmem>>, vector<16x128xbf16>,
    %c2_123 = arith.constant 2 : index
    %c40_124 = arith.constant 40 : index
    %174 = vector.load %arg10[%c2_123, %c40_124] : memref<22x176xf32, #tpu.memory_space<vmem>>, vector<16x128xf32>
    %c2_125 = arith.constant 2 : index
    %c40_126 = arith.constant 40 : index
    %175 = vector.load %arg3[%c2_125, %c40_126] : memref<22x176xf32, #tpu.memory_space<vmem>>, vector<16x128xf32>
    %176 = arith.addf %174, %40 : vector<16x128xf32>
    %177 = arith.subf %176, %175 : vector<16x128xf32>
    %178 = arith.mulf %9, %177 : vector<16x128xf32>
    %179 = arith.truncf %178 : vector<16x128xf32> to vector<16x128xbf16>
    %c304 = arith.constant 304 : index
    %c0_127 = arith.constant 0 : index
    %180 = vector.load %arg14[%c304, %c0_127] : memref<784x128xbf16, #tpu.memory_space<vmem>>, vector<16x128xbf16>
    tpu.vector_store %arg14[%c304, %c0_127], %179 {strides = array<i32>} : memref<784x128xbf16, #tpu.memory_space<vmem>>, vector<16x128xbf16>,
    %c2_128 = arith.constant 2 : index
    %c48_129 = arith.constant 48 : index
    %181 = vector.load %arg10[%c2_128, %c48_129] : memref<22x176xf32, #tpu.memory_space<vmem>>, vector<16x128xf32>
    %c2_130 = arith.constant 2 : index
    %c48_131 = arith.constant 48 : index
    %182 = vector.load %arg3[%c2_130, %c48_131] : memref<22x176xf32, #tpu.memory_space<vmem>>, vector<16x128xf32>
    %183 = arith.addf %181, %40 : vector<16x128xf32>
    %184 = arith.subf %183, %182 : vector<16x128xf32>
    %185 = arith.mulf %9, %184 : vector<16x128xf32>
    %186 = arith.truncf %185 : vector<16x128xf32> to vector<16x128xbf16>
    %c320 = arith.constant 320 : index
    %c0_132 = arith.constant 0 : index
    %187 = vector.load %arg14[%c320, %c0_132] : memref<784x128xbf16, #tpu.memory_space<vmem>>, vector<16x128xbf16>
    tpu.vector_store %arg14[%c320, %c0_132], %186 {strides = array<i32>} : memref<784x128xbf16, #tpu.memory_space<vmem>>, vector<16x128xbf16>,
    %c3_133 = arith.constant 3 : index
    %c0_134 = arith.constant 0 : index
    %188 = vector.load %arg10[%c3_133, %c0_134] : memref<22x176xf32, #tpu.memory_space<vmem>>, vector<16x128xf32>
    %c3_135 = arith.constant 3 : index
    %c0_136 = arith.constant 0 : index
    %189 = vector.load %arg3[%c3_135, %c0_136] : memref<22x176xf32, #tpu.memory_space<vmem>>, vector<16x128xf32>
    %190 = arith.addf %188, %40 : vector<16x128xf32>
    %191 = arith.subf %190, %189 : vector<16x128xf32>
    %192 = arith.mulf %9, %191 : vector<16x128xf32>
    %193 = arith.truncf %192 : vector<16x128xf32> to vector<16x128xbf16>
    %c336 = arith.constant 336 : index
    %c0_137 = arith.constant 0 : index
    %194 = vector.load %arg14[%c336, %c0_137] : memref<784x128xbf16, #tpu.memory_space<vmem>>, vector<16x128xbf16>
    tpu.vector_store %arg14[%c336, %c0_137], %193 {strides = array<i32>} : memref<784x128xbf16, #tpu.memory_space<vmem>>, vector<16x128xbf16>,
    %c3_138 = arith.constant 3 : index
    %c8_139 = arith.constant 8 : index
    %195 = vector.load %arg10[%c3_138, %c8_139] : memref<22x176xf32, #tpu.memory_space<vmem>>, vector<16x128xf32>
    %c3_140 = arith.constant 3 : index
    %c8_141 = arith.constant 8 : index
    %196 = vector.load %arg3[%c3_140, %c8_141] : memref<22x176xf32, #tpu.memory_space<vmem>>, vector<16x128xf32>
    %197 = arith.addf %195, %40 : vector<16x128xf32>
    %198 = arith.subf %197, %196 : vector<16x128xf32>
    %199 = arith.mulf %9, %198 : vector<16x128xf32>
    %200 = arith.truncf %199 : vector<16x128xf32> to vector<16x128xbf16>
    %c352 = arith.constant 352 : index
    %c0_142 = arith.constant 0 : index
    %201 = vector.load %arg14[%c352, %c0_142] : memref<784x128xbf16, #tpu.memory_space<vmem>>, vector<16x128xbf16>
    tpu.vector_store %arg14[%c352, %c0_142], %200 {strides = array<i32>} : memref<784x128xbf16, #tpu.memory_space<vmem>>, vector<16x128xbf16>,
    %c3_143 = arith.constant 3 : index
    %c16_144 = arith.constant 16 : index
    %202 = vector.load %arg10[%c3_143, %c16_144] : memref<22x176xf32, #tpu.memory_space<vmem>>, vector<16x128xf32>
    %c3_145 = arith.constant 3 : index
    %c16_146 = arith.constant 16 : index
    %203 = vector.load %arg3[%c3_145, %c16_146] : memref<22x176xf32, #tpu.memory_space<vmem>>, vector<16x128xf32>
    %204 = arith.addf %202, %40 : vector<16x128xf32>
    %205 = arith.subf %204, %203 : vector<16x128xf32>
    %206 = arith.mulf %9, %205 : vector<16x128xf32>
    %207 = arith.truncf %206 : vector<16x128xf32> to vector<16x128xbf16>
    %c368 = arith.constant 368 : index
    %c0_147 = arith.constant 0 : index
    %208 = vector.load %arg14[%c368, %c0_147] : memref<784x128xbf16, #tpu.memory_space<vmem>>, vector<16x128xbf16>
    tpu.vector_store %arg14[%c368, %c0_147], %207 {strides = array<i32>} : memref<784x128xbf16, #tpu.memory_space<vmem>>, vector<16x128xbf16>,
    %c3_148 = arith.constant 3 : index
    %c24_149 = arith.constant 24 : index
    %209 = vector.load %arg10[%c3_148, %c24_149] : memref<22x176xf32, #tpu.memory_space<vmem>>, vector<16x128xf32>
    %c3_150 = arith.constant 3 : index
    %c24_151 = arith.constant 24 : index
    %210 = vector.load %arg3[%c3_150, %c24_151] : memref<22x176xf32, #tpu.memory_space<vmem>>, vector<16x128xf32>
    %211 = arith.addf %209, %40 : vector<16x128xf32>
    %212 = arith.subf %211, %210 : vector<16x128xf32>
    %213 = arith.mulf %9, %212 : vector<16x128xf32>
    %214 = arith.truncf %213 : vector<16x128xf32> to vector<16x128xbf16>
    %c384 = arith.constant 384 : index
    %c0_152 = arith.constant 0 : index
    %215 = vector.load %arg14[%c384, %c0_152] : memref<784x128xbf16, #tpu.memory_space<vmem>>, vector<16x128xbf16>
    tpu.vector_store %arg14[%c384, %c0_152], %214 {strides = array<i32>} : memref<784x128xbf16, #tpu.memory_space<vmem>>, vector<16x128xbf16>,
    %c3_153 = arith.constant 3 : index
    %c32_154 = arith.constant 32 : index
    %216 = vector.load %arg10[%c3_153, %c32_154] : memref<22x176xf32, #tpu.memory_space<vmem>>, vector<16x128xf32>
    %c3_155 = arith.constant 3 : index
    %c32_156 = arith.constant 32 : index
    %217 = vector.load %arg3[%c3_155, %c32_156] : memref<22x176xf32, #tpu.memory_space<vmem>>, vector<16x128xf32>
    %218 = arith.addf %216, %40 : vector<16x128xf32>
    %219 = arith.subf %218, %217 : vector<16x128xf32>
    %220 = arith.mulf %9, %219 : vector<16x128xf32>
    %221 = arith.truncf %220 : vector<16x128xf32> to vector<16x128xbf16>
    %c400 = arith.constant 400 : index
    %c0_157 = arith.constant 0 : index
    %222 = vector.load %arg14[%c400, %c0_157] : memref<784x128xbf16, #tpu.memory_space<vmem>>, vector<16x128xbf16>
    tpu.vector_store %arg14[%c400, %c0_157], %221 {strides = array<i32>} : memref<784x128xbf16, #tpu.memory_space<vmem>>, vector<16x128xbf16>,
    %c3_158 = arith.constant 3 : index
    %c40_159 = arith.constant 40 : index
    %223 = vector.load %arg10[%c3_158, %c40_159] : memref<22x176xf32, #tpu.memory_space<vmem>>, vector<16x128xf32>
    %c3_160 = arith.constant 3 : index
    %c40_161 = arith.constant 40 : index
    %224 = vector.load %arg3[%c3_160, %c40_161] : memref<22x176xf32, #tpu.memory_space<vmem>>, vector<16x128xf32>
    %225 = arith.addf %223, %40 : vector<16x128xf32>
    %226 = arith.subf %225, %224 : vector<16x128xf32>
    %227 = arith.mulf %9, %226 : vector<16x128xf32>
    %228 = arith.truncf %227 : vector<16x128xf32> to vector<16x128xbf16>
    %c416 = arith.constant 416 : index
    %c0_162 = arith.constant 0 : index
    %229 = vector.load %arg14[%c416, %c0_162] : memref<784x128xbf16, #tpu.memory_space<vmem>>, vector<16x128xbf16>
    tpu.vector_store %arg14[%c416, %c0_162], %228 {strides = array<i32>} : memref<784x128xbf16, #tpu.memory_space<vmem>>, vector<16x128xbf16>,
    %c3_163 = arith.constant 3 : index
    %c48_164 = arith.constant 48 : index
    %230 = vector.load %arg10[%c3_163, %c48_164] : memref<22x176xf32, #tpu.memory_space<vmem>>, vector<16x128xf32>
    %c3_165 = arith.constant 3 : index
    %c48_166 = arith.constant 48 : index
    %231 = vector.load %arg3[%c3_165, %c48_166] : memref<22x176xf32, #tpu.memory_space<vmem>>, vector<16x128xf32>
    %232 = arith.addf %230, %40 : vector<16x128xf32>
    %233 = arith.subf %232, %231 : vector<16x128xf32>
    %234 = arith.mulf %9, %233 : vector<16x128xf32>
    %235 = arith.truncf %234 : vector<16x128xf32> to vector<16x128xbf16>
    %c432 = arith.constant 432 : index
    %c0_167 = arith.constant 0 : index
    %236 = vector.load %arg14[%c432, %c0_167] : memref<784x128xbf16, #tpu.memory_space<vmem>>, vector<16x128xbf16>
    tpu.vector_store %arg14[%c432, %c0_167], %235 {strides = array<i32>} : memref<784x128xbf16, #tpu.memory_space<vmem>>, vector<16x128xbf16>,
    %c4 = arith.constant 4 : index
    %c0_168 = arith.constant 0 : index
    %237 = vector.load %arg10[%c4, %c0_168] : memref<22x176xf32, #tpu.memory_space<vmem>>, vector<16x128xf32>
    %c4_169 = arith.constant 4 : index
    %c0_170 = arith.constant 0 : index
    %238 = vector.load %arg3[%c4_169, %c0_170] : memref<22x176xf32, #tpu.memory_space<vmem>>, vector<16x128xf32>
    %239 = arith.addf %237, %40 : vector<16x128xf32>
    %240 = arith.subf %239, %238 : vector<16x128xf32>
    %241 = arith.mulf %9, %240 : vector<16x128xf32>
    %242 = arith.truncf %241 : vector<16x128xf32> to vector<16x128xbf16>
    %c448 = arith.constant 448 : index
    %c0_171 = arith.constant 0 : index
    %243 = vector.load %arg14[%c448, %c0_171] : memref<784x128xbf16, #tpu.memory_space<vmem>>, vector<16x128xbf16>
    tpu.vector_store %arg14[%c448, %c0_171], %242 {strides = array<i32>} : memref<784x128xbf16, #tpu.memory_space<vmem>>, vector<16x128xbf16>,
    %c4_172 = arith.constant 4 : index
    %c8_173 = arith.constant 8 : index
    %244 = vector.load %arg10[%c4_172, %c8_173] : memref<22x176xf32, #tpu.memory_space<vmem>>, vector<16x128xf32>
    %c4_174 = arith.constant 4 : index
    %c8_175 = arith.constant 8 : index
    %245 = vector.load %arg3[%c4_174, %c8_175] : memref<22x176xf32, #tpu.memory_space<vmem>>, vector<16x128xf32>
    %246 = arith.addf %244, %40 : vector<16x128xf32>
    %247 = arith.subf %246, %245 : vector<16x128xf32>
    %248 = arith.mulf %9, %247 : vector<16x128xf32>
    %249 = arith.truncf %248 : vector<16x128xf32> to vector<16x128xbf16>
    %c464 = arith.constant 464 : index
    %c0_176 = arith.constant 0 : index
    %250 = vector.load %arg14[%c464, %c0_176] : memref<784x128xbf16, #tpu.memory_space<vmem>>, vector<16x128xbf16>
    tpu.vector_store %arg14[%c464, %c0_176], %249 {strides = array<i32>} : memref<784x128xbf16, #tpu.memory_space<vmem>>, vector<16x128xbf16>,
    %c4_177 = arith.constant 4 : index
    %c16_178 = arith.constant 16 : index
    %251 = vector.load %arg10[%c4_177, %c16_178] : memref<22x176xf32, #tpu.memory_space<vmem>>, vector<16x128xf32>
    %c4_179 = arith.constant 4 : index
    %c16_180 = arith.constant 16 : index
    %252 = vector.load %arg3[%c4_179, %c16_180] : memref<22x176xf32, #tpu.memory_space<vmem>>, vector<16x128xf32>
    %253 = arith.addf %251, %40 : vector<16x128xf32>
    %254 = arith.subf %253, %252 : vector<16x128xf32>
    %255 = arith.mulf %9, %254 : vector<16x128xf32>
    %256 = arith.truncf %255 : vector<16x128xf32> to vector<16x128xbf16>
    %c480 = arith.constant 480 : index
    %c0_181 = arith.constant 0 : index
    %257 = vector.load %arg14[%c480, %c0_181] : memref<784x128xbf16, #tpu.memory_space<vmem>>, vector<16x128xbf16>
    tpu.vector_store %arg14[%c480, %c0_181], %256 {strides = array<i32>} : memref<784x128xbf16, #tpu.memory_space<vmem>>, vector<16x128xbf16>,
    %c4_182 = arith.constant 4 : index
    %c24_183 = arith.constant 24 : index
    %258 = vector.load %arg10[%c4_182, %c24_183] : memref<22x176xf32, #tpu.memory_space<vmem>>, vector<16x128xf32>
    %c4_184 = arith.constant 4 : index
    %c24_185 = arith.constant 24 : index
    %259 = vector.load %arg3[%c4_184, %c24_185] : memref<22x176xf32, #tpu.memory_space<vmem>>, vector<16x128xf32>
    %260 = arith.addf %258, %40 : vector<16x128xf32>
    %261 = arith.subf %260, %259 : vector<16x128xf32>
    %262 = arith.mulf %9, %261 : vector<16x128xf32>
    %263 = arith.truncf %262 : vector<16x128xf32> to vector<16x128xbf16>
    %c496 = arith.constant 496 : index
    %c0_186 = arith.constant 0 : index
    %264 = vector.load %arg14[%c496, %c0_186] : memref<784x128xbf16, #tpu.memory_space<vmem>>, vector<16x128xbf16>
    tpu.vector_store %arg14[%c496, %c0_186], %263 {strides = array<i32>} : memref<784x128xbf16, #tpu.memory_space<vmem>>, vector<16x128xbf16>,
    %c4_187 = arith.constant 4 : index
    %c32_188 = arith.constant 32 : index
    %265 = vector.load %arg10[%c4_187, %c32_188] : memref<22x176xf32, #tpu.memory_space<vmem>>, vector<16x128xf32>
    %c4_189 = arith.constant 4 : index
    %c32_190 = arith.constant 32 : index
    %266 = vector.load %arg3[%c4_189, %c32_190] : memref<22x176xf32, #tpu.memory_space<vmem>>, vector<16x128xf32>
    %267 = arith.addf %265, %40 : vector<16x128xf32>
    %268 = arith.subf %267, %266 : vector<16x128xf32>
    %269 = arith.mulf %9, %268 : vector<16x128xf32>
    %270 = arith.truncf %269 : vector<16x128xf32> to vector<16x128xbf16>
    %c512 = arith.constant 512 : index
    %c0_191 = arith.constant 0 : index
    %271 = vector.load %arg14[%c512, %c0_191] : memref<784x128xbf16, #tpu.memory_space<vmem>>, vector<16x128xbf16>
    tpu.vector_store %arg14[%c512, %c0_191], %270 {strides = array<i32>} : memref<784x128xbf16, #tpu.memory_space<vmem>>, vector<16x128xbf16>,
    %c4_192 = arith.constant 4 : index
    %c40_193 = arith.constant 40 : index
    %272 = vector.load %arg10[%c4_192, %c40_193] : memref<22x176xf32, #tpu.memory_space<vmem>>, vector<16x128xf32>
    %c4_194 = arith.constant 4 : index
    %c40_195 = arith.constant 40 : index
    %273 = vector.load %arg3[%c4_194, %c40_195] : memref<22x176xf32, #tpu.memory_space<vmem>>, vector<16x128xf32>
    %274 = arith.addf %272, %40 : vector<16x128xf32>
    %275 = arith.subf %274, %273 : vector<16x128xf32>
    %276 = arith.mulf %9, %275 : vector<16x128xf32>
    %277 = arith.truncf %276 : vector<16x128xf32> to vector<16x128xbf16>
    %c528 = arith.constant 528 : index
    %c0_196 = arith.constant 0 : index
    %278 = vector.load %arg14[%c528, %c0_196] : memref<784x128xbf16, #tpu.memory_space<vmem>>, vector<16x128xbf16>
    tpu.vector_store %arg14[%c528, %c0_196], %277 {strides = array<i32>} : memref<784x128xbf16, #tpu.memory_space<vmem>>, vector<16x128xbf16>,
    %c4_197 = arith.constant 4 : index
    %c48_198 = arith.constant 48 : index
    %279 = vector.load %arg10[%c4_197, %c48_198] : memref<22x176xf32, #tpu.memory_space<vmem>>, vector<16x128xf32>
    %c4_199 = arith.constant 4 : index
    %c48_200 = arith.constant 48 : index
    %280 = vector.load %arg3[%c4_199, %c48_200] : memref<22x176xf32, #tpu.memory_space<vmem>>, vector<16x128xf32>
    %281 = arith.addf %279, %40 : vector<16x128xf32>
    %282 = arith.subf %281, %280 : vector<16x128xf32>
    %283 = arith.mulf %9, %282 : vector<16x128xf32>
    %284 = arith.truncf %283 : vector<16x128xf32> to vector<16x128xbf16>
    %c544 = arith.constant 544 : index
    %c0_201 = arith.constant 0 : index
    %285 = vector.load %arg14[%c544, %c0_201] : memref<784x128xbf16, #tpu.memory_space<vmem>>, vector<16x128xbf16>
    tpu.vector_store %arg14[%c544, %c0_201], %284 {strides = array<i32>} : memref<784x128xbf16, #tpu.memory_space<vmem>>, vector<16x128xbf16>,
    %c5 = arith.constant 5 : index
    %c0_202 = arith.constant 0 : index
    %286 = vector.load %arg10[%c5, %c0_202] : memref<22x176xf32, #tpu.memory_space<vmem>>, vector<16x128xf32>
    %c5_203 = arith.constant 5 : index
    %c0_204 = arith.constant 0 : index
    %287 = vector.load %arg3[%c5_203, %c0_204] : memref<22x176xf32, #tpu.memory_space<vmem>>, vector<16x128xf32>
    %288 = arith.addf %286, %40 : vector<16x128xf32>
    %289 = arith.subf %288, %287 : vector<16x128xf32>
    %290 = arith.mulf %9, %289 : vector<16x128xf32>
    %291 = arith.truncf %290 : vector<16x128xf32> to vector<16x128xbf16>
    %c560 = arith.constant 560 : index
    %c0_205 = arith.constant 0 : index
    %292 = vector.load %arg14[%c560, %c0_205] : memref<784x128xbf16, #tpu.memory_space<vmem>>, vector<16x128xbf16>
    tpu.vector_store %arg14[%c560, %c0_205], %291 {strides = array<i32>} : memref<784x128xbf16, #tpu.memory_space<vmem>>, vector<16x128xbf16>,
    %c5_206 = arith.constant 5 : index
    %c8_207 = arith.constant 8 : index
    %293 = vector.load %arg10[%c5_206, %c8_207] : memref<22x176xf32, #tpu.memory_space<vmem>>, vector<16x128xf32>
    %c5_208 = arith.constant 5 : index
    %c8_209 = arith.constant 8 : index
    %294 = vector.load %arg3[%c5_208, %c8_209] : memref<22x176xf32, #tpu.memory_space<vmem>>, vector<16x128xf32>
    %295 = arith.addf %293, %40 : vector<16x128xf32>
    %296 = arith.subf %295, %294 : vector<16x128xf32>
    %297 = arith.mulf %9, %296 : vector<16x128xf32>
    %298 = arith.truncf %297 : vector<16x128xf32> to vector<16x128xbf16>
    %c576 = arith.constant 576 : index
    %c0_210 = arith.constant 0 : index
    %299 = vector.load %arg14[%c576, %c0_210] : memref<784x128xbf16, #tpu.memory_space<vmem>>, vector<16x128xbf16>
    tpu.vector_store %arg14[%c576, %c0_210], %298 {strides = array<i32>} : memref<784x128xbf16, #tpu.memory_space<vmem>>, vector<16x128xbf16>,
    %c5_211 = arith.constant 5 : index
    %c16_212 = arith.constant 16 : index
    %300 = vector.load %arg10[%c5_211, %c16_212] : memref<22x176xf32, #tpu.memory_space<vmem>>, vector<16x128xf32>
    %c5_213 = arith.constant 5 : index
    %c16_214 = arith.constant 16 : index
    %301 = vector.load %arg3[%c5_213, %c16_214] : memref<22x176xf32, #tpu.memory_space<vmem>>, vector<16x128xf32>
    %302 = arith.addf %300, %40 : vector<16x128xf32>
    %303 = arith.subf %302, %301 : vector<16x128xf32>
    %304 = arith.mulf %9, %303 : vector<16x128xf32>
    %305 = arith.truncf %304 : vector<16x128xf32> to vector<16x128xbf16>
    %c592 = arith.constant 592 : index
    %c0_215 = arith.constant 0 : index
    %306 = vector.load %arg14[%c592, %c0_215] : memref<784x128xbf16, #tpu.memory_space<vmem>>, vector<16x128xbf16>
    tpu.vector_store %arg14[%c592, %c0_215], %305 {strides = array<i32>} : memref<784x128xbf16, #tpu.memory_space<vmem>>, vector<16x128xbf16>,
    %c5_216 = arith.constant 5 : index
    %c24_217 = arith.constant 24 : index
    %307 = vector.load %arg10[%c5_216, %c24_217] : memref<22x176xf32, #tpu.memory_space<vmem>>, vector<16x128xf32>
    %c5_218 = arith.constant 5 : index
    %c24_219 = arith.constant 24 : index
    %308 = vector.load %arg3[%c5_218, %c24_219] : memref<22x176xf32, #tpu.memory_space<vmem>>, vector<16x128xf32>
    %309 = arith.addf %307, %40 : vector<16x128xf32>
    %310 = arith.subf %309, %308 : vector<16x128xf32>
    %311 = arith.mulf %9, %310 : vector<16x128xf32>
    %312 = arith.truncf %311 : vector<16x128xf32> to vector<16x128xbf16>
    %c608 = arith.constant 608 : index
    %c0_220 = arith.constant 0 : index
    %313 = vector.load %arg14[%c608, %c0_220] : memref<784x128xbf16, #tpu.memory_space<vmem>>, vector<16x128xbf16>
    tpu.vector_store %arg14[%c608, %c0_220], %312 {strides = array<i32>} : memref<784x128xbf16, #tpu.memory_space<vmem>>, vector<16x128xbf16>,
    %c5_221 = arith.constant 5 : index
    %c32_222 = arith.constant 32 : index
    %314 = vector.load %arg10[%c5_221, %c32_222] : memref<22x176xf32, #tpu.memory_space<vmem>>, vector<16x128xf32>
    %c5_223 = arith.constant 5 : index
    %c32_224 = arith.constant 32 : index
    %315 = vector.load %arg3[%c5_223, %c32_224] : memref<22x176xf32, #tpu.memory_space<vmem>>, vector<16x128xf32>
    %316 = arith.addf %314, %40 : vector<16x128xf32>
    %317 = arith.subf %316, %315 : vector<16x128xf32>
    %318 = arith.mulf %9, %317 : vector<16x128xf32>
    %319 = arith.truncf %318 : vector<16x128xf32> to vector<16x128xbf16>
    %c624 = arith.constant 624 : index
    %c0_225 = arith.constant 0 : index
    %320 = vector.load %arg14[%c624, %c0_225] : memref<784x128xbf16, #tpu.memory_space<vmem>>, vector<16x128xbf16>
    tpu.vector_store %arg14[%c624, %c0_225], %319 {strides = array<i32>} : memref<784x128xbf16, #tpu.memory_space<vmem>>, vector<16x128xbf16>,
    %c5_226 = arith.constant 5 : index
    %c40_227 = arith.constant 40 : index
    %321 = vector.load %arg10[%c5_226, %c40_227] : memref<22x176xf32, #tpu.memory_space<vmem>>, vector<16x128xf32>
    %c5_228 = arith.constant 5 : index
    %c40_229 = arith.constant 40 : index
    %322 = vector.load %arg3[%c5_228, %c40_229] : memref<22x176xf32, #tpu.memory_space<vmem>>, vector<16x128xf32>
    %323 = arith.addf %321, %40 : vector<16x128xf32>
    %324 = arith.subf %323, %322 : vector<16x128xf32>
    %325 = arith.mulf %9, %324 : vector<16x128xf32>
    %326 = arith.truncf %325 : vector<16x128xf32> to vector<16x128xbf16>
    %c640 = arith.constant 640 : index
    %c0_230 = arith.constant 0 : index
    %327 = vector.load %arg14[%c640, %c0_230] : memref<784x128xbf16, #tpu.memory_space<vmem>>, vector<16x128xbf16>
    tpu.vector_store %arg14[%c640, %c0_230], %326 {strides = array<i32>} : memref<784x128xbf16, #tpu.memory_space<vmem>>, vector<16x128xbf16>,
    %c5_231 = arith.constant 5 : index
    %c48_232 = arith.constant 48 : index
    %328 = vector.load %arg10[%c5_231, %c48_232] : memref<22x176xf32, #tpu.memory_space<vmem>>, vector<16x128xf32>
    %c5_233 = arith.constant 5 : index
    %c48_234 = arith.constant 48 : index
    %329 = vector.load %arg3[%c5_233, %c48_234] : memref<22x176xf32, #tpu.memory_space<vmem>>, vector<16x128xf32>
    %330 = arith.addf %328, %40 : vector<16x128xf32>
    %331 = arith.subf %330, %329 : vector<16x128xf32>
    %332 = arith.mulf %9, %331 : vector<16x128xf32>
    %333 = arith.truncf %332 : vector<16x128xf32> to vector<16x128xbf16>
    %c656 = arith.constant 656 : index
    %c0_235 = arith.constant 0 : index
    %334 = vector.load %arg14[%c656, %c0_235] : memref<784x128xbf16, #tpu.memory_space<vmem>>, vector<16x128xbf16>
    tpu.vector_store %arg14[%c656, %c0_235], %333 {strides = array<i32>} : memref<784x128xbf16, #tpu.memory_space<vmem>>, vector<16x128xbf16>,
    %c6 = arith.constant 6 : index
    %c0_236 = arith.constant 0 : index
    %335 = vector.load %arg10[%c6, %c0_236] : memref<22x176xf32, #tpu.memory_space<vmem>>, vector<16x128xf32>
    %c6_237 = arith.constant 6 : index
    %c0_238 = arith.constant 0 : index
    %336 = vector.load %arg3[%c6_237, %c0_238] : memref<22x176xf32, #tpu.memory_space<vmem>>, vector<16x128xf32>
    %337 = arith.addf %335, %40 : vector<16x128xf32>
    %338 = arith.subf %337, %336 : vector<16x128xf32>
    %339 = arith.mulf %9, %338 : vector<16x128xf32>
    %340 = arith.truncf %339 : vector<16x128xf32> to vector<16x128xbf16>
    %c672 = arith.constant 672 : index
    %c0_239 = arith.constant 0 : index
    %341 = vector.load %arg14[%c672, %c0_239] : memref<784x128xbf16, #tpu.memory_space<vmem>>, vector<16x128xbf16>
    tpu.vector_store %arg14[%c672, %c0_239], %340 {strides = array<i32>} : memref<784x128xbf16, #tpu.memory_space<vmem>>, vector<16x128xbf16>,
    %c6_240 = arith.constant 6 : index
    %c8_241 = arith.constant 8 : index
    %342 = vector.load %arg10[%c6_240, %c8_241] : memref<22x176xf32, #tpu.memory_space<vmem>>, vector<16x128xf32>
    %c6_242 = arith.constant 6 : index
    %c8_243 = arith.constant 8 : index
    %343 = vector.load %arg3[%c6_242, %c8_243] : memref<22x176xf32, #tpu.memory_space<vmem>>, vector<16x128xf32>
    %344 = arith.addf %342, %40 : vector<16x128xf32>
    %345 = arith.subf %344, %343 : vector<16x128xf32>
    %346 = arith.mulf %9, %345 : vector<16x128xf32>
    %347 = arith.truncf %346 : vector<16x128xf32> to vector<16x128xbf16>
    %c688 = arith.constant 688 : index
    %c0_244 = arith.constant 0 : index
    %348 = vector.load %arg14[%c688, %c0_244] : memref<784x128xbf16, #tpu.memory_space<vmem>>, vector<16x128xbf16>
    tpu.vector_store %arg14[%c688, %c0_244], %347 {strides = array<i32>} : memref<784x128xbf16, #tpu.memory_space<vmem>>, vector<16x128xbf16>,
    %c6_245 = arith.constant 6 : index
    %c16_246 = arith.constant 16 : index
    %349 = vector.load %arg10[%c6_245, %c16_246] : memref<22x176xf32, #tpu.memory_space<vmem>>, vector<16x128xf32>
    %c6_247 = arith.constant 6 : index
    %c16_248 = arith.constant 16 : index
    %350 = vector.load %arg3[%c6_247, %c16_248] : memref<22x176xf32, #tpu.memory_space<vmem>>, vector<16x128xf32>
    %351 = arith.addf %349, %40 : vector<16x128xf32>
    %352 = arith.subf %351, %350 : vector<16x128xf32>
    %353 = arith.mulf %9, %352 : vector<16x128xf32>
    %354 = arith.truncf %353 : vector<16x128xf32> to vector<16x128xbf16>
    %c704 = arith.constant 704 : index
    %c0_249 = arith.constant 0 : index
    %355 = vector.load %arg14[%c704, %c0_249] : memref<784x128xbf16, #tpu.memory_space<vmem>>, vector<16x128xbf16>
    tpu.vector_store %arg14[%c704, %c0_249], %354 {strides = array<i32>} : memref<784x128xbf16, #tpu.memory_space<vmem>>, vector<16x128xbf16>,
    %c6_250 = arith.constant 6 : index
    %c24_251 = arith.constant 24 : index
    %356 = vector.load %arg10[%c6_250, %c24_251] : memref<22x176xf32, #tpu.memory_space<vmem>>, vector<16x128xf32>
    %c6_252 = arith.constant 6 : index
    %c24_253 = arith.constant 24 : index
    %357 = vector.load %arg3[%c6_252, %c24_253] : memref<22x176xf32, #tpu.memory_space<vmem>>, vector<16x128xf32>
    %358 = arith.addf %356, %40 : vector<16x128xf32>
    %359 = arith.subf %358, %357 : vector<16x128xf32>
    %360 = arith.mulf %9, %359 : vector<16x128xf32>
    %361 = arith.truncf %360 : vector<16x128xf32> to vector<16x128xbf16>
    %c720 = arith.constant 720 : index
    %c0_254 = arith.constant 0 : index
    %362 = vector.load %arg14[%c720, %c0_254] : memref<784x128xbf16, #tpu.memory_space<vmem>>, vector<16x128xbf16>
    tpu.vector_store %arg14[%c720, %c0_254], %361 {strides = array<i32>} : memref<784x128xbf16, #tpu.memory_space<vmem>>, vector<16x128xbf16>,
    %c6_255 = arith.constant 6 : index
    %c32_256 = arith.constant 32 : index
    %363 = vector.load %arg10[%c6_255, %c32_256] : memref<22x176xf32, #tpu.memory_space<vmem>>, vector<16x128xf32>
    %c6_257 = arith.constant 6 : index
    %c32_258 = arith.constant 32 : index
    %364 = vector.load %arg3[%c6_257, %c32_258] : memref<22x176xf32, #tpu.memory_space<vmem>>, vector<16x128xf32>
    %365 = arith.addf %363, %40 : vector<16x128xf32>
    %366 = arith.subf %365, %364 : vector<16x128xf32>
    %367 = arith.mulf %9, %366 : vector<16x128xf32>
    %368 = arith.truncf %367 : vector<16x128xf32> to vector<16x128xbf16>
    %c736 = arith.constant 736 : index
    %c0_259 = arith.constant 0 : index
    %369 = vector.load %arg14[%c736, %c0_259] : memref<784x128xbf16, #tpu.memory_space<vmem>>, vector<16x128xbf16>
    tpu.vector_store %arg14[%c736, %c0_259], %368 {strides = array<i32>} : memref<784x128xbf16, #tpu.memory_space<vmem>>, vector<16x128xbf16>,
    %c6_260 = arith.constant 6 : index
    %c40_261 = arith.constant 40 : index
    %370 = vector.load %arg10[%c6_260, %c40_261] : memref<22x176xf32, #tpu.memory_space<vmem>>, vector<16x128xf32>
    %c6_262 = arith.constant 6 : index
    %c40_263 = arith.constant 40 : index
    %371 = vector.load %arg3[%c6_262, %c40_263] : memref<22x176xf32, #tpu.memory_space<vmem>>, vector<16x128xf32>
    %372 = arith.addf %370, %40 : vector<16x128xf32>
    %373 = arith.subf %372, %371 : vector<16x128xf32>
    %374 = arith.mulf %9, %373 : vector<16x128xf32>
    %375 = arith.truncf %374 : vector<16x128xf32> to vector<16x128xbf16>
    %c752 = arith.constant 752 : index
    %c0_264 = arith.constant 0 : index
    %376 = vector.load %arg14[%c752, %c0_264] : memref<784x128xbf16, #tpu.memory_space<vmem>>, vector<16x128xbf16>
    tpu.vector_store %arg14[%c752, %c0_264], %375 {strides = array<i32>} : memref<784x128xbf16, #tpu.memory_space<vmem>>, vector<16x128xbf16>,
    %c6_265 = arith.constant 6 : index
    %c48_266 = arith.constant 48 : index
    %377 = vector.load %arg10[%c6_265, %c48_266] : memref<22x176xf32, #tpu.memory_space<vmem>>, vector<16x128xf32>
    %c6_267 = arith.constant 6 : index
    %c48_268 = arith.constant 48 : index
    %378 = vector.load %arg3[%c6_267, %c48_268] : memref<22x176xf32, #tpu.memory_space<vmem>>, vector<16x128xf32>
    %379 = arith.addf %377, %40 : vector<16x128xf32>
    %380 = arith.subf %379, %378 : vector<16x128xf32>
    %381 = arith.mulf %9, %380 : vector<16x128xf32>
    %382 = arith.truncf %381 : vector<16x128xf32> to vector<16x128xbf16>
    %c768 = arith.constant 768 : index
    %c0_269 = arith.constant 0 : index
    %383 = vector.load %arg14[%c768, %c0_269] : memref<784x128xbf16, #tpu.memory_space<vmem>>, vector<16x128xbf16>
    tpu.vector_store %arg14[%c768, %c0_269], %382 {strides = array<i32>} : memref<784x128xbf16, #tpu.memory_space<vmem>>, vector<16x128xbf16>,
    %c0_270 = arith.constant 0 : index
    %c0_271 = arith.constant 0 : index
    %384 = vector.load %arg14[%c0_270, %c0_271] : memref<784x128xbf16, #tpu.memory_space<vmem>>, vector<784x128xbf16>
    %c0_272 = arith.constant 0 : index
    %c0_273 = arith.constant 0 : index
    %385 = vector.load %arg4[%c0_272, %c0_273] : memref<128x128xbf16, #tpu.memory_space<vmem>>, vector<128x128xbf16>
    %cst_274 = arith.constant dense<0.000000e+00> : vector<784x128xf32>
    %386 = tpu.matmul %384, %385, %cst_274 {dimension_numbers = #tpu.dot_dimension_numbers<[1], [0], [0], [1], [0, 0, 1, 1], [], []>} : vector<784x128xbf16>, vector<128x128xbf16>, vector<784x128xf32> -> vector<784x128xf32>
    %c0_275 = arith.constant 0 : index
    %c0_276 = arith.constant 0 : index
    %387 = vector.load %arg15[%c0_275, %c0_276] : memref<784x128xf32, #tpu.memory_space<vmem>>, vector<784x128xf32>
    tpu.vector_store %arg15[%c0_275, %c0_276], %386 {strides = array<i32>} : memref<784x128xf32, #tpu.memory_space<vmem>>, vector<784x128xf32>,
    %c0_277 = arith.constant 0 : index
    %c0_278 = arith.constant 0 : index
    %388 = vector.load %arg15[%c0_277, %c0_278] : memref<784x128xf32, #tpu.memory_space<vmem>>, vector<16x128xf32>
    %c16_279 = arith.constant 16 : index
    %c0_280 = arith.constant 0 : index
    %389 = vector.load %arg15[%c16_279, %c0_280] : memref<784x128xf32, #tpu.memory_space<vmem>>, vector<16x128xf32>
    %390 = arith.maximumf %388, %389 : vector<16x128xf32>
    %c32_281 = arith.constant 32 : index
    %c0_282 = arith.constant 0 : index
    %391 = vector.load %arg15[%c32_281, %c0_282] : memref<784x128xf32, #tpu.memory_space<vmem>>, vector<16x128xf32>
    %392 = arith.maximumf %390, %391 : vector<16x128xf32>
    %c48_283 = arith.constant 48 : index
    %c0_284 = arith.constant 0 : index
    %393 = vector.load %arg15[%c48_283, %c0_284] : memref<784x128xf32, #tpu.memory_space<vmem>>, vector<16x128xf32>
    %394 = arith.maximumf %392, %393 : vector<16x128xf32>
    %c64_285 = arith.constant 64 : index
    %c0_286 = arith.constant 0 : index
    %395 = vector.load %arg15[%c64_285, %c0_286] : memref<784x128xf32, #tpu.memory_space<vmem>>, vector<16x128xf32>
    %396 = arith.maximumf %394, %395 : vector<16x128xf32>
    %c80_287 = arith.constant 80 : index
    %c0_288 = arith.constant 0 : index
    %397 = vector.load %arg15[%c80_287, %c0_288] : memref<784x128xf32, #tpu.memory_space<vmem>>, vector<16x128xf32>
    %398 = arith.maximumf %396, %397 : vector<16x128xf32>
    %c96_289 = arith.constant 96 : index
    %c0_290 = arith.constant 0 : index
    %399 = vector.load %arg15[%c96_289, %c0_290] : memref<784x128xf32, #tpu.memory_space<vmem>>, vector<16x128xf32>
    %400 = arith.maximumf %398, %399 : vector<16x128xf32>
    %c112_291 = arith.constant 112 : index
    %c0_292 = arith.constant 0 : index
    %401 = vector.load %arg15[%c112_291, %c0_292] : memref<784x128xf32, #tpu.memory_space<vmem>>, vector<16x128xf32>
    %402 = arith.maximumf %400, %401 : vector<16x128xf32>
    %c128_293 = arith.constant 128 : index
    %c0_294 = arith.constant 0 : index
    %403 = vector.load %arg15[%c128_293, %c0_294] : memref<784x128xf32, #tpu.memory_space<vmem>>, vector<16x128xf32>
    %404 = arith.maximumf %402, %403 : vector<16x128xf32>
    %c144_295 = arith.constant 144 : index
    %c0_296 = arith.constant 0 : index
    %405 = vector.load %arg15[%c144_295, %c0_296] : memref<784x128xf32, #tpu.memory_space<vmem>>, vector<16x128xf32>
    %406 = arith.maximumf %404, %405 : vector<16x128xf32>
    %c160_297 = arith.constant 160 : index
    %c0_298 = arith.constant 0 : index
    %407 = vector.load %arg15[%c160_297, %c0_298] : memref<784x128xf32, #tpu.memory_space<vmem>>, vector<16x128xf32>
    %408 = arith.maximumf %406, %407 : vector<16x128xf32>
    %c176_299 = arith.constant 176 : index
    %c0_300 = arith.constant 0 : index
    %409 = vector.load %arg15[%c176_299, %c0_300] : memref<784x128xf32, #tpu.memory_space<vmem>>, vector<16x128xf32>
    %410 = arith.maximumf %408, %409 : vector<16x128xf32>
    %c192_301 = arith.constant 192 : index
    %c0_302 = arith.constant 0 : index
    %411 = vector.load %arg15[%c192_301, %c0_302] : memref<784x128xf32, #tpu.memory_space<vmem>>, vector<16x128xf32>
    %412 = arith.maximumf %410, %411 : vector<16x128xf32>
    %c208_303 = arith.constant 208 : index
    %c0_304 = arith.constant 0 : index
    %413 = vector.load %arg15[%c208_303, %c0_304] : memref<784x128xf32, #tpu.memory_space<vmem>>, vector<16x128xf32>
    %414 = arith.maximumf %412, %413 : vector<16x128xf32>
    %c224_305 = arith.constant 224 : index
    %c0_306 = arith.constant 0 : index
    %415 = vector.load %arg15[%c224_305, %c0_306] : memref<784x128xf32, #tpu.memory_space<vmem>>, vector<16x128xf32>
    %416 = arith.maximumf %414, %415 : vector<16x128xf32>
    %c240_307 = arith.constant 240 : index
    %c0_308 = arith.constant 0 : index
    %417 = vector.load %arg15[%c240_307, %c0_308] : memref<784x128xf32, #tpu.memory_space<vmem>>, vector<16x128xf32>
    %418 = arith.maximumf %416, %417 : vector<16x128xf32>
    %c256_309 = arith.constant 256 : index
    %c0_310 = arith.constant 0 : index
    %419 = vector.load %arg15[%c256_309, %c0_310] : memref<784x128xf32, #tpu.memory_space<vmem>>, vector<16x128xf32>
    %420 = arith.maximumf %418, %419 : vector<16x128xf32>
    %c272_311 = arith.constant 272 : index
    %c0_312 = arith.constant 0 : index
    %421 = vector.load %arg15[%c272_311, %c0_312] : memref<784x128xf32, #tpu.memory_space<vmem>>, vector<16x128xf32>
    %422 = arith.maximumf %420, %421 : vector<16x128xf32>
    %c288_313 = arith.constant 288 : index
    %c0_314 = arith.constant 0 : index
    %423 = vector.load %arg15[%c288_313, %c0_314] : memref<784x128xf32, #tpu.memory_space<vmem>>, vector<16x128xf32>
    %424 = arith.maximumf %422, %423 : vector<16x128xf32>
    %c304_315 = arith.constant 304 : index
    %c0_316 = arith.constant 0 : index
    %425 = vector.load %arg15[%c304_315, %c0_316] : memref<784x128xf32, #tpu.memory_space<vmem>>, vector<16x128xf32>
    %426 = arith.maximumf %424, %425 : vector<16x128xf32>
    %c320_317 = arith.constant 320 : index
    %c0_318 = arith.constant 0 : index
    %427 = vector.load %arg15[%c320_317, %c0_318] : memref<784x128xf32, #tpu.memory_space<vmem>>, vector<16x128xf32>
    %428 = arith.maximumf %426, %427 : vector<16x128xf32>
    %c336_319 = arith.constant 336 : index
    %c0_320 = arith.constant 0 : index
    %429 = vector.load %arg15[%c336_319, %c0_320] : memref<784x128xf32, #tpu.memory_space<vmem>>, vector<16x128xf32>
    %430 = arith.maximumf %428, %429 : vector<16x128xf32>
    %c352_321 = arith.constant 352 : index
    %c0_322 = arith.constant 0 : index
    %431 = vector.load %arg15[%c352_321, %c0_322] : memref<784x128xf32, #tpu.memory_space<vmem>>, vector<16x128xf32>
    %432 = arith.maximumf %430, %431 : vector<16x128xf32>
    %c368_323 = arith.constant 368 : index
    %c0_324 = arith.constant 0 : index
    %433 = vector.load %arg15[%c368_323, %c0_324] : memref<784x128xf32, #tpu.memory_space<vmem>>, vector<16x128xf32>
    %434 = arith.maximumf %432, %433 : vector<16x128xf32>
    %c384_325 = arith.constant 384 : index
    %c0_326 = arith.constant 0 : index
    %435 = vector.load %arg15[%c384_325, %c0_326] : memref<784x128xf32, #tpu.memory_space<vmem>>, vector<16x128xf32>
    %436 = arith.maximumf %434, %435 : vector<16x128xf32>
    %c400_327 = arith.constant 400 : index
    %c0_328 = arith.constant 0 : index
    %437 = vector.load %arg15[%c400_327, %c0_328] : memref<784x128xf32, #tpu.memory_space<vmem>>, vector<16x128xf32>
    %438 = arith.maximumf %436, %437 : vector<16x128xf32>
    %c416_329 = arith.constant 416 : index
    %c0_330 = arith.constant 0 : index
    %439 = vector.load %arg15[%c416_329, %c0_330] : memref<784x128xf32, #tpu.memory_space<vmem>>, vector<16x128xf32>
    %440 = arith.maximumf %438, %439 : vector<16x128xf32>
    %c432_331 = arith.constant 432 : index
    %c0_332 = arith.constant 0 : index
    %441 = vector.load %arg15[%c432_331, %c0_332] : memref<784x128xf32, #tpu.memory_space<vmem>>, vector<16x128xf32>
    %442 = arith.maximumf %440, %441 : vector<16x128xf32>
    %c448_333 = arith.constant 448 : index
    %c0_334 = arith.constant 0 : index
    %443 = vector.load %arg15[%c448_333, %c0_334] : memref<784x128xf32, #tpu.memory_space<vmem>>, vector<16x128xf32>
    %444 = arith.maximumf %442, %443 : vector<16x128xf32>
    %c464_335 = arith.constant 464 : index
    %c0_336 = arith.constant 0 : index
    %445 = vector.load %arg15[%c464_335, %c0_336] : memref<784x128xf32, #tpu.memory_space<vmem>>, vector<16x128xf32>
    %446 = arith.maximumf %444, %445 : vector<16x128xf32>
    %c480_337 = arith.constant 480 : index
    %c0_338 = arith.constant 0 : index
    %447 = vector.load %arg15[%c480_337, %c0_338] : memref<784x128xf32, #tpu.memory_space<vmem>>, vector<16x128xf32>
    %448 = arith.maximumf %446, %447 : vector<16x128xf32>
    %c496_339 = arith.constant 496 : index
    %c0_340 = arith.constant 0 : index
    %449 = vector.load %arg15[%c496_339, %c0_340] : memref<784x128xf32, #tpu.memory_space<vmem>>, vector<16x128xf32>
    %450 = arith.maximumf %448, %449 : vector<16x128xf32>
    %c512_341 = arith.constant 512 : index
    %c0_342 = arith.constant 0 : index
    %451 = vector.load %arg15[%c512_341, %c0_342] : memref<784x128xf32, #tpu.memory_space<vmem>>, vector<16x128xf32>
    %452 = arith.maximumf %450, %451 : vector<16x128xf32>
    %c528_343 = arith.constant 528 : index
    %c0_344 = arith.constant 0 : index
    %453 = vector.load %arg15[%c528_343, %c0_344] : memref<784x128xf32, #tpu.memory_space<vmem>>, vector<16x128xf32>
    %454 = arith.maximumf %452, %453 : vector<16x128xf32>
    %c544_345 = arith.constant 544 : index
    %c0_346 = arith.constant 0 : index
    %455 = vector.load %arg15[%c544_345, %c0_346] : memref<784x128xf32, #tpu.memory_space<vmem>>, vector<16x128xf32>
    %456 = arith.maximumf %454, %455 : vector<16x128xf32>
    %c560_347 = arith.constant 560 : index
    %c0_348 = arith.constant 0 : index
    %457 = vector.load %arg15[%c560_347, %c0_348] : memref<784x128xf32, #tpu.memory_space<vmem>>, vector<16x128xf32>
    %458 = arith.maximumf %456, %457 : vector<16x128xf32>
    %c576_349 = arith.constant 576 : index
    %c0_350 = arith.constant 0 : index
    %459 = vector.load %arg15[%c576_349, %c0_350] : memref<784x128xf32, #tpu.memory_space<vmem>>, vector<16x128xf32>
    %460 = arith.maximumf %458, %459 : vector<16x128xf32>
    %c592_351 = arith.constant 592 : index
    %c0_352 = arith.constant 0 : index
    %461 = vector.load %arg15[%c592_351, %c0_352] : memref<784x128xf32, #tpu.memory_space<vmem>>, vector<16x128xf32>
    %462 = arith.maximumf %460, %461 : vector<16x128xf32>
    %c608_353 = arith.constant 608 : index
    %c0_354 = arith.constant 0 : index
    %463 = vector.load %arg15[%c608_353, %c0_354] : memref<784x128xf32, #tpu.memory_space<vmem>>, vector<16x128xf32>
    %464 = arith.maximumf %462, %463 : vector<16x128xf32>
    %c624_355 = arith.constant 624 : index
    %c0_356 = arith.constant 0 : index
    %465 = vector.load %arg15[%c624_355, %c0_356] : memref<784x128xf32, #tpu.memory_space<vmem>>, vector<16x128xf32>
    %466 = arith.maximumf %464, %465 : vector<16x128xf32>
    %c640_357 = arith.constant 640 : index
    %c0_358 = arith.constant 0 : index
    %467 = vector.load %arg15[%c640_357, %c0_358] : memref<784x128xf32, #tpu.memory_space<vmem>>, vector<16x128xf32>
    %468 = arith.maximumf %466, %467 : vector<16x128xf32>
    %c656_359 = arith.constant 656 : index
    %c0_360 = arith.constant 0 : index
    %469 = vector.load %arg15[%c656_359, %c0_360] : memref<784x128xf32, #tpu.memory_space<vmem>>, vector<16x128xf32>
    %470 = arith.maximumf %468, %469 : vector<16x128xf32>
    %c672_361 = arith.constant 672 : index
    %c0_362 = arith.constant 0 : index
    %471 = vector.load %arg15[%c672_361, %c0_362] : memref<784x128xf32, #tpu.memory_space<vmem>>, vector<16x128xf32>
    %472 = arith.maximumf %470, %471 : vector<16x128xf32>
    %c688_363 = arith.constant 688 : index
    %c0_364 = arith.constant 0 : index
    %473 = vector.load %arg15[%c688_363, %c0_364] : memref<784x128xf32, #tpu.memory_space<vmem>>, vector<16x128xf32>
    %474 = arith.maximumf %472, %473 : vector<16x128xf32>
    %c704_365 = arith.constant 704 : index
    %c0_366 = arith.constant 0 : index
    %475 = vector.load %arg15[%c704_365, %c0_366] : memref<784x128xf32, #tpu.memory_space<vmem>>, vector<16x128xf32>
    %476 = arith.maximumf %474, %475 : vector<16x128xf32>
    %c720_367 = arith.constant 720 : index
    %c0_368 = arith.constant 0 : index
    %477 = vector.load %arg15[%c720_367, %c0_368] : memref<784x128xf32, #tpu.memory_space<vmem>>, vector<16x128xf32>
    %478 = arith.maximumf %476, %477 : vector<16x128xf32>
    %c736_369 = arith.constant 736 : index
    %c0_370 = arith.constant 0 : index
    %479 = vector.load %arg15[%c736_369, %c0_370] : memref<784x128xf32, #tpu.memory_space<vmem>>, vector<16x128xf32>
    %480 = arith.maximumf %478, %479 : vector<16x128xf32>
    %c752_371 = arith.constant 752 : index
    %c0_372 = arith.constant 0 : index
    %481 = vector.load %arg15[%c752_371, %c0_372] : memref<784x128xf32, #tpu.memory_space<vmem>>, vector<16x128xf32>
    %482 = arith.maximumf %480, %481 : vector<16x128xf32>
    %c768_373 = arith.constant 768 : index
    %c0_374 = arith.constant 0 : index
    %483 = vector.load %arg15[%c768_373, %c0_374] : memref<784x128xf32, #tpu.memory_space<vmem>>, vector<16x128xf32>
    %484 = arith.maximumf %482, %483 : vector<16x128xf32>
    %cst_375 = arith.constant 0.000000e+00 : f32
    %485 = vector.broadcast %cst_375 : f32 to vector<16x128xf32>
    %cst_376 = arith.constant 0.000000e+00 : f32
    %486 = vector.broadcast %cst_376 : f32 to vector<16x128xf32>
    %c0_377 = arith.constant 0 : index
    %c0_378 = arith.constant 0 : index
    %487 = vector.load %arg15[%c0_377, %c0_378] : memref<784x128xf32, #tpu.memory_space<vmem>>, vector<16x128xf32>
    %488 = arith.subf %487, %484 : vector<16x128xf32>
    %489 = math.exp %488 : vector<16x128xf32>
    %490 = arith.addf %485, %489 : vector<16x128xf32>
    %c0_379 = arith.constant 0 : index
    %c0_380 = arith.constant 0 : index
    %491 = vector.load %arg11[%c0_379, %c0_380] : memref<22x176xf32, #tpu.memory_space<vmem>>, vector<16x128xf32>
    %492 = arith.mulf %489, %491 : vector<16x128xf32>
    %493 = arith.addf %486, %492 : vector<16x128xf32>
    %c16_381 = arith.constant 16 : index
    %c0_382 = arith.constant 0 : index
    %494 = vector.load %arg15[%c16_381, %c0_382] : memref<784x128xf32, #tpu.memory_space<vmem>>, vector<16x128xf32>
    %495 = arith.subf %494, %484 : vector<16x128xf32>
    %496 = math.exp %495 : vector<16x128xf32>
    %497 = arith.addf %490, %496 : vector<16x128xf32>
    %c0_383 = arith.constant 0 : index
    %c8_384 = arith.constant 8 : index
    %498 = vector.load %arg11[%c0_383, %c8_384] : memref<22x176xf32, #tpu.memory_space<vmem>>, vector<16x128xf32>
    %499 = arith.mulf %496, %498 : vector<16x128xf32>
    %500 = arith.addf %493, %499 : vector<16x128xf32>
    %c32_385 = arith.constant 32 : index
    %c0_386 = arith.constant 0 : index
    %501 = vector.load %arg15[%c32_385, %c0_386] : memref<784x128xf32, #tpu.memory_space<vmem>>, vector<16x128xf32>
    %502 = arith.subf %501, %484 : vector<16x128xf32>
    %503 = math.exp %502 : vector<16x128xf32>
    %504 = arith.addf %497, %503 : vector<16x128xf32>
    %c0_387 = arith.constant 0 : index
    %c16_388 = arith.constant 16 : index
    %505 = vector.load %arg11[%c0_387, %c16_388] : memref<22x176xf32, #tpu.memory_space<vmem>>, vector<16x128xf32>
    %506 = arith.mulf %503, %505 : vector<16x128xf32>
    %507 = arith.addf %500, %506 : vector<16x128xf32>
    %c48_389 = arith.constant 48 : index
    %c0_390 = arith.constant 0 : index
    %508 = vector.load %arg15[%c48_389, %c0_390] : memref<784x128xf32, #tpu.memory_space<vmem>>, vector<16x128xf32>
    %509 = arith.subf %508, %484 : vector<16x128xf32>
    %510 = math.exp %509 : vector<16x128xf32>
    %511 = arith.addf %504, %510 : vector<16x128xf32>
    %c0_391 = arith.constant 0 : index
    %c24_392 = arith.constant 24 : index
    %512 = vector.load %arg11[%c0_391, %c24_392] : memref<22x176xf32, #tpu.memory_space<vmem>>, vector<16x128xf32>
    %513 = arith.mulf %510, %512 : vector<16x128xf32>
    %514 = arith.addf %507, %513 : vector<16x128xf32>
    %c64_393 = arith.constant 64 : index
    %c0_394 = arith.constant 0 : index
    %515 = vector.load %arg15[%c64_393, %c0_394] : memref<784x128xf32, #tpu.memory_space<vmem>>, vector<16x128xf32>
    %516 = arith.subf %515, %484 : vector<16x128xf32>
    %517 = math.exp %516 : vector<16x128xf32>
    %518 = arith.addf %511, %517 : vector<16x128xf32>
    %c0_395 = arith.constant 0 : index
    %c32_396 = arith.constant 32 : index
    %519 = vector.load %arg11[%c0_395, %c32_396] : memref<22x176xf32, #tpu.memory_space<vmem>>, vector<16x128xf32>
    %520 = arith.mulf %517, %519 : vector<16x128xf32>
    %521 = arith.addf %514, %520 : vector<16x128xf32>
    %c80_397 = arith.constant 80 : index
    %c0_398 = arith.constant 0 : index
    %522 = vector.load %arg15[%c80_397, %c0_398] : memref<784x128xf32, #tpu.memory_space<vmem>>, vector<16x128xf32>
    %523 = arith.subf %522, %484 : vector<16x128xf32>
    %524 = math.exp %523 : vector<16x128xf32>
    %525 = arith.addf %518, %524 : vector<16x128xf32>
    %c0_399 = arith.constant 0 : index
    %c40_400 = arith.constant 40 : index
    %526 = vector.load %arg11[%c0_399, %c40_400] : memref<22x176xf32, #tpu.memory_space<vmem>>, vector<16x128xf32>
    %527 = arith.mulf %524, %526 : vector<16x128xf32>
    %528 = arith.addf %521, %527 : vector<16x128xf32>
    %c96_401 = arith.constant 96 : index
    %c0_402 = arith.constant 0 : index
    %529 = vector.load %arg15[%c96_401, %c0_402] : memref<784x128xf32, #tpu.memory_space<vmem>>, vector<16x128xf32>
    %530 = arith.subf %529, %484 : vector<16x128xf32>
    %531 = math.exp %530 : vector<16x128xf32>
    %532 = arith.addf %525, %531 : vector<16x128xf32>
    %c0_403 = arith.constant 0 : index
    %c48_404 = arith.constant 48 : index
    %533 = vector.load %arg11[%c0_403, %c48_404] : memref<22x176xf32, #tpu.memory_space<vmem>>, vector<16x128xf32>
    %534 = arith.mulf %531, %533 : vector<16x128xf32>
    %535 = arith.addf %528, %534 : vector<16x128xf32>
    %c112_405 = arith.constant 112 : index
    %c0_406 = arith.constant 0 : index
    %536 = vector.load %arg15[%c112_405, %c0_406] : memref<784x128xf32, #tpu.memory_space<vmem>>, vector<16x128xf32>
    %537 = arith.subf %536, %484 : vector<16x128xf32>
    %538 = math.exp %537 : vector<16x128xf32>
    %539 = arith.addf %532, %538 : vector<16x128xf32>
    %c1_407 = arith.constant 1 : index
    %c0_408 = arith.constant 0 : index
    %540 = vector.load %arg11[%c1_407, %c0_408] : memref<22x176xf32, #tpu.memory_space<vmem>>, vector<16x128xf32>
    %541 = arith.mulf %538, %540 : vector<16x128xf32>
    %542 = arith.addf %535, %541 : vector<16x128xf32>
    %c128_409 = arith.constant 128 : index
    %c0_410 = arith.constant 0 : index
    %543 = vector.load %arg15[%c128_409, %c0_410] : memref<784x128xf32, #tpu.memory_space<vmem>>, vector<16x128xf32>
    %544 = arith.subf %543, %484 : vector<16x128xf32>
    %545 = math.exp %544 : vector<16x128xf32>
    %546 = arith.addf %539, %545 : vector<16x128xf32>
    %c1_411 = arith.constant 1 : index
    %c8_412 = arith.constant 8 : index
    %547 = vector.load %arg11[%c1_411, %c8_412] : memref<22x176xf32, #tpu.memory_space<vmem>>, vector<16x128xf32>
    %548 = arith.mulf %545, %547 : vector<16x128xf32>
    %549 = arith.addf %542, %548 : vector<16x128xf32>
    %c144_413 = arith.constant 144 : index
    %c0_414 = arith.constant 0 : index
    %550 = vector.load %arg15[%c144_413, %c0_414] : memref<784x128xf32, #tpu.memory_space<vmem>>, vector<16x128xf32>
    %551 = arith.subf %550, %484 : vector<16x128xf32>
    %552 = math.exp %551 : vector<16x128xf32>
    %553 = arith.addf %546, %552 : vector<16x128xf32>
    %c1_415 = arith.constant 1 : index
    %c16_416 = arith.constant 16 : index
    %554 = vector.load %arg11[%c1_415, %c16_416] : memref<22x176xf32, #tpu.memory_space<vmem>>, vector<16x128xf32>
    %555 = arith.mulf %552, %554 : vector<16x128xf32>
    %556 = arith.addf %549, %555 : vector<16x128xf32>
    %c160_417 = arith.constant 160 : index
    %c0_418 = arith.constant 0 : index
    %557 = vector.load %arg15[%c160_417, %c0_418] : memref<784x128xf32, #tpu.memory_space<vmem>>, vector<16x128xf32>
    %558 = arith.subf %557, %484 : vector<16x128xf32>
    %559 = math.exp %558 : vector<16x128xf32>
    %560 = arith.addf %553, %559 : vector<16x128xf32>
    %c1_419 = arith.constant 1 : index
    %c24_420 = arith.constant 24 : index
    %561 = vector.load %arg11[%c1_419, %c24_420] : memref<22x176xf32, #tpu.memory_space<vmem>>, vector<16x128xf32>
    %562 = arith.mulf %559, %561 : vector<16x128xf32>
    %563 = arith.addf %556, %562 : vector<16x128xf32>
    %c176_421 = arith.constant 176 : index
    %c0_422 = arith.constant 0 : index
    %564 = vector.load %arg15[%c176_421, %c0_422] : memref<784x128xf32, #tpu.memory_space<vmem>>, vector<16x128xf32>
    %565 = arith.subf %564, %484 : vector<16x128xf32>
    %566 = math.exp %565 : vector<16x128xf32>
    %567 = arith.addf %560, %566 : vector<16x128xf32>
    %c1_423 = arith.constant 1 : index
    %c32_424 = arith.constant 32 : index
    %568 = vector.load %arg11[%c1_423, %c32_424] : memref<22x176xf32, #tpu.memory_space<vmem>>, vector<16x128xf32>
    %569 = arith.mulf %566, %568 : vector<16x128xf32>
    %570 = arith.addf %563, %569 : vector<16x128xf32>
    %c192_425 = arith.constant 192 : index
    %c0_426 = arith.constant 0 : index
    %571 = vector.load %arg15[%c192_425, %c0_426] : memref<784x128xf32, #tpu.memory_space<vmem>>, vector<16x128xf32>
    %572 = arith.subf %571, %484 : vector<16x128xf32>
    %573 = math.exp %572 : vector<16x128xf32>
    %574 = arith.addf %567, %573 : vector<16x128xf32>
    %c1_427 = arith.constant 1 : index
    %c40_428 = arith.constant 40 : index
    %575 = vector.load %arg11[%c1_427, %c40_428] : memref<22x176xf32, #tpu.memory_space<vmem>>, vector<16x128xf32>
    %576 = arith.mulf %573, %575 : vector<16x128xf32>
    %577 = arith.addf %570, %576 : vector<16x128xf32>
    %c208_429 = arith.constant 208 : index
    %c0_430 = arith.constant 0 : index
    %578 = vector.load %arg15[%c208_429, %c0_430] : memref<784x128xf32, #tpu.memory_space<vmem>>, vector<16x128xf32>
    %579 = arith.subf %578, %484 : vector<16x128xf32>
    %580 = math.exp %579 : vector<16x128xf32>
    %581 = arith.addf %574, %580 : vector<16x128xf32>
    %c1_431 = arith.constant 1 : index
    %c48_432 = arith.constant 48 : index
    %582 = vector.load %arg11[%c1_431, %c48_432] : memref<22x176xf32, #tpu.memory_space<vmem>>, vector<16x128xf32>
    %583 = arith.mulf %580, %582 : vector<16x128xf32>
    %584 = arith.addf %577, %583 : vector<16x128xf32>
    %c224_433 = arith.constant 224 : index
    %c0_434 = arith.constant 0 : index
    %585 = vector.load %arg15[%c224_433, %c0_434] : memref<784x128xf32, #tpu.memory_space<vmem>>, vector<16x128xf32>
    %586 = arith.subf %585, %484 : vector<16x128xf32>
    %587 = math.exp %586 : vector<16x128xf32>
    %588 = arith.addf %581, %587 : vector<16x128xf32>
    %c2_435 = arith.constant 2 : index
    %c0_436 = arith.constant 0 : index
    %589 = vector.load %arg11[%c2_435, %c0_436] : memref<22x176xf32, #tpu.memory_space<vmem>>, vector<16x128xf32>
    %590 = arith.mulf %587, %589 : vector<16x128xf32>
    %591 = arith.addf %584, %590 : vector<16x128xf32>
    %c240_437 = arith.constant 240 : index
    %c0_438 = arith.constant 0 : index
    %592 = vector.load %arg15[%c240_437, %c0_438] : memref<784x128xf32, #tpu.memory_space<vmem>>, vector<16x128xf32>
    %593 = arith.subf %592, %484 : vector<16x128xf32>
    %594 = math.exp %593 : vector<16x128xf32>
    %595 = arith.addf %588, %594 : vector<16x128xf32>
    %c2_439 = arith.constant 2 : index
    %c8_440 = arith.constant 8 : index
    %596 = vector.load %arg11[%c2_439, %c8_440] : memref<22x176xf32, #tpu.memory_space<vmem>>, vector<16x128xf32>
    %597 = arith.mulf %594, %596 : vector<16x128xf32>
    %598 = arith.addf %591, %597 : vector<16x128xf32>
    %c256_441 = arith.constant 256 : index
    %c0_442 = arith.constant 0 : index
    %599 = vector.load %arg15[%c256_441, %c0_442] : memref<784x128xf32, #tpu.memory_space<vmem>>, vector<16x128xf32>
    %600 = arith.subf %599, %484 : vector<16x128xf32>
    %601 = math.exp %600 : vector<16x128xf32>
    %602 = arith.addf %595, %601 : vector<16x128xf32>
    %c2_443 = arith.constant 2 : index
    %c16_444 = arith.constant 16 : index
    %603 = vector.load %arg11[%c2_443, %c16_444] : memref<22x176xf32, #tpu.memory_space<vmem>>, vector<16x128xf32>
    %604 = arith.mulf %601, %603 : vector<16x128xf32>
    %605 = arith.addf %598, %604 : vector<16x128xf32>
    %c272_445 = arith.constant 272 : index
    %c0_446 = arith.constant 0 : index
    %606 = vector.load %arg15[%c272_445, %c0_446] : memref<784x128xf32, #tpu.memory_space<vmem>>, vector<16x128xf32>
    %607 = arith.subf %606, %484 : vector<16x128xf32>
    %608 = math.exp %607 : vector<16x128xf32>
    %609 = arith.addf %602, %608 : vector<16x128xf32>
    %c2_447 = arith.constant 2 : index
    %c24_448 = arith.constant 24 : index
    %610 = vector.load %arg11[%c2_447, %c24_448] : memref<22x176xf32, #tpu.memory_space<vmem>>, vector<16x128xf32>
    %611 = arith.mulf %608, %610 : vector<16x128xf32>
    %612 = arith.addf %605, %611 : vector<16x128xf32>
    %c288_449 = arith.constant 288 : index
    %c0_450 = arith.constant 0 : index
    %613 = vector.load %arg15[%c288_449, %c0_450] : memref<784x128xf32, #tpu.memory_space<vmem>>, vector<16x128xf32>
    %614 = arith.subf %613, %484 : vector<16x128xf32>
    %615 = math.exp %614 : vector<16x128xf32>
    %616 = arith.addf %609, %615 : vector<16x128xf32>
    %c2_451 = arith.constant 2 : index
    %c32_452 = arith.constant 32 : index
    %617 = vector.load %arg11[%c2_451, %c32_452] : memref<22x176xf32, #tpu.memory_space<vmem>>, vector<16x128xf32>
    %618 = arith.mulf %615, %617 : vector<16x128xf32>
    %619 = arith.addf %612, %618 : vector<16x128xf32>
    %c304_453 = arith.constant 304 : index
    %c0_454 = arith.constant 0 : index
    %620 = vector.load %arg15[%c304_453, %c0_454] : memref<784x128xf32, #tpu.memory_space<vmem>>, vector<16x128xf32>
    %621 = arith.subf %620, %484 : vector<16x128xf32>
    %622 = math.exp %621 : vector<16x128xf32>
    %623 = arith.addf %616, %622 : vector<16x128xf32>
    %c2_455 = arith.constant 2 : index
    %c40_456 = arith.constant 40 : index
    %624 = vector.load %arg11[%c2_455, %c40_456] : memref<22x176xf32, #tpu.memory_space<vmem>>, vector<16x128xf32>
    %625 = arith.mulf %622, %624 : vector<16x128xf32>
    %626 = arith.addf %619, %625 : vector<16x128xf32>
    %c320_457 = arith.constant 320 : index
    %c0_458 = arith.constant 0 : index
    %627 = vector.load %arg15[%c320_457, %c0_458] : memref<784x128xf32, #tpu.memory_space<vmem>>, vector<16x128xf32>
    %628 = arith.subf %627, %484 : vector<16x128xf32>
    %629 = math.exp %628 : vector<16x128xf32>
    %630 = arith.addf %623, %629 : vector<16x128xf32>
    %c2_459 = arith.constant 2 : index
    %c48_460 = arith.constant 48 : index
    %631 = vector.load %arg11[%c2_459, %c48_460] : memref<22x176xf32, #tpu.memory_space<vmem>>, vector<16x128xf32>
    %632 = arith.mulf %629, %631 : vector<16x128xf32>
    %633 = arith.addf %626, %632 : vector<16x128xf32>
    %c336_461 = arith.constant 336 : index
    %c0_462 = arith.constant 0 : index
    %634 = vector.load %arg15[%c336_461, %c0_462] : memref<784x128xf32, #tpu.memory_space<vmem>>, vector<16x128xf32>
    %635 = arith.subf %634, %484 : vector<16x128xf32>
    %636 = math.exp %635 : vector<16x128xf32>
    %637 = arith.addf %630, %636 : vector<16x128xf32>
    %c3_463 = arith.constant 3 : index
    %c0_464 = arith.constant 0 : index
    %638 = vector.load %arg11[%c3_463, %c0_464] : memref<22x176xf32, #tpu.memory_space<vmem>>, vector<16x128xf32>
    %639 = arith.mulf %636, %638 : vector<16x128xf32>
    %640 = arith.addf %633, %639 : vector<16x128xf32>
    %c352_465 = arith.constant 352 : index
    %c0_466 = arith.constant 0 : index
    %641 = vector.load %arg15[%c352_465, %c0_466] : memref<784x128xf32, #tpu.memory_space<vmem>>, vector<16x128xf32>
    %642 = arith.subf %641, %484 : vector<16x128xf32>
    %643 = math.exp %642 : vector<16x128xf32>
    %644 = arith.addf %637, %643 : vector<16x128xf32>
    %c3_467 = arith.constant 3 : index
    %c8_468 = arith.constant 8 : index
    %645 = vector.load %arg11[%c3_467, %c8_468] : memref<22x176xf32, #tpu.memory_space<vmem>>, vector<16x128xf32>
    %646 = arith.mulf %643, %645 : vector<16x128xf32>
    %647 = arith.addf %640, %646 : vector<16x128xf32>
    %c368_469 = arith.constant 368 : index
    %c0_470 = arith.constant 0 : index
    %648 = vector.load %arg15[%c368_469, %c0_470] : memref<784x128xf32, #tpu.memory_space<vmem>>, vector<16x128xf32>
    %649 = arith.subf %648, %484 : vector<16x128xf32>
    %650 = math.exp %649 : vector<16x128xf32>
    %651 = arith.addf %644, %650 : vector<16x128xf32>
    %c3_471 = arith.constant 3 : index
    %c16_472 = arith.constant 16 : index
    %652 = vector.load %arg11[%c3_471, %c16_472] : memref<22x176xf32, #tpu.memory_space<vmem>>, vector<16x128xf32>
    %653 = arith.mulf %650, %652 : vector<16x128xf32>
    %654 = arith.addf %647, %653 : vector<16x128xf32>
    %c384_473 = arith.constant 384 : index
    %c0_474 = arith.constant 0 : index
    %655 = vector.load %arg15[%c384_473, %c0_474] : memref<784x128xf32, #tpu.memory_space<vmem>>, vector<16x128xf32>
    %656 = arith.subf %655, %484 : vector<16x128xf32>
    %657 = math.exp %656 : vector<16x128xf32>
    %658 = arith.addf %651, %657 : vector<16x128xf32>
    %c3_475 = arith.constant 3 : index
    %c24_476 = arith.constant 24 : index
    %659 = vector.load %arg11[%c3_475, %c24_476] : memref<22x176xf32, #tpu.memory_space<vmem>>, vector<16x128xf32>
    %660 = arith.mulf %657, %659 : vector<16x128xf32>
    %661 = arith.addf %654, %660 : vector<16x128xf32>
    %c400_477 = arith.constant 400 : index
    %c0_478 = arith.constant 0 : index
    %662 = vector.load %arg15[%c400_477, %c0_478] : memref<784x128xf32, #tpu.memory_space<vmem>>, vector<16x128xf32>
    %663 = arith.subf %662, %484 : vector<16x128xf32>
    %664 = math.exp %663 : vector<16x128xf32>
    %665 = arith.addf %658, %664 : vector<16x128xf32>
    %c3_479 = arith.constant 3 : index
    %c32_480 = arith.constant 32 : index
    %666 = vector.load %arg11[%c3_479, %c32_480] : memref<22x176xf32, #tpu.memory_space<vmem>>, vector<16x128xf32>
    %667 = arith.mulf %664, %666 : vector<16x128xf32>
    %668 = arith.addf %661, %667 : vector<16x128xf32>
    %c416_481 = arith.constant 416 : index
    %c0_482 = arith.constant 0 : index
    %669 = vector.load %arg15[%c416_481, %c0_482] : memref<784x128xf32, #tpu.memory_space<vmem>>, vector<16x128xf32>
    %670 = arith.subf %669, %484 : vector<16x128xf32>
    %671 = math.exp %670 : vector<16x128xf32>
    %672 = arith.addf %665, %671 : vector<16x128xf32>
    %c3_483 = arith.constant 3 : index
    %c40_484 = arith.constant 40 : index
    %673 = vector.load %arg11[%c3_483, %c40_484] : memref<22x176xf32, #tpu.memory_space<vmem>>, vector<16x128xf32>
    %674 = arith.mulf %671, %673 : vector<16x128xf32>
    %675 = arith.addf %668, %674 : vector<16x128xf32>
    %c432_485 = arith.constant 432 : index
    %c0_486 = arith.constant 0 : index
    %676 = vector.load %arg15[%c432_485, %c0_486] : memref<784x128xf32, #tpu.memory_space<vmem>>, vector<16x128xf32>
    %677 = arith.subf %676, %484 : vector<16x128xf32>
    %678 = math.exp %677 : vector<16x128xf32>
    %679 = arith.addf %672, %678 : vector<16x128xf32>
    %c3_487 = arith.constant 3 : index
    %c48_488 = arith.constant 48 : index
    %680 = vector.load %arg11[%c3_487, %c48_488] : memref<22x176xf32, #tpu.memory_space<vmem>>, vector<16x128xf32>
    %681 = arith.mulf %678, %680 : vector<16x128xf32>
    %682 = arith.addf %675, %681 : vector<16x128xf32>
    %c448_489 = arith.constant 448 : index
    %c0_490 = arith.constant 0 : index
    %683 = vector.load %arg15[%c448_489, %c0_490] : memref<784x128xf32, #tpu.memory_space<vmem>>, vector<16x128xf32>
    %684 = arith.subf %683, %484 : vector<16x128xf32>
    %685 = math.exp %684 : vector<16x128xf32>
    %686 = arith.addf %679, %685 : vector<16x128xf32>
    %c4_491 = arith.constant 4 : index
    %c0_492 = arith.constant 0 : index
    %687 = vector.load %arg11[%c4_491, %c0_492] : memref<22x176xf32, #tpu.memory_space<vmem>>, vector<16x128xf32>
    %688 = arith.mulf %685, %687 : vector<16x128xf32>
    %689 = arith.addf %682, %688 : vector<16x128xf32>
    %c464_493 = arith.constant 464 : index
    %c0_494 = arith.constant 0 : index
    %690 = vector.load %arg15[%c464_493, %c0_494] : memref<784x128xf32, #tpu.memory_space<vmem>>, vector<16x128xf32>
    %691 = arith.subf %690, %484 : vector<16x128xf32>
    %692 = math.exp %691 : vector<16x128xf32>
    %693 = arith.addf %686, %692 : vector<16x128xf32>
    %c4_495 = arith.constant 4 : index
    %c8_496 = arith.constant 8 : index
    %694 = vector.load %arg11[%c4_495, %c8_496] : memref<22x176xf32, #tpu.memory_space<vmem>>, vector<16x128xf32>
    %695 = arith.mulf %692, %694 : vector<16x128xf32>
    %696 = arith.addf %689, %695 : vector<16x128xf32>
    %c480_497 = arith.constant 480 : index
    %c0_498 = arith.constant 0 : index
    %697 = vector.load %arg15[%c480_497, %c0_498] : memref<784x128xf32, #tpu.memory_space<vmem>>, vector<16x128xf32>
    %698 = arith.subf %697, %484 : vector<16x128xf32>
    %699 = math.exp %698 : vector<16x128xf32>
    %700 = arith.addf %693, %699 : vector<16x128xf32>
    %c4_499 = arith.constant 4 : index
    %c16_500 = arith.constant 16 : index
    %701 = vector.load %arg11[%c4_499, %c16_500] : memref<22x176xf32, #tpu.memory_space<vmem>>, vector<16x128xf32>
    %702 = arith.mulf %699, %701 : vector<16x128xf32>
    %703 = arith.addf %696, %702 : vector<16x128xf32>
    %c496_501 = arith.constant 496 : index
    %c0_502 = arith.constant 0 : index
    %704 = vector.load %arg15[%c496_501, %c0_502] : memref<784x128xf32, #tpu.memory_space<vmem>>, vector<16x128xf32>
    %705 = arith.subf %704, %484 : vector<16x128xf32>
    %706 = math.exp %705 : vector<16x128xf32>
    %707 = arith.addf %700, %706 : vector<16x128xf32>
    %c4_503 = arith.constant 4 : index
    %c24_504 = arith.constant 24 : index
    %708 = vector.load %arg11[%c4_503, %c24_504] : memref<22x176xf32, #tpu.memory_space<vmem>>, vector<16x128xf32>
    %709 = arith.mulf %706, %708 : vector<16x128xf32>
    %710 = arith.addf %703, %709 : vector<16x128xf32>
    %c512_505 = arith.constant 512 : index
    %c0_506 = arith.constant 0 : index
    %711 = vector.load %arg15[%c512_505, %c0_506] : memref<784x128xf32, #tpu.memory_space<vmem>>, vector<16x128xf32>
    %712 = arith.subf %711, %484 : vector<16x128xf32>
    %713 = math.exp %712 : vector<16x128xf32>
    %714 = arith.addf %707, %713 : vector<16x128xf32>
    %c4_507 = arith.constant 4 : index
    %c32_508 = arith.constant 32 : index
    %715 = vector.load %arg11[%c4_507, %c32_508] : memref<22x176xf32, #tpu.memory_space<vmem>>, vector<16x128xf32>
    %716 = arith.mulf %713, %715 : vector<16x128xf32>
    %717 = arith.addf %710, %716 : vector<16x128xf32>
    %c528_509 = arith.constant 528 : index
    %c0_510 = arith.constant 0 : index
    %718 = vector.load %arg15[%c528_509, %c0_510] : memref<784x128xf32, #tpu.memory_space<vmem>>, vector<16x128xf32>
    %719 = arith.subf %718, %484 : vector<16x128xf32>
    %720 = math.exp %719 : vector<16x128xf32>
    %721 = arith.addf %714, %720 : vector<16x128xf32>
    %c4_511 = arith.constant 4 : index
    %c40_512 = arith.constant 40 : index
    %722 = vector.load %arg11[%c4_511, %c40_512] : memref<22x176xf32, #tpu.memory_space<vmem>>, vector<16x128xf32>
    %723 = arith.mulf %720, %722 : vector<16x128xf32>
    %724 = arith.addf %717, %723 : vector<16x128xf32>
    %c544_513 = arith.constant 544 : index
    %c0_514 = arith.constant 0 : index
    %725 = vector.load %arg15[%c544_513, %c0_514] : memref<784x128xf32, #tpu.memory_space<vmem>>, vector<16x128xf32>
    %726 = arith.subf %725, %484 : vector<16x128xf32>
    %727 = math.exp %726 : vector<16x128xf32>
    %728 = arith.addf %721, %727 : vector<16x128xf32>
    %c4_515 = arith.constant 4 : index
    %c48_516 = arith.constant 48 : index
    %729 = vector.load %arg11[%c4_515, %c48_516] : memref<22x176xf32, #tpu.memory_space<vmem>>, vector<16x128xf32>
    %730 = arith.mulf %727, %729 : vector<16x128xf32>
    %731 = arith.addf %724, %730 : vector<16x128xf32>
    %c560_517 = arith.constant 560 : index
    %c0_518 = arith.constant 0 : index
    %732 = vector.load %arg15[%c560_517, %c0_518] : memref<784x128xf32, #tpu.memory_space<vmem>>, vector<16x128xf32>
    %733 = arith.subf %732, %484 : vector<16x128xf32>
    %734 = math.exp %733 : vector<16x128xf32>
    %735 = arith.addf %728, %734 : vector<16x128xf32>
    %c5_519 = arith.constant 5 : index
    %c0_520 = arith.constant 0 : index
    %736 = vector.load %arg11[%c5_519, %c0_520] : memref<22x176xf32, #tpu.memory_space<vmem>>, vector<16x128xf32>
    %737 = arith.mulf %734, %736 : vector<16x128xf32>
    %738 = arith.addf %731, %737 : vector<16x128xf32>
    %c576_521 = arith.constant 576 : index
    %c0_522 = arith.constant 0 : index
    %739 = vector.load %arg15[%c576_521, %c0_522] : memref<784x128xf32, #tpu.memory_space<vmem>>, vector<16x128xf32>
    %740 = arith.subf %739, %484 : vector<16x128xf32>
    %741 = math.exp %740 : vector<16x128xf32>
    %742 = arith.addf %735, %741 : vector<16x128xf32>
    %c5_523 = arith.constant 5 : index
    %c8_524 = arith.constant 8 : index
    %743 = vector.load %arg11[%c5_523, %c8_524] : memref<22x176xf32, #tpu.memory_space<vmem>>, vector<16x128xf32>
    %744 = arith.mulf %741, %743 : vector<16x128xf32>
    %745 = arith.addf %738, %744 : vector<16x128xf32>
    %c592_525 = arith.constant 592 : index
    %c0_526 = arith.constant 0 : index
    %746 = vector.load %arg15[%c592_525, %c0_526] : memref<784x128xf32, #tpu.memory_space<vmem>>, vector<16x128xf32>
    %747 = arith.subf %746, %484 : vector<16x128xf32>
    %748 = math.exp %747 : vector<16x128xf32>
    %749 = arith.addf %742, %748 : vector<16x128xf32>
    %c5_527 = arith.constant 5 : index
    %c16_528 = arith.constant 16 : index
    %750 = vector.load %arg11[%c5_527, %c16_528] : memref<22x176xf32, #tpu.memory_space<vmem>>, vector<16x128xf32>
    %751 = arith.mulf %748, %750 : vector<16x128xf32>
    %752 = arith.addf %745, %751 : vector<16x128xf32>
    %c608_529 = arith.constant 608 : index
    %c0_530 = arith.constant 0 : index
    %753 = vector.load %arg15[%c608_529, %c0_530] : memref<784x128xf32, #tpu.memory_space<vmem>>, vector<16x128xf32>
    %754 = arith.subf %753, %484 : vector<16x128xf32>
    %755 = math.exp %754 : vector<16x128xf32>
    %756 = arith.addf %749, %755 : vector<16x128xf32>
    %c5_531 = arith.constant 5 : index
    %c24_532 = arith.constant 24 : index
    %757 = vector.load %arg11[%c5_531, %c24_532] : memref<22x176xf32, #tpu.memory_space<vmem>>, vector<16x128xf32>
    %758 = arith.mulf %755, %757 : vector<16x128xf32>
    %759 = arith.addf %752, %758 : vector<16x128xf32>
    %c624_533 = arith.constant 624 : index
    %c0_534 = arith.constant 0 : index
    %760 = vector.load %arg15[%c624_533, %c0_534] : memref<784x128xf32, #tpu.memory_space<vmem>>, vector<16x128xf32>
    %761 = arith.subf %760, %484 : vector<16x128xf32>
    %762 = math.exp %761 : vector<16x128xf32>
    %763 = arith.addf %756, %762 : vector<16x128xf32>
    %c5_535 = arith.constant 5 : index
    %c32_536 = arith.constant 32 : index
    %764 = vector.load %arg11[%c5_535, %c32_536] : memref<22x176xf32, #tpu.memory_space<vmem>>, vector<16x128xf32>
    %765 = arith.mulf %762, %764 : vector<16x128xf32>
    %766 = arith.addf %759, %765 : vector<16x128xf32>
    %c640_537 = arith.constant 640 : index
    %c0_538 = arith.constant 0 : index
    %767 = vector.load %arg15[%c640_537, %c0_538] : memref<784x128xf32, #tpu.memory_space<vmem>>, vector<16x128xf32>
    %768 = arith.subf %767, %484 : vector<16x128xf32>
    %769 = math.exp %768 : vector<16x128xf32>
    %770 = arith.addf %763, %769 : vector<16x128xf32>
    %c5_539 = arith.constant 5 : index
    %c40_540 = arith.constant 40 : index
    %771 = vector.load %arg11[%c5_539, %c40_540] : memref<22x176xf32, #tpu.memory_space<vmem>>, vector<16x128xf32>
    %772 = arith.mulf %769, %771 : vector<16x128xf32>
    %773 = arith.addf %766, %772 : vector<16x128xf32>
    %c656_541 = arith.constant 656 : index
    %c0_542 = arith.constant 0 : index
    %774 = vector.load %arg15[%c656_541, %c0_542] : memref<784x128xf32, #tpu.memory_space<vmem>>, vector<16x128xf32>
    %775 = arith.subf %774, %484 : vector<16x128xf32>
    %776 = math.exp %775 : vector<16x128xf32>
    %777 = arith.addf %770, %776 : vector<16x128xf32>
    %c5_543 = arith.constant 5 : index
    %c48_544 = arith.constant 48 : index
    %778 = vector.load %arg11[%c5_543, %c48_544] : memref<22x176xf32, #tpu.memory_space<vmem>>, vector<16x128xf32>
    %779 = arith.mulf %776, %778 : vector<16x128xf32>
    %780 = arith.addf %773, %779 : vector<16x128xf32>
    %c672_545 = arith.constant 672 : index
    %c0_546 = arith.constant 0 : index
    %781 = vector.load %arg15[%c672_545, %c0_546] : memref<784x128xf32, #tpu.memory_space<vmem>>, vector<16x128xf32>
    %782 = arith.subf %781, %484 : vector<16x128xf32>
    %783 = math.exp %782 : vector<16x128xf32>
    %784 = arith.addf %777, %783 : vector<16x128xf32>
    %c6_547 = arith.constant 6 : index
    %c0_548 = arith.constant 0 : index
    %785 = vector.load %arg11[%c6_547, %c0_548] : memref<22x176xf32, #tpu.memory_space<vmem>>, vector<16x128xf32>
    %786 = arith.mulf %783, %785 : vector<16x128xf32>
    %787 = arith.addf %780, %786 : vector<16x128xf32>
    %c688_549 = arith.constant 688 : index
    %c0_550 = arith.constant 0 : index
    %788 = vector.load %arg15[%c688_549, %c0_550] : memref<784x128xf32, #tpu.memory_space<vmem>>, vector<16x128xf32>
    %789 = arith.subf %788, %484 : vector<16x128xf32>
    %790 = math.exp %789 : vector<16x128xf32>
    %791 = arith.addf %784, %790 : vector<16x128xf32>
    %c6_551 = arith.constant 6 : index
    %c8_552 = arith.constant 8 : index
    %792 = vector.load %arg11[%c6_551, %c8_552] : memref<22x176xf32, #tpu.memory_space<vmem>>, vector<16x128xf32>
    %793 = arith.mulf %790, %792 : vector<16x128xf32>
    %794 = arith.addf %787, %793 : vector<16x128xf32>
    %c704_553 = arith.constant 704 : index
    %c0_554 = arith.constant 0 : index
    %795 = vector.load %arg15[%c704_553, %c0_554] : memref<784x128xf32, #tpu.memory_space<vmem>>, vector<16x128xf32>
    %796 = arith.subf %795, %484 : vector<16x128xf32>
    %797 = math.exp %796 : vector<16x128xf32>
    %798 = arith.addf %791, %797 : vector<16x128xf32>
    %c6_555 = arith.constant 6 : index
    %c16_556 = arith.constant 16 : index
    %799 = vector.load %arg11[%c6_555, %c16_556] : memref<22x176xf32, #tpu.memory_space<vmem>>, vector<16x128xf32>
    %800 = arith.mulf %797, %799 : vector<16x128xf32>
    %801 = arith.addf %794, %800 : vector<16x128xf32>
    %c720_557 = arith.constant 720 : index
    %c0_558 = arith.constant 0 : index
    %802 = vector.load %arg15[%c720_557, %c0_558] : memref<784x128xf32, #tpu.memory_space<vmem>>, vector<16x128xf32>
    %803 = arith.subf %802, %484 : vector<16x128xf32>
    %804 = math.exp %803 : vector<16x128xf32>
    %805 = arith.addf %798, %804 : vector<16x128xf32>
    %c6_559 = arith.constant 6 : index
    %c24_560 = arith.constant 24 : index
    %806 = vector.load %arg11[%c6_559, %c24_560] : memref<22x176xf32, #tpu.memory_space<vmem>>, vector<16x128xf32>
    %807 = arith.mulf %804, %806 : vector<16x128xf32>
    %808 = arith.addf %801, %807 : vector<16x128xf32>
    %c736_561 = arith.constant 736 : index
    %c0_562 = arith.constant 0 : index
    %809 = vector.load %arg15[%c736_561, %c0_562] : memref<784x128xf32, #tpu.memory_space<vmem>>, vector<16x128xf32>
    %810 = arith.subf %809, %484 : vector<16x128xf32>
    %811 = math.exp %810 : vector<16x128xf32>
    %812 = arith.addf %805, %811 : vector<16x128xf32>
    %c6_563 = arith.constant 6 : index
    %c32_564 = arith.constant 32 : index
    %813 = vector.load %arg11[%c6_563, %c32_564] : memref<22x176xf32, #tpu.memory_space<vmem>>, vector<16x128xf32>
    %814 = arith.mulf %811, %813 : vector<16x128xf32>
    %815 = arith.addf %808, %814 : vector<16x128xf32>
    %c752_565 = arith.constant 752 : index
    %c0_566 = arith.constant 0 : index
    %816 = vector.load %arg15[%c752_565, %c0_566] : memref<784x128xf32, #tpu.memory_space<vmem>>, vector<16x128xf32>
    %817 = arith.subf %816, %484 : vector<16x128xf32>
    %818 = math.exp %817 : vector<16x128xf32>
    %819 = arith.addf %812, %818 : vector<16x128xf32>
    %c6_567 = arith.constant 6 : index
    %c40_568 = arith.constant 40 : index
    %820 = vector.load %arg11[%c6_567, %c40_568] : memref<22x176xf32, #tpu.memory_space<vmem>>, vector<16x128xf32>
    %821 = arith.mulf %818, %820 : vector<16x128xf32>
    %822 = arith.addf %815, %821 : vector<16x128xf32>
    %c768_569 = arith.constant 768 : index
    %c0_570 = arith.constant 0 : index
    %823 = vector.load %arg15[%c768_569, %c0_570] : memref<784x128xf32, #tpu.memory_space<vmem>>, vector<16x128xf32>
    %824 = arith.subf %823, %484 : vector<16x128xf32>
    %825 = math.exp %824 : vector<16x128xf32>
    %826 = arith.addf %819, %825 : vector<16x128xf32>
    %c6_571 = arith.constant 6 : index
    %c48_572 = arith.constant 48 : index
    %827 = vector.load %arg11[%c6_571, %c48_572] : memref<22x176xf32, #tpu.memory_space<vmem>>, vector<16x128xf32>
    %828 = arith.mulf %825, %827 : vector<16x128xf32>
    %829 = arith.addf %822, %828 : vector<16x128xf32>
    %830 = tpu.reciprocal %826 {approx = true} : vector<16x128xf32> -> vector<16x128xf32>
    %831 = arith.mulf %829, %830 : vector<16x128xf32>
    %cst_573 = arith.constant 0.000000e+00 : bf16
    %832 = vector.broadcast %cst_573 : bf16 to vector<18x324xbf16>
    %c0_574 = arith.constant 0 : index
    %c0_575 = arith.constant 0 : index
    %833 = vector.load %arg12[%c0_574, %c0_575] : memref<18x324xbf16, #tpu.memory_space<vmem>>, vector<18x324xbf16>
    tpu.vector_store %arg12[%c0_574, %c0_575], %832 {strides = array<i32>} : memref<18x324xbf16, #tpu.memory_space<vmem>>, vector<18x324xbf16>,
    %834 = arith.truncf %13 : vector<16x288xf32> to vector<16x288xbf16>
    %c1_576 = arith.constant 1 : index
    %c18 = arith.constant 18 : index
    %835 = vector.load %arg12[%c1_576, %c18] : memref<18x324xbf16, #tpu.memory_space<vmem>>, vector<16x288xbf16>
    tpu.vector_store %arg12[%c1_576, %c18], %834 {strides = array<i32>} : memref<18x324xbf16, #tpu.memory_space<vmem>>, vector<16x288xbf16>,
    %c0_577 = arith.constant 0 : index
    %c0_578 = arith.constant 0 : index
    %836 = vector.load %arg12[%c0_577, %c0_578] : memref<18x324xbf16, #tpu.memory_space<vmem>>, vector<16x288xbf16>
    %c0_579 = arith.constant 0 : index
    %c0_580 = arith.constant 0 : index
    %837 = vector.load %arg13[%c0_579, %c0_580] : memref<16x2592xbf16, #tpu.memory_space<vmem>>, vector<16x288xbf16>
    tpu.vector_store %arg13[%c0_579, %c0_580], %836 {strides = array<i32>} : memref<16x2592xbf16, #tpu.memory_space<vmem>>, vector<16x288xbf16>,
    %c0_581 = arith.constant 0 : index
    %c18_582 = arith.constant 18 : index
    %838 = vector.load %arg12[%c0_581, %c18_582] : memref<18x324xbf16, #tpu.memory_space<vmem>>, vector<16x288xbf16>
    %c0_583 = arith.constant 0 : index
    %c288_584 = arith.constant 288 : index
    %839 = vector.load %arg13[%c0_583, %c288_584] : memref<16x2592xbf16, #tpu.memory_space<vmem>>, vector<16x288xbf16>
    tpu.vector_store %arg13[%c0_583, %c288_584], %838 {strides = array<i32>} : memref<16x2592xbf16, #tpu.memory_space<vmem>>, vector<16x288xbf16>,
    %c0_585 = arith.constant 0 : index
    %c36 = arith.constant 36 : index
    %840 = vector.load %arg12[%c0_585, %c36] : memref<18x324xbf16, #tpu.memory_space<vmem>>, vector<16x288xbf16>
    %c0_586 = arith.constant 0 : index
    %c576_587 = arith.constant 576 : index
    %841 = vector.load %arg13[%c0_586, %c576_587] : memref<16x2592xbf16, #tpu.memory_space<vmem>>, vector<16x288xbf16>
    tpu.vector_store %arg13[%c0_586, %c576_587], %840 {strides = array<i32>} : memref<16x2592xbf16, #tpu.memory_space<vmem>>, vector<16x288xbf16>,
    %c1_588 = arith.constant 1 : index
    %c0_589 = arith.constant 0 : index
    %842 = vector.load %arg12[%c1_588, %c0_589] : memref<18x324xbf16, #tpu.memory_space<vmem>>, vector<16x288xbf16>
    %c0_590 = arith.constant 0 : index
    %c864 = arith.constant 864 : index
    %843 = vector.load %arg13[%c0_590, %c864] : memref<16x2592xbf16, #tpu.memory_space<vmem>>, vector<16x288xbf16>
    tpu.vector_store %arg13[%c0_590, %c864], %842 {strides = array<i32>} : memref<16x2592xbf16, #tpu.memory_space<vmem>>, vector<16x288xbf16>,
    %c1_591 = arith.constant 1 : index
    %c18_592 = arith.constant 18 : index
    %844 = vector.load %arg12[%c1_591, %c18_592] : memref<18x324xbf16, #tpu.memory_space<vmem>>, vector<16x288xbf16>
    %c0_593 = arith.constant 0 : index
    %c1152 = arith.constant 1152 : index
    %845 = vector.load %arg13[%c0_593, %c1152] : memref<16x2592xbf16, #tpu.memory_space<vmem>>, vector<16x288xbf16>
    tpu.vector_store %arg13[%c0_593, %c1152], %844 {strides = array<i32>} : memref<16x2592xbf16, #tpu.memory_space<vmem>>, vector<16x288xbf16>,
    %c1_594 = arith.constant 1 : index
    %c36_595 = arith.constant 36 : index
    %846 = vector.load %arg12[%c1_594, %c36_595] : memref<18x324xbf16, #tpu.memory_space<vmem>>, vector<16x288xbf16>
    %c0_596 = arith.constant 0 : index
    %c1440 = arith.constant 1440 : index
    %847 = vector.load %arg13[%c0_596, %c1440] : memref<16x2592xbf16, #tpu.memory_space<vmem>>, vector<16x288xbf16>
    tpu.vector_store %arg13[%c0_596, %c1440], %846 {strides = array<i32>} : memref<16x2592xbf16, #tpu.memory_space<vmem>>, vector<16x288xbf16>,
    %c2_597 = arith.constant 2 : index
    %c0_598 = arith.constant 0 : index
    %848 = vector.load %arg12[%c2_597, %c0_598] : memref<18x324xbf16, #tpu.memory_space<vmem>>, vector<16x288xbf16>
    %c0_599 = arith.constant 0 : index
    %c1728 = arith.constant 1728 : index
    %849 = vector.load %arg13[%c0_599, %c1728] : memref<16x2592xbf16, #tpu.memory_space<vmem>>, vector<16x288xbf16>
    tpu.vector_store %arg13[%c0_599, %c1728], %848 {strides = array<i32>} : memref<16x2592xbf16, #tpu.memory_space<vmem>>, vector<16x288xbf16>,
    %c2_600 = arith.constant 2 : index
    %c18_601 = arith.constant 18 : index
    %850 = vector.load %arg12[%c2_600, %c18_601] : memref<18x324xbf16, #tpu.memory_space<vmem>>, vector<16x288xbf16>
    %c0_602 = arith.constant 0 : index
    %c2016 = arith.constant 2016 : index
    %851 = vector.load %arg13[%c0_602, %c2016] : memref<16x2592xbf16, #tpu.memory_space<vmem>>, vector<16x288xbf16>
    tpu.vector_store %arg13[%c0_602, %c2016], %850 {strides = array<i32>} : memref<16x2592xbf16, #tpu.memory_space<vmem>>, vector<16x288xbf16>,
    %c2_603 = arith.constant 2 : index
    %c36_604 = arith.constant 36 : index
    %852 = vector.load %arg12[%c2_603, %c36_604] : memref<18x324xbf16, #tpu.memory_space<vmem>>, vector<16x288xbf16>
    %c0_605 = arith.constant 0 : index
    %c2304 = arith.constant 2304 : index
    %853 = vector.load %arg13[%c0_605, %c2304] : memref<16x2592xbf16, #tpu.memory_space<vmem>>, vector<16x288xbf16>
    tpu.vector_store %arg13[%c0_605, %c2304], %852 {strides = array<i32>} : memref<16x2592xbf16, #tpu.memory_space<vmem>>, vector<16x288xbf16>,
    %c0_606 = arith.constant 0 : index
    %c0_607 = arith.constant 0 : index
    %854 = vector.load %arg13[%c0_606, %c0_607] : memref<16x2592xbf16, #tpu.memory_space<vmem>>, vector<16x2592xbf16>
    %c0_608 = arith.constant 0 : index
    %c0_609 = arith.constant 0 : index
    %855 = vector.load %arg5[%c0_608, %c0_609] : memref<2592x128xbf16, #tpu.memory_space<vmem>>, vector<2592x128xbf16>
    %cst_610 = arith.constant dense<0.000000e+00> : vector<16x128xf32>
    %856 = tpu.matmul %854, %855, %cst_610 {dimension_numbers = #tpu.dot_dimension_numbers<[1], [0], [0], [1], [0, 0, 1, 1], [], []>} : vector<16x2592xbf16>, vector<2592x128xbf16>, vector<16x128xf32> -> vector<16x128xf32>
    %c3_611 = arith.constant 3 : index
    %c0_612 = arith.constant 0 : index
    %857 = vector.load %arg7[%c3_611, %c0_612] : memref<4x128xf32, #tpu.memory_space<vmem>>, vector<1x128xf32>
    %858 = vector.broadcast %857 : vector<1x128xf32> to vector<16x128xf32>
    %859 = arith.addf %856, %858 : vector<16x128xf32>
    %c0_613 = arith.constant 0 : index
    %860 = memref.load %arg8[%c0_613] : memref<3xf32, #tpu.memory_space<smem>>
    %c1_614 = arith.constant 1 : index
    %861 = memref.load %arg8[%c1_614] : memref<3xf32, #tpu.memory_space<smem>>
    %c2_615 = arith.constant 2 : index
    %862 = memref.load %arg8[%c2_615] : memref<3xf32, #tpu.memory_space<smem>>
    %863 = vector.broadcast %860 : f32 to vector<16x128xf32>
    %864 = arith.mulf %863, %831 : vector<16x128xf32>
    %865 = vector.broadcast %861 : f32 to vector<16x128xf32>
    %866 = arith.mulf %865, %859 : vector<16x128xf32>
    %867 = arith.addf %864, %866 : vector<16x128xf32>
    %c0_616 = arith.constant 0 : index
    %c0_617 = arith.constant 0 : index
    %868 = vector.load %arg6[%c0_616, %c0_617] : memref<384x128xf32, #tpu.memory_space<vmem>>, vector<128x128xf32>
    %c128_618 = arith.constant 128 : index
    %c0_619 = arith.constant 0 : index
    %869 = vector.load %arg6[%c128_618, %c0_619] : memref<384x128xf32, #tpu.memory_space<vmem>>, vector<128x128xf32>
    %c256_620 = arith.constant 256 : index
    %c0_621 = arith.constant 0 : index
    %870 = vector.load %arg6[%c256_620, %c0_621] : memref<384x128xf32, #tpu.memory_space<vmem>>, vector<128x128xf32>
    %871 = arith.mulf %867, %867 : vector<16x128xf32>
    %cst_622 = arith.constant dense<0.000000e+00> : vector<16x128xf32>
    %872 = tpu.matmul %871, %868, %cst_622 {dimension_numbers = #tpu.dot_dimension_numbers<[1], [0], [0], [1], [0, 0, 1, 1], [], []>} : vector<16x128xf32>, vector<128x128xf32>, vector<16x128xf32> -> vector<16x128xf32>
    %c0_623 = arith.constant 0 : index
    %c0_624 = arith.constant 0 : index
    %873 = vector.load %arg7[%c0_623, %c0_624] : memref<4x128xf32, #tpu.memory_space<vmem>>, vector<1x128xf32>
    %874 = vector.broadcast %873 : vector<1x128xf32> to vector<16x128xf32>
    %875 = arith.addf %872, %874 : vector<16x128xf32>
    %cst_625 = arith.constant 9.99999971E-10 : f32
    %876 = vector.broadcast %cst_625 : f32 to vector<16x128xf32>
    %877 = arith.maximumf %875, %876 : vector<16x128xf32>
    %878 = math.rsqrt %877 : vector<16x128xf32>
    %879 = arith.mulf %867, %878 : vector<16x128xf32>
    %cst_626 = arith.constant 0.000000e+00 : f32
    %880 = vector.broadcast %cst_626 : f32 to vector<16x128xf32>
    %881 = arith.cmpf ogt, %879, %880 : vector<16x128xf32>
    %882 = vector.broadcast %862 : f32 to vector<16x128xf32>
    %883 = arith.mulf %882, %879 : vector<16x128xf32>
    %884 = arith.select %881, %879, %883 : vector<16x128xi1>, vector<16x128xf32>
    %cst_627 = arith.constant dense<0.000000e+00> : vector<16x128xf32>
    %885 = tpu.matmul %884, %869, %cst_627 {dimension_numbers = #tpu.dot_dimension_numbers<[1], [0], [0], [1], [0, 0, 1, 1], [], []>} : vector<16x128xf32>, vector<128x128xf32>, vector<16x128xf32> -> vector<16x128xf32>
    %c1_628 = arith.constant 1 : index
    %c0_629 = arith.constant 0 : index
    %886 = vector.load %arg7[%c1_628, %c0_629] : memref<4x128xf32, #tpu.memory_space<vmem>>, vector<1x128xf32>
    %887 = vector.broadcast %886 : vector<1x128xf32> to vector<16x128xf32>
    %888 = arith.addf %885, %887 : vector<16x128xf32>
    %889 = arith.mulf %888, %888 : vector<16x128xf32>
    %cst_630 = arith.constant dense<0.000000e+00> : vector<16x128xf32>
    %890 = tpu.matmul %889, %870, %cst_630 {dimension_numbers = #tpu.dot_dimension_numbers<[1], [0], [0], [1], [0, 0, 1, 1], [], []>} : vector<16x128xf32>, vector<128x128xf32>, vector<16x128xf32> -> vector<16x128xf32>
    %c2_631 = arith.constant 2 : index
    %c0_632 = arith.constant 0 : index
    %891 = vector.load %arg7[%c2_631, %c0_632] : memref<4x128xf32, #tpu.memory_space<vmem>>, vector<1x128xf32>
    %892 = vector.broadcast %891 : vector<1x128xf32> to vector<16x128xf32>
    %893 = arith.addf %890, %892 : vector<16x128xf32>
    %cst_633 = arith.constant 9.99999971E-10 : f32
    %894 = vector.broadcast %cst_633 : f32 to vector<16x128xf32>
    %895 = arith.maximumf %893, %894 : vector<16x128xf32>
    %896 = math.rsqrt %895 : vector<16x128xf32>
    %897 = arith.mulf %888, %896 : vector<16x128xf32>
    %898 = arith.addf %897, %12 : vector<16x128xf32>
    %cst_634 = arith.constant 0.000000e+00 : f32
    %899 = vector.broadcast %cst_634 : f32 to vector<16x128xf32>
    %900 = arith.cmpf ogt, %898, %899 : vector<16x128xf32>
    %901 = vector.broadcast %862 : f32 to vector<16x128xf32>
    %902 = arith.mulf %901, %898 : vector<16x128xf32>
    %903 = arith.select %900, %898, %902 : vector<16x128xi1>, vector<16x128xf32>
    %c0_635 = arith.constant 0 : index
    %c0_636 = arith.constant 0 : index
    %c0_637 = arith.constant 0 : index
    %904 = vector.load %arg9[%c0_635, %c0_636, %c0_637] : memref<1x16x128xf32, #tpu.memory_space<vmem>>, vector<1x16x128xf32>
    %905 = vector.shape_cast %904 : vector<1x16x128xf32> to vector<16x128xf32>
    %906 = vector.shape_cast %903 : vector<16x128xf32> to vector<1x16x128xf32>
    tpu.vector_store %arg9[%c0_635, %c0_636, %c0_637], %906 {strides = array<i32>} : memref<1x16x128xf32, #tpu.memory_space<vmem>>, vector<1x16x128xf32>,
    return
  }
  func.func @transform_0(%arg0: i32) -> (i32, i32, i32) {
    %c0_i32 = arith.constant 0 : i32
    %c0_i32_0 = arith.constant 0 : i32
    %c0_i32_1 = arith.constant 0 : i32
    return %arg0, %c0_i32, %c0_i32_0 : i32, i32, i32
  }
  func.func @transform_1(%arg0: i32) -> (i32, i32) {
    %c0_i32 = arith.constant 0 : i32
    %c0_i32_0 = arith.constant 0 : i32
    %c0_i32_1 = arith.constant 0 : i32
    return %c0_i32, %c0_i32_0 : i32, i32
  }
  func.func @transform_2(%arg0: i32) -> (i32, i32) {
    %c0_i32 = arith.constant 0 : i32
    %c0_i32_0 = arith.constant 0 : i32
    %c0_i32_1 = arith.constant 0 : i32
    return %c0_i32, %c0_i32_0 : i32, i32
  }
  func.func @transform_3(%arg0: i32) -> (i32, i32) {
    %c0_i32 = arith.constant 0 : i32
    %c0_i32_0 = arith.constant 0 : i32
    %c0_i32_1 = arith.constant 0 : i32
    return %c0_i32, %c0_i32_0 : i32, i32
  }
  func.func @transform_4(%arg0: i32) -> (i32, i32) {
    %c0_i32 = arith.constant 0 : i32
    %c0_i32_0 = arith.constant 0 : i32
    %c0_i32_1 = arith.constant 0 : i32
    return %c0_i32, %c0_i32_0 : i32, i32
  }
  func.func @transform_5(%arg0: i32) -> (i32, i32) {
    %c0_i32 = arith.constant 0 : i32
    %c0_i32_0 = arith.constant 0 : i32
    %c0_i32_1 = arith.constant 0 : i32
    return %c0_i32, %c0_i32_0 : i32, i32
  }
  func.func @transform_6(%arg0: i32) -> (i32, i32) {
    %c0_i32 = arith.constant 0 : i32
    %c0_i32_0 = arith.constant 0 : i32
    %c0_i32_1 = arith.constant 0 : i32
    return %c0_i32, %c0_i32_0 : i32, i32
  }
  func.func @transform_7(%arg0: i32) -> i32 {
    %c0_i32 = arith.constant 0 : i32
    %c0_i32_0 = arith.constant 0 : i32
    return %c0_i32 : i32
  }
  func.func @transform_8(%arg0: i32) -> (i32, i32, i32) {
    %c0_i32 = arith.constant 0 : i32
    %c0_i32_0 = arith.constant 0 : i32
    %c0_i32_1 = arith.constant 0 : i32
    return %arg0, %c0_i32, %c0_i32_0 : i32, i32, i32
  }
}

</mosaic_0001>

<llo_original>
// kernel: tpu_custom_call.1
$region0: #{tpu_custom_call.1}
  #allocation0 [shape = 'u32[]', space=smem, size = 0x4, offset = 0x4, fixed_abs, tag = 'smem constant byte address 0x4 - core index']
  #allocation1 [shape = 'u32[144,128]{1,0:T(1,128)}', space=vmem, size = 0x12000, scoped, tag = 'internal scratch']
  #allocation2 [shape = 'f32[22,176]{1,0:T(8,128)}', space=vmem, size = 0x6000, scoped, tag = 'scratch operand']
  #allocation3 [shape = 'f32[22,176]{1,0:T(8,128)}', space=vmem, size = 0x6000, scoped, tag = 'scratch operand']
  #allocation4 [shape = 'bf16[18,324]{1,0:T(8,128)(2,1)}', space=vmem, size = 0x4800, scoped, tag = 'scratch operand']
  #allocation5 [shape = 'bf16[16,2592]{1,0:T(16,128)(2,1)}', space=vmem, size = 0x15000, scoped, tag = 'scratch operand']
  #allocation6 [shape = 'bf16[784,128]{1,0:T(16,128)(2,1)}', space=vmem, size = 0x31000, scoped, tag = 'scratch operand']
  #allocation7 [shape = 'f32[784,128]{1,0:T(8,128)}', space=vmem, size = 0x62000, scoped, tag = 'scratch operand']
  %s0 = inlined_call_operand.hbm [shape: f32[2,16,64], index: 0, kind: input, shape index: {}]
  %s1 = inlined_call_operand.hbm [shape: bf16[65,1056], index: 1, kind: input, shape index: {}]
  %s2 = inlined_call_operand.hbm [shape: f32[22,176], index: 2, kind: input, shape index: {}]
  %s3 = inlined_call_operand.hbm [shape: bf16[128,128], index: 3, kind: input, shape index: {}]
  %s4 = inlined_call_operand.hbm [shape: bf16[2592,128], index: 4, kind: input, shape index: {}]
  %s5 = inlined_call_operand.hbm [shape: f32[384,128], index: 5, kind: input, shape index: {}]
  %s6 = inlined_call_operand.vmem [shape: f32[4,128], index: 6, kind: input, shape index: {}]
  %s7 = inlined_call_operand.vmem [shape: f32[3], index: 7, kind: input, shape index: {}]
  %s8 = inlined_call_operand.hbm [shape: f32[2,16,128], index: 8, kind: output, shape index: {}]
  %s9 = sld [smem:[#allocation0]]
  $region93: #{tpu_custom_call.1} parent=0
    _
  %s11 = ssub.s32 1, %s9
  %s12 = scalar_select 0, %s11, %s9
  $region1: #{tpu_custom_call.1} parent=0
    #allocation8 [shape = 'u8[16384]{0}', space=vmem, size = 0x4000, scoped, tag = 'input window, operand 0']
    #allocation9 [shape = 's32[2]{0}', space=sflag, size = 0x8, scoped, tag = 'scoped memory for tpu_custom_call.1']
    #allocation10 [shape = 's32[2]{0}', space=sflag, size = 0x8, scoped, tag = 'scoped memory for tpu_custom_call.1']
    #allocation11 [shape = 's32[2]{0}', space=sflag, size = 0x8, scoped, tag = 'scoped memory for tpu_custom_call.1']
    #allocation12 [shape = 'u8[165888]{0}', space=vmem, size = 0x28800, scoped, tag = 'input window, operand 1, single buffered']
    #allocation13 [shape = 's32[1]{0}', space=sflag, size = 0x4, scoped, tag = 'scoped memory for tpu_custom_call.1']
    #allocation14 [shape = 'u8[24576]{0}', space=vmem, size = 0x6000, scoped, tag = 'input window, operand 2, single buffered']
    #allocation15 [shape = 'u8[32768]{0}', space=vmem, size = 0x8000, scoped, tag = 'input window, operand 3, single buffered']
    #allocation16 [shape = 's32[1]{0}', space=sflag, size = 0x4, scoped, tag = 'scoped memory for tpu_custom_call.1']
    #allocation17 [shape = 'u8[663552]{0}', space=vmem, size = 0xa2000, scoped, tag = 'input window, operand 4, single buffered']
    #allocation18 [shape = 'u8[196608]{0}', space=vmem, size = 0x30000, scoped, tag = 'input window, operand 5, single buffered']
    #allocation19 [shape = 's32[1]{0}', space=sflag, size = 0x4, scoped, tag = 'scoped memory for tpu_custom_call.1']
    #allocation20 [shape = 'u8[512]{0}', space=smem, size = 0x200, scoped, tag = 'input window, operand 7, single buffered']
    #allocation21 [shape = 'u8[16384]{0}', space=vmem, size = 0x4000, scoped, tag = 'output window, operand 0']
    %13 = vsyncpa [#allocation9], 0
    %s14 = scalar_lea.sflag [#allocation9], 1
    %15 = vsyncpa %s14, 0
    %16 = vsyncpa [#allocation13], 0
    %17 = vsyncpa [#allocation16], 0
    %18 = vsyncpa [#allocation19], 0
    %19 = vsyncpa [#allocation11], 0
    %20 = vsyncpa [#allocation10], 0
    %s21 = scalar_lea.sflag [#allocation10], 1
    %22 = vsyncpa %s21, 0
    loop: start=0, step=1, limit=4
    $region2: #{tpu_custom_call.1} parent=1 // loop_pre_header
      _
    $region3: #{tpu_custom_call.1} parent=1 // loop_header
      %s24 = sphi 0, %s28
      %p25 = scmp.ge.s32.totalorder %s24, 4
      %s34 = sphi 0, %s36
      %s37 = sphi 0, %s34
      %s38 = sphi 0, %s37
      %s54 = sphi 0, %s38
      %s58 = sphi 0, %s58
      %s60 = sphi 0, %s58
      %s61 = sphi 0, %s60
      %s75 = sphi 0, %s61
      %s79 = sphi 0, %s79
      %s81 = sphi 0, %s79
      %s82 = sphi 0, %s81
      %s96 = sphi 0, %s82
      %s100 = sphi 0, %s100
      %s102 = sphi 0, %s100
      %s103 = sphi 0, %s102
      %s117 = sphi 0, %s103
      %s121 = sphi 0, %s121
      %s123 = sphi 0, %s121
      %s124 = sphi 0, %s123
      %s138 = sphi 0, %s124
      %s142 = sphi 0, %s142
      %s144 = sphi 0, %s142
      %s145 = sphi 0, %s144
      %s159 = sphi 0, %s145
      %s163 = sphi 0, %s163
      %s165 = sphi 0, %s163
      %s166 = sphi 0, %s165
      %s180 = sphi 0, %s166
      %s184 = sphi 0, %s184
      %s186 = sphi 0, %s184
      %s187 = sphi 0, %s186
      %s201 = sphi 0, %s187
      %s207 = sphi 0, %s209
      %s210 = sphi 0, %s207
      %s211 = sphi 0, %s210
      %s227 = sphi 0, %s211
    $region4: #{tpu_custom_call.1} parent=1 // loop_header_branch
      %27 = sbr.rel (%p25) target = $region8
    $region5: #{tpu_custom_call.1} parent=1 // loop_body
      %s29 = ssub.s32 %s24, 1
      %s30 = ssub.s32 %s24, 2
      %s31 = sadd.s32 %s24, 1
      %s32 = ssub.s32 %s24, %s31
      %p33 = scmp.eq.s32.totalorder %s32, 0
      %s35 = sadd.s32 %s34, 1
      %s36 = scalar_select %p33, %s34, %s35
      %p39 = pneg %p33
      %p40 = scmp.eq.s32.totalorder %s24, 1
      %p41 = por %p39, %p40
      %p42 = scmp.ne.s32.totalorder %s34, %s37
      %p43 = scmp.eq.s32.totalorder %s24, 0
      %p44 = por %p42, %p43
      %p45 = scmp.ne.s32.totalorder %s34, %s37
      %p46 = scmp.eq.s32.totalorder %s29, 1
      %p47 = por %p45, %p46
      %p48 = scmp.ne.s32.totalorder %s37, %s38
      %p49 = scmp.eq.s32.totalorder %s29, 0
      %p50 = por %p48, %p49
      %p51 = scmp.ne.s32.totalorder %s37, %s38
      %p52 = scmp.eq.s32.totalorder %s30, 1
      %p53 = por %p51, %p52
      %p55 = scmp.ne.s32.totalorder %s38, %s54
      %p56 = scmp.eq.s32.totalorder %s30, 0
      %p57 = por %p55, %p56
      %s59 = sadd.s32 %s58, 1
      %p62 = scmp.eq.s32.totalorder %s24, 1
      %p63 = scmp.ne.s32.totalorder %s58, %s60
      %p64 = scmp.eq.s32.totalorder %s24, 0
      %p65 = por %p63, %p64
      %p66 = scmp.ne.s32.totalorder %s58, %s60
      %p67 = scmp.eq.s32.totalorder %s29, 1
      %p68 = por %p66, %p67
      %p69 = scmp.ne.s32.totalorder %s60, %s61
      %p70 = scmp.eq.s32.totalorder %s29, 0
      %p71 = por %p69, %p70
      %p72 = scmp.ne.s32.totalorder %s60, %s61
      %p73 = scmp.eq.s32.totalorder %s30, 1
      %p74 = por %p72, %p73
      %p76 = scmp.ne.s32.totalorder %s61, %s75
      %p77 = scmp.eq.s32.totalorder %s30, 0
      %p78 = por %p76, %p77
      %s80 = sadd.s32 %s79, 1
      %p83 = scmp.eq.s32.totalorder %s24, 1
      %p84 = scmp.ne.s32.totalorder %s79, %s81
      %p85 = scmp.eq.s32.totalorder %s24, 0
      %p86 = por %p84, %p85
      %p87 = scmp.ne.s32.totalorder %s79, %s81
      %p88 = scmp.eq.s32.totalorder %s29, 1
      %p89 = por %p87, %p88
      %p90 = scmp.ne.s32.totalorder %s81, %s82
      %p91 = scmp.eq.s32.totalorder %s29, 0
      %p92 = por %p90, %p91
      %p93 = scmp.ne.s32.totalorder %s81, %s82
      %p94 = scmp.eq.s32.totalorder %s30, 1
      %p95 = por %p93, %p94
      %p97 = scmp.ne.s32.totalorder %s82, %s96
      %p98 = scmp.eq.s32.totalorder %s30, 0
      %p99 = por %p97, %p98
      %s101 = sadd.s32 %s100, 1
      %p104 = scmp.eq.s32.totalorder %s24, 1
      %p105 = scmp.ne.s32.totalorder %s100, %s102
      %p106 = scmp.eq.s32.totalorder %s24, 0
      %p107 = por %p105, %p106
      %p108 = scmp.ne.s32.totalorder %s100, %s102
      %p109 = scmp.eq.s32.totalorder %s29, 1
      %p110 = por %p108, %p109
      %p111 = scmp.ne.s32.totalorder %s102, %s103
      %p112 = scmp.eq.s32.totalorder %s29, 0
      %p113 = por %p111, %p112
      %p114 = scmp.ne.s32.totalorder %s102, %s103
      %p115 = scmp.eq.s32.totalorder %s30, 1
      %p116 = por %p114, %p115
      %p118 = scmp.ne.s32.totalorder %s103, %s117
      %p119 = scmp.eq.s32.totalorder %s30, 0
      %p120 = por %p118, %p119
      %s122 = sadd.s32 %s121, 1
      %p125 = scmp.eq.s32.totalorder %s24, 1
      %p126 = scmp.ne.s32.totalorder %s121, %s123
      %p127 = scmp.eq.s32.totalorder %s24, 0
      %p128 = por %p126, %p127
      %p129 = scmp.ne.s32.totalorder %s121, %s123
      %p130 = scmp.eq.s32.totalorder %s29, 1
      %p131 = por %p129, %p130
      %p132 = scmp.ne.s32.totalorder %s123, %s124
      %p133 = scmp.eq.s32.totalorder %s29, 0
      %p134 = por %p132, %p133
      %p135 = scmp.ne.s32.totalorder %s123, %s124
      %p136 = scmp.eq.s32.totalorder %s30, 1
      %p137 = por %p135, %p136
      %p139 = scmp.ne.s32.totalorder %s124, %s138
      %p140 = scmp.eq.s32.totalorder %s30, 0
      %p141 = por %p139, %p140
      %s143 = sadd.s32 %s142, 1
      %p146 = scmp.eq.s32.totalorder %s24, 1
      %p147 = scmp.ne.s32.totalorder %s142, %s144
      %p148 = scmp.eq.s32.totalorder %s24, 0
      %p149 = por %p147, %p148
      %p150 = scmp.ne.s32.totalorder %s142, %s144
      %p151 = scmp.eq.s32.totalorder %s29, 1
      %p152 = por %p150, %p151
      %p153 = scmp.ne.s32.totalorder %s144, %s145
      %p154 = scmp.eq.s32.totalorder %s29, 0
      %p155 = por %p153, %p154
      %p156 = scmp.ne.s32.totalorder %s144, %s145
      %p157 = scmp.eq.s32.totalorder %s30, 1
      %p158 = por %p156, %p157
      %p160 = scmp.ne.s32.totalorder %s145, %s159
      %p161 = scmp.eq.s32.totalorder %s30, 0
      %p162 = por %p160, %p161
      %s164 = sadd.s32 %s163, 1
      %p167 = scmp.eq.s32.totalorder %s24, 1
      %p168 = scmp.ne.s32.totalorder %s163, %s165
      %p169 = scmp.eq.s32.totalorder %s24, 0
      %p170 = por %p168, %p169
      %p171 = scmp.ne.s32.totalorder %s163, %s165
      %p172 = scmp.eq.s32.totalorder %s29, 1
      %p173 = por %p171, %p172
      %p174 = scmp.ne.s32.totalorder %s165, %s166
      %p175 = scmp.eq.s32.totalorder %s29, 0
      %p176 = por %p174, %p175
      %p177 = scmp.ne.s32.totalorder %s165, %s166
      %p178 = scmp.eq.s32.totalorder %s30, 1
      %p179 = por %p177, %p178
      %p181 = scmp.ne.s32.totalorder %s166, %s180
      %p182 = scmp.eq.s32.totalorder %s30, 0
      %p183 = por %p181, %p182
      %s185 = sadd.s32 %s184, 1
      %p188 = scmp.eq.s32.totalorder %s24, 1
      %p189 = scmp.ne.s32.totalorder %s184, %s186
      %p190 = scmp.eq.s32.totalorder %s24, 0
      %p191 = por %p189, %p190
      %p192 = scmp.ne.s32.totalorder %s184, %s186
      %p193 = scmp.eq.s32.totalorder %s29, 1
      %p194 = por %p192, %p193
      %p195 = scmp.ne.s32.totalorder %s186, %s187
      %p196 = scmp.eq.s32.totalorder %s29, 0
      %p197 = por %p195, %p196
      %p198 = scmp.ne.s32.totalorder %s186, %s187
      %p199 = scmp.eq.s32.totalorder %s30, 1
      %p200 = por %p198, %p199
      %p202 = scmp.ne.s32.totalorder %s187, %s201
      %p203 = scmp.eq.s32.totalorder %s30, 0
      %p204 = por %p202, %p203
      %s205 = ssub.s32 %s24, %s31
      %p206 = scmp.eq.s32.totalorder %s205, 0
      %s208 = sadd.s32 %s207, 1
      %s209 = scalar_select %p206, %s207, %s208
      %p212 = pneg %p206
      %p213 = scmp.eq.s32.totalorder %s24, 1
      %p214 = por %p212, %p213
      %p215 = scmp.ne.s32.totalorder %s207, %s210
      %p216 = scmp.eq.s32.totalorder %s24, 0
      %p217 = por %p215, %p216
      %p218 = scmp.ne.s32.totalorder %s207, %s210
      %p219 = scmp.eq.s32.totalorder %s29, 1
      %p220 = por %p218, %p219
      %p221 = scmp.ne.s32.totalorder %s210, %s211
      %p222 = scmp.eq.s32.totalorder %s29, 0
      %p223 = por %p221, %p222
      %p224 = scmp.ne.s32.totalorder %s210, %s211
      %p225 = scmp.eq.s32.totalorder %s30, 1
      %p226 = por %p224, %p225
      %p228 = scmp.ne.s32.totalorder %s211, %s227
      %p229 = scmp.eq.s32.totalorder %s30, 0
      %p230 = por %p228, %p229
      %p231 = scmp.le.s32.totalorder 1, %s24
      %p232 = scmp.lt.s32.totalorder %s24, 3
      %p233 = pnand %p231, %p232
      %p234 = pneg %p233
      // Predicated region
      $region9: #{tpu_custom_call.1} parent=5 // pred_check
        _
      $region10: #{tpu_custom_call.1} parent=5 // pred_check_branch
        %236 = sbr.rel (%p233) target = $region12
      $region11: #{tpu_custom_call.1} parent=5 // pred_region
        %s237 = ssub.s32 %s24, 1
        // Predicated region
        $region13: #{tpu_custom_call.1} parent=11 // pred_check
          %p238 = pneg %p71
        $region14: #{tpu_custom_call.1} parent=11 // pred_check_branch
          %240 = sbr.rel (%p238) target = $region16
        $region15: #{tpu_custom_call.1} parent=11 // pred_region
          %s242 = ssub.s32 5184, 5184
          %243 = vsyncadd [#allocation13], %s242
          %s244 = sshll.u32 [#allocation12], 4
          %s245 = int_to_ptr.vmem [resolvable:$true] %s244
          %250 = dma.hbm_to_vmem [thread:$0]  %s1, 5184, %s245, [#allocation13], 576, 576, 36
        $region16: #{tpu_custom_call.1} parent=11 // pred_fallthru
          _
        // Predicated region
        $region17: #{tpu_custom_call.1} parent=11 // pred_check
          %p251 = pneg %p92
        $region18: #{tpu_custom_call.1} parent=11 // pred_check_branch
          %253 = sbr.rel (%p251) target = $region20
        $region19: #{tpu_custom_call.1} parent=11 // pred_region
          %s255 = ssub.s32 768, 768
          %256 = vsyncadd [#allocation13], %s255
          %s257 = sshll.u32 [#allocation14], 4
          %s258 = int_to_ptr.vmem [resolvable:$true] %s257
          %263 = dma.hbm_to_vmem [thread:$0]  %s2, 768, %s258, [#allocation13], 256, 256, 16
        $region20: #{tpu_custom_call.1} parent=11 // pred_fallthru
          _
        // Predicated region
        $region21: #{tpu_custom_call.1} parent=11 // pred_check
          %p264 = pneg %p113
        $region22: #{tpu_custom_call.1} parent=11 // pred_check_branch
          %266 = sbr.rel (%p264) target = $region24
        $region23: #{tpu_custom_call.1} parent=11 // pred_region
          %s268 = ssub.s32 1024, 1024
          %269 = vsyncadd [#allocation16], %s268
          %s270 = sshll.u32 [#allocation15], 4
          %s271 = int_to_ptr.vmem [resolvable:$true] %s270
          %276 = dma.hbm_to_vmem [thread:$0]  %s3, 1024, %s271, [#allocation16], 64, 64, 4
        $region24: #{tpu_custom_call.1} parent=11 // pred_fallthru
          _
        // Predicated region
        $region25: #{tpu_custom_call.1} parent=11 // pred_check
          %p277 = pneg %p134
        $region26: #{tpu_custom_call.1} parent=11 // pred_check_branch
          %279 = sbr.rel (%p277) target = $region28
        $region27: #{tpu_custom_call.1} parent=11 // pred_region
          %s281 = ssub.s32 20736, 20736
          %282 = vsyncadd [#allocation16], %s281
          %s283 = sshll.u32 [#allocation17], 4
          %s284 = int_to_ptr.vmem [resolvable:$true] %s283
          %289 = dma.hbm_to_vmem [thread:$0]  %s4, 20736, %s284, [#allocation16], 64, 64, 4
        $region28: #{tpu_custom_call.1} parent=11 // pred_fallthru
          _
        // Predicated region
        $region29: #{tpu_custom_call.1} parent=11 // pred_check
          %p290 = pneg %p155
        $region30: #{tpu_custom_call.1} parent=11 // pred_check_branch
          %292 = sbr.rel (%p290) target = $region32
        $region31: #{tpu_custom_call.1} parent=11 // pred_region
          %s294 = ssub.s32 6144, 6144
          %295 = vsyncadd [#allocation19], %s294
          %s296 = sshll.u32 [#allocation18], 4
          %s297 = int_to_ptr.vmem [resolvable:$true] %s296
          %302 = dma.hbm_to_vmem [thread:$0]  %s5, 6144, %s297, [#allocation19], 128, 128, 8
        $region32: #{tpu_custom_call.1} parent=11 // pred_fallthru
          _
        // Predicated region
        $region33: #{tpu_custom_call.1} parent=11 // pred_check
          %p303 = pneg %p176
        $region34: #{tpu_custom_call.1} parent=11 // pred_check_branch
          %305 = sbr.rel (%p303) target = $region36
        $region35: #{tpu_custom_call.1} parent=11 // pred_region
          _
        $region36: #{tpu_custom_call.1} parent=11 // pred_fallthru
          _
        // Predicated region
        $region37: #{tpu_custom_call.1} parent=11 // pred_check
          %p306 = pneg %p197
        $region38: #{tpu_custom_call.1} parent=11 // pred_check_branch
          %308 = sbr.rel (%p306) target = $region40
        $region39: #{tpu_custom_call.1} parent=11 // pred_region
          %s310 = ssub.s32 16, 16
          %311 = vsyncadd [#allocation11], %s310
          %s313 = sshll.u32 %s7, 4
          %s314 = int_to_ptr.vmem [resolvable:$true] %s313
          %316 = dma.vmem_to_smem %s314, 16, [#allocation20], [#allocation11]
        $region40: #{tpu_custom_call.1} parent=11 // pred_fallthru
          _
      $region12: #{tpu_custom_call.1} parent=5 // pred_fallthru
        _
      %p317 = scmp.lt.s32.totalorder %s24, 2
      // Predicated region
      $region41: #{tpu_custom_call.1} parent=5 // pred_check
        %p318 = pneg %p317
      $region42: #{tpu_custom_call.1} parent=5 // pred_check_branch
        %320 = sbr.rel (%p318) target = $region44
      $region43: #{tpu_custom_call.1} parent=5 // pred_region
        // Predicated region
        $region45: #{tpu_custom_call.1} parent=43 // pred_check
          %p321 = pneg %p44
        $region46: #{tpu_custom_call.1} parent=43 // pred_check_branch
          %323 = sbr.rel (%p321) target = $region48
        $region47: #{tpu_custom_call.1} parent=43 // pred_region
          %s324 = sand.u32 %s34, 1
          %s325 = scalar_lea.sflag [#allocation9], %s324
          %s326 = sand.u32 %s34, 1
          %s327 = smul.addr %s326, 16
          %s328 = scalar_lea.vmem [#allocation8], %s327
          %s330 = ssub.s32 256, 256
          %331 = vsyncadd %s325, %s330
          %s332 = smul.addr %s24, 2
          %s333 = smul.addr %s332, 128
          %s334 = scalar_lea.hbm %s0, %s333
          %s335 = sshll.u32 %s328, 4
          %s336 = int_to_ptr.vmem [resolvable:$true] %s335
          %341 = dma.hbm_to_vmem [thread:$0]  %s334, 256, %s336, %s325, 128, 128, 8
        $region48: #{tpu_custom_call.1} parent=43 // pred_fallthru
          _
      $region44: #{tpu_custom_call.1} parent=5 // pred_fallthru
        _
      %p342 = scmp.le.s32.totalorder 1, %s24
      %p343 = scmp.lt.s32.totalorder %s24, 3
      %p344 = pnand %p342, %p343
      %p345 = pneg %p344
      // Predicated region
      $region49: #{tpu_custom_call.1} parent=5 // pred_check
        _
      $region50: #{tpu_custom_call.1} parent=5 // pred_check_branch
        %347 = sbr.rel (%p344) target = $region52
      $region51: #{tpu_custom_call.1} parent=5 // pred_region
        %s348 = ssub.s32 %s24, 1
        %s349 = sand.u32 %s37, 1
        %s350 = scalar_lea.sflag [#allocation9], %s349
        %s351 = sand.u32 %s37, 1
        %s352 = smul.addr %s351, 16
        %s353 = scalar_lea.vmem [#allocation8], %s352
        // Predicated region
        $region53: #{tpu_custom_call.1} parent=51 // pred_check
          %p354 = pneg %p50
        $region54: #{tpu_custom_call.1} parent=51 // pred_check_branch
          %356 = sbr.rel (%p354) target = $region56
        $region55: #{tpu_custom_call.1} parent=51 // pred_region
          %357 = dma.done %s350, 256
        $region56: #{tpu_custom_call.1} parent=51 // pred_fallthru
          _
        // Predicated region
        $region57: #{tpu_custom_call.1} parent=51 // pred_check
          %p358 = pneg %p71
        $region58: #{tpu_custom_call.1} parent=51 // pred_check_branch
          %360 = sbr.rel (%p358) target = $region60
        $region59: #{tpu_custom_call.1} parent=51 // pred_region
          %361 = dma.done [#allocation13], 5184
        $region60: #{tpu_custom_call.1} parent=51 // pred_fallthru
          _
        // Predicated region
        $region61: #{tpu_custom_call.1} parent=51 // pred_check
          %p362 = pneg %p92
        $region62: #{tpu_custom_call.1} parent=51 // pred_check_branch
          %364 = sbr.rel (%p362) target = $region64
        $region63: #{tpu_custom_call.1} parent=51 // pred_region
          %365 = dma.done [#allocation13], 768
        $region64: #{tpu_custom_call.1} parent=51 // pred_fallthru
          _
        // Predicated region
        $region65: #{tpu_custom_call.1} parent=51 // pred_check
          %p366 = pneg %p113
        $region66: #{tpu_custom_call.1} parent=51 // pred_check_branch
          %368 = sbr.rel (%p366) target = $region68
        $region67: #{tpu_custom_call.1} parent=51 // pred_region
          %369 = dma.done [#allocation16], 1024
        $region68: #{tpu_custom_call.1} parent=51 // pred_fallthru
          _
        // Predicated region
        $region69: #{tpu_custom_call.1} parent=51 // pred_check
          %p370 = pneg %p134
        $region70: #{tpu_custom_call.1} parent=51 // pred_check_branch
          %372 = sbr.rel (%p370) target = $region72
        $region71: #{tpu_custom_call.1} parent=51 // pred_region
          %373 = dma.done [#allocation16], 20736
        $region72: #{tpu_custom_call.1} parent=51 // pred_fallthru
          _
        // Predicated region
        $region73: #{tpu_custom_call.1} parent=51 // pred_check
          %p374 = pneg %p155
        $region74: #{tpu_custom_call.1} parent=51 // pred_check_branch
          %376 = sbr.rel (%p374) target = $region76
        $region75: #{tpu_custom_call.1} parent=51 // pred_region
          %377 = dma.done [#allocation19], 6144
        $region76: #{tpu_custom_call.1} parent=51 // pred_fallthru
          _
        // Predicated region
        $region77: #{tpu_custom_call.1} parent=51 // pred_check
          %p378 = pneg %p197
        $region78: #{tpu_custom_call.1} parent=51 // pred_check_branch
          %380 = sbr.rel (%p378) target = $region80
        $region79: #{tpu_custom_call.1} parent=51 // pred_region
          %381 = dma.done [#allocation11], 16
        $region80: #{tpu_custom_call.1} parent=51 // pred_fallthru
          _
        %382 = sfence
        %s383 = sand.u32 %s37, 1
        %s384 = scalar_lea.sflag [#allocation9], %s383
        %s385 = sand.u32 %s37, 1
        %s386 = smul.addr %s385, 16
        %s387 = scalar_lea.vmem [#allocation8], %s386
        %p388 = pneg %p50
        %p389 = pneg %p47
        %p390 = pneg %p71
        %p391 = pneg %p68
        %p392 = pneg %p92
        %p393 = pneg %p89
        %p394 = pneg %p113
        %p395 = pneg %p110
        %p396 = pneg %p134
        %p397 = pneg %p131
        %p398 = pneg %p155
        %p399 = pneg %p152
        %p400 = pneg %p176
        %p401 = pneg %p173
        %p402 = pneg %p197
        %p403 = pneg %p194
        %p404 = pneg %p223
        %p405 = pneg %p220
        %s406 = sand.u32 %s210, 1
        %s407 = scalar_lea.sflag [#allocation10], %s406
        %s408 = sand.u32 %s210, 1
        %s409 = smul.addr %s408, 16
        %s410 = scalar_lea.vmem [#allocation21], %s409
        %v412 = vld [vmem:[%s353] sm:$0xff]
        %v413 = vld [vmem:[%s353 + $0x8] sm:$0xff]
        %v414 = vpack.c.bf16 %v413, %v412
        %v415 = vld [vmem:[#allocation12] sm:$0xff]
        %v416 = vld [vmem:[#allocation12 + $0x8] sm:$0xff]
        %v417 = vld [vmem:[#allocation12 + $0x10] sm:$0xff]
        %v418 = vld [vmem:[#allocation12 + $0x18] sm:$0xff]
        %v419 = vld [vmem:[#allocation12 + $0x20] sm:$0xf]
        %v420 = vld [vmem:[#allocation12 + $0x24] sm:$0xff]
        %v421 = vld [vmem:[#allocation12 + $0x2c] sm:$0xff]
        %v422 = vld [vmem:[#allocation12 + $0x34] sm:$0xff]
        %v423 = vld [vmem:[#allocation12 + $0x3c] sm:$0xff]
        %v424 = vld [vmem:[#allocation12 + $0x44] sm:$0xf]
        %v425 = vld [vmem:[#allocation12 + $0x48] sm:$0xff]
        %v426 = vld [vmem:[#allocation12 + $0x50] sm:$0xff]
        %v427 = vld [vmem:[#allocation12 + $0x58] sm:$0xff]
        %v428 = vld [vmem:[#allocation12 + $0x60] sm:$0xff]
        %v429 = vld [vmem:[#allocation12 + $0x68] sm:$0xf]
        %v430 = vld [vmem:[#allocation12 + $0x6c] sm:$0xff]
        %v431 = vld [vmem:[#allocation12 + $0x74] sm:$0xff]
        %v432 = vld [vmem:[#allocation12 + $0x7c] sm:$0xff]
        %v433 = vld [vmem:[#allocation12 + $0x84] sm:$0xff]
        %v434 = vld [vmem:[#allocation12 + $0x8c] sm:$0xf]
        %v435 = vld [vmem:[#allocation12 + $0x90] sm:$0xff]
        %v436 = vld [vmem:[#allocation12 + $0x98] sm:$0xff]
        %v437 = vld [vmem:[#allocation12 + $0xa0] sm:$0xff]
        %v438 = vld [vmem:[#allocation12 + $0xa8] sm:$0xff]
        %v439 = vld [vmem:[#allocation12 + $0xb0] sm:$0xf]
        %v440 = vld [vmem:[#allocation12 + $0xb4] sm:$0xff]
        %v441 = vld [vmem:[#allocation12 + $0xbc] sm:$0xff]
        %v442 = vld [vmem:[#allocation12 + $0xc4] sm:$0xff]
        %v443 = vld [vmem:[#allocation12 + $0xcc] sm:$0xff]
        %v444 = vld [vmem:[#allocation12 + $0xd4] sm:$0xf]
        %v445 = vld [vmem:[#allocation12 + $0xd8] sm:$0xff]
        %v446 = vld [vmem:[#allocation12 + $0xe0] sm:$0xff]
        %v447 = vld [vmem:[#allocation12 + $0xe8] sm:$0xff]
        %v448 = vld [vmem:[#allocation12 + $0xf0] sm:$0xff]
        %v449 = vld [vmem:[#allocation12 + $0xf8] sm:$0xf]
        %v450 = vld [vmem:[#allocation12 + $0xfc] sm:$0xff]
        %v451 = vld [vmem:[#allocation12 + $0x104] sm:$0xff]
        %v452 = vld [vmem:[#allocation12 + $0x10c] sm:$0xff]
        %v453 = vld [vmem:[#allocation12 + $0x114] sm:$0xff]
        %v454 = vld [vmem:[#allocation12 + $0x11c] sm:$0xf]
        %v455 = vld [vmem:[#allocation12 + $0x120] sm:$0x11]
        %v456 = vld [vmem:[#allocation12 + $0x128] sm:$0x11]
        %v457 = vld [vmem:[#allocation12 + $0x130] sm:$0x11]
        %v458 = vld [vmem:[#allocation12 + $0x138] sm:$0x11]
        %v459 = vld [vmem:[#allocation12 + $0x140] sm:$0x1]
        %v460 = vunpack.c.l.bf16 %v455
        %v461 = vunpack.c.h.bf16 %v455
        %v462 = vunpack.c.l.bf16 %v456
        %v463 = vunpack.c.h.bf16 %v456
        %v464 = vunpack.c.l.bf16 %v457
        %v465 = vunpack.c.h.bf16 %v457
        %v466 = vunpack.c.l.bf16 %v458
        %v467 = vunpack.c.h.bf16 %v458
        %v468 = vunpack.c.l.bf16 %v459
        %v469 = vlaneseq
        %v470 = vshrl.u32 %v469, 7
        %v471 = vsub.s32 0, %v470
        %v472 = vrot.slane %v460, %v471
        %v473 = vlaneseq
        %v474 = vshrl.u32 %v473, 7
        %v475 = vsub.s32 0, %v474
        %v476 = vrot.slane %v461, %v475
        %v477 = vlaneseq
        %v478 = vshrl.u32 %v477, 7
        %v479 = vsub.s32 0, %v478
        %v480 = vrot.slane %v462, %v479
        %v481 = vlaneseq
        %v482 = vshrl.u32 %v481, 7
        %v483 = vsub.s32 0, %v482
        %v484 = vrot.slane %v463, %v483
        %v485 = vlaneseq
        %v486 = vshrl.u32 %v485, 7
        %v487 = vsub.s32 0, %v486
        %v488 = vrot.slane %v464, %v487
        %v489 = vlaneseq
        %v490 = vshrl.u32 %v489, 7
        %v491 = vsub.s32 0, %v490
        %v492 = vrot.slane %v465, %v491
        %v493 = vlaneseq
        %v494 = vshrl.u32 %v493, 7
        %v495 = vsub.s32 0, %v494
        %v496 = vrot.slane %v466, %v495
        %v497 = vlaneseq
        %v498 = vshrl.u32 %v497, 7
        %v499 = vsub.s32 0, %v498
        %v500 = vrot.slane %v467, %v499
        %v501 = vlaneseq
        %v502 = vshrl.u32 %v501, 7
        %v503 = vsub.s32 0, %v502
        %v504 = vrot.slane %v468, %v503
        %v545 = vunpack.c.l.b16 %v415
        %v546 = vunpack.c.h.b16 %v415
        %v547 = vunpack.c.l.b16 %v416
        %v548 = vunpack.c.h.b16 %v416
        %v549 = vunpack.c.l.b16 %v417
        %v550 = vunpack.c.h.b16 %v417
        %v551 = vunpack.c.l.b16 %v418
        %v552 = vunpack.c.h.b16 %v418
        %v553 = vunpack.c.l.b16 %v419
        %v554 = vunpack.c.l.b16 %v420
        %v555 = vunpack.c.h.b16 %v420
        %v556 = vunpack.c.l.b16 %v421
        %v557 = vunpack.c.h.b16 %v421
        %v558 = vunpack.c.l.b16 %v422
        %v559 = vunpack.c.h.b16 %v422
        %v560 = vunpack.c.l.b16 %v423
        %v561 = vunpack.c.h.b16 %v423
        %v562 = vunpack.c.l.b16 %v424
        %v563 = vunpack.c.l.b16 %v425
        %v564 = vunpack.c.h.b16 %v425
        %v565 = vunpack.c.l.b16 %v426
        %v566 = vunpack.c.h.b16 %v426
        %v567 = vunpack.c.l.b16 %v427
        %v568 = vunpack.c.h.b16 %v427
        %v569 = vunpack.c.l.b16 %v428
        %v570 = vunpack.c.h.b16 %v428
        %v571 = vunpack.c.l.b16 %v429
        %v572 = vunpack.c.l.b16 %v430
        %v573 = vunpack.c.h.b16 %v430
        %v574 = vunpack.c.l.b16 %v431
        %v575 = vunpack.c.h.b16 %v431
        %v576 = vunpack.c.l.b16 %v432
        %v577 = vunpack.c.h.b16 %v432
        %v578 = vunpack.c.l.b16 %v433
        %v579 = vunpack.c.h.b16 %v433
        %v580 = vunpack.c.l.b16 %v434
        %v581 = vunpack.c.l.b16 %v435
        %v582 = vunpack.c.h.b16 %v435
        %v583 = vunpack.c.l.b16 %v436
        %v584 = vunpack.c.h.b16 %v436
        %v585 = vunpack.c.l.b16 %v437
        %v586 = vunpack.c.h.b16 %v437
        %v587 = vunpack.c.l.b16 %v438
        %v588 = vunpack.c.h.b16 %v438
        %v589 = vunpack.c.l.b16 %v439
        %v590 = vunpack.c.l.b16 %v440
        %v591 = vunpack.c.h.b16 %v440
        %v592 = vunpack.c.l.b16 %v441
        %v593 = vunpack.c.h.b16 %v441
        %v594 = vunpack.c.l.b16 %v442
        %v595 = vunpack.c.h.b16 %v442
        %v596 = vunpack.c.l.b16 %v443
        %v597 = vunpack.c.h.b16 %v443
        %v598 = vunpack.c.l.b16 %v444
        %v599 = vunpack.c.l.b16 %v445
        %v600 = vunpack.c.h.b16 %v445
        %v601 = vunpack.c.l.b16 %v446
        %v602 = vunpack.c.h.b16 %v446
        %v603 = vunpack.c.l.b16 %v447
        %v604 = vunpack.c.h.b16 %v447
        %v605 = vunpack.c.l.b16 %v448
        %v606 = vunpack.c.h.b16 %v448
        %v607 = vunpack.c.l.b16 %v449
        %v608 = vunpack.c.l.b16 %v450
        %v609 = vunpack.c.h.b16 %v450
        %v610 = vunpack.c.l.b16 %v451
        %v611 = vunpack.c.h.b16 %v451
        %v612 = vunpack.c.l.b16 %v452
        %v613 = vunpack.c.h.b16 %v452
        %v614 = vunpack.c.l.b16 %v453
        %v615 = vunpack.c.h.b16 %v453
        %v616 = vunpack.c.l.b16 %v454
        %v617 = vpack.c.b16 %v554, %v545
        %v618 = vpack.c.b16 %v555, %v546
        %v619 = vpack.c.b16 %v556, %v547
        %v620 = vpack.c.b16 %v557, %v548
        %v621 = vpack.c.b16 %v558, %v549
        %v622 = vpack.c.b16 %v559, %v550
        %v623 = vpack.c.b16 %v560, %v551
        %v624 = vpack.c.b16 %v561, %v552
        %v625 = vpack.c.b16 %v562, %v553
        %v626 = vpack.c.b16 %v572, %v563
        %v627 = vpack.c.b16 %v573, %v564
        %v628 = vpack.c.b16 %v574, %v565
        %v629 = vpack.c.b16 %v575, %v566
        %v630 = vpack.c.b16 %v576, %v567
        %v631 = vpack.c.b16 %v577, %v568
        %v632 = vpack.c.b16 %v578, %v569
        %v633 = vpack.c.b16 %v579, %v570
        %v634 = vpack.c.b16 %v580, %v571
        %v635 = vpack.c.b16 %v590, %v581
        %v636 = vpack.c.b16 %v591, %v582
        %v637 = vpack.c.b16 %v592, %v583
        %v638 = vpack.c.b16 %v593, %v584
        %v639 = vpack.c.b16 %v594, %v585
        %v640 = vpack.c.b16 %v595, %v586
        %v641 = vpack.c.b16 %v596, %v587
        %v642 = vpack.c.b16 %v597, %v588
        %v643 = vpack.c.b16 %v598, %v589
        %v644 = vpack.c.b16 %v608, %v599
        %v645 = vpack.c.b16 %v609, %v600
        %v646 = vpack.c.b16 %v610, %v601
        %v647 = vpack.c.b16 %v611, %v602
        %v648 = vpack.c.b16 %v612, %v603
        %v649 = vpack.c.b16 %v613, %v604
        %v650 = vpack.c.b16 %v614, %v605
        %v651 = vpack.c.b16 %v615, %v606
        %v652 = vpack.c.b16 %v616, %v607
        %vm689 = vcmask 523264
        %v691 = vsel %vm689, %v414, 0
        %693 = vmatprep.subr.bf16.mxu0 %v618
        %694 = vmatpush1.bf16.msra.mxu0 %v617
        %695 = vmatprep.subr.bf16.mxu0 %v627
        %696 = vmatpush1.bf16.msra.mxu0 %v626
        %697 = vmatprep.subr.bf16.mxu0 %v636
        %698 = vmatpush1.bf16.msra.mxu0 %v635
        %699 = vmatprep.subr.bf16.mxu0 %v645
        %700 = vmatpush1.bf16.msra.mxu0 %v644
        %701 = vmatprep.subr.bf16.mxu0 0
        %702 = vmatpush1.bf16.msra.mxu0 0
        %703 = vmatprep.subr.bf16.mxu0 0
        %704 = vmatpush1.bf16.msra.mxu0 0
        %705 = vmatprep.subr.bf16.mxu0 0
        %706 = vmatpush1.bf16.msra.mxu0 0
        %707 = vmatprep.subr.bf16.mxu0 0
        %708 = vmatpush1.bf16.msra.mxu0 0
        %709 = vmatprep.subr.bf16.mxu0 0
        %710 = vmatpush1.bf16.msra.mxu0 0
        %711 = vmatprep.subr.bf16.mxu0 0
        %712 = vmatpush1.bf16.msra.mxu0 0
        %713 = vmatprep.subr.bf16.mxu0 0
        %714 = vmatpush1.bf16.msra.mxu0 0
        %715 = vmatprep.subr.bf16.mxu0 0
        %716 = vmatpush1.bf16.msra.mxu0 0
        %717 = vmatprep.subr.bf16.mxu0 0
        %718 = vmatpush1.bf16.msra.mxu0 0
        %719 = vmatprep.subr.bf16.mxu0 0
        %720 = vmatpush1.bf16.msra.mxu0 0
        %721 = vmatprep.subr.bf16.mxu0 0
        %722 = vmatpush1.bf16.msra.mxu0 0
        %723 = vmatprep.subr.bf16.mxu0 0
        %724 = vmatpush1.bf16.msra.mxu0 0
        %725 = vmatprep.mubr.bf16.mxu0 0
        %726 = vmatmul.mubr.bf16.gmra.mrb[0].mxu0 %v691
        %v727 = vpop.f32.mrb[0].mxu0
        %v728 = vadd.f32 %v472, %v727
        %v729 = vpop.f32.mrb[0].mxu0
        %v730 = vadd.f32 %v476, %v729
        %v731 = vpop.f32.mrb[0].mxu0
        %v732 = vadd.f32 %v472, %v731
        %v733 = vpop.f32.mrb[0].mxu0
        %v734 = vadd.f32 %v476, %v733
        %735 = vdwg.mxu0
        %736 = vmatprep.subr.bf16.mxu0 %v620
        %737 = vmatpush1.bf16.msra.mxu0 %v619
        %738 = vmatprep.subr.bf16.mxu0 %v629
        %739 = vmatpush1.bf16.msra.mxu0 %v628
        %740 = vmatprep.subr.bf16.mxu0 %v638
        %741 = vmatpush1.bf16.msra.mxu0 %v637
        %742 = vmatprep.subr.bf16.mxu0 %v647
        %743 = vmatpush1.bf16.msra.mxu0 %v646
        %744 = vmatprep.subr.bf16.mxu0 0
        %745 = vmatpush1.bf16.msra.mxu0 0
        %746 = vmatprep.subr.bf16.mxu0 0
        %747 = vmatpush1.bf16.msra.mxu0 0
        %748 = vmatprep.subr.bf16.mxu0 0
        %749 = vmatpush1.bf16.msra.mxu0 0
        %750 = vmatprep.subr.bf16.mxu0 0
        %751 = vmatpush1.bf16.msra.mxu0 0
        %752 = vmatprep.subr.bf16.mxu0 0
        %753 = vmatpush1.bf16.msra.mxu0 0
        %754 = vmatprep.subr.bf16.mxu0 0
        %755 = vmatpush1.bf16.msra.mxu0 0
        %756 = vmatprep.subr.bf16.mxu0 0
        %757 = vmatpush1.bf16.msra.mxu0 0
        %758 = vmatprep.subr.bf16.mxu0 0
        %759 = vmatpush1.bf16.msra.mxu0 0
        %760 = vmatprep.subr.bf16.mxu0 0
        %761 = vmatpush1.bf16.msra.mxu0 0
        %762 = vmatprep.subr.bf16.mxu0 0
        %763 = vmatpush1.bf16.msra.mxu0 0
        %764 = vmatprep.subr.bf16.mxu0 0
        %765 = vmatpush1.bf16.msra.mxu0 0
        %766 = vmatprep.subr.bf16.mxu0 0
        %767 = vmatpush1.bf16.msra.mxu0 0
        %768 = vmatprep.mubr.bf16.mxu0 0
        %769 = vmatmul.mubr.bf16.gmra.mrb[0].mxu0 %v691
        %v770 = vpop.f32.mrb[0].mxu0
        %v771 = vadd.f32 %v480, %v770
        %v772 = vpop.f32.mrb[0].mxu0
        %v773 = vadd.f32 %v484, %v772
        %v774 = vpop.f32.mrb[0].mxu0
        %v775 = vadd.f32 %v480, %v774
        %v776 = vpop.f32.mrb[0].mxu0
        %v777 = vadd.f32 %v484, %v776
        %778 = vdwg.mxu0
        %779 = vmatprep.subr.bf16.mxu0 %v622
        %780 = vmatpush1.bf16.msra.mxu0 %v621
        %781 = vmatprep.subr.bf16.mxu0 %v631
        %782 = vmatpush1.bf16.msra.mxu0 %v630
        %783 = vmatprep.subr.bf16.mxu0 %v640
        %784 = vmatpush1.bf16.msra.mxu0 %v639
        %785 = vmatprep.subr.bf16.mxu0 %v649
        %786 = vmatpush1.bf16.msra.mxu0 %v648
        %787 = vmatprep.subr.bf16.mxu0 0
        %788 = vmatpush1.bf16.msra.mxu0 0
        %789 = vmatprep.subr.bf16.mxu0 0
        %790 = vmatpush1.bf16.msra.mxu0 0
        %791 = vmatprep.subr.bf16.mxu0 0
        %792 = vmatpush1.bf16.msra.mxu0 0
        %793 = vmatprep.subr.bf16.mxu0 0
        %794 = vmatpush1.bf16.msra.mxu0 0
        %795 = vmatprep.subr.bf16.mxu0 0
        %796 = vmatpush1.bf16.msra.mxu0 0
        %797 = vmatprep.subr.bf16.mxu0 0
        %798 = vmatpush1.bf16.msra.mxu0 0
        %799 = vmatprep.subr.bf16.mxu0 0
        %800 = vmatpush1.bf16.msra.mxu0 0
        %801 = vmatprep.subr.bf16.mxu0 0
        %802 = vmatpush1.bf16.msra.mxu0 0
        %803 = vmatprep.subr.bf16.mxu0 0
        %804 = vmatpush1.bf16.msra.mxu0 0
        %805 = vmatprep.subr.bf16.mxu0 0
        %806 = vmatpush1.bf16.msra.mxu0 0
        %807 = vmatprep.subr.bf16.mxu0 0
        %808 = vmatpush1.bf16.msra.mxu0 0
        %809 = vmatprep.subr.bf16.mxu0 0
        %810 = vmatpush1.bf16.msra.mxu0 0
        %811 = vmatprep.mubr.bf16.mxu0 0
        %812 = vmatmul.mubr.bf16.gmra.mrb[0].mxu0 %v691
        %v813 = vpop.f32.mrb[0].mxu0
        %v814 = vadd.f32 %v488, %v813
        %v815 = vpop.f32.mrb[0].mxu0
        %v816 = vadd.f32 %v492, %v815
        %v817 = vpop.f32.mrb[0].mxu0
        %v818 = vadd.f32 %v488, %v817
        %v819 = vpop.f32.mrb[0].mxu0
        %v820 = vadd.f32 %v492, %v819
        %821 = vdwg.mxu0
        %822 = vmatprep.subr.bf16.mxu0 %v624
        %823 = vmatpush1.bf16.msra.mxu0 %v623
        %824 = vmatprep.subr.bf16.mxu0 %v633
        %825 = vmatpush1.bf16.msra.mxu0 %v632
        %826 = vmatprep.subr.bf16.mxu0 %v642
        %827 = vmatpush1.bf16.msra.mxu0 %v641
        %828 = vmatprep.subr.bf16.mxu0 %v651
        %829 = vmatpush1.bf16.msra.mxu0 %v650
        %830 = vmatprep.subr.bf16.mxu0 0
        %831 = vmatpush1.bf16.msra.mxu0 0
        %832 = vmatprep.subr.bf16.mxu0 0
        %833 = vmatpush1.bf16.msra.mxu0 0
        %834 = vmatprep.subr.bf16.mxu0 0
        %835 = vmatpush1.bf16.msra.mxu0 0
        %836 = vmatprep.subr.bf16.mxu0 0
        %837 = vmatpush1.bf16.msra.mxu0 0
        %838 = vmatprep.subr.bf16.mxu0 0
        %839 = vmatpush1.bf16.msra.mxu0 0
        %840 = vmatprep.subr.bf16.mxu0 0
        %841 = vmatpush1.bf16.msra.mxu0 0
        %842 = vmatprep.subr.bf16.mxu0 0
        %843 = vmatpush1.bf16.msra.mxu0 0
        %844 = vmatprep.subr.bf16.mxu0 0
        %845 = vmatpush1.bf16.msra.mxu0 0
        %846 = vmatprep.subr.bf16.mxu0 0
        %847 = vmatpush1.bf16.msra.mxu0 0
        %848 = vmatprep.subr.bf16.mxu0 0
        %849 = vmatpush1.bf16.msra.mxu0 0
        %850 = vmatprep.subr.bf16.mxu0 0
        %851 = vmatpush1.bf16.msra.mxu0 0
        %852 = vmatprep.subr.bf16.mxu0 0
        %853 = vmatpush1.bf16.msra.mxu0 0
        %854 = vmatprep.mubr.bf16.mxu0 0
        %855 = vmatmul.mubr.bf16.gmra.mrb[0].mxu0 %v691
        %v856 = vpop.f32.mrb[0].mxu0
        %v857 = vadd.f32 %v496, %v856
        %v858 = vpop.f32.mrb[0].mxu0
        %v859 = vadd.f32 %v500, %v858
        %v860 = vpop.f32.mrb[0].mxu0
        %v861 = vadd.f32 %v496, %v860
        %v862 = vpop.f32.mrb[0].mxu0
        %v863 = vadd.f32 %v500, %v862
        %864 = vdwg.mxu0
        %865 = vmatprep.subr.bf16.mxu0 0
        %866 = vmatpush1.bf16.msra.mxu0 %v625
        %867 = vmatprep.subr.bf16.mxu0 0
        %868 = vmatpush1.bf16.msra.mxu0 %v634
        %869 = vmatprep.subr.bf16.mxu0 0
        %870 = vmatpush1.bf16.msra.mxu0 %v643
        %871 = vmatprep.subr.bf16.mxu0 0
        %872 = vmatpush1.bf16.msra.mxu0 %v652
        %873 = vmatprep.subr.bf16.mxu0 0
        %874 = vmatpush1.bf16.msra.mxu0 0
        %875 = vmatprep.subr.bf16.mxu0 0
        %876 = vmatpush1.bf16.msra.mxu0 0
        %877 = vmatprep.subr.bf16.mxu0 0
        %878 = vmatpush1.bf16.msra.mxu0 0
        %879 = vmatprep.subr.bf16.mxu0 0
        %880 = vmatpush1.bf16.msra.mxu0 0
        %881 = vmatprep.subr.bf16.mxu0 0
        %882 = vmatpush1.bf16.msra.mxu0 0
        %883 = vmatprep.subr.bf16.mxu0 0
        %884 = vmatpush1.bf16.msra.mxu0 0
        %885 = vmatprep.subr.bf16.mxu0 0
        %886 = vmatpush1.bf16.msra.mxu0 0
        %887 = vmatprep.subr.bf16.mxu0 0
        %888 = vmatpush1.bf16.msra.mxu0 0
        %889 = vmatprep.subr.bf16.mxu0 0
        %890 = vmatpush1.bf16.msra.mxu0 0
        %891 = vmatprep.subr.bf16.mxu0 0
        %892 = vmatpush1.bf16.msra.mxu0 0
        %893 = vmatprep.subr.bf16.mxu0 0
        %894 = vmatpush1.bf16.msra.mxu0 0
        %895 = vmatprep.subr.bf16.mxu0 0
        %896 = vmatpush1.bf16.msra.mxu0 0
        %897 = vmatprep.mubr.bf16.mxu0 0
        %898 = vmatmul.mubr.bf16.gmra.mrb[0].mxu0 %v691
        %v899 = vpop.f32.mrb[0].mxu0
        %v900 = vadd.f32 %v504, %v899
        %v901 = vpop.f32.mrb[0].mxu0
        %v902 = vpop.f32.mrb[0].mxu0
        %v903 = vadd.f32 %v504, %v902
        %v904 = vpop.f32.mrb[0].mxu0
        %905 = vdwg.mxu0
        %vm910 = vcmask 1042432
        %v911 = vrot.slane %v730, 5
        %v912 = vrot.slane %v771, 5
        %v913 = vrot.slane %v734, 5
        %v914 = vsel %vm910, %v911, %v913
        %v915 = vrot.slane %v775, 5
        %v916 = vsel %vm910, %v912, %v915
        %923 = vst [vmem:[#allocation2] sm:$0xf8] %v911
        %vm924 = vcmask 392195
        %925 = vst.msk [vmem:[#allocation2 + $0x8] sm:$0xf8] %vm924, %v912
        %926 = vst [vmem:[#allocation2 + $0x10] sm:$0xff] %v914
        %vm927 = vcmask 392192
        %928 = vst.msk [vmem:[#allocation2 + $0x18] sm:$0xff] %vm927, %v916
        %929 = vst [vmem:[#allocation2 + $0x20] sm:$0x7] %v913
        %vm930 = vcmask 387072
        %931 = vst.msk [vmem:[#allocation2 + $0x28] sm:$0x7] %vm930, %v915
        %v932 = vcombine.low %v730, %v771
        %v934 = vunpack.c.l.s4 1966171168
        %v935 = vunpack.c.0.s8 %v934
        %v936 = vlaneseq
        %v937 = vshrl.u32 %v936, 7
        %v938 = vsub.s32 %v935, %v937
        %v939 = vrot.slane %v932, %v938
        %v940 = vcombine.high %v939, %v939
        %v942 = vunpack.c.l.s4 1966171168
        %v943 = vunpack.c.0.s8 %v942
        %v944 = vlaneseq
        %v945 = vshrl.u32 %v944, 7
        %v946 = vsub.s32 %v943, %v945
        %v947 = vrot.slane %v940, %v946
        %v949 = vlaneseq
        %vm950 = vcmp.ge.s32.totalorder %v949, 0
        %vm951 = vcmp.lt.s32.totalorder %v949, 176
        %vm952 = vmand %vm950, %vm951
        %s953 = scalar_lea.vmem [#allocation2], 2
        %954 = vst.msk [vmem:[%s953] ss:$8 sm:$0x3] %vm952, %v947
        %955 = vst.msk [vmem:[%s953] ss:$8 sm:$0x0] %vm952, %v947
        %v956 = vcombine.high %v734, %v775
        %v958 = vunpack.c.l.s4 1966171168
        %v959 = vunpack.c.0.s8 %v958
        %v960 = vlaneseq
        %v961 = vshrl.u32 %v960, 7
        %v962 = vsub.s32 %v959, %v961
        %v963 = vrot.slane %v956, %v962
        %v965 = vunpack.c.l.s4 1966171168
        %v966 = vunpack.c.0.s8 %v965
        %v967 = vlaneseq
        %v968 = vshrl.u32 %v967, 7
        %v969 = vsub.s32 %v966, %v968
        %v970 = vrot.slane %v963, %v969
        %v971 = vcombine.high %v970, %v970
        %s973 = scalar_lea.vmem [#allocation2], 35
        %974 = vst.msk [vmem:[%s973] ss:$8 sm:$0x3] %vm952, %v971
        %975 = vst.msk [vmem:[%s973] ss:$8 sm:$0x0] %vm952, %v971
        %v977 = vunpack.c.l.s4 1966171168
        %v978 = vunpack.c.0.s8 %v977
        %v979 = vlaneseq
        %v980 = vshrl.u32 %v979, 7
        %v981 = vsub.s32 %v978, %v980
        %v982 = vrot.slane %v939, %v981
        %v983 = vcombine.high %v982, %v982
        %s985 = scalar_lea.vmem [#allocation2], 1
        %986 = vst.msk [vmem:[%s985] ss:$8 sm:$0x3] %vm952, %v983
        %987 = vst.msk [vmem:[%s985] ss:$8 sm:$0x0] %vm952, %v983
        %v988 = vcombine.high %v963, %v963
        %v990 = vunpack.c.l.s4 1966171168
        %v991 = vunpack.c.0.s8 %v990
        %v992 = vlaneseq
        %v993 = vshrl.u32 %v992, 7
        %v994 = vsub.s32 %v991, %v993
        %v995 = vrot.slane %v988, %v994
        %s997 = scalar_lea.vmem [#allocation2], 36
        %998 = vst.msk [vmem:[%s997] ss:$8 sm:$0x3] %vm952, %v995
        %999 = vst.msk [vmem:[%s997] ss:$8 sm:$0x0] %vm952, %v995
        %v1000 = vcombine.high %v947, %v947
        %1002 = vst.msk [vmem:[#allocation2] ss:$8 sm:$0x3] %vm952, %v1000
        %1003 = vst.msk [vmem:[#allocation2] ss:$8 sm:$0x0] %vm952, %v1000
        %s1005 = scalar_lea.vmem [#allocation2], 37
        %1006 = vst.msk [vmem:[%s1005] ss:$8 sm:$0x3] %vm952, %v970
        %1007 = vst.msk [vmem:[%s1005] ss:$8 sm:$0x0] %vm952, %v970
        %v1012 = vrot.slane %v773, 5
        %v1013 = vrot.slane %v814, 5
        %v1014 = vrot.slane %v777, 5
        %v1015 = vsel %vm910, %v1012, %v1014
        %v1016 = vrot.slane %v818, 5
        %v1017 = vsel %vm910, %v1013, %v1016
        %1024 = vst [vmem:[#allocation3] sm:$0xf8] %v1012
        %1025 = vst.msk [vmem:[#allocation3 + $0x8] sm:$0xf8] %vm924, %v1013
        %1026 = vst [vmem:[#allocation3 + $0x10] sm:$0xff] %v1015
        %1027 = vst.msk [vmem:[#allocation3 + $0x18] sm:$0xff] %vm927, %v1017
        %1028 = vst [vmem:[#allocation3 + $0x20] sm:$0x7] %v1014
        %1029 = vst.msk [vmem:[#allocation3 + $0x28] sm:$0x7] %vm930, %v1016
        %v1030 = vcombine.low %v773, %v814
        %v1032 = vunpack.c.l.s4 1966171168
        %v1033 = vunpack.c.0.s8 %v1032
        %v1034 = vlaneseq
        %v1035 = vshrl.u32 %v1034, 7
        %v1036 = vsub.s32 %v1033, %v1035
        %v1037 = vrot.slane %v1030, %v1036
        %v1038 = vcombine.high %v1037, %v1037
        %v1040 = vunpack.c.l.s4 1966171168
        %v1041 = vunpack.c.0.s8 %v1040
        %v1042 = vlaneseq
        %v1043 = vshrl.u32 %v1042, 7
        %v1044 = vsub.s32 %v1041, %v1043
        %v1045 = vrot.slane %v1038, %v1044
        %s1047 = scalar_lea.vmem [#allocation3], 2
        %1048 = vst.msk [vmem:[%s1047] ss:$8 sm:$0x3] %vm952, %v1045
        %1049 = vst.msk [vmem:[%s1047] ss:$8 sm:$0x0] %vm952, %v1045
        %v1050 = vcombine.high %v777, %v818
        %v1052 = vunpack.c.l.s4 1966171168
        %v1053 = vunpack.c.0.s8 %v1052
        %v1054 = vlaneseq
        %v1055 = vshrl.u32 %v1054, 7
        %v1056 = vsub.s32 %v1053, %v1055
        %v1057 = vrot.slane %v1050, %v1056
        %v1059 = vunpack.c.l.s4 1966171168
        %v1060 = vunpack.c.0.s8 %v1059
        %v1061 = vlaneseq
        %v1062 = vshrl.u32 %v1061, 7
        %v1063 = vsub.s32 %v1060, %v1062
        %v1064 = vrot.slane %v1057, %v1063
        %v1065 = vcombine.high %v1064, %v1064
        %s1067 = scalar_lea.vmem [#allocation3], 35
        %1068 = vst.msk [vmem:[%s1067] ss:$8 sm:$0x3] %vm952, %v1065
        %1069 = vst.msk [vmem:[%s1067] ss:$8 sm:$0x0] %vm952, %v1065
        %v1071 = vunpack.c.l.s4 1966171168
        %v1072 = vunpack.c.0.s8 %v1071
        %v1073 = vlaneseq
        %v1074 = vshrl.u32 %v1073, 7
        %v1075 = vsub.s32 %v1072, %v1074
        %v1076 = vrot.slane %v1037, %v1075
        %v1077 = vcombine.high %v1076, %v1076
        %s1079 = scalar_lea.vmem [#allocation3], 1
        %1080 = vst.msk [vmem:[%s1079] ss:$8 sm:$0x3] %vm952, %v1077
        %1081 = vst.msk [vmem:[%s1079] ss:$8 sm:$0x0] %vm952, %v1077
        %v1082 = vcombine.high %v1057, %v1057
        %v1084 = vunpack.c.l.s4 1966171168
        %v1085 = vunpack.c.0.s8 %v1084
        %v1086 = vlaneseq
        %v1087 = vshrl.u32 %v1086, 7
        %v1088 = vsub.s32 %v1085, %v1087
        %v1089 = vrot.slane %v1082, %v1088
        %s1091 = scalar_lea.vmem [#allocation3], 36
        %1092 = vst.msk [vmem:[%s1091] ss:$8 sm:$0x3] %vm952, %v1089
        %1093 = vst.msk [vmem:[%s1091] ss:$8 sm:$0x0] %vm952, %v1089
        %v1094 = vcombine.high %v1045, %v1045
        %1096 = vst.msk [vmem:[#allocation3] ss:$8 sm:$0x3] %vm952, %v1094
        %1097 = vst.msk [vmem:[#allocation3] ss:$8 sm:$0x0] %vm952, %v1094
        %s1099 = scalar_lea.vmem [#allocation3], 37
        %1100 = vst.msk [vmem:[%s1099] ss:$8 sm:$0x3] %vm952, %v1064
        %1101 = vst.msk [vmem:[%s1099] ss:$8 sm:$0x0] %vm952, %v1064
        %v1102 = vld [vmem:[#allocation14] sm:$0xf8]
        %v1103 = vld [vmem:[#allocation14 + $0x8] sm:$0xf8]
        %v1104 = vld [vmem:[#allocation14 + $0x10] sm:$0xff]
        %v1105 = vld [vmem:[#allocation14 + $0x18] sm:$0xff]
        %v1106 = vld [vmem:[#allocation14 + $0x20] sm:$0x7]
        %v1107 = vld [vmem:[#allocation14 + $0x28] sm:$0x7]
        %v1108 = vld [vmem:[#allocation2] sm:$0xff]
        %v1109 = vld [vmem:[#allocation2 + $0x10] sm:$0xff]
        %v1110 = vld [vmem:[#allocation14] sm:$0xff]
        %vm1117 = vcmask 1044480
        %v1118 = vrot.slane %v1102, 3
        %v1119 = vrot.slane %v1104, 3
        %v1120 = vsel %vm1117, %v1118, %v1119
        %v1121 = vrot.slane %v1103, 3
        %v1122 = vrot.slane %v1105, 3
        %v1123 = vsel %vm1117, %v1121, %v1122
        %v1124 = vrot.slane %v1106, 3
        %v1125 = vsel %vm1117, %v1119, %v1124
        %v1126 = vrot.slane %v1107, 3
        %v1127 = vsel %vm1117, %v1122, %v1126
        %1128 = vrot.lane.b32.xlu0 %v1120, 104
        %v1129 = vpop.permute.xlu0 %1128
        %1130 = vrot.lane.b32.xlu0 %v1123, 104
        %v1131 = vpop.permute.xlu0 %1130
        %1132 = vrot.lane.b32.xlu0 %v1125, 104
        %v1133 = vpop.permute.xlu0 %1132
        %1134 = vrot.lane.b32.xlu0 %v1127, 104
        %v1135 = vpop.permute.xlu0 %1134
        %vm1136 = vcmask 850944
        %v1137 = vsel %vm1136, %v1129, %v1131
        %v1138 = vsel %vm1136, %v1133, %v1135
        %v1141 = vadd.f32 %v1108, %v1137
        %v1142 = vadd.f32 %v1109, %v1138
        %v1143 = vsub.f32 %v1141, %v1110
        %v1144 = vsub.f32 %v1142, %v1104
        %v1145 = vmul.f32 %v728, %v1143
        %v1146 = vmul.f32 %v732, %v1144
        %v1147 = vpack.c.bf16 %v1146, %v1145
        %1148 = vst [vmem:[#allocation6] sm:$0xff] %v1147
        %v1149 = vld [vmem:[#allocation2] sm:$0xff]
        %v1150 = vld [vmem:[#allocation2 + $0x8] sm:$0xff]
        %v1151 = vld [vmem:[#allocation2 + $0x10] sm:$0xff]
        %v1152 = vld [vmem:[#allocation2 + $0x18] sm:$0xff]
        %v1153 = vld [vmem:[#allocation14] sm:$0xff]
        %v1154 = vld [vmem:[#allocation14 + $0x8] sm:$0xff]
        %v1155 = vld [vmem:[#allocation14 + $0x10] sm:$0xff]
        %v1156 = vld [vmem:[#allocation14 + $0x18] sm:$0xff]
        %1157 = vrot.lane.b32.xlu0 %v1120, 112
        %v1158 = vpop.permute.xlu0 %1157
        %1159 = vrot.lane.b32.xlu0 %v1123, 112
        %v1160 = vpop.permute.xlu0 %1159
        %1161 = vrot.lane.b32.xlu0 %v1125, 112
        %v1162 = vpop.permute.xlu0 %1161
        %1163 = vrot.lane.b32.xlu0 %v1127, 112
        %v1164 = vpop.permute.xlu0 %1163
        %vm1165 = vcmask 916480
        %v1166 = vsel %vm1165, %v1158, %v1160
        %v1167 = vsel %vm1165, %v1162, %v1164
        %v1172 = vadd.f32 %v1149, %v1166
        %v1173 = vadd.f32 %v1150, %v1160
        %v1174 = vadd.f32 %v1151, %v1167
        %v1175 = vadd.f32 %v1152, %v1164
        %v1176 = vsub.f32 %v1172, %v1153
        %v1177 = vsub.f32 %v1173, %v1154
        %v1178 = vsub.f32 %v1174, %v1155
        %v1179 = vsub.f32 %v1175, %v1156
        %1184 = vrot.lane.b32.xlu0 %v1176, 120
        %v1185 = vpop.permute.xlu0 %1184
        %1186 = vrot.lane.b32.xlu0 %v1177, 120
        %v1187 = vpop.permute.xlu0 %1186
        %1188 = vrot.lane.b32.xlu0 %v1178, 120
        %v1189 = vpop.permute.xlu0 %1188
        %1190 = vrot.lane.b32.xlu0 %v1179, 120
        %v1191 = vpop.permute.xlu0 %1190
        %vm1192 = vcmask 982016
        %v1193 = vsel %vm1192, %v1185, %v1187
        %v1194 = vsel %vm1192, %v1189, %v1191
        %v1197 = vmul.f32 %v728, %v1193
        %v1198 = vmul.f32 %v732, %v1194
        %v1199 = vpack.c.bf16 %v1198, %v1197
        %1200 = vst [vmem:[#allocation6 + $0x8] sm:$0xff] %v1199
        %v1201 = vld [vmem:[#allocation2] sm:$0xff]
        %v1202 = vld [vmem:[#allocation2 + $0x8] sm:$0xff]
        %v1203 = vld [vmem:[#allocation2 + $0x10] sm:$0xff]
        %v1204 = vld [vmem:[#allocation2 + $0x18] sm:$0xff]
        %v1205 = vld [vmem:[#allocation14] sm:$0xff]
        %v1206 = vld [vmem:[#allocation14 + $0x8] sm:$0xff]
        %v1207 = vld [vmem:[#allocation14 + $0x10] sm:$0xff]
        %v1208 = vld [vmem:[#allocation14 + $0x18] sm:$0xff]
        %1209 = vrot.lane.b32.xlu0 %v1120, 120
        %v1210 = vpop.permute.xlu0 %1209
        %1211 = vrot.lane.b32.xlu0 %v1123, 120
        %v1212 = vpop.permute.xlu0 %1211
        %1213 = vrot.lane.b32.xlu0 %v1125, 120
        %v1214 = vpop.permute.xlu0 %1213
        %1215 = vrot.lane.b32.xlu0 %v1127, 120
        %v1216 = vpop.permute.xlu0 %1215
        %v1217 = vsel %vm1192, %v1210, %v1212
        %v1218 = vsel %vm1192, %v1214, %v1216
        %v1223 = vadd.f32 %v1201, %v1217
        %v1224 = vadd.f32 %v1202, %v1212
        %v1225 = vadd.f32 %v1203, %v1218
        %v1226 = vadd.f32 %v1204, %v1216
        %v1227 = vsub.f32 %v1223, %v1205
        %v1228 = vsub.f32 %v1224, %v1206
        %v1229 = vsub.f32 %v1225, %v1207
        %v1230 = vsub.f32 %v1226, %v1208
        %1235 = vrot.lane.b32.xlu0 %v1227, 112
        %v1236 = vpop.permute.xlu0 %1235
        %1237 = vrot.lane.b32.xlu0 %v1228, 112
        %v1238 = vpop.permute.xlu0 %1237
        %1239 = vrot.lane.b32.xlu0 %v1229, 112
        %v1240 = vpop.permute.xlu0 %1239
        %1241 = vrot.lane.b32.xlu0 %v1230, 112
        %v1242 = vpop.permute.xlu0 %1241
        %v1243 = vsel %vm1165, %v1236, %v1238
        %v1244 = vsel %vm1165, %v1240, %v1242
        %v1247 = vmul.f32 %v728, %v1243
        %v1248 = vmul.f32 %v732, %v1244
        %v1249 = vpack.c.bf16 %v1248, %v1247
        %1250 = vst [vmem:[#allocation6 + $0x10] sm:$0xff] %v1249
        %v1251 = vld [vmem:[#allocation2] sm:$0xff]
        %v1252 = vld [vmem:[#allocation2 + $0x8] sm:$0xff]
        %v1253 = vld [vmem:[#allocation2 + $0x10] sm:$0xff]
        %v1254 = vld [vmem:[#allocation2 + $0x18] sm:$0xff]
        %v1255 = vld [vmem:[#allocation14] sm:$0xff]
        %v1256 = vld [vmem:[#allocation14 + $0x8] sm:$0xff]
        %v1257 = vld [vmem:[#allocation14 + $0x10] sm:$0xff]
        %v1258 = vld [vmem:[#allocation14 + $0x18] sm:$0xff]
        %v1263 = vadd.f32 %v1251, %v1120
        %v1264 = vadd.f32 %v1252, %v1123
        %v1265 = vadd.f32 %v1253, %v1125
        %v1266 = vadd.f32 %v1254, %v1127
        %v1267 = vsub.f32 %v1263, %v1255
        %v1268 = vsub.f32 %v1264, %v1256
        %v1269 = vsub.f32 %v1265, %v1257
        %v1270 = vsub.f32 %v1266, %v1258
        %1275 = vrot.lane.b32.xlu0 %v1267, 104
        %v1276 = vpop.permute.xlu0 %1275
        %1277 = vrot.lane.b32.xlu0 %v1268, 104
        %v1278 = vpop.permute.xlu0 %1277
        %1279 = vrot.lane.b32.xlu0 %v1269, 104
        %v1280 = vpop.permute.xlu0 %1279
        %1281 = vrot.lane.b32.xlu0 %v1270, 104
        %v1282 = vpop.permute.xlu0 %1281
        %v1283 = vsel %vm1136, %v1276, %v1278
        %v1284 = vsel %vm1136, %v1280, %v1282
        %v1287 = vmul.f32 %v728, %v1283
        %v1288 = vmul.f32 %v732, %v1284
        %v1289 = vpack.c.bf16 %v1288, %v1287
        %1290 = vst [vmem:[#allocation6 + $0x18] sm:$0xff] %v1289
        %v1291 = vld [vmem:[#allocation2] sm:$0xff]
        %v1292 = vld [vmem:[#allocation2 + $0x8] sm:$0xff]
        %v1293 = vld [vmem:[#allocation2 + $0x10] sm:$0xff]
        %v1294 = vld [vmem:[#allocation2 + $0x18] sm:$0xff]
        %v1295 = vld [vmem:[#allocation14] sm:$0xff]
        %v1296 = vld [vmem:[#allocation14 + $0x8] sm:$0xff]
        %v1297 = vld [vmem:[#allocation14 + $0x10] sm:$0xff]
        %v1298 = vld [vmem:[#allocation14 + $0x18] sm:$0xff]
        %1299 = vrot.lane.b32.xlu0 %v1120, 8
        %v1300 = vpop.permute.xlu0 %1299
        %1301 = vrot.lane.b32.xlu0 %v1123, 8
        %v1302 = vpop.permute.xlu0 %1301
        %1303 = vrot.lane.b32.xlu0 %v1125, 8
        %v1304 = vpop.permute.xlu0 %1303
        %1305 = vrot.lane.b32.xlu0 %v1127, 8
        %v1306 = vpop.permute.xlu0 %1305
        %vm1307 = vcmask 64512
        %v1308 = vsel %vm1307, %v1300, %v1302
        %v1309 = vsel %vm1307, %v1304, %v1306
        %v1314 = vadd.f32 %v1291, %v1300
        %v1315 = vadd.f32 %v1292, %v1308
        %v1316 = vadd.f32 %v1293, %v1304
        %v1317 = vadd.f32 %v1294, %v1309
        %v1318 = vsub.f32 %v1314, %v1295
        %v1319 = vsub.f32 %v1315, %v1296
        %v1320 = vsub.f32 %v1316, %v1297
        %v1321 = vsub.f32 %v1317, %v1298
        %1326 = vrot.lane.b32.xlu0 %v1318, 96
        %v1327 = vpop.permute.xlu0 %1326
        %1328 = vrot.lane.b32.xlu0 %v1319, 96
        %v1329 = vpop.permute.xlu0 %1328
        %1330 = vrot.lane.b32.xlu0 %v1320, 96
        %v1331 = vpop.permute.xlu0 %1330
        %1332 = vrot.lane.b32.xlu0 %v1321, 96
        %v1333 = vpop.permute.xlu0 %1332
        %vm1334 = vcmask 785408
        %v1335 = vsel %vm1334, %v1327, %v1329
        %v1336 = vsel %vm1334, %v1331, %v1333
        %v1339 = vmul.f32 %v728, %v1335
        %v1340 = vmul.f32 %v732, %v1336
        %v1341 = vpack.c.bf16 %v1340, %v1339
        %1342 = vst [vmem:[#allocation6 + $0x20] sm:$0xff] %v1341
        %v1343 = vld [vmem:[#allocation2] sm:$0xff]
        %v1344 = vld [vmem:[#allocation2 + $0x8] sm:$0xff]
        %v1345 = vld [vmem:[#allocation2 + $0x10] sm:$0xff]
        %v1346 = vld [vmem:[#allocation2 + $0x18] sm:$0xff]
        %v1347 = vld [vmem:[#allocation14] sm:$0xff]
        %v1348 = vld [vmem:[#allocation14 + $0x8] sm:$0xff]
        %v1349 = vld [vmem:[#allocation14 + $0x10] sm:$0xff]
        %v1350 = vld [vmem:[#allocation14 + $0x18] sm:$0xff]
        %1351 = vrot.lane.b32.xlu0 %v1120, 16
        %v1352 = vpop.permute.xlu0 %1351
        %1353 = vrot.lane.b32.xlu0 %v1123, 16
        %v1354 = vpop.permute.xlu0 %1353
        %1355 = vrot.lane.b32.xlu0 %v1125, 16
        %v1356 = vpop.permute.xlu0 %1355
        %1357 = vrot.lane.b32.xlu0 %v1127, 16
        %v1358 = vpop.permute.xlu0 %1357
        %vm1359 = vcmask 130048
        %v1360 = vsel %vm1359, %v1352, %v1354
        %v1361 = vsel %vm1359, %v1356, %v1358
        %v1366 = vadd.f32 %v1343, %v1352
        %v1367 = vadd.f32 %v1344, %v1360
        %v1368 = vadd.f32 %v1345, %v1356
        %v1369 = vadd.f32 %v1346, %v1361
        %v1370 = vsub.f32 %v1366, %v1347
        %v1371 = vsub.f32 %v1367, %v1348
        %v1372 = vsub.f32 %v1368, %v1349
        %v1373 = vsub.f32 %v1369, %v1350
        %1378 = vrot.lane.b32.xlu0 %v1370, 88
        %v1379 = vpop.permute.xlu0 %1378
        %1380 = vrot.lane.b32.xlu0 %v1371, 88
        %v1381 = vpop.permute.xlu0 %1380
        %1382 = vrot.lane.b32.xlu0 %v1372, 88
        %v1383 = vpop.permute.xlu0 %1382
        %1384 = vrot.lane.b32.xlu0 %v1373, 88
        %v1385 = vpop.permute.xlu0 %1384
        %vm1386 = vcmask 719872
        %v1387 = vsel %vm1386, %v1379, %v1381
        %v1388 = vsel %vm1386, %v1383, %v1385
        %v1391 = vmul.f32 %v728, %v1387
        %v1392 = vmul.f32 %v732, %v1388
        %v1393 = vpack.c.bf16 %v1392, %v1391
        %1394 = vst [vmem:[#allocation6 + $0x28] sm:$0xff] %v1393
        %v1395 = vld [vmem:[#allocation2] sm:$0xff]
        %v1396 = vld [vmem:[#allocation2 + $0x8] sm:$0xff]
        %v1397 = vld [vmem:[#allocation2 + $0x10] sm:$0xff]
        %v1398 = vld [vmem:[#allocation2 + $0x18] sm:$0xff]
        %v1399 = vld [vmem:[#allocation14] sm:$0xff]
        %v1400 = vld [vmem:[#allocation14 + $0x8] sm:$0xff]
        %v1401 = vld [vmem:[#allocation14 + $0x10] sm:$0xff]
        %v1402 = vld [vmem:[#allocation14 + $0x18] sm:$0xff]
        %1403 = vrot.lane.b32.xlu0 %v1120, 24
        %v1404 = vpop.permute.xlu0 %1403
        %1405 = vrot.lane.b32.xlu0 %v1123, 24
        %v1406 = vpop.permute.xlu0 %1405
        %1407 = vrot.lane.b32.xlu0 %v1125, 24
        %v1408 = vpop.permute.xlu0 %1407
        %1409 = vrot.lane.b32.xlu0 %v1127, 24
        %v1410 = vpop.permute.xlu0 %1409
        %vm1411 = vcmask 195584
        %v1412 = vsel %vm1411, %v1404, %v1406
        %v1413 = vsel %vm1411, %v1408, %v1410
        %v1418 = vadd.f32 %v1395, %v1404
        %v1419 = vadd.f32 %v1396, %v1412
        %v1420 = vadd.f32 %v1397, %v1408
        %v1421 = vadd.f32 %v1398, %v1413
        %v1422 = vsub.f32 %v1418, %v1399
        %v1423 = vsub.f32 %v1419, %v1400
        %v1424 = vsub.f32 %v1420, %v1401
        %v1425 = vsub.f32 %v1421, %v1402
        %1430 = vrot.lane.b32.xlu0 %v1422, 80
        %v1431 = vpop.permute.xlu0 %1430
        %1432 = vrot.lane.b32.xlu0 %v1423, 80
        %v1433 = vpop.permute.xlu0 %1432
        %1434 = vrot.lane.b32.xlu0 %v1424, 80
        %v1435 = vpop.permute.xlu0 %1434
        %1436 = vrot.lane.b32.xlu0 %v1425, 80
        %v1437 = vpop.permute.xlu0 %1436
        %vm1438 = vcmask 654336
        %v1439 = vsel %vm1438, %v1431, %v1433
        %v1440 = vsel %vm1438, %v1435, %v1437
        %v1443 = vmul.f32 %v728, %v1439
        %v1444 = vmul.f32 %v732, %v1440
        %v1445 = vpack.c.bf16 %v1444, %v1443
        %1446 = vst [vmem:[#allocation6 + $0x30] sm:$0xff] %v1445
        %v1447 = vld [vmem:[#allocation2] sm:$0xfe]
        %v1448 = vld [vmem:[#allocation2 + $0x10] sm:$0xff]
        %v1449 = vld [vmem:[#allocation2 + $0x20] sm:$0x1]
        %v1450 = vld [vmem:[#allocation14] sm:$0xfe]
        %v1451 = vld [vmem:[#allocation14 + $0x10] sm:$0xff]
        %v1452 = vld [vmem:[#allocation14 + $0x20] sm:$0x1]
        %vm1453 = vcmask 1045504
        %v1454 = vrot.slane %v1102, 2
        %v1455 = vrot.slane %v1104, 2
        %v1456 = vsel %vm1453, %v1454, %v1455
        %v1457 = vrot.slane %v1103, 2
        %v1458 = vrot.slane %v1105, 2
        %v1459 = vsel %vm1453, %v1457, %v1458
        %v1460 = vrot.slane %v1106, 2
        %v1461 = vsel %vm1453, %v1455, %v1460
        %v1462 = vrot.slane %v1107, 2
        %v1463 = vsel %vm1453, %v1458, %v1462
        %1464 = vrot.lane.b32.xlu0 %v1456, 104
        %v1465 = vpop.permute.xlu0 %1464
        %1466 = vrot.lane.b32.xlu0 %v1459, 104
        %v1467 = vpop.permute.xlu0 %1466
        %1468 = vrot.lane.b32.xlu0 %v1461, 104
        %v1469 = vpop.permute.xlu0 %1468
        %1470 = vrot.lane.b32.xlu0 %v1463, 104
        %v1471 = vpop.permute.xlu0 %1470
        %1472 = vrot.lane.b32.xlu0 %v1460, 104
        %v1473 = vpop.permute.xlu0 %1472
        %1474 = vrot.lane.b32.xlu0 %v1462, 104
        %v1475 = vpop.permute.xlu0 %1474
        %v1476 = vsel %vm1136, %v1465, %v1467
        %v1477 = vsel %vm1136, %v1469, %v1471
        %v1478 = vsel %vm1136, %v1473, %v1475
        %v1482 = vadd.f32 %v1447, %v1476
        %v1483 = vadd.f32 %v1448, %v1477
        %v1484 = vadd.f32 %v1449, %v1478
        %v1485 = vsub.f32 %v1482, %v1450
        %v1486 = vsub.f32 %v1483, %v1451
        %v1487 = vsub.f32 %v1484, %v1452
        %vm1491 = vcmask 1046528
        %v1492 = vrot.slane %v1485, 1
        %v1493 = vrot.slane %v1486, 1
        %v1494 = vsel %vm1491, %v1492, %v1493
        %v1495 = vrot.slane %v1487, 1
        %v1496 = vsel %vm1491, %v1493, %v1495
        %v1499 = vmul.f32 %v728, %v1494
        %v1500 = vmul.f32 %v732, %v1496
        %v1501 = vpack.c.bf16 %v1500, %v1499
        %1502 = vst [vmem:[#allocation6 + $0x38] sm:$0xff] %v1501
        %v1503 = vld [vmem:[#allocation2] sm:$0xfe]
        %v1504 = vld [vmem:[#allocation2 + $0x8] sm:$0xfe]
        %v1505 = vld [vmem:[#allocation2 + $0x10] sm:$0xff]
        %v1506 = vld [vmem:[#allocation2 + $0x18] sm:$0xff]
        %v1507 = vld [vmem:[#allocation2 + $0x20] sm:$0x1]
        %v1508 = vld [vmem:[#allocation2 + $0x28] sm:$0x1]
        %v1509 = vld [vmem:[#allocation14] sm:$0xfe]
        %v1510 = vld [vmem:[#allocation14 + $0x8] sm:$0xfe]
        %v1511 = vld [vmem:[#allocation14 + $0x10] sm:$0xff]
        %v1512 = vld [vmem:[#allocation14 + $0x18] sm:$0xff]
        %v1513 = vld [vmem:[#allocation14 + $0x20] sm:$0x1]
        %v1514 = vld [vmem:[#allocation14 + $0x28] sm:$0x1]
        %1515 = vrot.lane.b32.xlu0 %v1456, 112
        %v1516 = vpop.permute.xlu0 %1515
        %1517 = vrot.lane.b32.xlu0 %v1459, 112
        %v1518 = vpop.permute.xlu0 %1517
        %1519 = vrot.lane.b32.xlu0 %v1461, 112
        %v1520 = vpop.permute.xlu0 %1519
        %1521 = vrot.lane.b32.xlu0 %v1463, 112
        %v1522 = vpop.permute.xlu0 %1521
        %1523 = vrot.lane.b32.xlu0 %v1460, 112
        %v1524 = vpop.permute.xlu0 %1523
        %1525 = vrot.lane.b32.xlu0 %v1462, 112
        %v1526 = vpop.permute.xlu0 %1525
        %v1527 = vsel %vm1165, %v1516, %v1518
        %v1528 = vsel %vm1165, %v1520, %v1522
        %v1529 = vsel %vm1165, %v1524, %v1526
        %v1536 = vadd.f32 %v1503, %v1527
        %v1537 = vadd.f32 %v1504, %v1518
        %v1538 = vadd.f32 %v1505, %v1528
        %v1539 = vadd.f32 %v1506, %v1522
        %v1540 = vadd.f32 %v1507, %v1529
        %v1541 = vadd.f32 %v1508, %v1526
        %v1542 = vsub.f32 %v1536, %v1509
        %v1543 = vsub.f32 %v1537, %v1510
        %v1544 = vsub.f32 %v1538, %v1511
        %v1545 = vsub.f32 %v1539, %v1512
        %v1546 = vsub.f32 %v1540, %v1513
        %v1547 = vsub.f32 %v1541, %v1514
        %v1554 = vrot.slane %v1542, 1
        %v1555 = vrot.slane %v1544, 1
        %v1556 = vsel %vm1491, %v1554, %v1555
        %v1557 = vrot.slane %v1543, 1
        %v1558 = vrot.slane %v1545, 1
        %v1559 = vsel %vm1491, %v1557, %v1558
        %v1560 = vrot.slane %v1546, 1
        %v1561 = vsel %vm1491, %v1555, %v1560
        %v1562 = vrot.slane %v1547, 1
        %v1563 = vsel %vm1491, %v1558, %v1562
        %1564 = vrot.lane.b32.xlu0 %v1556, 120
        %v1565 = vpop.permute.xlu0 %1564
        %1566 = vrot.lane.b32.xlu0 %v1559, 120
        %v1567 = vpop.permute.xlu0 %1566
        %1568 = vrot.lane.b32.xlu0 %v1561, 120
        %v1569 = vpop.permute.xlu0 %1568
        %1570 = vrot.lane.b32.xlu0 %v1563, 120
        %v1571 = vpop.permute.xlu0 %1570
        %v1572 = vsel %vm1192, %v1565, %v1567
        %v1573 = vsel %vm1192, %v1569, %v1571
        %v1576 = vmul.f32 %v728, %v1572
        %v1577 = vmul.f32 %v732, %v1573
        %v1578 = vpack.c.bf16 %v1577, %v1576
        %1579 = vst [vmem:[#allocation6 + $0x40] sm:$0xff] %v1578
        %v1580 = vld [vmem:[#allocation2] sm:$0xfe]
        %v1581 = vld [vmem:[#allocation2 + $0x8] sm:$0xfe]
        %v1582 = vld [vmem:[#allocation2 + $0x10] sm:$0xff]
        %v1583 = vld [vmem:[#allocation2 + $0x18] sm:$0xff]
        %v1584 = vld [vmem:[#allocation2 + $0x20] sm:$0x1]
        %v1585 = vld [vmem:[#allocation2 + $0x28] sm:$0x1]
        %v1586 = vld [vmem:[#allocation14] sm:$0xfe]
        %v1587 = vld [vmem:[#allocation14 + $0x8] sm:$0xfe]
        %v1588 = vld [vmem:[#allocation14 + $0x10] sm:$0xff]
        %v1589 = vld [vmem:[#allocation14 + $0x18] sm:$0xff]
        %v1590 = vld [vmem:[#allocation14 + $0x20] sm:$0x1]
        %v1591 = vld [vmem:[#allocation14 + $0x28] sm:$0x1]
        %1592 = vrot.lane.b32.xlu0 %v1456, 120
        %v1593 = vpop.permute.xlu0 %1592
        %1594 = vrot.lane.b32.xlu0 %v1459, 120
        %v1595 = vpop.permute.xlu0 %1594
        %1596 = vrot.lane.b32.xlu0 %v1461, 120
        %v1597 = vpop.permute.xlu0 %1596
        %1598 = vrot.lane.b32.xlu0 %v1463, 120
        %v1599 = vpop.permute.xlu0 %1598
        %1600 = vrot.lane.b32.xlu0 %v1460, 120
        %v1601 = vpop.permute.xlu0 %1600
        %1602 = vrot.lane.b32.xlu0 %v1462, 120
        %v1603 = vpop.permute.xlu0 %1602
        %v1604 = vsel %vm1192, %v1593, %v1595
        %v1605 = vsel %vm1192, %v1597, %v1599
        %v1606 = vsel %vm1192, %v1601, %v1603
        %v1613 = vadd.f32 %v1580, %v1604
        %v1614 = vadd.f32 %v1581, %v1595
        %v1615 = vadd.f32 %v1582, %v1605
        %v1616 = vadd.f32 %v1583, %v1599
        %v1617 = vadd.f32 %v1584, %v1606
        %v1618 = vadd.f32 %v1585, %v1603
        %v1619 = vsub.f32 %v1613, %v1586
        %v1620 = vsub.f32 %v1614, %v1587
        %v1621 = vsub.f32 %v1615, %v1588
        %v1622 = vsub.f32 %v1616, %v1589
        %v1623 = vsub.f32 %v1617, %v1590
        %v1624 = vsub.f32 %v1618, %v1591
        %v1631 = vrot.slane %v1619, 1
        %v1632 = vrot.slane %v1621, 1
        %v1633 = vsel %vm1491, %v1631, %v1632
        %v1634 = vrot.slane %v1620, 1
        %v1635 = vrot.slane %v1622, 1
        %v1636 = vsel %vm1491, %v1634, %v1635
        %v1637 = vrot.slane %v1623, 1
        %v1638 = vsel %vm1491, %v1632, %v1637
        %v1639 = vrot.slane %v1624, 1
        %v1640 = vsel %vm1491, %v1635, %v1639
        %1641 = vrot.lane.b32.xlu0 %v1633, 112
        %v1642 = vpop.permute.xlu0 %1641
        %1643 = vrot.lane.b32.xlu0 %v1636, 112
        %v1644 = vpop.permute.xlu0 %1643
        %1645 = vrot.lane.b32.xlu0 %v1638, 112
        %v1646 = vpop.permute.xlu0 %1645
        %1647 = vrot.lane.b32.xlu0 %v1640, 112
        %v1648 = vpop.permute.xlu0 %1647
        %v1649 = vsel %vm1165, %v1642, %v1644
        %v1650 = vsel %vm1165, %v1646, %v1648
        %v1653 = vmul.f32 %v728, %v1649
        %v1654 = vmul.f32 %v732, %v1650
        %v1655 = vpack.c.bf16 %v1654, %v1653
        %1656 = vst [vmem:[#allocation6 + $0x48] sm:$0xff] %v1655
        %v1657 = vld [vmem:[#allocation2] sm:$0xfe]
        %v1658 = vld [vmem:[#allocation2 + $0x8] sm:$0xfe]
        %v1659 = vld [vmem:[#allocation2 + $0x10] sm:$0xff]
        %v1660 = vld [vmem:[#allocation2 + $0x18] sm:$0xff]
        %v1661 = vld [vmem:[#allocation2 + $0x20] sm:$0x1]
        %v1662 = vld [vmem:[#allocation2 + $0x28] sm:$0x1]
        %v1663 = vld [vmem:[#allocation14] sm:$0xfe]
        %v1664 = vld [vmem:[#allocation14 + $0x8] sm:$0xfe]
        %v1665 = vld [vmem:[#allocation14 + $0x10] sm:$0xff]
        %v1666 = vld [vmem:[#allocation14 + $0x18] sm:$0xff]
        %v1667 = vld [vmem:[#allocation14 + $0x20] sm:$0x1]
        %v1668 = vld [vmem:[#allocation14 + $0x28] sm:$0x1]
        %v1675 = vadd.f32 %v1657, %v1456
        %v1676 = vadd.f32 %v1658, %v1459
        %v1677 = vadd.f32 %v1659, %v1461
        %v1678 = vadd.f32 %v1660, %v1463
        %v1679 = vadd.f32 %v1661, %v1460
        %v1680 = vadd.f32 %v1662, %v1462
        %v1681 = vsub.f32 %v1675, %v1663
        %v1682 = vsub.f32 %v1676, %v1664
        %v1683 = vsub.f32 %v1677, %v1665
        %v1684 = vsub.f32 %v1678, %v1666
        %v1685 = vsub.f32 %v1679, %v1667
        %v1686 = vsub.f32 %v1680, %v1668
        %v1693 = vrot.slane %v1681, 1
        %v1694 = vrot.slane %v1683, 1
        %v1695 = vsel %vm1491, %v1693, %v1694
        %v1696 = vrot.slane %v1682, 1
        %v1697 = vrot.slane %v1684, 1
        %v1698 = vsel %vm1491, %v1696, %v1697
        %v1699 = vrot.slane %v1685, 1
        %v1700 = vsel %vm1491, %v1694, %v1699
        %v1701 = vrot.slane %v1686, 1
        %v1702 = vsel %vm1491, %v1697, %v1701
        %1703 = vrot.lane.b32.xlu0 %v1695, 104
        %v1704 = vpop.permute.xlu0 %1703
        %1705 = vrot.lane.b32.xlu0 %v1698, 104
        %v1706 = vpop.permute.xlu0 %1705
        %1707 = vrot.lane.b32.xlu0 %v1700, 104
        %v1708 = vpop.permute.xlu0 %1707
        %1709 = vrot.lane.b32.xlu0 %v1702, 104
        %v1710 = vpop.permute.xlu0 %1709
        %v1711 = vsel %vm1136, %v1704, %v1706
        %v1712 = vsel %vm1136, %v1708, %v1710
        %v1715 = vmul.f32 %v728, %v1711
        %v1716 = vmul.f32 %v732, %v1712
        %v1717 = vpack.c.bf16 %v1716, %v1715
        %1718 = vst [vmem:[#allocation6 + $0x50] sm:$0xff] %v1717
        %v1719 = vld [vmem:[#allocation2] sm:$0xfe]
        %v1720 = vld [vmem:[#allocation2 + $0x8] sm:$0xfe]
        %v1721 = vld [vmem:[#allocation2 + $0x10] sm:$0xff]
        %v1722 = vld [vmem:[#allocation2 + $0x18] sm:$0xff]
        %v1723 = vld [vmem:[#allocation2 + $0x20] sm:$0x1]
        %v1724 = vld [vmem:[#allocation2 + $0x28] sm:$0x1]
        %v1725 = vld [vmem:[#allocation14] sm:$0xfe]
        %v1726 = vld [vmem:[#allocation14 + $0x8] sm:$0xfe]
        %v1727 = vld [vmem:[#allocation14 + $0x10] sm:$0xff]
        %v1728 = vld [vmem:[#allocation14 + $0x18] sm:$0xff]
        %v1729 = vld [vmem:[#allocation14 + $0x20] sm:$0x1]
        %v1730 = vld [vmem:[#allocation14 + $0x28] sm:$0x1]
        %1731 = vrot.lane.b32.xlu0 %v1456, 8
        %v1732 = vpop.permute.xlu0 %1731
        %1733 = vrot.lane.b32.xlu0 %v1459, 8
        %v1734 = vpop.permute.xlu0 %1733
        %1735 = vrot.lane.b32.xlu0 %v1461, 8
        %v1736 = vpop.permute.xlu0 %1735
        %1737 = vrot.lane.b32.xlu0 %v1463, 8
        %v1738 = vpop.permute.xlu0 %1737
        %1739 = vrot.lane.b32.xlu0 %v1460, 8
        %v1740 = vpop.permute.xlu0 %1739
        %1741 = vrot.lane.b32.xlu0 %v1462, 8
        %v1742 = vpop.permute.xlu0 %1741
        %v1743 = vsel %vm1307, %v1732, %v1734
        %v1744 = vsel %vm1307, %v1736, %v1738
        %v1745 = vsel %vm1307, %v1740, %v1742
        %v1752 = vadd.f32 %v1719, %v1732
        %v1753 = vadd.f32 %v1720, %v1743
        %v1754 = vadd.f32 %v1721, %v1736
        %v1755 = vadd.f32 %v1722, %v1744
        %v1756 = vadd.f32 %v1723, %v1740
        %v1757 = vadd.f32 %v1724, %v1745
        %v1758 = vsub.f32 %v1752, %v1725
        %v1759 = vsub.f32 %v1753, %v1726
        %v1760 = vsub.f32 %v1754, %v1727
        %v1761 = vsub.f32 %v1755, %v1728
        %v1762 = vsub.f32 %v1756, %v1729
        %v1763 = vsub.f32 %v1757, %v1730
        %v1770 = vrot.slane %v1758, 1
        %v1771 = vrot.slane %v1760, 1
        %v1772 = vsel %vm1491, %v1770, %v1771
        %v1773 = vrot.slane %v1759, 1
        %v1774 = vrot.slane %v1761, 1
        %v1775 = vsel %vm1491, %v1773, %v1774
        %v1776 = vrot.slane %v1762, 1
        %v1777 = vsel %vm1491, %v1771, %v1776
        %v1778 = vrot.slane %v1763, 1
        %v1779 = vsel %vm1491, %v1774, %v1778
        %1780 = vrot.lane.b32.xlu0 %v1772, 96
        %v1781 = vpop.permute.xlu0 %1780
        %1782 = vrot.lane.b32.xlu0 %v1775, 96
        %v1783 = vpop.permute.xlu0 %1782
        %1784 = vrot.lane.b32.xlu0 %v1777, 96
        %v1785 = vpop.permute.xlu0 %1784
        %1786 = vrot.lane.b32.xlu0 %v1779, 96
        %v1787 = vpop.permute.xlu0 %1786
        %v1788 = vsel %vm1334, %v1781, %v1783
        %v1789 = vsel %vm1334, %v1785, %v1787
        %v1792 = vmul.f32 %v728, %v1788
        %v1793 = vmul.f32 %v732, %v1789
        %v1794 = vpack.c.bf16 %v1793, %v1792
        %1795 = vst [vmem:[#allocation6 + $0x58] sm:$0xff] %v1794
        %v1796 = vld [vmem:[#allocation2] sm:$0xfe]
        %v1797 = vld [vmem:[#allocation2 + $0x8] sm:$0xfe]
        %v1798 = vld [vmem:[#allocation2 + $0x10] sm:$0xff]
        %v1799 = vld [vmem:[#allocation2 + $0x18] sm:$0xff]
        %v1800 = vld [vmem:[#allocation2 + $0x20] sm:$0x1]
        %v1801 = vld [vmem:[#allocation2 + $0x28] sm:$0x1]
        %v1802 = vld [vmem:[#allocation14] sm:$0xfe]
        %v1803 = vld [vmem:[#allocation14 + $0x8] sm:$0xfe]
        %v1804 = vld [vmem:[#allocation14 + $0x10] sm:$0xff]
        %v1805 = vld [vmem:[#allocation14 + $0x18] sm:$0xff]
        %v1806 = vld [vmem:[#allocation14 + $0x20] sm:$0x1]
        %v1807 = vld [vmem:[#allocation14 + $0x28] sm:$0x1]
        %1808 = vrot.lane.b32.xlu0 %v1456, 16
        %v1809 = vpop.permute.xlu0 %1808
        %1810 = vrot.lane.b32.xlu0 %v1459, 16
        %v1811 = vpop.permute.xlu0 %1810
        %1812 = vrot.lane.b32.xlu0 %v1461, 16
        %v1813 = vpop.permute.xlu0 %1812
        %1814 = vrot.lane.b32.xlu0 %v1463, 16
        %v1815 = vpop.permute.xlu0 %1814
        %1816 = vrot.lane.b32.xlu0 %v1460, 16
        %v1817 = vpop.permute.xlu0 %1816
        %1818 = vrot.lane.b32.xlu0 %v1462, 16
        %v1819 = vpop.permute.xlu0 %1818
        %v1820 = vsel %vm1359, %v1809, %v1811
        %v1821 = vsel %vm1359, %v1813, %v1815
        %v1822 = vsel %vm1359, %v1817, %v1819
        %v1829 = vadd.f32 %v1796, %v1809
        %v1830 = vadd.f32 %v1797, %v1820
        %v1831 = vadd.f32 %v1798, %v1813
        %v1832 = vadd.f32 %v1799, %v1821
        %v1833 = vadd.f32 %v1800, %v1817
        %v1834 = vadd.f32 %v1801, %v1822
        %v1835 = vsub.f32 %v1829, %v1802
        %v1836 = vsub.f32 %v1830, %v1803
        %v1837 = vsub.f32 %v1831, %v1804
        %v1838 = vsub.f32 %v1832, %v1805
        %v1839 = vsub.f32 %v1833, %v1806
        %v1840 = vsub.f32 %v1834, %v1807
        %v1847 = vrot.slane %v1835, 1
        %v1848 = vrot.slane %v1837, 1
        %v1849 = vsel %vm1491, %v1847, %v1848
        %v1850 = vrot.slane %v1836, 1
        %v1851 = vrot.slane %v1838, 1
        %v1852 = vsel %vm1491, %v1850, %v1851
        %v1853 = vrot.slane %v1839, 1
        %v1854 = vsel %vm1491, %v1848, %v1853
        %v1855 = vrot.slane %v1840, 1
        %v1856 = vsel %vm1491, %v1851, %v1855
        %1857 = vrot.lane.b32.xlu0 %v1849, 88
        %v1858 = vpop.permute.xlu0 %1857
        %1859 = vrot.lane.b32.xlu0 %v1852, 88
        %v1860 = vpop.permute.xlu0 %1859
        %1861 = vrot.lane.b32.xlu0 %v1854, 88
        %v1862 = vpop.permute.xlu0 %1861
        %1863 = vrot.lane.b32.xlu0 %v1856, 88
        %v1864 = vpop.permute.xlu0 %1863
        %v1865 = vsel %vm1386, %v1858, %v1860
        %v1866 = vsel %vm1386, %v1862, %v1864
        %v1869 = vmul.f32 %v728, %v1865
        %v1870 = vmul.f32 %v732, %v1866
        %v1871 = vpack.c.bf16 %v1870, %v1869
        %1872 = vst [vmem:[#allocation6 + $0x60] sm:$0xff] %v1871
        %v1873 = vld [vmem:[#allocation2] sm:$0xfe]
        %v1874 = vld [vmem:[#allocation2 + $0x8] sm:$0xfe]
        %v1875 = vld [vmem:[#allocation2 + $0x10] sm:$0xff]
        %v1876 = vld [vmem:[#allocation2 + $0x18] sm:$0xff]
        %v1877 = vld [vmem:[#allocation2 + $0x20] sm:$0x1]
        %v1878 = vld [vmem:[#allocation2 + $0x28] sm:$0x1]
        %v1879 = vld [vmem:[#allocation14] sm:$0xfe]
        %v1880 = vld [vmem:[#allocation14 + $0x8] sm:$0xfe]
        %v1881 = vld [vmem:[#allocation14 + $0x10] sm:$0xff]
        %v1882 = vld [vmem:[#allocation14 + $0x18] sm:$0xff]
        %v1883 = vld [vmem:[#allocation14 + $0x20] sm:$0x1]
        %v1884 = vld [vmem:[#allocation14 + $0x28] sm:$0x1]
        %1885 = vrot.lane.b32.xlu0 %v1456, 24
        %v1886 = vpop.permute.xlu0 %1885
        %1887 = vrot.lane.b32.xlu0 %v1459, 24
        %v1888 = vpop.permute.xlu0 %1887
        %1889 = vrot.lane.b32.xlu0 %v1461, 24
        %v1890 = vpop.permute.xlu0 %1889
        %1891 = vrot.lane.b32.xlu0 %v1463, 24
        %v1892 = vpop.permute.xlu0 %1891
        %1893 = vrot.lane.b32.xlu0 %v1460, 24
        %v1894 = vpop.permute.xlu0 %1893
        %1895 = vrot.lane.b32.xlu0 %v1462, 24
        %v1896 = vpop.permute.xlu0 %1895
        %v1897 = vsel %vm1411, %v1886, %v1888
        %v1898 = vsel %vm1411, %v1890, %v1892
        %v1899 = vsel %vm1411, %v1894, %v1896
        %v1906 = vadd.f32 %v1873, %v1886
        %v1907 = vadd.f32 %v1874, %v1897
        %v1908 = vadd.f32 %v1875, %v1890
        %v1909 = vadd.f32 %v1876, %v1898
        %v1910 = vadd.f32 %v1877, %v1894
        %v1911 = vadd.f32 %v1878, %v1899
        %v1912 = vsub.f32 %v1906, %v1879
        %v1913 = vsub.f32 %v1907, %v1880
        %v1914 = vsub.f32 %v1908, %v1881
        %v1915 = vsub.f32 %v1909, %v1882
        %v1916 = vsub.f32 %v1910, %v1883
        %v1917 = vsub.f32 %v1911, %v1884
        %v1924 = vrot.slane %v1912, 1
        %v1925 = vrot.slane %v1914, 1
        %v1926 = vsel %vm1491, %v1924, %v1925
        %v1927 = vrot.slane %v1913, 1
        %v1928 = vrot.slane %v1915, 1
        %v1929 = vsel %vm1491, %v1927, %v1928
        %v1930 = vrot.slane %v1916, 1
        %v1931 = vsel %vm1491, %v1925, %v1930
        %v1932 = vrot.slane %v1917, 1
        %v1933 = vsel %vm1491, %v1928, %v1932
        %1934 = vrot.lane.b32.xlu0 %v1926, 80
        %v1935 = vpop.permute.xlu0 %1934
        %1936 = vrot.lane.b32.xlu0 %v1929, 80
        %v1937 = vpop.permute.xlu0 %1936
        %1938 = vrot.lane.b32.xlu0 %v1931, 80
        %v1939 = vpop.permute.xlu0 %1938
        %1940 = vrot.lane.b32.xlu0 %v1933, 80
        %v1941 = vpop.permute.xlu0 %1940
        %v1942 = vsel %vm1438, %v1935, %v1937
        %v1943 = vsel %vm1438, %v1939, %v1941
        %v1946 = vmul.f32 %v728, %v1942
        %v1947 = vmul.f32 %v732, %v1943
        %v1948 = vpack.c.bf16 %v1947, %v1946
        %1949 = vst [vmem:[#allocation6 + $0x68] sm:$0xff] %v1948
        %v1950 = vld [vmem:[#allocation2] sm:$0xfc]
        %v1951 = vld [vmem:[#allocation2 + $0x10] sm:$0xff]
        %v1952 = vld [vmem:[#allocation2 + $0x20] sm:$0x3]
        %v1953 = vld [vmem:[#allocation14] sm:$0xfc]
        %v1954 = vld [vmem:[#allocation14 + $0x10] sm:$0xff]
        %v1955 = vld [vmem:[#allocation14 + $0x20] sm:$0x3]
        %v1956 = vrot.slane %v1102, 1
        %v1957 = vrot.slane %v1104, 1
        %v1958 = vsel %vm1491, %v1956, %v1957
        %v1959 = vrot.slane %v1103, 1
        %v1960 = vrot.slane %v1105, 1
        %v1961 = vsel %vm1491, %v1959, %v1960
        %v1962 = vrot.slane %v1106, 1
        %v1963 = vsel %vm1491, %v1957, %v1962
        %v1964 = vrot.slane %v1107, 1
        %v1965 = vsel %vm1491, %v1960, %v1964
        %1966 = vrot.lane.b32.xlu0 %v1958, 104
        %v1967 = vpop.permute.xlu0 %1966
        %1968 = vrot.lane.b32.xlu0 %v1961, 104
        %v1969 = vpop.permute.xlu0 %1968
        %1970 = vrot.lane.b32.xlu0 %v1963, 104
        %v1971 = vpop.permute.xlu0 %1970
        %1972 = vrot.lane.b32.xlu0 %v1965, 104
        %v1973 = vpop.permute.xlu0 %1972
        %1974 = vrot.lane.b32.xlu0 %v1962, 104
        %v1975 = vpop.permute.xlu0 %1974
        %1976 = vrot.lane.b32.xlu0 %v1964, 104
        %v1977 = vpop.permute.xlu0 %1976
        %v1978 = vsel %vm1136, %v1967, %v1969
        %v1979 = vsel %vm1136, %v1971, %v1973
        %v1980 = vsel %vm1136, %v1975, %v1977
        %v1984 = vadd.f32 %v1950, %v1978
        %v1985 = vadd.f32 %v1951, %v1979
        %v1986 = vadd.f32 %v1952, %v1980
        %v1987 = vsub.f32 %v1984, %v1953
        %v1988 = vsub.f32 %v1985, %v1954
        %v1989 = vsub.f32 %v1986, %v1955
        %v1993 = vrot.slane %v1987, 2
        %v1994 = vrot.slane %v1988, 2
        %v1995 = vsel %vm1453, %v1993, %v1994
        %v1996 = vrot.slane %v1989, 2
        %v1997 = vsel %vm1453, %v1994, %v1996
        %v2000 = vmul.f32 %v728, %v1995
        %v2001 = vmul.f32 %v732, %v1997
        %v2002 = vpack.c.bf16 %v2001, %v2000
        %2003 = vst [vmem:[#allocation6 + $0x70] sm:$0xff] %v2002
        %v2004 = vld [vmem:[#allocation2] sm:$0xfc]
        %v2005 = vld [vmem:[#allocation2 + $0x8] sm:$0xfc]
        %v2006 = vld [vmem:[#allocation2 + $0x10] sm:$0xff]
        %v2007 = vld [vmem:[#allocation2 + $0x18] sm:$0xff]
        %v2008 = vld [vmem:[#allocation2 + $0x20] sm:$0x3]
        %v2009 = vld [vmem:[#allocation2 + $0x28] sm:$0x3]
        %v2010 = vld [vmem:[#allocation14] sm:$0xfc]
        %v2011 = vld [vmem:[#allocation14 + $0x8] sm:$0xfc]
        %v2012 = vld [vmem:[#allocation14 + $0x10] sm:$0xff]
        %v2013 = vld [vmem:[#allocation14 + $0x18] sm:$0xff]
        %v2014 = vld [vmem:[#allocation14 + $0x20] sm:$0x3]
        %v2015 = vld [vmem:[#allocation14 + $0x28] sm:$0x3]
        %2016 = vrot.lane.b32.xlu0 %v1958, 112
        %v2017 = vpop.permute.xlu0 %2016
        %2018 = vrot.lane.b32.xlu0 %v1961, 112
        %v2019 = vpop.permute.xlu0 %2018
        %2020 = vrot.lane.b32.xlu0 %v1963, 112
        %v2021 = vpop.permute.xlu0 %2020
        %2022 = vrot.lane.b32.xlu0 %v1965, 112
        %v2023 = vpop.permute.xlu0 %2022
        %2024 = vrot.lane.b32.xlu0 %v1962, 112
        %v2025 = vpop.permute.xlu0 %2024
        %2026 = vrot.lane.b32.xlu0 %v1964, 112
        %v2027 = vpop.permute.xlu0 %2026
        %v2028 = vsel %vm1165, %v2017, %v2019
        %v2029 = vsel %vm1165, %v2021, %v2023
        %v2030 = vsel %vm1165, %v2025, %v2027
        %v2037 = vadd.f32 %v2004, %v2028
        %v2038 = vadd.f32 %v2005, %v2019
        %v2039 = vadd.f32 %v2006, %v2029
        %v2040 = vadd.f32 %v2007, %v2023
        %v2041 = vadd.f32 %v2008, %v2030
        %v2042 = vadd.f32 %v2009, %v2027
        %v2043 = vsub.f32 %v2037, %v2010
        %v2044 = vsub.f32 %v2038, %v2011
        %v2045 = vsub.f32 %v2039, %v2012
        %v2046 = vsub.f32 %v2040, %v2013
        %v2047 = vsub.f32 %v2041, %v2014
        %v2048 = vsub.f32 %v2042, %v2015
        %v2055 = vrot.slane %v2043, 2
        %v2056 = vrot.slane %v2045, 2
        %v2057 = vsel %vm1453, %v2055, %v2056
        %v2058 = vrot.slane %v2044, 2
        %v2059 = vrot.slane %v2046, 2
        %v2060 = vsel %vm1453, %v2058, %v2059
        %v2061 = vrot.slane %v2047, 2
        %v2062 = vsel %vm1453, %v2056, %v2061
        %v2063 = vrot.slane %v2048, 2
        %v2064 = vsel %vm1453, %v2059, %v2063
        %2065 = vrot.lane.b32.xlu0 %v2057, 120
        %v2066 = vpop.permute.xlu0 %2065
        %2067 = vrot.lane.b32.xlu0 %v2060, 120
        %v2068 = vpop.permute.xlu0 %2067
        %2069 = vrot.lane.b32.xlu0 %v2062, 120
        %v2070 = vpop.permute.xlu0 %2069
        %2071 = vrot.lane.b32.xlu0 %v2064, 120
        %v2072 = vpop.permute.xlu0 %2071
        %v2073 = vsel %vm1192, %v2066, %v2068
        %v2074 = vsel %vm1192, %v2070, %v2072
        %v2077 = vmul.f32 %v728, %v2073
        %v2078 = vmul.f32 %v732, %v2074
        %v2079 = vpack.c.bf16 %v2078, %v2077
        %2080 = vst [vmem:[#allocation6 + $0x78] sm:$0xff] %v2079
        %v2081 = vld [vmem:[#allocation2] sm:$0xfc]
        %v2082 = vld [vmem:[#allocation2 + $0x8] sm:$0xfc]
        %v2083 = vld [vmem:[#allocation2 + $0x10] sm:$0xff]
        %v2084 = vld [vmem:[#allocation2 + $0x18] sm:$0xff]
        %v2085 = vld [vmem:[#allocation2 + $0x20] sm:$0x3]
        %v2086 = vld [vmem:[#allocation2 + $0x28] sm:$0x3]
        %v2087 = vld [vmem:[#allocation14] sm:$0xfc]
        %v2088 = vld [vmem:[#allocation14 + $0x8] sm:$0xfc]
        %v2089 = vld [vmem:[#allocation14 + $0x10] sm:$0xff]
        %v2090 = vld [vmem:[#allocation14 + $0x18] sm:$0xff]
        %v2091 = vld [vmem:[#allocation14 + $0x20] sm:$0x3]
        %v2092 = vld [vmem:[#allocation14 + $0x28] sm:$0x3]
        %2093 = vrot.lane.b32.xlu0 %v1958, 120
        %v2094 = vpop.permute.xlu0 %2093
        %2095 = vrot.lane.b32.xlu0 %v1961, 120
        %v2096 = vpop.permute.xlu0 %2095
        %2097 = vrot.lane.b32.xlu0 %v1963, 120
        %v2098 = vpop.permute.xlu0 %2097
        %2099 = vrot.lane.b32.xlu0 %v1965, 120
        %v2100 = vpop.permute.xlu0 %2099
        %2101 = vrot.lane.b32.xlu0 %v1962, 120
        %v2102 = vpop.permute.xlu0 %2101
        %2103 = vrot.lane.b32.xlu0 %v1964, 120
        %v2104 = vpop.permute.xlu0 %2103
        %v2105 = vsel %vm1192, %v2094, %v2096
        %v2106 = vsel %vm1192, %v2098, %v2100
        %v2107 = vsel %vm1192, %v2102, %v2104
        %v2114 = vadd.f32 %v2081, %v2105
        %v2115 = vadd.f32 %v2082, %v2096
        %v2116 = vadd.f32 %v2083, %v2106
        %v2117 = vadd.f32 %v2084, %v2100
        %v2118 = vadd.f32 %v2085, %v2107
        %v2119 = vadd.f32 %v2086, %v2104
        %v2120 = vsub.f32 %v2114, %v2087
        %v2121 = vsub.f32 %v2115, %v2088
        %v2122 = vsub.f32 %v2116, %v2089
        %v2123 = vsub.f32 %v2117, %v2090
        %v2124 = vsub.f32 %v2118, %v2091
        %v2125 = vsub.f32 %v2119, %v2092
        %v2132 = vrot.slane %v2120, 2
        %v2133 = vrot.slane %v2122, 2
        %v2134 = vsel %vm1453, %v2132, %v2133
        %v2135 = vrot.slane %v2121, 2
        %v2136 = vrot.slane %v2123, 2
        %v2137 = vsel %vm1453, %v2135, %v2136
        %v2138 = vrot.slane %v2124, 2
        %v2139 = vsel %vm1453, %v2133, %v2138
        %v2140 = vrot.slane %v2125, 2
        %v2141 = vsel %vm1453, %v2136, %v2140
        %2142 = vrot.lane.b32.xlu0 %v2134, 112
        %v2143 = vpop.permute.xlu0 %2142
        %2144 = vrot.lane.b32.xlu0 %v2137, 112
        %v2145 = vpop.permute.xlu0 %2144
        %2146 = vrot.lane.b32.xlu0 %v2139, 112
        %v2147 = vpop.permute.xlu0 %2146
        %2148 = vrot.lane.b32.xlu0 %v2141, 112
        %v2149 = vpop.permute.xlu0 %2148
        %v2150 = vsel %vm1165, %v2143, %v2145
        %v2151 = vsel %vm1165, %v2147, %v2149
        %v2154 = vmul.f32 %v728, %v2150
        %v2155 = vmul.f32 %v732, %v2151
        %v2156 = vpack.c.bf16 %v2155, %v2154
        %2157 = vst [vmem:[#allocation6 + $0x80] sm:$0xff] %v2156
        %v2158 = vld [vmem:[#allocation2] sm:$0xfc]
        %v2159 = vld [vmem:[#allocation2 + $0x8] sm:$0xfc]
        %v2160 = vld [vmem:[#allocation2 + $0x10] sm:$0xff]
        %v2161 = vld [vmem:[#allocation2 + $0x18] sm:$0xff]
        %v2162 = vld [vmem:[#allocation2 + $0x20] sm:$0x3]
        %v2163 = vld [vmem:[#allocation2 + $0x28] sm:$0x3]
        %v2164 = vld [vmem:[#allocation14] sm:$0xfc]
        %v2165 = vld [vmem:[#allocation14 + $0x8] sm:$0xfc]
        %v2166 = vld [vmem:[#allocation14 + $0x10] sm:$0xff]
        %v2167 = vld [vmem:[#allocation14 + $0x18] sm:$0xff]
        %v2168 = vld [vmem:[#allocation14 + $0x20] sm:$0x3]
        %v2169 = vld [vmem:[#allocation14 + $0x28] sm:$0x3]
        %v2176 = vadd.f32 %v2158, %v1958
        %v2177 = vadd.f32 %v2159, %v1961
        %v2178 = vadd.f32 %v2160, %v1963
        %v2179 = vadd.f32 %v2161, %v1965
        %v2180 = vadd.f32 %v2162, %v1962
        %v2181 = vadd.f32 %v2163, %v1964
        %v2182 = vsub.f32 %v2176, %v2164
        %v2183 = vsub.f32 %v2177, %v2165
        %v2184 = vsub.f32 %v2178, %v2166
        %v2185 = vsub.f32 %v2179, %v2167
        %v2186 = vsub.f32 %v2180, %v2168
        %v2187 = vsub.f32 %v2181, %v2169
        %v2194 = vrot.slane %v2182, 2
        %v2195 = vrot.slane %v2184, 2
        %v2196 = vsel %vm1453, %v2194, %v2195
        %v2197 = vrot.slane %v2183, 2
        %v2198 = vrot.slane %v2185, 2
        %v2199 = vsel %vm1453, %v2197, %v2198
        %v2200 = vrot.slane %v2186, 2
        %v2201 = vsel %vm1453, %v2195, %v2200
        %v2202 = vrot.slane %v2187, 2
        %v2203 = vsel %vm1453, %v2198, %v2202
        %2204 = vrot.lane.b32.xlu0 %v2196, 104
        %v2205 = vpop.permute.xlu0 %2204
        %2206 = vrot.lane.b32.xlu0 %v2199, 104
        %v2207 = vpop.permute.xlu0 %2206
        %2208 = vrot.lane.b32.xlu0 %v2201, 104
        %v2209 = vpop.permute.xlu0 %2208
        %2210 = vrot.lane.b32.xlu0 %v2203, 104
        %v2211 = vpop.permute.xlu0 %2210
        %v2212 = vsel %vm1136, %v2205, %v2207
        %v2213 = vsel %vm1136, %v2209, %v2211
        %v2216 = vmul.f32 %v728, %v2212
        %v2217 = vmul.f32 %v732, %v2213
        %v2218 = vpack.c.bf16 %v2217, %v2216
        %2219 = vst [vmem:[#allocation6 + $0x88] sm:$0xff] %v2218
        %v2220 = vld [vmem:[#allocation2] sm:$0xfc]
        %v2221 = vld [vmem:[#allocation2 + $0x8] sm:$0xfc]
        %v2222 = vld [vmem:[#allocation2 + $0x10] sm:$0xff]
        %v2223 = vld [vmem:[#allocation2 + $0x18] sm:$0xff]
        %v2224 = vld [vmem:[#allocation2 + $0x20] sm:$0x3]
        %v2225 = vld [vmem:[#allocation2 + $0x28] sm:$0x3]
        %v2226 = vld [vmem:[#allocation14] sm:$0xfc]
        %v2227 = vld [vmem:[#allocation14 + $0x8] sm:$0xfc]
        %v2228 = vld [vmem:[#allocation14 + $0x10] sm:$0xff]
        %v2229 = vld [vmem:[#allocation14 + $0x18] sm:$0xff]
        %v2230 = vld [vmem:[#allocation14 + $0x20] sm:$0x3]
        %v2231 = vld [vmem:[#allocation14 + $0x28] sm:$0x3]
        %2232 = vrot.lane.b32.xlu0 %v1958, 8
        %v2233 = vpop.permute.xlu0 %2232
        %2234 = vrot.lane.b32.xlu0 %v1961, 8
        %v2235 = vpop.permute.xlu0 %2234
        %2236 = vrot.lane.b32.xlu0 %v1963, 8
        %v2237 = vpop.permute.xlu0 %2236
        %2238 = vrot.lane.b32.xlu0 %v1965, 8
        %v2239 = vpop.permute.xlu0 %2238
        %2240 = vrot.lane.b32.xlu0 %v1962, 8
        %v2241 = vpop.permute.xlu0 %2240
        %2242 = vrot.lane.b32.xlu0 %v1964, 8
        %v2243 = vpop.permute.xlu0 %2242
        %v2244 = vsel %vm1307, %v2233, %v2235
        %v2245 = vsel %vm1307, %v2237, %v2239
        %v2246 = vsel %vm1307, %v2241, %v2243
        %v2253 = vadd.f32 %v2220, %v2233
        %v2254 = vadd.f32 %v2221, %v2244
        %v2255 = vadd.f32 %v2222, %v2237
        %v2256 = vadd.f32 %v2223, %v2245
        %v2257 = vadd.f32 %v2224, %v2241
        %v2258 = vadd.f32 %v2225, %v2246
        %v2259 = vsub.f32 %v2253, %v2226
        %v2260 = vsub.f32 %v2254, %v2227
        %v2261 = vsub.f32 %v2255, %v2228
        %v2262 = vsub.f32 %v2256, %v2229
        %v2263 = vsub.f32 %v2257, %v2230
        %v2264 = vsub.f32 %v2258, %v2231
        %v2271 = vrot.slane %v2259, 2
        %v2272 = vrot.slane %v2261, 2
        %v2273 = vsel %vm1453, %v2271, %v2272
        %v2274 = vrot.slane %v2260, 2
        %v2275 = vrot.slane %v2262, 2
        %v2276 = vsel %vm1453, %v2274, %v2275
        %v2277 = vrot.slane %v2263, 2
        %v2278 = vsel %vm1453, %v2272, %v2277
        %v2279 = vrot.slane %v2264, 2
        %v2280 = vsel %vm1453, %v2275, %v2279
        %2281 = vrot.lane.b32.xlu0 %v2273, 96
        %v2282 = vpop.permute.xlu0 %2281
        %2283 = vrot.lane.b32.xlu0 %v2276, 96
        %v2284 = vpop.permute.xlu0 %2283
        %2285 = vrot.lane.b32.xlu0 %v2278, 96
        %v2286 = vpop.permute.xlu0 %2285
        %2287 = vrot.lane.b32.xlu0 %v2280, 96
        %v2288 = vpop.permute.xlu0 %2287
        %v2289 = vsel %vm1334, %v2282, %v2284
        %v2290 = vsel %vm1334, %v2286, %v2288
        %v2293 = vmul.f32 %v728, %v2289
        %v2294 = vmul.f32 %v732, %v2290
        %v2295 = vpack.c.bf16 %v2294, %v2293
        %2296 = vst [vmem:[#allocation6 + $0x90] sm:$0xff] %v2295
        %v2297 = vld [vmem:[#allocation2] sm:$0xfc]
        %v2298 = vld [vmem:[#allocation2 + $0x8] sm:$0xfc]
        %v2299 = vld [vmem:[#allocation2 + $0x10] sm:$0xff]
        %v2300 = vld [vmem:[#allocation2 + $0x18] sm:$0xff]
        %v2301 = vld [vmem:[#allocation2 + $0x20] sm:$0x3]
        %v2302 = vld [vmem:[#allocation2 + $0x28] sm:$0x3]
        %v2303 = vld [vmem:[#allocation14] sm:$0xfc]
        %v2304 = vld [vmem:[#allocation14 + $0x8] sm:$0xfc]
        %v2305 = vld [vmem:[#allocation14 + $0x10] sm:$0xff]
        %v2306 = vld [vmem:[#allocation14 + $0x18] sm:$0xff]
        %v2307 = vld [vmem:[#allocation14 + $0x20] sm:$0x3]
        %v2308 = vld [vmem:[#allocation14 + $0x28] sm:$0x3]
        %2309 = vrot.lane.b32.xlu0 %v1958, 16
        %v2310 = vpop.permute.xlu0 %2309
        %2311 = vrot.lane.b32.xlu0 %v1961, 16
        %v2312 = vpop.permute.xlu0 %2311
        %2313 = vrot.lane.b32.xlu0 %v1963, 16
        %v2314 = vpop.permute.xlu0 %2313
        %2315 = vrot.lane.b32.xlu0 %v1965, 16
        %v2316 = vpop.permute.xlu0 %2315
        %2317 = vrot.lane.b32.xlu0 %v1962, 16
        %v2318 = vpop.permute.xlu0 %2317
        %2319 = vrot.lane.b32.xlu0 %v1964, 16
        %v2320 = vpop.permute.xlu0 %2319
        %v2321 = vsel %vm1359, %v2310, %v2312
        %v2322 = vsel %vm1359, %v2314, %v2316
        %v2323 = vsel %vm1359, %v2318, %v2320
        %v2330 = vadd.f32 %v2297, %v2310
        %v2331 = vadd.f32 %v2298, %v2321
        %v2332 = vadd.f32 %v2299, %v2314
        %v2333 = vadd.f32 %v2300, %v2322
        %v2334 = vadd.f32 %v2301, %v2318
        %v2335 = vadd.f32 %v2302, %v2323
        %v2336 = vsub.f32 %v2330, %v2303
        %v2337 = vsub.f32 %v2331, %v2304
        %v2338 = vsub.f32 %v2332, %v2305
        %v2339 = vsub.f32 %v2333, %v2306
        %v2340 = vsub.f32 %v2334, %v2307
        %v2341 = vsub.f32 %v2335, %v2308
        %v2348 = vrot.slane %v2336, 2
        %v2349 = vrot.slane %v2338, 2
        %v2350 = vsel %vm1453, %v2348, %v2349
        %v2351 = vrot.slane %v2337, 2
        %v2352 = vrot.slane %v2339, 2
        %v2353 = vsel %vm1453, %v2351, %v2352
        %v2354 = vrot.slane %v2340, 2
        %v2355 = vsel %vm1453, %v2349, %v2354
        %v2356 = vrot.slane %v2341, 2
        %v2357 = vsel %vm1453, %v2352, %v2356
        %2358 = vrot.lane.b32.xlu0 %v2350, 88
        %v2359 = vpop.permute.xlu0 %2358
        %2360 = vrot.lane.b32.xlu0 %v2353, 88
        %v2361 = vpop.permute.xlu0 %2360
        %2362 = vrot.lane.b32.xlu0 %v2355, 88
        %v2363 = vpop.permute.xlu0 %2362
        %2364 = vrot.lane.b32.xlu0 %v2357, 88
        %v2365 = vpop.permute.xlu0 %2364
        %v2366 = vsel %vm1386, %v2359, %v2361
        %v2367 = vsel %vm1386, %v2363, %v2365
        %v2370 = vmul.f32 %v728, %v2366
        %v2371 = vmul.f32 %v732, %v2367
        %v2372 = vpack.c.bf16 %v2371, %v2370
        %2373 = vst [vmem:[#allocation6 + $0x98] sm:$0xff] %v2372
        %v2374 = vld [vmem:[#allocation2] sm:$0xfc]
        %v2375 = vld [vmem:[#allocation2 + $0x8] sm:$0xfc]
        %v2376 = vld [vmem:[#allocation2 + $0x10] sm:$0xff]
        %v2377 = vld [vmem:[#allocation2 + $0x18] sm:$0xff]
        %v2378 = vld [vmem:[#allocation2 + $0x20] sm:$0x3]
        %v2379 = vld [vmem:[#allocation2 + $0x28] sm:$0x3]
        %v2380 = vld [vmem:[#allocation14] sm:$0xfc]
        %v2381 = vld [vmem:[#allocation14 + $0x8] sm:$0xfc]
        %v2382 = vld [vmem:[#allocation14 + $0x10] sm:$0xff]
        %v2383 = vld [vmem:[#allocation14 + $0x18] sm:$0xff]
        %v2384 = vld [vmem:[#allocation14 + $0x20] sm:$0x3]
        %v2385 = vld [vmem:[#allocation14 + $0x28] sm:$0x3]
        %2386 = vrot.lane.b32.xlu0 %v1958, 24
        %v2387 = vpop.permute.xlu0 %2386
        %2388 = vrot.lane.b32.xlu0 %v1961, 24
        %v2389 = vpop.permute.xlu0 %2388
        %2390 = vrot.lane.b32.xlu0 %v1963, 24
        %v2391 = vpop.permute.xlu0 %2390
        %2392 = vrot.lane.b32.xlu0 %v1965, 24
        %v2393 = vpop.permute.xlu0 %2392
        %2394 = vrot.lane.b32.xlu0 %v1962, 24
        %v2395 = vpop.permute.xlu0 %2394
        %2396 = vrot.lane.b32.xlu0 %v1964, 24
        %v2397 = vpop.permute.xlu0 %2396
        %v2398 = vsel %vm1411, %v2387, %v2389
        %v2399 = vsel %vm1411, %v2391, %v2393
        %v2400 = vsel %vm1411, %v2395, %v2397
        %v2407 = vadd.f32 %v2374, %v2387
        %v2408 = vadd.f32 %v2375, %v2398
        %v2409 = vadd.f32 %v2376, %v2391
        %v2410 = vadd.f32 %v2377, %v2399
        %v2411 = vadd.f32 %v2378, %v2395
        %v2412 = vadd.f32 %v2379, %v2400
        %v2413 = vsub.f32 %v2407, %v2380
        %v2414 = vsub.f32 %v2408, %v2381
        %v2415 = vsub.f32 %v2409, %v2382
        %v2416 = vsub.f32 %v2410, %v2383
        %v2417 = vsub.f32 %v2411, %v2384
        %v2418 = vsub.f32 %v2412, %v2385
        %v2425 = vrot.slane %v2413, 2
        %v2426 = vrot.slane %v2415, 2
        %v2427 = vsel %vm1453, %v2425, %v2426
        %v2428 = vrot.slane %v2414, 2
        %v2429 = vrot.slane %v2416, 2
        %v2430 = vsel %vm1453, %v2428, %v2429
        %v2431 = vrot.slane %v2417, 2
        %v2432 = vsel %vm1453, %v2426, %v2431
        %v2433 = vrot.slane %v2418, 2
        %v2434 = vsel %vm1453, %v2429, %v2433
        %2435 = vrot.lane.b32.xlu0 %v2427, 80
        %v2436 = vpop.permute.xlu0 %2435
        %2437 = vrot.lane.b32.xlu0 %v2430, 80
        %v2438 = vpop.permute.xlu0 %2437
        %2439 = vrot.lane.b32.xlu0 %v2432, 80
        %v2440 = vpop.permute.xlu0 %2439
        %2441 = vrot.lane.b32.xlu0 %v2434, 80
        %v2442 = vpop.permute.xlu0 %2441
        %v2443 = vsel %vm1438, %v2436, %v2438
        %v2444 = vsel %vm1438, %v2440, %v2442
        %v2447 = vmul.f32 %v728, %v2443
        %v2448 = vmul.f32 %v732, %v2444
        %v2449 = vpack.c.bf16 %v2448, %v2447
        %2450 = vst [vmem:[#allocation6 + $0xa0] sm:$0xff] %v2449
        %v2451 = vld [vmem:[#allocation2] sm:$0xf8]
        %v2452 = vld [vmem:[#allocation2 + $0x10] sm:$0xff]
        %v2453 = vld [vmem:[#allocation2 + $0x20] sm:$0x7]
        %v2454 = vld [vmem:[#allocation14] sm:$0xf8]
        %v2455 = vld [vmem:[#allocation14 + $0x10] sm:$0xff]
        %v2456 = vld [vmem:[#allocation14 + $0x20] sm:$0x7]
        %2457 = vrot.lane.b32.xlu0 %v1102, 104
        %v2458 = vpop.permute.xlu0 %2457
        %2459 = vrot.lane.b32.xlu0 %v1103, 104
        %v2460 = vpop.permute.xlu0 %2459
        %2461 = vrot.lane.b32.xlu0 %v1104, 104
        %v2462 = vpop.permute.xlu0 %2461
        %2463 = vrot.lane.b32.xlu0 %v1105, 104
        %v2464 = vpop.permute.xlu0 %2463
        %2465 = vrot.lane.b32.xlu0 %v1106, 104
        %v2466 = vpop.permute.xlu0 %2465
        %2467 = vrot.lane.b32.xlu0 %v1107, 104
        %v2468 = vpop.permute.xlu0 %2467
        %v2469 = vsel %vm1136, %v2458, %v2460
        %v2470 = vsel %vm1136, %v2462, %v2464
        %v2471 = vsel %vm1136, %v2466, %v2468
        %v2475 = vadd.f32 %v2451, %v2469
        %v2476 = vadd.f32 %v2452, %v2470
        %v2477 = vadd.f32 %v2453, %v2471
        %v2478 = vsub.f32 %v2475, %v2454
        %v2479 = vsub.f32 %v2476, %v2455
        %v2480 = vsub.f32 %v2477, %v2456
        %v2484 = vrot.slane %v2478, 3
        %v2485 = vrot.slane %v2479, 3
        %v2486 = vsel %vm1117, %v2484, %v2485
        %v2487 = vrot.slane %v2480, 3
        %v2488 = vsel %vm1117, %v2485, %v2487
        %v2491 = vmul.f32 %v728, %v2486
        %v2492 = vmul.f32 %v732, %v2488
        %v2493 = vpack.c.bf16 %v2492, %v2491
        %2494 = vst [vmem:[#allocation6 + $0xa8] sm:$0xff] %v2493
        %v2495 = vld [vmem:[#allocation2] sm:$0xf8]
        %v2496 = vld [vmem:[#allocation2 + $0x8] sm:$0xf8]
        %v2497 = vld [vmem:[#allocation2 + $0x10] sm:$0xff]
        %v2498 = vld [vmem:[#allocation2 + $0x18] sm:$0xff]
        %v2499 = vld [vmem:[#allocation2 + $0x20] sm:$0x7]
        %v2500 = vld [vmem:[#allocation2 + $0x28] sm:$0x7]
        %v2501 = vld [vmem:[#allocation14] sm:$0xf8]
        %v2502 = vld [vmem:[#allocation14 + $0x8] sm:$0xf8]
        %v2503 = vld [vmem:[#allocation14 + $0x10] sm:$0xff]
        %v2504 = vld [vmem:[#allocation14 + $0x18] sm:$0xff]
        %v2505 = vld [vmem:[#allocation14 + $0x20] sm:$0x7]
        %v2506 = vld [vmem:[#allocation14 + $0x28] sm:$0x7]
        %2507 = vrot.lane.b32.xlu0 %v1102, 112
        %v2508 = vpop.permute.xlu0 %2507
        %2509 = vrot.lane.b32.xlu0 %v1103, 112
        %v2510 = vpop.permute.xlu0 %2509
        %2511 = vrot.lane.b32.xlu0 %v1104, 112
        %v2512 = vpop.permute.xlu0 %2511
        %2513 = vrot.lane.b32.xlu0 %v1105, 112
        %v2514 = vpop.permute.xlu0 %2513
        %2515 = vrot.lane.b32.xlu0 %v1106, 112
        %v2516 = vpop.permute.xlu0 %2515
        %2517 = vrot.lane.b32.xlu0 %v1107, 112
        %v2518 = vpop.permute.xlu0 %2517
        %v2519 = vsel %vm1165, %v2508, %v2510
        %v2520 = vsel %vm1165, %v2512, %v2514
        %v2521 = vsel %vm1165, %v2516, %v2518
        %v2528 = vadd.f32 %v2495, %v2519
        %v2529 = vadd.f32 %v2496, %v2510
        %v2530 = vadd.f32 %v2497, %v2520
        %v2531 = vadd.f32 %v2498, %v2514
        %v2532 = vadd.f32 %v2499, %v2521
        %v2533 = vadd.f32 %v2500, %v2518
        %v2534 = vsub.f32 %v2528, %v2501
        %v2535 = vsub.f32 %v2529, %v2502
        %v2536 = vsub.f32 %v2530, %v2503
        %v2537 = vsub.f32 %v2531, %v2504
        %v2538 = vsub.f32 %v2532, %v2505
        %v2539 = vsub.f32 %v2533, %v2506
        %v2546 = vrot.slane %v2534, 3
        %v2547 = vrot.slane %v2536, 3
        %v2548 = vsel %vm1117, %v2546, %v2547
        %v2549 = vrot.slane %v2535, 3
        %v2550 = vrot.slane %v2537, 3
        %v2551 = vsel %vm1117, %v2549, %v2550
        %v2552 = vrot.slane %v2538, 3
        %v2553 = vsel %vm1117, %v2547, %v2552
        %v2554 = vrot.slane %v2539, 3
        %v2555 = vsel %vm1117, %v2550, %v2554
        %2556 = vrot.lane.b32.xlu0 %v2548, 120
        %v2557 = vpop.permute.xlu0 %2556
        %2558 = vrot.lane.b32.xlu0 %v2551, 120
        %v2559 = vpop.permute.xlu0 %2558
        %2560 = vrot.lane.b32.xlu0 %v2553, 120
        %v2561 = vpop.permute.xlu0 %2560
        %2562 = vrot.lane.b32.xlu0 %v2555, 120
        %v2563 = vpop.permute.xlu0 %2562
        %v2564 = vsel %vm1192, %v2557, %v2559
        %v2565 = vsel %vm1192, %v2561, %v2563
        %v2568 = vmul.f32 %v728, %v2564
        %v2569 = vmul.f32 %v732, %v2565
        %v2570 = vpack.c.bf16 %v2569, %v2568
        %2571 = vst [vmem:[#allocation6 + $0xb0] sm:$0xff] %v2570
        %v2572 = vld [vmem:[#allocation2] sm:$0xf8]
        %v2573 = vld [vmem:[#allocation2 + $0x8] sm:$0xf8]
        %v2574 = vld [vmem:[#allocation2 + $0x10] sm:$0xff]
        %v2575 = vld [vmem:[#allocation2 + $0x18] sm:$0xff]
        %v2576 = vld [vmem:[#allocation2 + $0x20] sm:$0x7]
        %v2577 = vld [vmem:[#allocation2 + $0x28] sm:$0x7]
        %v2578 = vld [vmem:[#allocation14] sm:$0xf8]
        %v2579 = vld [vmem:[#allocation14 + $0x8] sm:$0xf8]
        %v2580 = vld [vmem:[#allocation14 + $0x10] sm:$0xff]
        %v2581 = vld [vmem:[#allocation14 + $0x18] sm:$0xff]
        %v2582 = vld [vmem:[#allocation14 + $0x20] sm:$0x7]
        %v2583 = vld [vmem:[#allocation14 + $0x28] sm:$0x7]
        %2584 = vrot.lane.b32.xlu0 %v1102, 120
        %v2585 = vpop.permute.xlu0 %2584
        %2586 = vrot.lane.b32.xlu0 %v1103, 120
        %v2587 = vpop.permute.xlu0 %2586
        %2588 = vrot.lane.b32.xlu0 %v1104, 120
        %v2589 = vpop.permute.xlu0 %2588
        %2590 = vrot.lane.b32.xlu0 %v1105, 120
        %v2591 = vpop.permute.xlu0 %2590
        %2592 = vrot.lane.b32.xlu0 %v1106, 120
        %v2593 = vpop.permute.xlu0 %2592
        %2594 = vrot.lane.b32.xlu0 %v1107, 120
        %v2595 = vpop.permute.xlu0 %2594
        %v2596 = vsel %vm1192, %v2585, %v2587
        %v2597 = vsel %vm1192, %v2589, %v2591
        %v2598 = vsel %vm1192, %v2593, %v2595
        %v2605 = vadd.f32 %v2572, %v2596
        %v2606 = vadd.f32 %v2573, %v2587
        %v2607 = vadd.f32 %v2574, %v2597
        %v2608 = vadd.f32 %v2575, %v2591
        %v2609 = vadd.f32 %v2576, %v2598
        %v2610 = vadd.f32 %v2577, %v2595
        %v2611 = vsub.f32 %v2605, %v2578
        %v2612 = vsub.f32 %v2606, %v2579
        %v2613 = vsub.f32 %v2607, %v2580
        %v2614 = vsub.f32 %v2608, %v2581
        %v2615 = vsub.f32 %v2609, %v2582
        %v2616 = vsub.f32 %v2610, %v2583
        %v2623 = vrot.slane %v2611, 3
        %v2624 = vrot.slane %v2613, 3
        %v2625 = vsel %vm1117, %v2623, %v2624
        %v2626 = vrot.slane %v2612, 3
        %v2627 = vrot.slane %v2614, 3
        %v2628 = vsel %vm1117, %v2626, %v2627
        %v2629 = vrot.slane %v2615, 3
        %v2630 = vsel %vm1117, %v2624, %v2629
        %v2631 = vrot.slane %v2616, 3
        %v2632 = vsel %vm1117, %v2627, %v2631
        %2633 = vrot.lane.b32.xlu0 %v2625, 112
        %v2634 = vpop.permute.xlu0 %2633
        %2635 = vrot.lane.b32.xlu0 %v2628, 112
        %v2636 = vpop.permute.xlu0 %2635
        %2637 = vrot.lane.b32.xlu0 %v2630, 112
        %v2638 = vpop.permute.xlu0 %2637
        %2639 = vrot.lane.b32.xlu0 %v2632, 112
        %v2640 = vpop.permute.xlu0 %2639
        %v2641 = vsel %vm1165, %v2634, %v2636
        %v2642 = vsel %vm1165, %v2638, %v2640
        %v2645 = vmul.f32 %v728, %v2641
        %v2646 = vmul.f32 %v732, %v2642
        %v2647 = vpack.c.bf16 %v2646, %v2645
        %2648 = vst [vmem:[#allocation6 + $0xb8] sm:$0xff] %v2647
        %v2649 = vld [vmem:[#allocation2] sm:$0xf8]
        %v2650 = vld [vmem:[#allocation2 + $0x8] sm:$0xf8]
        %v2651 = vld [vmem:[#allocation2 + $0x10] sm:$0xff]
        %v2652 = vld [vmem:[#allocation2 + $0x18] sm:$0xff]
        %v2653 = vld [vmem:[#allocation2 + $0x20] sm:$0x7]
        %v2654 = vld [vmem:[#allocation2 + $0x28] sm:$0x7]
        %v2655 = vld [vmem:[#allocation14] sm:$0xf8]
        %v2656 = vld [vmem:[#allocation14 + $0x8] sm:$0xf8]
        %v2657 = vld [vmem:[#allocation14 + $0x10] sm:$0xff]
        %v2658 = vld [vmem:[#allocation14 + $0x18] sm:$0xff]
        %v2659 = vld [vmem:[#allocation14 + $0x20] sm:$0x7]
        %v2660 = vld [vmem:[#allocation14 + $0x28] sm:$0x7]
        %v2661 = vadd.f32 %v2649, %v1102
        %v2662 = vadd.f32 %v2650, %v1103
        %v2663 = vadd.f32 %v2651, %v1104
        %v2664 = vadd.f32 %v2652, %v1105
        %v2665 = vadd.f32 %v2653, %v1106
        %v2666 = vadd.f32 %v2654, %v1107
        %v2667 = vsub.f32 %v2661, %v2655
        %v2668 = vsub.f32 %v2662, %v2656
        %v2669 = vsub.f32 %v2663, %v2657
        %v2670 = vsub.f32 %v2664, %v2658
        %v2671 = vsub.f32 %v2665, %v2659
        %v2672 = vsub.f32 %v2666, %v2660
        %v2679 = vrot.slane %v2667, 3
        %v2680 = vrot.slane %v2669, 3
        %v2681 = vsel %vm1117, %v2679, %v2680
        %v2682 = vrot.slane %v2668, 3
        %v2683 = vrot.slane %v2670, 3
        %v2684 = vsel %vm1117, %v2682, %v2683
        %v2685 = vrot.slane %v2671, 3
        %v2686 = vsel %vm1117, %v2680, %v2685
        %v2687 = vrot.slane %v2672, 3
        %v2688 = vsel %vm1117, %v2683, %v2687
        %2689 = vrot.lane.b32.xlu0 %v2681, 104
        %v2690 = vpop.permute.xlu0 %2689
        %2691 = vrot.lane.b32.xlu0 %v2684, 104
        %v2692 = vpop.permute.xlu0 %2691
        %2693 = vrot.lane.b32.xlu0 %v2686, 104
        %v2694 = vpop.permute.xlu0 %2693
        %2695 = vrot.lane.b32.xlu0 %v2688, 104
        %v2696 = vpop.permute.xlu0 %2695
        %v2697 = vsel %vm1136, %v2690, %v2692
        %v2698 = vsel %vm1136, %v2694, %v2696
        %v2701 = vmul.f32 %v728, %v2697
        %v2702 = vmul.f32 %v732, %v2698
        %v2703 = vpack.c.bf16 %v2702, %v2701
        %2704 = vst [vmem:[#allocation6 + $0xc0] sm:$0xff] %v2703
        %v2705 = vld [vmem:[#allocation2] sm:$0xf8]
        %v2706 = vld [vmem:[#allocation2 + $0x8] sm:$0xf8]
        %v2707 = vld [vmem:[#allocation2 + $0x10] sm:$0xff]
        %v2708 = vld [vmem:[#allocation2 + $0x18] sm:$0xff]
        %v2709 = vld [vmem:[#allocation2 + $0x20] sm:$0x7]
        %v2710 = vld [vmem:[#allocation2 + $0x28] sm:$0x7]
        %v2711 = vld [vmem:[#allocation14] sm:$0xf8]
        %v2712 = vld [vmem:[#allocation14 + $0x8] sm:$0xf8]
        %v2713 = vld [vmem:[#allocation14 + $0x10] sm:$0xff]
        %v2714 = vld [vmem:[#allocation14 + $0x18] sm:$0xff]
        %v2715 = vld [vmem:[#allocation14 + $0x20] sm:$0x7]
        %v2716 = vld [vmem:[#allocation14 + $0x28] sm:$0x7]
        %2717 = vrot.lane.b32.xlu0 %v1102, 8
        %v2718 = vpop.permute.xlu0 %2717
        %2719 = vrot.lane.b32.xlu0 %v1103, 8
        %v2720 = vpop.permute.xlu0 %2719
        %2721 = vrot.lane.b32.xlu0 %v1104, 8
        %v2722 = vpop.permute.xlu0 %2721
        %2723 = vrot.lane.b32.xlu0 %v1105, 8
        %v2724 = vpop.permute.xlu0 %2723
        %2725 = vrot.lane.b32.xlu0 %v1106, 8
        %v2726 = vpop.permute.xlu0 %2725
        %2727 = vrot.lane.b32.xlu0 %v1107, 8
        %v2728 = vpop.permute.xlu0 %2727
        %v2729 = vsel %vm1307, %v2718, %v2720
        %v2730 = vsel %vm1307, %v2722, %v2724
        %v2731 = vsel %vm1307, %v2726, %v2728
        %v2738 = vadd.f32 %v2705, %v2718
        %v2739 = vadd.f32 %v2706, %v2729
        %v2740 = vadd.f32 %v2707, %v2722
        %v2741 = vadd.f32 %v2708, %v2730
        %v2742 = vadd.f32 %v2709, %v2726
        %v2743 = vadd.f32 %v2710, %v2731
        %v2744 = vsub.f32 %v2738, %v2711
        %v2745 = vsub.f32 %v2739, %v2712
        %v2746 = vsub.f32 %v2740, %v2713
        %v2747 = vsub.f32 %v2741, %v2714
        %v2748 = vsub.f32 %v2742, %v2715
        %v2749 = vsub.f32 %v2743, %v2716
        %v2756 = vrot.slane %v2744, 3
        %v2757 = vrot.slane %v2746, 3
        %v2758 = vsel %vm1117, %v2756, %v2757
        %v2759 = vrot.slane %v2745, 3
        %v2760 = vrot.slane %v2747, 3
        %v2761 = vsel %vm1117, %v2759, %v2760
        %v2762 = vrot.slane %v2748, 3
        %v2763 = vsel %vm1117, %v2757, %v2762
        %v2764 = vrot.slane %v2749, 3
        %v2765 = vsel %vm1117, %v2760, %v2764
        %2766 = vrot.lane.b32.xlu0 %v2758, 96
        %v2767 = vpop.permute.xlu0 %2766
        %2768 = vrot.lane.b32.xlu0 %v2761, 96
        %v2769 = vpop.permute.xlu0 %2768
        %2770 = vrot.lane.b32.xlu0 %v2763, 96
        %v2771 = vpop.permute.xlu0 %2770
        %2772 = vrot.lane.b32.xlu0 %v2765, 96
        %v2773 = vpop.permute.xlu0 %2772
        %v2774 = vsel %vm1334, %v2767, %v2769
        %v2775 = vsel %vm1334, %v2771, %v2773
        %v2778 = vmul.f32 %v728, %v2774
        %v2779 = vmul.f32 %v732, %v2775
        %v2780 = vpack.c.bf16 %v2779, %v2778
        %2781 = vst [vmem:[#allocation6 + $0xc8] sm:$0xff] %v2780
        %v2782 = vld [vmem:[#allocation2] sm:$0xf8]
        %v2783 = vld [vmem:[#allocation2 + $0x8] sm:$0xf8]
        %v2784 = vld [vmem:[#allocation2 + $0x10] sm:$0xff]
        %v2785 = vld [vmem:[#allocation2 + $0x18] sm:$0xff]
        %v2786 = vld [vmem:[#allocation2 + $0x20] sm:$0x7]
        %v2787 = vld [vmem:[#allocation2 + $0x28] sm:$0x7]
        %v2788 = vld [vmem:[#allocation14] sm:$0xf8]
        %v2789 = vld [vmem:[#allocation14 + $0x8] sm:$0xf8]
        %v2790 = vld [vmem:[#allocation14 + $0x10] sm:$0xff]
        %v2791 = vld [vmem:[#allocation14 + $0x18] sm:$0xff]
        %v2792 = vld [vmem:[#allocation14 + $0x20] sm:$0x7]
        %v2793 = vld [vmem:[#allocation14 + $0x28] sm:$0x7]
        %2794 = vrot.lane.b32.xlu0 %v1102, 16
        %v2795 = vpop.permute.xlu0 %2794
        %2796 = vrot.lane.b32.xlu0 %v1103, 16
        %v2797 = vpop.permute.xlu0 %2796
        %2798 = vrot.lane.b32.xlu0 %v1104, 16
        %v2799 = vpop.permute.xlu0 %2798
        %2800 = vrot.lane.b32.xlu0 %v1105, 16
        %v2801 = vpop.permute.xlu0 %2800
        %2802 = vrot.lane.b32.xlu0 %v1106, 16
        %v2803 = vpop.permute.xlu0 %2802
        %2804 = vrot.lane.b32.xlu0 %v1107, 16
        %v2805 = vpop.permute.xlu0 %2804
        %v2806 = vsel %vm1359, %v2795, %v2797
        %v2807 = vsel %vm1359, %v2799, %v2801
        %v2808 = vsel %vm1359, %v2803, %v2805
        %v2815 = vadd.f32 %v2782, %v2795
        %v2816 = vadd.f32 %v2783, %v2806
        %v2817 = vadd.f32 %v2784, %v2799
        %v2818 = vadd.f32 %v2785, %v2807
        %v2819 = vadd.f32 %v2786, %v2803
        %v2820 = vadd.f32 %v2787, %v2808
        %v2821 = vsub.f32 %v2815, %v2788
        %v2822 = vsub.f32 %v2816, %v2789
        %v2823 = vsub.f32 %v2817, %v2790
        %v2824 = vsub.f32 %v2818, %v2791
        %v2825 = vsub.f32 %v2819, %v2792
        %v2826 = vsub.f32 %v2820, %v2793
        %v2833 = vrot.slane %v2821, 3
        %v2834 = vrot.slane %v2823, 3
        %v2835 = vsel %vm1117, %v2833, %v2834
        %v2836 = vrot.slane %v2822, 3
        %v2837 = vrot.slane %v2824, 3
        %v2838 = vsel %vm1117, %v2836, %v2837
        %v2839 = vrot.slane %v2825, 3
        %v2840 = vsel %vm1117, %v2834, %v2839
        %v2841 = vrot.slane %v2826, 3
        %v2842 = vsel %vm1117, %v2837, %v2841
        %2843 = vrot.lane.b32.xlu0 %v2835, 88
        %v2844 = vpop.permute.xlu0 %2843
        %2845 = vrot.lane.b32.xlu0 %v2838, 88
        %v2846 = vpop.permute.xlu0 %2845
        %2847 = vrot.lane.b32.xlu0 %v2840, 88
        %v2848 = vpop.permute.xlu0 %2847
        %2849 = vrot.lane.b32.xlu0 %v2842, 88
        %v2850 = vpop.permute.xlu0 %2849
        %v2851 = vsel %vm1386, %v2844, %v2846
        %v2852 = vsel %vm1386, %v2848, %v2850
        %v2855 = vmul.f32 %v728, %v2851
        %v2856 = vmul.f32 %v732, %v2852
        %v2857 = vpack.c.bf16 %v2856, %v2855
        %2858 = vst [vmem:[#allocation6 + $0xd0] sm:$0xff] %v2857
        %v2859 = vld [vmem:[#allocation2] sm:$0xf8]
        %v2860 = vld [vmem:[#allocation2 + $0x8] sm:$0xf8]
        %v2861 = vld [vmem:[#allocation2 + $0x10] sm:$0xff]
        %v2862 = vld [vmem:[#allocation2 + $0x18] sm:$0xff]
        %v2863 = vld [vmem:[#allocation2 + $0x20] sm:$0x7]
        %v2864 = vld [vmem:[#allocation2 + $0x28] sm:$0x7]
        %v2865 = vld [vmem:[#allocation14] sm:$0xf8]
        %v2866 = vld [vmem:[#allocation14 + $0x8] sm:$0xf8]
        %v2867 = vld [vmem:[#allocation14 + $0x10] sm:$0xff]
        %v2868 = vld [vmem:[#allocation14 + $0x18] sm:$0xff]
        %v2869 = vld [vmem:[#allocation14 + $0x20] sm:$0x7]
        %v2870 = vld [vmem:[#allocation14 + $0x28] sm:$0x7]
        %2871 = vrot.lane.b32.xlu0 %v1102, 24
        %v2872 = vpop.permute.xlu0 %2871
        %2873 = vrot.lane.b32.xlu0 %v1103, 24
        %v2874 = vpop.permute.xlu0 %2873
        %2875 = vrot.lane.b32.xlu0 %v1104, 24
        %v2876 = vpop.permute.xlu0 %2875
        %2877 = vrot.lane.b32.xlu0 %v1105, 24
        %v2878 = vpop.permute.xlu0 %2877
        %2879 = vrot.lane.b32.xlu0 %v1106, 24
        %v2880 = vpop.permute.xlu0 %2879
        %2881 = vrot.lane.b32.xlu0 %v1107, 24
        %v2882 = vpop.permute.xlu0 %2881
        %v2883 = vsel %vm1411, %v2872, %v2874
        %v2884 = vsel %vm1411, %v2876, %v2878
        %v2885 = vsel %vm1411, %v2880, %v2882
        %v2892 = vadd.f32 %v2859, %v2872
        %v2893 = vadd.f32 %v2860, %v2883
        %v2894 = vadd.f32 %v2861, %v2876
        %v2895 = vadd.f32 %v2862, %v2884
        %v2896 = vadd.f32 %v2863, %v2880
        %v2897 = vadd.f32 %v2864, %v2885
        %v2898 = vsub.f32 %v2892, %v2865
        %v2899 = vsub.f32 %v2893, %v2866
        %v2900 = vsub.f32 %v2894, %v2867
        %v2901 = vsub.f32 %v2895, %v2868
        %v2902 = vsub.f32 %v2896, %v2869
        %v2903 = vsub.f32 %v2897, %v2870
        %v2910 = vrot.slane %v2898, 3
        %v2911 = vrot.slane %v2900, 3
        %v2912 = vsel %vm1117, %v2910, %v2911
        %v2913 = vrot.slane %v2899, 3
        %v2914 = vrot.slane %v2901, 3
        %v2915 = vsel %vm1117, %v2913, %v2914
        %v2916 = vrot.slane %v2902, 3
        %v2917 = vsel %vm1117, %v2911, %v2916
        %v2918 = vrot.slane %v2903, 3
        %v2919 = vsel %vm1117, %v2914, %v2918
        %2920 = vrot.lane.b32.xlu0 %v2912, 80
        %v2921 = vpop.permute.xlu0 %2920
        %2922 = vrot.lane.b32.xlu0 %v2915, 80
        %v2923 = vpop.permute.xlu0 %2922
        %2924 = vrot.lane.b32.xlu0 %v2917, 80
        %v2925 = vpop.permute.xlu0 %2924
        %2926 = vrot.lane.b32.xlu0 %v2919, 80
        %v2927 = vpop.permute.xlu0 %2926
        %v2928 = vsel %vm1438, %v2921, %v2923
        %v2929 = vsel %vm1438, %v2925, %v2927
        %v2932 = vmul.f32 %v728, %v2928
        %v2933 = vmul.f32 %v732, %v2929
        %v2934 = vpack.c.bf16 %v2933, %v2932
        %2935 = vst [vmem:[#allocation6 + $0xd8] sm:$0xff] %v2934
        %v2936 = vld [vmem:[#allocation2] sm:$0xf0]
        %v2937 = vld [vmem:[#allocation2 + $0x10] sm:$0xff]
        %v2938 = vld [vmem:[#allocation2 + $0x20] sm:$0xf]
        %v2939 = vld [vmem:[#allocation14] sm:$0xf0]
        %v2940 = vld [vmem:[#allocation14 + $0x10] sm:$0xff]
        %v2941 = vld [vmem:[#allocation14 + $0x20] sm:$0xf]
        %vm2942 = vcmask 1040384
        %v2943 = vrot.slane %v1102, 7
        %v2944 = vrot.slane %v1103, 7
        %v2945 = vrot.slane %v1104, 7
        %v2946 = vsel %vm2942, %v2943, %v2945
        %v2947 = vrot.slane %v1105, 7
        %v2948 = vsel %vm2942, %v2944, %v2947
        %v2949 = vrot.slane %v1106, 7
        %v2950 = vsel %vm2942, %v2945, %v2949
        %v2951 = vrot.slane %v1107, 7
        %v2952 = vsel %vm2942, %v2947, %v2951
        %2953 = vrot.lane.b32.xlu0 %v2943, 104
        %v2954 = vpop.permute.xlu0 %2953
        %2955 = vrot.lane.b32.xlu0 %v2944, 104
        %v2956 = vpop.permute.xlu0 %2955
        %2957 = vrot.lane.b32.xlu0 %v2946, 104
        %v2958 = vpop.permute.xlu0 %2957
        %2959 = vrot.lane.b32.xlu0 %v2948, 104
        %v2960 = vpop.permute.xlu0 %2959
        %2961 = vrot.lane.b32.xlu0 %v2950, 104
        %v2962 = vpop.permute.xlu0 %2961
        %2963 = vrot.lane.b32.xlu0 %v2952, 104
        %v2964 = vpop.permute.xlu0 %2963
        %v2965 = vsel %vm1136, %v2954, %v2956
        %v2966 = vsel %vm1136, %v2958, %v2960
        %v2967 = vsel %vm1136, %v2962, %v2964
        %v2971 = vadd.f32 %v2936, %v2965
        %v2972 = vadd.f32 %v2937, %v2966
        %v2973 = vadd.f32 %v2938, %v2967
        %v2974 = vsub.f32 %v2971, %v2939
        %v2975 = vsub.f32 %v2972, %v2940
        %v2976 = vsub.f32 %v2973, %v2941
        %vm2980 = vcmask 1043456
        %v2981 = vrot.slane %v2974, 4
        %v2982 = vrot.slane %v2975, 4
        %v2983 = vsel %vm2980, %v2981, %v2982
        %v2984 = vrot.slane %v2976, 4
        %v2985 = vsel %vm2980, %v2982, %v2984
        %v2988 = vmul.f32 %v728, %v2983
        %v2989 = vmul.f32 %v732, %v2985
        %v2990 = vpack.c.bf16 %v2989, %v2988
        %2991 = vst [vmem:[#allocation6 + $0xe0] sm:$0xff] %v2990
        %v2992 = vld [vmem:[#allocation2] sm:$0xf0]
        %v2993 = vld [vmem:[#allocation2 + $0x8] sm:$0xf0]
        %v2994 = vld [vmem:[#allocation2 + $0x10] sm:$0xff]
        %v2995 = vld [vmem:[#allocation2 + $0x18] sm:$0xff]
        %v2996 = vld [vmem:[#allocation2 + $0x20] sm:$0xf]
        %v2997 = vld [vmem:[#allocation2 + $0x28] sm:$0xf]
        %v2998 = vld [vmem:[#allocation14] sm:$0xf0]
        %v2999 = vld [vmem:[#allocation14 + $0x8] sm:$0xf0]
        %v3000 = vld [vmem:[#allocation14 + $0x10] sm:$0xff]
        %v3001 = vld [vmem:[#allocation14 + $0x18] sm:$0xff]
        %v3002 = vld [vmem:[#allocation14 + $0x20] sm:$0xf]
        %v3003 = vld [vmem:[#allocation14 + $0x28] sm:$0xf]
        %3004 = vrot.lane.b32.xlu0 %v2943, 112
        %v3005 = vpop.permute.xlu0 %3004
        %3006 = vrot.lane.b32.xlu0 %v2944, 112
        %v3007 = vpop.permute.xlu0 %3006
        %3008 = vrot.lane.b32.xlu0 %v2946, 112
        %v3009 = vpop.permute.xlu0 %3008
        %3010 = vrot.lane.b32.xlu0 %v2948, 112
        %v3011 = vpop.permute.xlu0 %3010
        %3012 = vrot.lane.b32.xlu0 %v2950, 112
        %v3013 = vpop.permute.xlu0 %3012
        %3014 = vrot.lane.b32.xlu0 %v2952, 112
        %v3015 = vpop.permute.xlu0 %3014
        %v3016 = vsel %vm1165, %v3005, %v3007
        %v3017 = vsel %vm1165, %v3009, %v3011
        %v3018 = vsel %vm1165, %v3013, %v3015
        %v3025 = vadd.f32 %v2992, %v3016
        %v3026 = vadd.f32 %v2993, %v3007
        %v3027 = vadd.f32 %v2994, %v3017
        %v3028 = vadd.f32 %v2995, %v3011
        %v3029 = vadd.f32 %v2996, %v3018
        %v3030 = vadd.f32 %v2997, %v3015
        %v3031 = vsub.f32 %v3025, %v2998
        %v3032 = vsub.f32 %v3026, %v2999
        %v3033 = vsub.f32 %v3027, %v3000
        %v3034 = vsub.f32 %v3028, %v3001
        %v3035 = vsub.f32 %v3029, %v3002
        %v3036 = vsub.f32 %v3030, %v3003
        %v3043 = vrot.slane %v3031, 4
        %v3044 = vrot.slane %v3033, 4
        %v3045 = vsel %vm2980, %v3043, %v3044
        %v3046 = vrot.slane %v3032, 4
        %v3047 = vrot.slane %v3034, 4
        %v3048 = vsel %vm2980, %v3046, %v3047
        %v3049 = vrot.slane %v3035, 4
        %v3050 = vsel %vm2980, %v3044, %v3049
        %v3051 = vrot.slane %v3036, 4
        %v3052 = vsel %vm2980, %v3047, %v3051
        %3053 = vrot.lane.b32.xlu0 %v3045, 120
        %v3054 = vpop.permute.xlu0 %3053
        %3055 = vrot.lane.b32.xlu0 %v3048, 120
        %v3056 = vpop.permute.xlu0 %3055
        %3057 = vrot.lane.b32.xlu0 %v3050, 120
        %v3058 = vpop.permute.xlu0 %3057
        %3059 = vrot.lane.b32.xlu0 %v3052, 120
        %v3060 = vpop.permute.xlu0 %3059
        %v3061 = vsel %vm1192, %v3054, %v3056
        %v3062 = vsel %vm1192, %v3058, %v3060
        %v3065 = vmul.f32 %v728, %v3061
        %v3066 = vmul.f32 %v732, %v3062
        %v3067 = vpack.c.bf16 %v3066, %v3065
        %3068 = vst [vmem:[#allocation6 + $0xe8] sm:$0xff] %v3067
        %v3069 = vld [vmem:[#allocation2] sm:$0xf0]
        %v3070 = vld [vmem:[#allocation2 + $0x8] sm:$0xf0]
        %v3071 = vld [vmem:[#allocation2 + $0x10] sm:$0xff]
        %v3072 = vld [vmem:[#allocation2 + $0x18] sm:$0xff]
        %v3073 = vld [vmem:[#allocation2 + $0x20] sm:$0xf]
        %v3074 = vld [vmem:[#allocation2 + $0x28] sm:$0xf]
        %v3075 = vld [vmem:[#allocation14] sm:$0xf0]
        %v3076 = vld [vmem:[#allocation14 + $0x8] sm:$0xf0]
        %v3077 = vld [vmem:[#allocation14 + $0x10] sm:$0xff]
        %v3078 = vld [vmem:[#allocation14 + $0x18] sm:$0xff]
        %v3079 = vld [vmem:[#allocation14 + $0x20] sm:$0xf]
        %v3080 = vld [vmem:[#allocation14 + $0x28] sm:$0xf]
        %3081 = vrot.lane.b32.xlu0 %v2943, 120
        %v3082 = vpop.permute.xlu0 %3081
        %3083 = vrot.lane.b32.xlu0 %v2944, 120
        %v3084 = vpop.permute.xlu0 %3083
        %3085 = vrot.lane.b32.xlu0 %v2946, 120
        %v3086 = vpop.permute.xlu0 %3085
        %3087 = vrot.lane.b32.xlu0 %v2948, 120
        %v3088 = vpop.permute.xlu0 %3087
        %3089 = vrot.lane.b32.xlu0 %v2950, 120
        %v3090 = vpop.permute.xlu0 %3089
        %3091 = vrot.lane.b32.xlu0 %v2952, 120
        %v3092 = vpop.permute.xlu0 %3091
        %v3093 = vsel %vm1192, %v3082, %v3084
        %v3094 = vsel %vm1192, %v3086, %v3088
        %v3095 = vsel %vm1192, %v3090, %v3092
        %v3102 = vadd.f32 %v3069, %v3093
        %v3103 = vadd.f32 %v3070, %v3084
        %v3104 = vadd.f32 %v3071, %v3094
        %v3105 = vadd.f32 %v3072, %v3088
        %v3106 = vadd.f32 %v3073, %v3095
        %v3107 = vadd.f32 %v3074, %v3092
        %v3108 = vsub.f32 %v3102, %v3075
        %v3109 = vsub.f32 %v3103, %v3076
        %v3110 = vsub.f32 %v3104, %v3077
        %v3111 = vsub.f32 %v3105, %v3078
        %v3112 = vsub.f32 %v3106, %v3079
        %v3113 = vsub.f32 %v3107, %v3080
        %v3120 = vrot.slane %v3108, 4
        %v3121 = vrot.slane %v3110, 4
        %v3122 = vsel %vm2980, %v3120, %v3121
        %v3123 = vrot.slane %v3109, 4
        %v3124 = vrot.slane %v3111, 4
        %v3125 = vsel %vm2980, %v3123, %v3124
        %v3126 = vrot.slane %v3112, 4
        %v3127 = vsel %vm2980, %v3121, %v3126
        %v3128 = vrot.slane %v3113, 4
        %v3129 = vsel %vm2980, %v3124, %v3128
        %3130 = vrot.lane.b32.xlu0 %v3122, 112
        %v3131 = vpop.permute.xlu0 %3130
        %3132 = vrot.lane.b32.xlu0 %v3125, 112
        %v3133 = vpop.permute.xlu0 %3132
        %3134 = vrot.lane.b32.xlu0 %v3127, 112
        %v3135 = vpop.permute.xlu0 %3134
        %3136 = vrot.lane.b32.xlu0 %v3129, 112
        %v3137 = vpop.permute.xlu0 %3136
        %v3138 = vsel %vm1165, %v3131, %v3133
        %v3139 = vsel %vm1165, %v3135, %v3137
        %v3142 = vmul.f32 %v728, %v3138
        %v3143 = vmul.f32 %v732, %v3139
        %v3144 = vpack.c.bf16 %v3143, %v3142
        %3145 = vst [vmem:[#allocation6 + $0xf0] sm:$0xff] %v3144
        %v3146 = vld [vmem:[#allocation2] sm:$0xf0]
        %v3147 = vld [vmem:[#allocation2 + $0x8] sm:$0xf0]
        %v3148 = vld [vmem:[#allocation2 + $0x10] sm:$0xff]
        %v3149 = vld [vmem:[#allocation2 + $0x18] sm:$0xff]
        %v3150 = vld [vmem:[#allocation2 + $0x20] sm:$0xf]
        %v3151 = vld [vmem:[#allocation2 + $0x28] sm:$0xf]
        %v3152 = vld [vmem:[#allocation14] sm:$0xf0]
        %v3153 = vld [vmem:[#allocation14 + $0x8] sm:$0xf0]
        %v3154 = vld [vmem:[#allocation14 + $0x10] sm:$0xff]
        %v3155 = vld [vmem:[#allocation14 + $0x18] sm:$0xff]
        %v3156 = vld [vmem:[#allocation14 + $0x20] sm:$0xf]
        %v3157 = vld [vmem:[#allocation14 + $0x28] sm:$0xf]
        %v3164 = vadd.f32 %v3146, %v2943
        %v3165 = vadd.f32 %v3147, %v2944
        %v3166 = vadd.f32 %v3148, %v2946
        %v3167 = vadd.f32 %v3149, %v2948
        %v3168 = vadd.f32 %v3150, %v2950
        %v3169 = vadd.f32 %v3151, %v2952
        %v3170 = vsub.f32 %v3164, %v3152
        %v3171 = vsub.f32 %v3165, %v3153
        %v3172 = vsub.f32 %v3166, %v3154
        %v3173 = vsub.f32 %v3167, %v3155
        %v3174 = vsub.f32 %v3168, %v3156
        %v3175 = vsub.f32 %v3169, %v3157
        %v3182 = vrot.slane %v3170, 4
        %v3183 = vrot.slane %v3172, 4
        %v3184 = vsel %vm2980, %v3182, %v3183
        %v3185 = vrot.slane %v3171, 4
        %v3186 = vrot.slane %v3173, 4
        %v3187 = vsel %vm2980, %v3185, %v3186
        %v3188 = vrot.slane %v3174, 4
        %v3189 = vsel %vm2980, %v3183, %v3188
        %v3190 = vrot.slane %v3175, 4
        %v3191 = vsel %vm2980, %v3186, %v3190
        %3192 = vrot.lane.b32.xlu0 %v3184, 104
        %v3193 = vpop.permute.xlu0 %3192
        %3194 = vrot.lane.b32.xlu0 %v3187, 104
        %v3195 = vpop.permute.xlu0 %3194
        %3196 = vrot.lane.b32.xlu0 %v3189, 104
        %v3197 = vpop.permute.xlu0 %3196
        %3198 = vrot.lane.b32.xlu0 %v3191, 104
        %v3199 = vpop.permute.xlu0 %3198
        %v3200 = vsel %vm1136, %v3193, %v3195
        %v3201 = vsel %vm1136, %v3197, %v3199
        %v3204 = vmul.f32 %v728, %v3200
        %v3205 = vmul.f32 %v732, %v3201
        %v3206 = vpack.c.bf16 %v3205, %v3204
        %3207 = vst [vmem:[#allocation6 + $0xf8] sm:$0xff] %v3206
        %v3208 = vld [vmem:[#allocation2] sm:$0xf0]
        %v3209 = vld [vmem:[#allocation2 + $0x8] sm:$0xf0]
        %v3210 = vld [vmem:[#allocation2 + $0x10] sm:$0xff]
        %v3211 = vld [vmem:[#allocation2 + $0x18] sm:$0xff]
        %v3212 = vld [vmem:[#allocation2 + $0x20] sm:$0xf]
        %v3213 = vld [vmem:[#allocation2 + $0x28] sm:$0xf]
        %v3214 = vld [vmem:[#allocation14] sm:$0xf0]
        %v3215 = vld [vmem:[#allocation14 + $0x8] sm:$0xf0]
        %v3216 = vld [vmem:[#allocation14 + $0x10] sm:$0xff]
        %v3217 = vld [vmem:[#allocation14 + $0x18] sm:$0xff]
        %v3218 = vld [vmem:[#allocation14 + $0x20] sm:$0xf]
        %v3219 = vld [vmem:[#allocation14 + $0x28] sm:$0xf]
        %3220 = vrot.lane.b32.xlu0 %v2943, 8
        %v3221 = vpop.permute.xlu0 %3220
        %3222 = vrot.lane.b32.xlu0 %v2944, 8
        %v3223 = vpop.permute.xlu0 %3222
        %3224 = vrot.lane.b32.xlu0 %v2946, 8
        %v3225 = vpop.permute.xlu0 %3224
        %3226 = vrot.lane.b32.xlu0 %v2948, 8
        %v3227 = vpop.permute.xlu0 %3226
        %3228 = vrot.lane.b32.xlu0 %v2950, 8
        %v3229 = vpop.permute.xlu0 %3228
        %3230 = vrot.lane.b32.xlu0 %v2952, 8
        %v3231 = vpop.permute.xlu0 %3230
        %v3232 = vsel %vm1307, %v3221, %v3223
        %v3233 = vsel %vm1307, %v3225, %v3227
        %v3234 = vsel %vm1307, %v3229, %v3231
        %v3241 = vadd.f32 %v3208, %v3221
        %v3242 = vadd.f32 %v3209, %v3232
        %v3243 = vadd.f32 %v3210, %v3225
        %v3244 = vadd.f32 %v3211, %v3233
        %v3245 = vadd.f32 %v3212, %v3229
        %v3246 = vadd.f32 %v3213, %v3234
        %v3247 = vsub.f32 %v3241, %v3214
        %v3248 = vsub.f32 %v3242, %v3215
        %v3249 = vsub.f32 %v3243, %v3216
        %v3250 = vsub.f32 %v3244, %v3217
        %v3251 = vsub.f32 %v3245, %v3218
        %v3252 = vsub.f32 %v3246, %v3219
        %v3259 = vrot.slane %v3247, 4
        %v3260 = vrot.slane %v3249, 4
        %v3261 = vsel %vm2980, %v3259, %v3260
        %v3262 = vrot.slane %v3248, 4
        %v3263 = vrot.slane %v3250, 4
        %v3264 = vsel %vm2980, %v3262, %v3263
        %v3265 = vrot.slane %v3251, 4
        %v3266 = vsel %vm2980, %v3260, %v3265
        %v3267 = vrot.slane %v3252, 4
        %v3268 = vsel %vm2980, %v3263, %v3267
        %3269 = vrot.lane.b32.xlu0 %v3261, 96
        %v3270 = vpop.permute.xlu0 %3269
        %3271 = vrot.lane.b32.xlu0 %v3264, 96
        %v3272 = vpop.permute.xlu0 %3271
        %3273 = vrot.lane.b32.xlu0 %v3266, 96
        %v3274 = vpop.permute.xlu0 %3273
        %3275 = vrot.lane.b32.xlu0 %v3268, 96
        %v3276 = vpop.permute.xlu0 %3275
        %v3277 = vsel %vm1334, %v3270, %v3272
        %v3278 = vsel %vm1334, %v3274, %v3276
        %v3281 = vmul.f32 %v728, %v3277
        %v3282 = vmul.f32 %v732, %v3278
        %v3283 = vpack.c.bf16 %v3282, %v3281
        %3284 = vst [vmem:[#allocation6 + $0x100] sm:$0xff] %v3283
        %v3285 = vld [vmem:[#allocation2] sm:$0xf0]
        %v3286 = vld [vmem:[#allocation2 + $0x8] sm:$0xf0]
        %v3287 = vld [vmem:[#allocation2 + $0x10] sm:$0xff]
        %v3288 = vld [vmem:[#allocation2 + $0x18] sm:$0xff]
        %v3289 = vld [vmem:[#allocation2 + $0x20] sm:$0xf]
        %v3290 = vld [vmem:[#allocation2 + $0x28] sm:$0xf]
        %v3291 = vld [vmem:[#allocation14] sm:$0xf0]
        %v3292 = vld [vmem:[#allocation14 + $0x8] sm:$0xf0]
        %v3293 = vld [vmem:[#allocation14 + $0x10] sm:$0xff]
        %v3294 = vld [vmem:[#allocation14 + $0x18] sm:$0xff]
        %v3295 = vld [vmem:[#allocation14 + $0x20] sm:$0xf]
        %v3296 = vld [vmem:[#allocation14 + $0x28] sm:$0xf]
        %3297 = vrot.lane.b32.xlu0 %v2943, 16
        %v3298 = vpop.permute.xlu0 %3297
        %3299 = vrot.lane.b32.xlu0 %v2944, 16
        %v3300 = vpop.permute.xlu0 %3299
        %3301 = vrot.lane.b32.xlu0 %v2946, 16
        %v3302 = vpop.permute.xlu0 %3301
        %3303 = vrot.lane.b32.xlu0 %v2948, 16
        %v3304 = vpop.permute.xlu0 %3303
        %3305 = vrot.lane.b32.xlu0 %v2950, 16
        %v3306 = vpop.permute.xlu0 %3305
        %3307 = vrot.lane.b32.xlu0 %v2952, 16
        %v3308 = vpop.permute.xlu0 %3307
        %v3309 = vsel %vm1359, %v3298, %v3300
        %v3310 = vsel %vm1359, %v3302, %v3304
        %v3311 = vsel %vm1359, %v3306, %v3308
        %v3318 = vadd.f32 %v3285, %v3298
        %v3319 = vadd.f32 %v3286, %v3309
        %v3320 = vadd.f32 %v3287, %v3302
        %v3321 = vadd.f32 %v3288, %v3310
        %v3322 = vadd.f32 %v3289, %v3306
        %v3323 = vadd.f32 %v3290, %v3311
        %v3324 = vsub.f32 %v3318, %v3291
        %v3325 = vsub.f32 %v3319, %v3292
        %v3326 = vsub.f32 %v3320, %v3293
        %v3327 = vsub.f32 %v3321, %v3294
        %v3328 = vsub.f32 %v3322, %v3295
        %v3329 = vsub.f32 %v3323, %v3296
        %v3336 = vrot.slane %v3324, 4
        %v3337 = vrot.slane %v3326, 4
        %v3338 = vsel %vm2980, %v3336, %v3337
        %v3339 = vrot.slane %v3325, 4
        %v3340 = vrot.slane %v3327, 4
        %v3341 = vsel %vm2980, %v3339, %v3340
        %v3342 = vrot.slane %v3328, 4
        %v3343 = vsel %vm2980, %v3337, %v3342
        %v3344 = vrot.slane %v3329, 4
        %v3345 = vsel %vm2980, %v3340, %v3344
        %3346 = vrot.lane.b32.xlu0 %v3338, 88
        %v3347 = vpop.permute.xlu0 %3346
        %3348 = vrot.lane.b32.xlu0 %v3341, 88
        %v3349 = vpop.permute.xlu0 %3348
        %3350 = vrot.lane.b32.xlu0 %v3343, 88
        %v3351 = vpop.permute.xlu0 %3350
        %3352 = vrot.lane.b32.xlu0 %v3345, 88
        %v3353 = vpop.permute.xlu0 %3352
        %v3354 = vsel %vm1386, %v3347, %v3349
        %v3355 = vsel %vm1386, %v3351, %v3353
        %v3358 = vmul.f32 %v728, %v3354
        %v3359 = vmul.f32 %v732, %v3355
        %v3360 = vpack.c.bf16 %v3359, %v3358
        %3361 = vst [vmem:[#allocation6 + $0x108] sm:$0xff] %v3360
        %v3362 = vld [vmem:[#allocation2] sm:$0xf0]
        %v3363 = vld [vmem:[#allocation2 + $0x8] sm:$0xf0]
        %v3364 = vld [vmem:[#allocation2 + $0x10] sm:$0xff]
        %v3365 = vld [vmem:[#allocation2 + $0x18] sm:$0xff]
        %v3366 = vld [vmem:[#allocation2 + $0x20] sm:$0xf]
        %v3367 = vld [vmem:[#allocation2 + $0x28] sm:$0xf]
        %v3368 = vld [vmem:[#allocation14] sm:$0xf0]
        %v3369 = vld [vmem:[#allocation14 + $0x8] sm:$0xf0]
        %v3370 = vld [vmem:[#allocation14 + $0x10] sm:$0xff]
        %v3371 = vld [vmem:[#allocation14 + $0x18] sm:$0xff]
        %v3372 = vld [vmem:[#allocation14 + $0x20] sm:$0xf]
        %v3373 = vld [vmem:[#allocation14 + $0x28] sm:$0xf]
        %3374 = vrot.lane.b32.xlu0 %v2943, 24
        %v3375 = vpop.permute.xlu0 %3374
        %3376 = vrot.lane.b32.xlu0 %v2944, 24
        %v3377 = vpop.permute.xlu0 %3376
        %3378 = vrot.lane.b32.xlu0 %v2946, 24
        %v3379 = vpop.permute.xlu0 %3378
        %3380 = vrot.lane.b32.xlu0 %v2948, 24
        %v3381 = vpop.permute.xlu0 %3380
        %3382 = vrot.lane.b32.xlu0 %v2950, 24
        %v3383 = vpop.permute.xlu0 %3382
        %3384 = vrot.lane.b32.xlu0 %v2952, 24
        %v3385 = vpop.permute.xlu0 %3384
        %v3386 = vsel %vm1411, %v3375, %v3377
        %v3387 = vsel %vm1411, %v3379, %v3381
        %v3388 = vsel %vm1411, %v3383, %v3385
        %v3395 = vadd.f32 %v3362, %v3375
        %v3396 = vadd.f32 %v3363, %v3386
        %v3397 = vadd.f32 %v3364, %v3379
        %v3398 = vadd.f32 %v3365, %v3387
        %v3399 = vadd.f32 %v3366, %v3383
        %v3400 = vadd.f32 %v3367, %v3388
        %v3401 = vsub.f32 %v3395, %v3368
        %v3402 = vsub.f32 %v3396, %v3369
        %v3403 = vsub.f32 %v3397, %v3370
        %v3404 = vsub.f32 %v3398, %v3371
        %v3405 = vsub.f32 %v3399, %v3372
        %v3406 = vsub.f32 %v3400, %v3373
        %v3413 = vrot.slane %v3401, 4
        %v3414 = vrot.slane %v3403, 4
        %v3415 = vsel %vm2980, %v3413, %v3414
        %v3416 = vrot.slane %v3402, 4
        %v3417 = vrot.slane %v3404, 4
        %v3418 = vsel %vm2980, %v3416, %v3417
        %v3419 = vrot.slane %v3405, 4
        %v3420 = vsel %vm2980, %v3414, %v3419
        %v3421 = vrot.slane %v3406, 4
        %v3422 = vsel %vm2980, %v3417, %v3421
        %3423 = vrot.lane.b32.xlu0 %v3415, 80
        %v3424 = vpop.permute.xlu0 %3423
        %3425 = vrot.lane.b32.xlu0 %v3418, 80
        %v3426 = vpop.permute.xlu0 %3425
        %3427 = vrot.lane.b32.xlu0 %v3420, 80
        %v3428 = vpop.permute.xlu0 %3427
        %3429 = vrot.lane.b32.xlu0 %v3422, 80
        %v3430 = vpop.permute.xlu0 %3429
        %v3431 = vsel %vm1438, %v3424, %v3426
        %v3432 = vsel %vm1438, %v3428, %v3430
        %v3435 = vmul.f32 %v728, %v3431
        %v3436 = vmul.f32 %v732, %v3432
        %v3437 = vpack.c.bf16 %v3436, %v3435
        %3438 = vst [vmem:[#allocation6 + $0x110] sm:$0xff] %v3437
        %v3439 = vld [vmem:[#allocation2] sm:$0xe0]
        %v3440 = vld [vmem:[#allocation2 + $0x10] sm:$0xff]
        %v3441 = vld [vmem:[#allocation2 + $0x20] sm:$0x1f]
        %v3442 = vld [vmem:[#allocation14] sm:$0xe0]
        %v3443 = vld [vmem:[#allocation14 + $0x10] sm:$0xff]
        %v3444 = vld [vmem:[#allocation14 + $0x20] sm:$0x1f]
        %vm3445 = vcmask 1041408
        %v3446 = vrot.slane %v1102, 6
        %v3447 = vrot.slane %v1103, 6
        %v3448 = vrot.slane %v1104, 6
        %v3449 = vsel %vm3445, %v3446, %v3448
        %v3450 = vrot.slane %v1105, 6
        %v3451 = vsel %vm3445, %v3447, %v3450
        %v3452 = vrot.slane %v1106, 6
        %v3453 = vsel %vm3445, %v3448, %v3452
        %v3454 = vrot.slane %v1107, 6
        %v3455 = vsel %vm3445, %v3450, %v3454
        %3456 = vrot.lane.b32.xlu0 %v3446, 104
        %v3457 = vpop.permute.xlu0 %3456
        %3458 = vrot.lane.b32.xlu0 %v3447, 104
        %v3459 = vpop.permute.xlu0 %3458
        %3460 = vrot.lane.b32.xlu0 %v3449, 104
        %v3461 = vpop.permute.xlu0 %3460
        %3462 = vrot.lane.b32.xlu0 %v3451, 104
        %v3463 = vpop.permute.xlu0 %3462
        %3464 = vrot.lane.b32.xlu0 %v3453, 104
        %v3465 = vpop.permute.xlu0 %3464
        %3466 = vrot.lane.b32.xlu0 %v3455, 104
        %v3467 = vpop.permute.xlu0 %3466
        %v3468 = vsel %vm1136, %v3457, %v3459
        %v3469 = vsel %vm1136, %v3461, %v3463
        %v3470 = vsel %vm1136, %v3465, %v3467
        %v3474 = vadd.f32 %v3439, %v3468
        %v3475 = vadd.f32 %v3440, %v3469
        %v3476 = vadd.f32 %v3441, %v3470
        %v3477 = vsub.f32 %v3474, %v3442
        %v3478 = vsub.f32 %v3475, %v3443
        %v3479 = vsub.f32 %v3476, %v3444
        %v3483 = vrot.slane %v3477, 5
        %v3484 = vrot.slane %v3478, 5
        %v3485 = vsel %vm910, %v3483, %v3484
        %v3486 = vrot.slane %v3479, 5
        %v3487 = vsel %vm910, %v3484, %v3486
        %v3490 = vmul.f32 %v728, %v3485
        %v3491 = vmul.f32 %v732, %v3487
        %v3492 = vpack.c.bf16 %v3491, %v3490
        %3493 = vst [vmem:[#allocation6 + $0x118] sm:$0xff] %v3492
        %v3494 = vld [vmem:[#allocation2] sm:$0xe0]
        %v3495 = vld [vmem:[#allocation2 + $0x8] sm:$0xe0]
        %v3496 = vld [vmem:[#allocation2 + $0x10] sm:$0xff]
        %v3497 = vld [vmem:[#allocation2 + $0x18] sm:$0xff]
        %v3498 = vld [vmem:[#allocation2 + $0x20] sm:$0x1f]
        %v3499 = vld [vmem:[#allocation2 + $0x28] sm:$0x1f]
        %v3500 = vld [vmem:[#allocation14] sm:$0xe0]
        %v3501 = vld [vmem:[#allocation14 + $0x8] sm:$0xe0]
        %v3502 = vld [vmem:[#allocation14 + $0x10] sm:$0xff]
        %v3503 = vld [vmem:[#allocation14 + $0x18] sm:$0xff]
        %v3504 = vld [vmem:[#allocation14 + $0x20] sm:$0x1f]
        %v3505 = vld [vmem:[#allocation14 + $0x28] sm:$0x1f]
        %3506 = vrot.lane.b32.xlu0 %v3446, 112
        %v3507 = vpop.permute.xlu0 %3506
        %3508 = vrot.lane.b32.xlu0 %v3447, 112
        %v3509 = vpop.permute.xlu0 %3508
        %3510 = vrot.lane.b32.xlu0 %v3449, 112
        %v3511 = vpop.permute.xlu0 %3510
        %3512 = vrot.lane.b32.xlu0 %v3451, 112
        %v3513 = vpop.permute.xlu0 %3512
        %3514 = vrot.lane.b32.xlu0 %v3453, 112
        %v3515 = vpop.permute.xlu0 %3514
        %3516 = vrot.lane.b32.xlu0 %v3455, 112
        %v3517 = vpop.permute.xlu0 %3516
        %v3518 = vsel %vm1165, %v3507, %v3509
        %v3519 = vsel %vm1165, %v3511, %v3513
        %v3520 = vsel %vm1165, %v3515, %v3517
        %v3527 = vadd.f32 %v3494, %v3518
        %v3528 = vadd.f32 %v3495, %v3509
        %v3529 = vadd.f32 %v3496, %v3519
        %v3530 = vadd.f32 %v3497, %v3513
        %v3531 = vadd.f32 %v3498, %v3520
        %v3532 = vadd.f32 %v3499, %v3517
        %v3533 = vsub.f32 %v3527, %v3500
        %v3534 = vsub.f32 %v3528, %v3501
        %v3535 = vsub.f32 %v3529, %v3502
        %v3536 = vsub.f32 %v3530, %v3503
        %v3537 = vsub.f32 %v3531, %v3504
        %v3538 = vsub.f32 %v3532, %v3505
        %v3545 = vrot.slane %v3533, 5
        %v3546 = vrot.slane %v3535, 5
        %v3547 = vsel %vm910, %v3545, %v3546
        %v3548 = vrot.slane %v3534, 5
        %v3549 = vrot.slane %v3536, 5
        %v3550 = vsel %vm910, %v3548, %v3549
        %v3551 = vrot.slane %v3537, 5
        %v3552 = vsel %vm910, %v3546, %v3551
        %v3553 = vrot.slane %v3538, 5
        %v3554 = vsel %vm910, %v3549, %v3553
        %3555 = vrot.lane.b32.xlu0 %v3547, 120
        %v3556 = vpop.permute.xlu0 %3555
        %3557 = vrot.lane.b32.xlu0 %v3550, 120
        %v3558 = vpop.permute.xlu0 %3557
        %3559 = vrot.lane.b32.xlu0 %v3552, 120
        %v3560 = vpop.permute.xlu0 %3559
        %3561 = vrot.lane.b32.xlu0 %v3554, 120
        %v3562 = vpop.permute.xlu0 %3561
        %v3563 = vsel %vm1192, %v3556, %v3558
        %v3564 = vsel %vm1192, %v3560, %v3562
        %v3567 = vmul.f32 %v728, %v3563
        %v3568 = vmul.f32 %v732, %v3564
        %v3569 = vpack.c.bf16 %v3568, %v3567
        %3570 = vst [vmem:[#allocation6 + $0x120] sm:$0xff] %v3569
        %v3571 = vld [vmem:[#allocation2] sm:$0xe0]
        %v3572 = vld [vmem:[#allocation2 + $0x8] sm:$0xe0]
        %v3573 = vld [vmem:[#allocation2 + $0x10] sm:$0xff]
        %v3574 = vld [vmem:[#allocation2 + $0x18] sm:$0xff]
        %v3575 = vld [vmem:[#allocation2 + $0x20] sm:$0x1f]
        %v3576 = vld [vmem:[#allocation2 + $0x28] sm:$0x1f]
        %v3577 = vld [vmem:[#allocation14] sm:$0xe0]
        %v3578 = vld [vmem:[#allocation14 + $0x8] sm:$0xe0]
        %v3579 = vld [vmem:[#allocation14 + $0x10] sm:$0xff]
        %v3580 = vld [vmem:[#allocation14 + $0x18] sm:$0xff]
        %v3581 = vld [vmem:[#allocation14 + $0x20] sm:$0x1f]
        %v3582 = vld [vmem:[#allocation14 + $0x28] sm:$0x1f]
        %3583 = vrot.lane.b32.xlu0 %v3446, 120
        %v3584 = vpop.permute.xlu0 %3583
        %3585 = vrot.lane.b32.xlu0 %v3447, 120
        %v3586 = vpop.permute.xlu0 %3585
        %3587 = vrot.lane.b32.xlu0 %v3449, 120
        %v3588 = vpop.permute.xlu0 %3587
        %3589 = vrot.lane.b32.xlu0 %v3451, 120
        %v3590 = vpop.permute.xlu0 %3589
        %3591 = vrot.lane.b32.xlu0 %v3453, 120
        %v3592 = vpop.permute.xlu0 %3591
        %3593 = vrot.lane.b32.xlu0 %v3455, 120
        %v3594 = vpop.permute.xlu0 %3593
        %v3595 = vsel %vm1192, %v3584, %v3586
        %v3596 = vsel %vm1192, %v3588, %v3590
        %v3597 = vsel %vm1192, %v3592, %v3594
        %v3604 = vadd.f32 %v3571, %v3595
        %v3605 = vadd.f32 %v3572, %v3586
        %v3606 = vadd.f32 %v3573, %v3596
        %v3607 = vadd.f32 %v3574, %v3590
        %v3608 = vadd.f32 %v3575, %v3597
        %v3609 = vadd.f32 %v3576, %v3594
        %v3610 = vsub.f32 %v3604, %v3577
        %v3611 = vsub.f32 %v3605, %v3578
        %v3612 = vsub.f32 %v3606, %v3579
        %v3613 = vsub.f32 %v3607, %v3580
        %v3614 = vsub.f32 %v3608, %v3581
        %v3615 = vsub.f32 %v3609, %v3582
        %v3622 = vrot.slane %v3610, 5
        %v3623 = vrot.slane %v3612, 5
        %v3624 = vsel %vm910, %v3622, %v3623
        %v3625 = vrot.slane %v3611, 5
        %v3626 = vrot.slane %v3613, 5
        %v3627 = vsel %vm910, %v3625, %v3626
        %v3628 = vrot.slane %v3614, 5
        %v3629 = vsel %vm910, %v3623, %v3628
        %v3630 = vrot.slane %v3615, 5
        %v3631 = vsel %vm910, %v3626, %v3630
        %3632 = vrot.lane.b32.xlu0 %v3624, 112
        %v3633 = vpop.permute.xlu0 %3632
        %3634 = vrot.lane.b32.xlu0 %v3627, 112
        %v3635 = vpop.permute.xlu0 %3634
        %3636 = vrot.lane.b32.xlu0 %v3629, 112
        %v3637 = vpop.permute.xlu0 %3636
        %3638 = vrot.lane.b32.xlu0 %v3631, 112
        %v3639 = vpop.permute.xlu0 %3638
        %v3640 = vsel %vm1165, %v3633, %v3635
        %v3641 = vsel %vm1165, %v3637, %v3639
        %v3644 = vmul.f32 %v728, %v3640
        %v3645 = vmul.f32 %v732, %v3641
        %v3646 = vpack.c.bf16 %v3645, %v3644
        %3647 = vst [vmem:[#allocation6 + $0x128] sm:$0xff] %v3646
        %v3648 = vld [vmem:[#allocation2] sm:$0xe0]
        %v3649 = vld [vmem:[#allocation2 + $0x8] sm:$0xe0]
        %v3650 = vld [vmem:[#allocation2 + $0x10] sm:$0xff]
        %v3651 = vld [vmem:[#allocation2 + $0x18] sm:$0xff]
        %v3652 = vld [vmem:[#allocation2 + $0x20] sm:$0x1f]
        %v3653 = vld [vmem:[#allocation2 + $0x28] sm:$0x1f]
        %v3654 = vld [vmem:[#allocation14] sm:$0xe0]
        %v3655 = vld [vmem:[#allocation14 + $0x8] sm:$0xe0]
        %v3656 = vld [vmem:[#allocation14 + $0x10] sm:$0xff]
        %v3657 = vld [vmem:[#allocation14 + $0x18] sm:$0xff]
        %v3658 = vld [vmem:[#allocation14 + $0x20] sm:$0x1f]
        %v3659 = vld [vmem:[#allocation14 + $0x28] sm:$0x1f]
        %v3666 = vadd.f32 %v3648, %v3446
        %v3667 = vadd.f32 %v3649, %v3447
        %v3668 = vadd.f32 %v3650, %v3449
        %v3669 = vadd.f32 %v3651, %v3451
        %v3670 = vadd.f32 %v3652, %v3453
        %v3671 = vadd.f32 %v3653, %v3455
        %v3672 = vsub.f32 %v3666, %v3654
        %v3673 = vsub.f32 %v3667, %v3655
        %v3674 = vsub.f32 %v3668, %v3656
        %v3675 = vsub.f32 %v3669, %v3657
        %v3676 = vsub.f32 %v3670, %v3658
        %v3677 = vsub.f32 %v3671, %v3659
        %v3684 = vrot.slane %v3672, 5
        %v3685 = vrot.slane %v3674, 5
        %v3686 = vsel %vm910, %v3684, %v3685
        %v3687 = vrot.slane %v3673, 5
        %v3688 = vrot.slane %v3675, 5
        %v3689 = vsel %vm910, %v3687, %v3688
        %v3690 = vrot.slane %v3676, 5
        %v3691 = vsel %vm910, %v3685, %v3690
        %v3692 = vrot.slane %v3677, 5
        %v3693 = vsel %vm910, %v3688, %v3692
        %3694 = vrot.lane.b32.xlu0 %v3686, 104
        %v3695 = vpop.permute.xlu0 %3694
        %3696 = vrot.lane.b32.xlu0 %v3689, 104
        %v3697 = vpop.permute.xlu0 %3696
        %3698 = vrot.lane.b32.xlu0 %v3691, 104
        %v3699 = vpop.permute.xlu0 %3698
        %3700 = vrot.lane.b32.xlu0 %v3693, 104
        %v3701 = vpop.permute.xlu0 %3700
        %v3702 = vsel %vm1136, %v3695, %v3697
        %v3703 = vsel %vm1136, %v3699, %v3701
        %v3706 = vmul.f32 %v728, %v3702
        %v3707 = vmul.f32 %v732, %v3703
        %v3708 = vpack.c.bf16 %v3707, %v3706
        %3709 = vst [vmem:[#allocation6 + $0x130] sm:$0xff] %v3708
        %v3710 = vld [vmem:[#allocation2] sm:$0xe0]
        %v3711 = vld [vmem:[#allocation2 + $0x8] sm:$0xe0]
        %v3712 = vld [vmem:[#allocation2 + $0x10] sm:$0xff]
        %v3713 = vld [vmem:[#allocation2 + $0x18] sm:$0xff]
        %v3714 = vld [vmem:[#allocation2 + $0x20] sm:$0x1f]
        %v3715 = vld [vmem:[#allocation2 + $0x28] sm:$0x1f]
        %v3716 = vld [vmem:[#allocation14] sm:$0xe0]
        %v3717 = vld [vmem:[#allocation14 + $0x8] sm:$0xe0]
        %v3718 = vld [vmem:[#allocation14 + $0x10] sm:$0xff]
        %v3719 = vld [vmem:[#allocation14 + $0x18] sm:$0xff]
        %v3720 = vld [vmem:[#allocation14 + $0x20] sm:$0x1f]
        %v3721 = vld [vmem:[#allocation14 + $0x28] sm:$0x1f]
        %3722 = vrot.lane.b32.xlu0 %v3446, 8
        %v3723 = vpop.permute.xlu0 %3722
        %3724 = vrot.lane.b32.xlu0 %v3447, 8
        %v3725 = vpop.permute.xlu0 %3724
        %3726 = vrot.lane.b32.xlu0 %v3449, 8
        %v3727 = vpop.permute.xlu0 %3726
        %3728 = vrot.lane.b32.xlu0 %v3451, 8
        %v3729 = vpop.permute.xlu0 %3728
        %3730 = vrot.lane.b32.xlu0 %v3453, 8
        %v3731 = vpop.permute.xlu0 %3730
        %3732 = vrot.lane.b32.xlu0 %v3455, 8
        %v3733 = vpop.permute.xlu0 %3732
        %v3734 = vsel %vm1307, %v3723, %v3725
        %v3735 = vsel %vm1307, %v3727, %v3729
        %v3736 = vsel %vm1307, %v3731, %v3733
        %v3743 = vadd.f32 %v3710, %v3723
        %v3744 = vadd.f32 %v3711, %v3734
        %v3745 = vadd.f32 %v3712, %v3727
        %v3746 = vadd.f32 %v3713, %v3735
        %v3747 = vadd.f32 %v3714, %v3731
        %v3748 = vadd.f32 %v3715, %v3736
        %v3749 = vsub.f32 %v3743, %v3716
        %v3750 = vsub.f32 %v3744, %v3717
        %v3751 = vsub.f32 %v3745, %v3718
        %v3752 = vsub.f32 %v3746, %v3719
        %v3753 = vsub.f32 %v3747, %v3720
        %v3754 = vsub.f32 %v3748, %v3721
        %v3761 = vrot.slane %v3749, 5
        %v3762 = vrot.slane %v3751, 5
        %v3763 = vsel %vm910, %v3761, %v3762
        %v3764 = vrot.slane %v3750, 5
        %v3765 = vrot.slane %v3752, 5
        %v3766 = vsel %vm910, %v3764, %v3765
        %v3767 = vrot.slane %v3753, 5
        %v3768 = vsel %vm910, %v3762, %v3767
        %v3769 = vrot.slane %v3754, 5
        %v3770 = vsel %vm910, %v3765, %v3769
        %3771 = vrot.lane.b32.xlu0 %v3763, 96
        %v3772 = vpop.permute.xlu0 %3771
        %3773 = vrot.lane.b32.xlu0 %v3766, 96
        %v3774 = vpop.permute.xlu0 %3773
        %3775 = vrot.lane.b32.xlu0 %v3768, 96
        %v3776 = vpop.permute.xlu0 %3775
        %3777 = vrot.lane.b32.xlu0 %v3770, 96
        %v3778 = vpop.permute.xlu0 %3777
        %v3779 = vsel %vm1334, %v3772, %v3774
        %v3780 = vsel %vm1334, %v3776, %v3778
        %v3783 = vmul.f32 %v728, %v3779
        %v3784 = vmul.f32 %v732, %v3780
        %v3785 = vpack.c.bf16 %v3784, %v3783
        %3786 = vst [vmem:[#allocation6 + $0x138] sm:$0xff] %v3785
        %v3787 = vld [vmem:[#allocation2] sm:$0xe0]
        %v3788 = vld [vmem:[#allocation2 + $0x8] sm:$0xe0]
        %v3789 = vld [vmem:[#allocation2 + $0x10] sm:$0xff]
        %v3790 = vld [vmem:[#allocation2 + $0x18] sm:$0xff]
        %v3791 = vld [vmem:[#allocation2 + $0x20] sm:$0x1f]
        %v3792 = vld [vmem:[#allocation2 + $0x28] sm:$0x1f]
        %v3793 = vld [vmem:[#allocation14] sm:$0xe0]
        %v3794 = vld [vmem:[#allocation14 + $0x8] sm:$0xe0]
        %v3795 = vld [vmem:[#allocation14 + $0x10] sm:$0xff]
        %v3796 = vld [vmem:[#allocation14 + $0x18] sm:$0xff]
        %v3797 = vld [vmem:[#allocation14 + $0x20] sm:$0x1f]
        %v3798 = vld [vmem:[#allocation14 + $0x28] sm:$0x1f]
        %3799 = vrot.lane.b32.xlu0 %v3446, 16
        %v3800 = vpop.permute.xlu0 %3799
        %3801 = vrot.lane.b32.xlu0 %v3447, 16
        %v3802 = vpop.permute.xlu0 %3801
        %3803 = vrot.lane.b32.xlu0 %v3449, 16
        %v3804 = vpop.permute.xlu0 %3803
        %3805 = vrot.lane.b32.xlu0 %v3451, 16
        %v3806 = vpop.permute.xlu0 %3805
        %3807 = vrot.lane.b32.xlu0 %v3453, 16
        %v3808 = vpop.permute.xlu0 %3807
        %3809 = vrot.lane.b32.xlu0 %v3455, 16
        %v3810 = vpop.permute.xlu0 %3809
        %v3811 = vsel %vm1359, %v3800, %v3802
        %v3812 = vsel %vm1359, %v3804, %v3806
        %v3813 = vsel %vm1359, %v3808, %v3810
        %v3820 = vadd.f32 %v3787, %v3800
        %v3821 = vadd.f32 %v3788, %v3811
        %v3822 = vadd.f32 %v3789, %v3804
        %v3823 = vadd.f32 %v3790, %v3812
        %v3824 = vadd.f32 %v3791, %v3808
        %v3825 = vadd.f32 %v3792, %v3813
        %v3826 = vsub.f32 %v3820, %v3793
        %v3827 = vsub.f32 %v3821, %v3794
        %v3828 = vsub.f32 %v3822, %v3795
        %v3829 = vsub.f32 %v3823, %v3796
        %v3830 = vsub.f32 %v3824, %v3797
        %v3831 = vsub.f32 %v3825, %v3798
        %v3838 = vrot.slane %v3826, 5
        %v3839 = vrot.slane %v3828, 5
        %v3840 = vsel %vm910, %v3838, %v3839
        %v3841 = vrot.slane %v3827, 5
        %v3842 = vrot.slane %v3829, 5
        %v3843 = vsel %vm910, %v3841, %v3842
        %v3844 = vrot.slane %v3830, 5
        %v3845 = vsel %vm910, %v3839, %v3844
        %v3846 = vrot.slane %v3831, 5
        %v3847 = vsel %vm910, %v3842, %v3846
        %3848 = vrot.lane.b32.xlu0 %v3840, 88
        %v3849 = vpop.permute.xlu0 %3848
        %3850 = vrot.lane.b32.xlu0 %v3843, 88
        %v3851 = vpop.permute.xlu0 %3850
        %3852 = vrot.lane.b32.xlu0 %v3845, 88
        %v3853 = vpop.permute.xlu0 %3852
        %3854 = vrot.lane.b32.xlu0 %v3847, 88
        %v3855 = vpop.permute.xlu0 %3854
        %v3856 = vsel %vm1386, %v3849, %v3851
        %v3857 = vsel %vm1386, %v3853, %v3855
        %v3860 = vmul.f32 %v728, %v3856
        %v3861 = vmul.f32 %v732, %v3857
        %v3862 = vpack.c.bf16 %v3861, %v3860
        %3863 = vst [vmem:[#allocation6 + $0x140] sm:$0xff] %v3862
        %v3864 = vld [vmem:[#allocation2] sm:$0xe0]
        %v3865 = vld [vmem:[#allocation2 + $0x8] sm:$0xe0]
        %v3866 = vld [vmem:[#allocation2 + $0x10] sm:$0xff]
        %v3867 = vld [vmem:[#allocation2 + $0x18] sm:$0xff]
        %v3868 = vld [vmem:[#allocation2 + $0x20] sm:$0x1f]
        %v3869 = vld [vmem:[#allocation2 + $0x28] sm:$0x1f]
        %v3870 = vld [vmem:[#allocation14] sm:$0xe0]
        %v3871 = vld [vmem:[#allocation14 + $0x8] sm:$0xe0]
        %v3872 = vld [vmem:[#allocation14 + $0x10] sm:$0xff]
        %v3873 = vld [vmem:[#allocation14 + $0x18] sm:$0xff]
        %v3874 = vld [vmem:[#allocation14 + $0x20] sm:$0x1f]
        %v3875 = vld [vmem:[#allocation14 + $0x28] sm:$0x1f]
        %3876 = vrot.lane.b32.xlu0 %v3446, 24
        %v3877 = vpop.permute.xlu0 %3876
        %3878 = vrot.lane.b32.xlu0 %v3447, 24
        %v3879 = vpop.permute.xlu0 %3878
        %3880 = vrot.lane.b32.xlu0 %v3449, 24
        %v3881 = vpop.permute.xlu0 %3880
        %3882 = vrot.lane.b32.xlu0 %v3451, 24
        %v3883 = vpop.permute.xlu0 %3882
        %3884 = vrot.lane.b32.xlu0 %v3453, 24
        %v3885 = vpop.permute.xlu0 %3884
        %3886 = vrot.lane.b32.xlu0 %v3455, 24
        %v3887 = vpop.permute.xlu0 %3886
        %v3888 = vsel %vm1411, %v3877, %v3879
        %v3889 = vsel %vm1411, %v3881, %v3883
        %v3890 = vsel %vm1411, %v3885, %v3887
        %v3897 = vadd.f32 %v3864, %v3877
        %v3898 = vadd.f32 %v3865, %v3888
        %v3899 = vadd.f32 %v3866, %v3881
        %v3900 = vadd.f32 %v3867, %v3889
        %v3901 = vadd.f32 %v3868, %v3885
        %v3902 = vadd.f32 %v3869, %v3890
        %v3903 = vsub.f32 %v3897, %v3870
        %v3904 = vsub.f32 %v3898, %v3871
        %v3905 = vsub.f32 %v3899, %v3872
        %v3906 = vsub.f32 %v3900, %v3873
        %v3907 = vsub.f32 %v3901, %v3874
        %v3908 = vsub.f32 %v3902, %v3875
        %v3915 = vrot.slane %v3903, 5
        %v3916 = vrot.slane %v3905, 5
        %v3917 = vsel %vm910, %v3915, %v3916
        %v3918 = vrot.slane %v3904, 5
        %v3919 = vrot.slane %v3906, 5
        %v3920 = vsel %vm910, %v3918, %v3919
        %v3921 = vrot.slane %v3907, 5
        %v3922 = vsel %vm910, %v3916, %v3921
        %v3923 = vrot.slane %v3908, 5
        %v3924 = vsel %vm910, %v3919, %v3923
        %3925 = vrot.lane.b32.xlu0 %v3917, 80
        %v3926 = vpop.permute.xlu0 %3925
        %3927 = vrot.lane.b32.xlu0 %v3920, 80
        %v3928 = vpop.permute.xlu0 %3927
        %3929 = vrot.lane.b32.xlu0 %v3922, 80
        %v3930 = vpop.permute.xlu0 %3929
        %3931 = vrot.lane.b32.xlu0 %v3924, 80
        %v3932 = vpop.permute.xlu0 %3931
        %v3933 = vsel %vm1438, %v3926, %v3928
        %v3934 = vsel %vm1438, %v3930, %v3932
        %v3937 = vmul.f32 %v728, %v3933
        %v3938 = vmul.f32 %v732, %v3934
        %v3939 = vpack.c.bf16 %v3938, %v3937
        %3940 = vst [vmem:[#allocation6 + $0x148] sm:$0xff] %v3939
        %v3941 = vld [vmem:[#allocation2] sm:$0xc0]
        %v3942 = vld [vmem:[#allocation2 + $0x10] sm:$0xff]
        %v3943 = vld [vmem:[#allocation2 + $0x20] sm:$0x3f]
        %v3944 = vld [vmem:[#allocation14] sm:$0xc0]
        %v3945 = vld [vmem:[#allocation14 + $0x10] sm:$0xff]
        %v3946 = vld [vmem:[#allocation14 + $0x20] sm:$0x3f]
        %v3947 = vrot.slane %v1102, 5
        %v3948 = vrot.slane %v1103, 5
        %v3949 = vrot.slane %v1104, 5
        %v3950 = vsel %vm910, %v3947, %v3949
        %v3951 = vrot.slane %v1105, 5
        %v3952 = vsel %vm910, %v3948, %v3951
        %v3953 = vrot.slane %v1106, 5
        %v3954 = vsel %vm910, %v3949, %v3953
        %v3955 = vrot.slane %v1107, 5
        %v3956 = vsel %vm910, %v3951, %v3955
        %3957 = vrot.lane.b32.xlu0 %v3947, 104
        %v3958 = vpop.permute.xlu0 %3957
        %3959 = vrot.lane.b32.xlu0 %v3948, 104
        %v3960 = vpop.permute.xlu0 %3959
        %3961 = vrot.lane.b32.xlu0 %v3950, 104
        %v3962 = vpop.permute.xlu0 %3961
        %3963 = vrot.lane.b32.xlu0 %v3952, 104
        %v3964 = vpop.permute.xlu0 %3963
        %3965 = vrot.lane.b32.xlu0 %v3954, 104
        %v3966 = vpop.permute.xlu0 %3965
        %3967 = vrot.lane.b32.xlu0 %v3956, 104
        %v3968 = vpop.permute.xlu0 %3967
        %v3969 = vsel %vm1136, %v3958, %v3960
        %v3970 = vsel %vm1136, %v3962, %v3964
        %v3971 = vsel %vm1136, %v3966, %v3968
        %v3975 = vadd.f32 %v3941, %v3969
        %v3976 = vadd.f32 %v3942, %v3970
        %v3977 = vadd.f32 %v3943, %v3971
        %v3978 = vsub.f32 %v3975, %v3944
        %v3979 = vsub.f32 %v3976, %v3945
        %v3980 = vsub.f32 %v3977, %v3946
        %v3984 = vrot.slane %v3978, 6
        %v3985 = vrot.slane %v3979, 6
        %v3986 = vsel %vm3445, %v3984, %v3985
        %v3987 = vrot.slane %v3980, 6
        %v3988 = vsel %vm3445, %v3985, %v3987
        %v3991 = vmul.f32 %v728, %v3986
        %v3992 = vmul.f32 %v732, %v3988
        %v3993 = vpack.c.bf16 %v3992, %v3991
        %3994 = vst [vmem:[#allocation6 + $0x150] sm:$0xff] %v3993
        %v3995 = vld [vmem:[#allocation2] sm:$0xc0]
        %v3996 = vld [vmem:[#allocation2 + $0x8] sm:$0xc0]
        %v3997 = vld [vmem:[#allocation2 + $0x10] sm:$0xff]
        %v3998 = vld [vmem:[#allocation2 + $0x18] sm:$0xff]
        %v3999 = vld [vmem:[#allocation2 + $0x20] sm:$0x3f]
        %v4000 = vld [vmem:[#allocation2 + $0x28] sm:$0x3f]
        %v4001 = vld [vmem:[#allocation14] sm:$0xc0]
        %v4002 = vld [vmem:[#allocation14 + $0x8] sm:$0xc0]
        %v4003 = vld [vmem:[#allocation14 + $0x10] sm:$0xff]
        %v4004 = vld [vmem:[#allocation14 + $0x18] sm:$0xff]
        %v4005 = vld [vmem:[#allocation14 + $0x20] sm:$0x3f]
        %v4006 = vld [vmem:[#allocation14 + $0x28] sm:$0x3f]
        %4007 = vrot.lane.b32.xlu0 %v3947, 112
        %v4008 = vpop.permute.xlu0 %4007
        %4009 = vrot.lane.b32.xlu0 %v3948, 112
        %v4010 = vpop.permute.xlu0 %4009
        %4011 = vrot.lane.b32.xlu0 %v3950, 112
        %v4012 = vpop.permute.xlu0 %4011
        %4013 = vrot.lane.b32.xlu0 %v3952, 112
        %v4014 = vpop.permute.xlu0 %4013
        %4015 = vrot.lane.b32.xlu0 %v3954, 112
        %v4016 = vpop.permute.xlu0 %4015
        %4017 = vrot.lane.b32.xlu0 %v3956, 112
        %v4018 = vpop.permute.xlu0 %4017
        %v4019 = vsel %vm1165, %v4008, %v4010
        %v4020 = vsel %vm1165, %v4012, %v4014
        %v4021 = vsel %vm1165, %v4016, %v4018
        %v4028 = vadd.f32 %v3995, %v4019
        %v4029 = vadd.f32 %v3996, %v4010
        %v4030 = vadd.f32 %v3997, %v4020
        %v4031 = vadd.f32 %v3998, %v4014
        %v4032 = vadd.f32 %v3999, %v4021
        %v4033 = vadd.f32 %v4000, %v4018
        %v4034 = vsub.f32 %v4028, %v4001
        %v4035 = vsub.f32 %v4029, %v4002
        %v4036 = vsub.f32 %v4030, %v4003
        %v4037 = vsub.f32 %v4031, %v4004
        %v4038 = vsub.f32 %v4032, %v4005
        %v4039 = vsub.f32 %v4033, %v4006
        %v4046 = vrot.slane %v4034, 6
        %v4047 = vrot.slane %v4036, 6
        %v4048 = vsel %vm3445, %v4046, %v4047
        %v4049 = vrot.slane %v4035, 6
        %v4050 = vrot.slane %v4037, 6
        %v4051 = vsel %vm3445, %v4049, %v4050
        %v4052 = vrot.slane %v4038, 6
        %v4053 = vsel %vm3445, %v4047, %v4052
        %v4054 = vrot.slane %v4039, 6
        %v4055 = vsel %vm3445, %v4050, %v4054
        %4056 = vrot.lane.b32.xlu0 %v4048, 120
        %v4057 = vpop.permute.xlu0 %4056
        %4058 = vrot.lane.b32.xlu0 %v4051, 120
        %v4059 = vpop.permute.xlu0 %4058
        %4060 = vrot.lane.b32.xlu0 %v4053, 120
        %v4061 = vpop.permute.xlu0 %4060
        %4062 = vrot.lane.b32.xlu0 %v4055, 120
        %v4063 = vpop.permute.xlu0 %4062
        %v4064 = vsel %vm1192, %v4057, %v4059
        %v4065 = vsel %vm1192, %v4061, %v4063
        %v4068 = vmul.f32 %v728, %v4064
        %v4069 = vmul.f32 %v732, %v4065
        %v4070 = vpack.c.bf16 %v4069, %v4068
        %4071 = vst [vmem:[#allocation6 + $0x158] sm:$0xff] %v4070
        %v4072 = vld [vmem:[#allocation2] sm:$0xc0]
        %v4073 = vld [vmem:[#allocation2 + $0x8] sm:$0xc0]
        %v4074 = vld [vmem:[#allocation2 + $0x10] sm:$0xff]
        %v4075 = vld [vmem:[#allocation2 + $0x18] sm:$0xff]
        %v4076 = vld [vmem:[#allocation2 + $0x20] sm:$0x3f]
        %v4077 = vld [vmem:[#allocation2 + $0x28] sm:$0x3f]
        %v4078 = vld [vmem:[#allocation14] sm:$0xc0]
        %v4079 = vld [vmem:[#allocation14 + $0x8] sm:$0xc0]
        %v4080 = vld [vmem:[#allocation14 + $0x10] sm:$0xff]
        %v4081 = vld [vmem:[#allocation14 + $0x18] sm:$0xff]
        %v4082 = vld [vmem:[#allocation14 + $0x20] sm:$0x3f]
        %v4083 = vld [vmem:[#allocation14 + $0x28] sm:$0x3f]
        %4084 = vrot.lane.b32.xlu0 %v3947, 120
        %v4085 = vpop.permute.xlu0 %4084
        %4086 = vrot.lane.b32.xlu0 %v3948, 120
        %v4087 = vpop.permute.xlu0 %4086
        %4088 = vrot.lane.b32.xlu0 %v3950, 120
        %v4089 = vpop.permute.xlu0 %4088
        %4090 = vrot.lane.b32.xlu0 %v3952, 120
        %v4091 = vpop.permute.xlu0 %4090
        %4092 = vrot.lane.b32.xlu0 %v3954, 120
        %v4093 = vpop.permute.xlu0 %4092
        %4094 = vrot.lane.b32.xlu0 %v3956, 120
        %v4095 = vpop.permute.xlu0 %4094
        %v4096 = vsel %vm1192, %v4085, %v4087
        %v4097 = vsel %vm1192, %v4089, %v4091
        %v4098 = vsel %vm1192, %v4093, %v4095
        %v4105 = vadd.f32 %v4072, %v4096
        %v4106 = vadd.f32 %v4073, %v4087
        %v4107 = vadd.f32 %v4074, %v4097
        %v4108 = vadd.f32 %v4075, %v4091
        %v4109 = vadd.f32 %v4076, %v4098
        %v4110 = vadd.f32 %v4077, %v4095
        %v4111 = vsub.f32 %v4105, %v4078
        %v4112 = vsub.f32 %v4106, %v4079
        %v4113 = vsub.f32 %v4107, %v4080
        %v4114 = vsub.f32 %v4108, %v4081
        %v4115 = vsub.f32 %v4109, %v4082
        %v4116 = vsub.f32 %v4110, %v4083
        %v4123 = vrot.slane %v4111, 6
        %v4124 = vrot.slane %v4113, 6
        %v4125 = vsel %vm3445, %v4123, %v4124
        %v4126 = vrot.slane %v4112, 6
        %v4127 = vrot.slane %v4114, 6
        %v4128 = vsel %vm3445, %v4126, %v4127
        %v4129 = vrot.slane %v4115, 6
        %v4130 = vsel %vm3445, %v4124, %v4129
        %v4131 = vrot.slane %v4116, 6
        %v4132 = vsel %vm3445, %v4127, %v4131
        %4133 = vrot.lane.b32.xlu0 %v4125, 112
        %v4134 = vpop.permute.xlu0 %4133
        %4135 = vrot.lane.b32.xlu0 %v4128, 112
        %v4136 = vpop.permute.xlu0 %4135
        %4137 = vrot.lane.b32.xlu0 %v4130, 112
        %v4138 = vpop.permute.xlu0 %4137
        %4139 = vrot.lane.b32.xlu0 %v4132, 112
        %v4140 = vpop.permute.xlu0 %4139
        %v4141 = vsel %vm1165, %v4134, %v4136
        %v4142 = vsel %vm1165, %v4138, %v4140
        %v4145 = vmul.f32 %v728, %v4141
        %v4146 = vmul.f32 %v732, %v4142
        %v4147 = vpack.c.bf16 %v4146, %v4145
        %4148 = vst [vmem:[#allocation6 + $0x160] sm:$0xff] %v4147
        %v4149 = vld [vmem:[#allocation2] sm:$0xc0]
        %v4150 = vld [vmem:[#allocation2 + $0x8] sm:$0xc0]
        %v4151 = vld [vmem:[#allocation2 + $0x10] sm:$0xff]
        %v4152 = vld [vmem:[#allocation2 + $0x18] sm:$0xff]
        %v4153 = vld [vmem:[#allocation2 + $0x20] sm:$0x3f]
        %v4154 = vld [vmem:[#allocation2 + $0x28] sm:$0x3f]
        %v4155 = vld [vmem:[#allocation14] sm:$0xc0]
        %v4156 = vld [vmem:[#allocation14 + $0x8] sm:$0xc0]
        %v4157 = vld [vmem:[#allocation14 + $0x10] sm:$0xff]
        %v4158 = vld [vmem:[#allocation14 + $0x18] sm:$0xff]
        %v4159 = vld [vmem:[#allocation14 + $0x20] sm:$0x3f]
        %v4160 = vld [vmem:[#allocation14 + $0x28] sm:$0x3f]
        %v4167 = vadd.f32 %v4149, %v3947
        %v4168 = vadd.f32 %v4150, %v3948
        %v4169 = vadd.f32 %v4151, %v3950
        %v4170 = vadd.f32 %v4152, %v3952
        %v4171 = vadd.f32 %v4153, %v3954
        %v4172 = vadd.f32 %v4154, %v3956
        %v4173 = vsub.f32 %v4167, %v4155
        %v4174 = vsub.f32 %v4168, %v4156
        %v4175 = vsub.f32 %v4169, %v4157
        %v4176 = vsub.f32 %v4170, %v4158
        %v4177 = vsub.f32 %v4171, %v4159
        %v4178 = vsub.f32 %v4172, %v4160
        %v4185 = vrot.slane %v4173, 6
        %v4186 = vrot.slane %v4175, 6
        %v4187 = vsel %vm3445, %v4185, %v4186
        %v4188 = vrot.slane %v4174, 6
        %v4189 = vrot.slane %v4176, 6
        %v4190 = vsel %vm3445, %v4188, %v4189
        %v4191 = vrot.slane %v4177, 6
        %v4192 = vsel %vm3445, %v4186, %v4191
        %v4193 = vrot.slane %v4178, 6
        %v4194 = vsel %vm3445, %v4189, %v4193
        %4195 = vrot.lane.b32.xlu0 %v4187, 104
        %v4196 = vpop.permute.xlu0 %4195
        %4197 = vrot.lane.b32.xlu0 %v4190, 104
        %v4198 = vpop.permute.xlu0 %4197
        %4199 = vrot.lane.b32.xlu0 %v4192, 104
        %v4200 = vpop.permute.xlu0 %4199
        %4201 = vrot.lane.b32.xlu0 %v4194, 104
        %v4202 = vpop.permute.xlu0 %4201
        %v4203 = vsel %vm1136, %v4196, %v4198
        %v4204 = vsel %vm1136, %v4200, %v4202
        %v4207 = vmul.f32 %v728, %v4203
        %v4208 = vmul.f32 %v732, %v4204
        %v4209 = vpack.c.bf16 %v4208, %v4207
        %4210 = vst [vmem:[#allocation6 + $0x168] sm:$0xff] %v4209
        %v4211 = vld [vmem:[#allocation2] sm:$0xc0]
        %v4212 = vld [vmem:[#allocation2 + $0x8] sm:$0xc0]
        %v4213 = vld [vmem:[#allocation2 + $0x10] sm:$0xff]
        %v4214 = vld [vmem:[#allocation2 + $0x18] sm:$0xff]
        %v4215 = vld [vmem:[#allocation2 + $0x20] sm:$0x3f]
        %v4216 = vld [vmem:[#allocation2 + $0x28] sm:$0x3f]
        %v4217 = vld [vmem:[#allocation14] sm:$0xc0]
        %v4218 = vld [vmem:[#allocation14 + $0x8] sm:$0xc0]
        %v4219 = vld [vmem:[#allocation14 + $0x10] sm:$0xff]
        %v4220 = vld [vmem:[#allocation14 + $0x18] sm:$0xff]
        %v4221 = vld [vmem:[#allocation14 + $0x20] sm:$0x3f]
        %v4222 = vld [vmem:[#allocation14 + $0x28] sm:$0x3f]
        %4223 = vrot.lane.b32.xlu0 %v3947, 8
        %v4224 = vpop.permute.xlu0 %4223
        %4225 = vrot.lane.b32.xlu0 %v3948, 8
        %v4226 = vpop.permute.xlu0 %4225
        %4227 = vrot.lane.b32.xlu0 %v3950, 8
        %v4228 = vpop.permute.xlu0 %4227
        %4229 = vrot.lane.b32.xlu0 %v3952, 8
        %v4230 = vpop.permute.xlu0 %4229
        %4231 = vrot.lane.b32.xlu0 %v3954, 8
        %v4232 = vpop.permute.xlu0 %4231
        %4233 = vrot.lane.b32.xlu0 %v3956, 8
        %v4234 = vpop.permute.xlu0 %4233
        %v4235 = vsel %vm1307, %v4224, %v4226
        %v4236 = vsel %vm1307, %v4228, %v4230
        %v4237 = vsel %vm1307, %v4232, %v4234
        %v4244 = vadd.f32 %v4211, %v4224
        %v4245 = vadd.f32 %v4212, %v4235
        %v4246 = vadd.f32 %v4213, %v4228
        %v4247 = vadd.f32 %v4214, %v4236
        %v4248 = vadd.f32 %v4215, %v4232
        %v4249 = vadd.f32 %v4216, %v4237
        %v4250 = vsub.f32 %v4244, %v4217
        %v4251 = vsub.f32 %v4245, %v4218
        %v4252 = vsub.f32 %v4246, %v4219
        %v4253 = vsub.f32 %v4247, %v4220
        %v4254 = vsub.f32 %v4248, %v4221
        %v4255 = vsub.f32 %v4249, %v4222
        %v4262 = vrot.slane %v4250, 6
        %v4263 = vrot.slane %v4252, 6
        %v4264 = vsel %vm3445, %v4262, %v4263
        %v4265 = vrot.slane %v4251, 6
        %v4266 = vrot.slane %v4253, 6
        %v4267 = vsel %vm3445, %v4265, %v4266
        %v4268 = vrot.slane %v4254, 6
        %v4269 = vsel %vm3445, %v4263, %v4268
        %v4270 = vrot.slane %v4255, 6
        %v4271 = vsel %vm3445, %v4266, %v4270
        %4272 = vrot.lane.b32.xlu0 %v4264, 96
        %v4273 = vpop.permute.xlu0 %4272
        %4274 = vrot.lane.b32.xlu0 %v4267, 96
        %v4275 = vpop.permute.xlu0 %4274
        %4276 = vrot.lane.b32.xlu0 %v4269, 96
        %v4277 = vpop.permute.xlu0 %4276
        %4278 = vrot.lane.b32.xlu0 %v4271, 96
        %v4279 = vpop.permute.xlu0 %4278
        %v4280 = vsel %vm1334, %v4273, %v4275
        %v4281 = vsel %vm1334, %v4277, %v4279
        %v4284 = vmul.f32 %v728, %v4280
        %v4285 = vmul.f32 %v732, %v4281
        %v4286 = vpack.c.bf16 %v4285, %v4284
        %4287 = vst [vmem:[#allocation6 + $0x170] sm:$0xff] %v4286
        %v4288 = vld [vmem:[#allocation2] sm:$0xc0]
        %v4289 = vld [vmem:[#allocation2 + $0x8] sm:$0xc0]
        %v4290 = vld [vmem:[#allocation2 + $0x10] sm:$0xff]
        %v4291 = vld [vmem:[#allocation2 + $0x18] sm:$0xff]
        %v4292 = vld [vmem:[#allocation2 + $0x20] sm:$0x3f]
        %v4293 = vld [vmem:[#allocation2 + $0x28] sm:$0x3f]
        %v4294 = vld [vmem:[#allocation14] sm:$0xc0]
        %v4295 = vld [vmem:[#allocation14 + $0x8] sm:$0xc0]
        %v4296 = vld [vmem:[#allocation14 + $0x10] sm:$0xff]
        %v4297 = vld [vmem:[#allocation14 + $0x18] sm:$0xff]
        %v4298 = vld [vmem:[#allocation14 + $0x20] sm:$0x3f]
        %v4299 = vld [vmem:[#allocation14 + $0x28] sm:$0x3f]
        %4300 = vrot.lane.b32.xlu0 %v3947, 16
        %v4301 = vpop.permute.xlu0 %4300
        %4302 = vrot.lane.b32.xlu0 %v3948, 16
        %v4303 = vpop.permute.xlu0 %4302
        %4304 = vrot.lane.b32.xlu0 %v3950, 16
        %v4305 = vpop.permute.xlu0 %4304
        %4306 = vrot.lane.b32.xlu0 %v3952, 16
        %v4307 = vpop.permute.xlu0 %4306
        %4308 = vrot.lane.b32.xlu0 %v3954, 16
        %v4309 = vpop.permute.xlu0 %4308
        %4310 = vrot.lane.b32.xlu0 %v3956, 16
        %v4311 = vpop.permute.xlu0 %4310
        %v4312 = vsel %vm1359, %v4301, %v4303
        %v4313 = vsel %vm1359, %v4305, %v4307
        %v4314 = vsel %vm1359, %v4309, %v4311
        %v4321 = vadd.f32 %v4288, %v4301
        %v4322 = vadd.f32 %v4289, %v4312
        %v4323 = vadd.f32 %v4290, %v4305
        %v4324 = vadd.f32 %v4291, %v4313
        %v4325 = vadd.f32 %v4292, %v4309
        %v4326 = vadd.f32 %v4293, %v4314
        %v4327 = vsub.f32 %v4321, %v4294
        %v4328 = vsub.f32 %v4322, %v4295
        %v4329 = vsub.f32 %v4323, %v4296
        %v4330 = vsub.f32 %v4324, %v4297
        %v4331 = vsub.f32 %v4325, %v4298
        %v4332 = vsub.f32 %v4326, %v4299
        %v4339 = vrot.slane %v4327, 6
        %v4340 = vrot.slane %v4329, 6
        %v4341 = vsel %vm3445, %v4339, %v4340
        %v4342 = vrot.slane %v4328, 6
        %v4343 = vrot.slane %v4330, 6
        %v4344 = vsel %vm3445, %v4342, %v4343
        %v4345 = vrot.slane %v4331, 6
        %v4346 = vsel %vm3445, %v4340, %v4345
        %v4347 = vrot.slane %v4332, 6
        %v4348 = vsel %vm3445, %v4343, %v4347
        %4349 = vrot.lane.b32.xlu0 %v4341, 88
        %v4350 = vpop.permute.xlu0 %4349
        %4351 = vrot.lane.b32.xlu0 %v4344, 88
        %v4352 = vpop.permute.xlu0 %4351
        %4353 = vrot.lane.b32.xlu0 %v4346, 88
        %v4354 = vpop.permute.xlu0 %4353
        %4355 = vrot.lane.b32.xlu0 %v4348, 88
        %v4356 = vpop.permute.xlu0 %4355
        %v4357 = vsel %vm1386, %v4350, %v4352
        %v4358 = vsel %vm1386, %v4354, %v4356
        %v4361 = vmul.f32 %v728, %v4357
        %v4362 = vmul.f32 %v732, %v4358
        %v4363 = vpack.c.bf16 %v4362, %v4361
        %4364 = vst [vmem:[#allocation6 + $0x178] sm:$0xff] %v4363
        %v4365 = vld [vmem:[#allocation2] sm:$0xc0]
        %v4366 = vld [vmem:[#allocation2 + $0x8] sm:$0xc0]
        %v4367 = vld [vmem:[#allocation2 + $0x10] sm:$0xff]
        %v4368 = vld [vmem:[#allocation2 + $0x18] sm:$0xff]
        %v4369 = vld [vmem:[#allocation2 + $0x20] sm:$0x3f]
        %v4370 = vld [vmem:[#allocation2 + $0x28] sm:$0x3f]
        %v4371 = vld [vmem:[#allocation14] sm:$0xc0]
        %v4372 = vld [vmem:[#allocation14 + $0x8] sm:$0xc0]
        %v4373 = vld [vmem:[#allocation14 + $0x10] sm:$0xff]
        %v4374 = vld [vmem:[#allocation14 + $0x18] sm:$0xff]
        %v4375 = vld [vmem:[#allocation14 + $0x20] sm:$0x3f]
        %v4376 = vld [vmem:[#allocation14 + $0x28] sm:$0x3f]
        %4377 = vrot.lane.b32.xlu0 %v3947, 24
        %v4378 = vpop.permute.xlu0 %4377
        %4379 = vrot.lane.b32.xlu0 %v3948, 24
        %v4380 = vpop.permute.xlu0 %4379
        %4381 = vrot.lane.b32.xlu0 %v3950, 24
        %v4382 = vpop.permute.xlu0 %4381
        %4383 = vrot.lane.b32.xlu0 %v3952, 24
        %v4384 = vpop.permute.xlu0 %4383
        %4385 = vrot.lane.b32.xlu0 %v3954, 24
        %v4386 = vpop.permute.xlu0 %4385
        %4387 = vrot.lane.b32.xlu0 %v3956, 24
        %v4388 = vpop.permute.xlu0 %4387
        %v4389 = vsel %vm1411, %v4378, %v4380
        %v4390 = vsel %vm1411, %v4382, %v4384
        %v4391 = vsel %vm1411, %v4386, %v4388
        %v4398 = vadd.f32 %v4365, %v4378
        %v4399 = vadd.f32 %v4366, %v4389
        %v4400 = vadd.f32 %v4367, %v4382
        %v4401 = vadd.f32 %v4368, %v4390
        %v4402 = vadd.f32 %v4369, %v4386
        %v4403 = vadd.f32 %v4370, %v4391
        %v4404 = vsub.f32 %v4398, %v4371
        %v4405 = vsub.f32 %v4399, %v4372
        %v4406 = vsub.f32 %v4400, %v4373
        %v4407 = vsub.f32 %v4401, %v4374
        %v4408 = vsub.f32 %v4402, %v4375
        %v4409 = vsub.f32 %v4403, %v4376
        %v4416 = vrot.slane %v4404, 6
        %v4417 = vrot.slane %v4406, 6
        %v4418 = vsel %vm3445, %v4416, %v4417
        %v4419 = vrot.slane %v4405, 6
        %v4420 = vrot.slane %v4407, 6
        %v4421 = vsel %vm3445, %v4419, %v4420
        %v4422 = vrot.slane %v4408, 6
        %v4423 = vsel %vm3445, %v4417, %v4422
        %v4424 = vrot.slane %v4409, 6
        %v4425 = vsel %vm3445, %v4420, %v4424
        %4426 = vrot.lane.b32.xlu0 %v4418, 80
        %v4427 = vpop.permute.xlu0 %4426
        %4428 = vrot.lane.b32.xlu0 %v4421, 80
        %v4429 = vpop.permute.xlu0 %4428
        %4430 = vrot.lane.b32.xlu0 %v4423, 80
        %v4431 = vpop.permute.xlu0 %4430
        %4432 = vrot.lane.b32.xlu0 %v4425, 80
        %v4433 = vpop.permute.xlu0 %4432
        %v4434 = vsel %vm1438, %v4427, %v4429
        %v4435 = vsel %vm1438, %v4431, %v4433
        %v4438 = vmul.f32 %v728, %v4434
        %v4439 = vmul.f32 %v732, %v4435
        %v4440 = vpack.c.bf16 %v4439, %v4438
        %4441 = vst [vmem:[#allocation6 + $0x180] sm:$0xff] %v4440
        %v4442 = vld [vmem:[#allocation6] sm:$0xff]
        %v4443 = vld [vmem:[#allocation6 + $0x8] sm:$0xff]
        %v4444 = vld [vmem:[#allocation6 + $0x10] sm:$0xff]
        %v4445 = vld [vmem:[#allocation6 + $0x18] sm:$0xff]
        %v4446 = vld [vmem:[#allocation6 + $0x20] sm:$0xff]
        %v4447 = vld [vmem:[#allocation6 + $0x28] sm:$0xff]
        %v4448 = vld [vmem:[#allocation6 + $0x30] sm:$0xff]
        %v4449 = vld [vmem:[#allocation6 + $0x38] sm:$0xff]
        %v4450 = vld [vmem:[#allocation6 + $0x40] sm:$0xff]
        %v4451 = vld [vmem:[#allocation6 + $0x48] sm:$0xff]
        %v4452 = vld [vmem:[#allocation6 + $0x50] sm:$0xff]
        %v4453 = vld [vmem:[#allocation6 + $0x58] sm:$0xff]
        %v4454 = vld [vmem:[#allocation6 + $0x60] sm:$0xff]
        %v4455 = vld [vmem:[#allocation6 + $0x68] sm:$0xff]
        %v4456 = vld [vmem:[#allocation6 + $0x70] sm:$0xff]
        %v4457 = vld [vmem:[#allocation6 + $0x78] sm:$0xff]
        %v4458 = vld [vmem:[#allocation6 + $0x80] sm:$0xff]
        %v4459 = vld [vmem:[#allocation6 + $0x88] sm:$0xff]
        %v4460 = vld [vmem:[#allocation6 + $0x90] sm:$0xff]
        %v4461 = vld [vmem:[#allocation6 + $0x98] sm:$0xff]
        %v4462 = vld [vmem:[#allocation6 + $0xa0] sm:$0xff]
        %v4463 = vld [vmem:[#allocation6 + $0xa8] sm:$0xff]
        %v4464 = vld [vmem:[#allocation6 + $0xb0] sm:$0xff]
        %v4465 = vld [vmem:[#allocation6 + $0xb8] sm:$0xff]
        %v4466 = vld [vmem:[#allocation6 + $0xc0] sm:$0xff]
        %v4467 = vld [vmem:[#allocation6 + $0xc8] sm:$0xff]
        %v4468 = vld [vmem:[#allocation6 + $0xd0] sm:$0xff]
        %v4469 = vld [vmem:[#allocation6 + $0xd8] sm:$0xff]
        %v4470 = vld [vmem:[#allocation6 + $0xe0] sm:$0xff]
        %v4471 = vld [vmem:[#allocation6 + $0xe8] sm:$0xff]
        %v4472 = vld [vmem:[#allocation6 + $0xf0] sm:$0xff]
        %v4473 = vld [vmem:[#allocation6 + $0xf8] sm:$0xff]
        %v4474 = vld [vmem:[#allocation6 + $0x100] sm:$0xff]
        %v4475 = vld [vmem:[#allocation6 + $0x108] sm:$0xff]
        %v4476 = vld [vmem:[#allocation6 + $0x110] sm:$0xff]
        %v4477 = vld [vmem:[#allocation6 + $0x118] sm:$0xff]
        %v4478 = vld [vmem:[#allocation6 + $0x120] sm:$0xff]
        %v4479 = vld [vmem:[#allocation6 + $0x128] sm:$0xff]
        %v4480 = vld [vmem:[#allocation6 + $0x130] sm:$0xff]
        %v4481 = vld [vmem:[#allocation6 + $0x138] sm:$0xff]
        %v4482 = vld [vmem:[#allocation6 + $0x140] sm:$0xff]
        %v4483 = vld [vmem:[#allocation6 + $0x148] sm:$0xff]
        %v4484 = vld [vmem:[#allocation6 + $0x150] sm:$0xff]
        %v4485 = vld [vmem:[#allocation6 + $0x158] sm:$0xff]
        %v4486 = vld [vmem:[#allocation6 + $0x160] sm:$0xff]
        %v4487 = vld [vmem:[#allocation6 + $0x168] sm:$0xff]
        %v4488 = vld [vmem:[#allocation6 + $0x170] sm:$0xff]
        %v4489 = vld [vmem:[#allocation6 + $0x178] sm:$0xff]
        %v4490 = vld [vmem:[#allocation6 + $0x180] sm:$0xff]
        %v4491 = vld [vmem:[#allocation15] sm:$0xf]
        %v4492 = vld [vmem:[#allocation15 + $0x4] sm:$0xf]
        %v4493 = vld [vmem:[#allocation15 + $0x8] sm:$0xf]
        %v4494 = vld [vmem:[#allocation15 + $0xc] sm:$0xf]
        %v4495 = vld [vmem:[#allocation15 + $0x10] sm:$0xf]
        %v4496 = vld [vmem:[#allocation15 + $0x14] sm:$0xf]
        %v4497 = vld [vmem:[#allocation15 + $0x18] sm:$0xf]
        %v4498 = vld [vmem:[#allocation15 + $0x1c] sm:$0xf]
        %v4499 = vld [vmem:[#allocation15 + $0x20] sm:$0xf]
        %v4500 = vld [vmem:[#allocation15 + $0x24] sm:$0xf]
        %v4501 = vld [vmem:[#allocation15 + $0x28] sm:$0xf]
        %v4502 = vld [vmem:[#allocation15 + $0x2c] sm:$0xf]
        %v4503 = vld [vmem:[#allocation15 + $0x30] sm:$0xf]
        %v4504 = vld [vmem:[#allocation15 + $0x34] sm:$0xf]
        %v4505 = vld [vmem:[#allocation15 + $0x38] sm:$0xf]
        %v4506 = vld [vmem:[#allocation15 + $0x3c] sm:$0xf]
        %v4523 = vunpack.c.l.b16 %v4491
        %v4524 = vunpack.c.l.b16 %v4492
        %v4525 = vunpack.c.l.b16 %v4493
        %v4526 = vunpack.c.l.b16 %v4494
        %v4527 = vunpack.c.l.b16 %v4495
        %v4528 = vunpack.c.l.b16 %v4496
        %v4529 = vunpack.c.l.b16 %v4497
        %v4530 = vunpack.c.l.b16 %v4498
        %v4531 = vunpack.c.l.b16 %v4499
        %v4532 = vunpack.c.l.b16 %v4500
        %v4533 = vunpack.c.l.b16 %v4501
        %v4534 = vunpack.c.l.b16 %v4502
        %v4535 = vunpack.c.l.b16 %v4503
        %v4536 = vunpack.c.l.b16 %v4504
        %v4537 = vunpack.c.l.b16 %v4505
        %v4538 = vunpack.c.l.b16 %v4506
        %v4539 = vpack.c.b16 %v4524, %v4523
        %v4540 = vpack.c.b16 %v4526, %v4525
        %v4541 = vpack.c.b16 %v4528, %v4527
        %v4542 = vpack.c.b16 %v4530, %v4529
        %v4543 = vpack.c.b16 %v4532, %v4531
        %v4544 = vpack.c.b16 %v4534, %v4533
        %v4545 = vpack.c.b16 %v4536, %v4535
        %v4546 = vpack.c.b16 %v4538, %v4537
        %4555 = vmatprep.subr.bf16.mxu0 0
        %4556 = vmatpush1.bf16.msra.mxu0 %v4539
        %4557 = vmatprep.subr.bf16.mxu0 0
        %4558 = vmatpush1.bf16.msra.mxu0 %v4540
        %4559 = vmatprep.subr.bf16.mxu0 0
        %4560 = vmatpush1.bf16.msra.mxu0 %v4541
        %4561 = vmatprep.subr.bf16.mxu0 0
        %4562 = vmatpush1.bf16.msra.mxu0 %v4542
        %4563 = vmatprep.subr.bf16.mxu0 0
        %4564 = vmatpush1.bf16.msra.mxu0 %v4543
        %4565 = vmatprep.subr.bf16.mxu0 0
        %4566 = vmatpush1.bf16.msra.mxu0 %v4544
        %4567 = vmatprep.subr.bf16.mxu0 0
        %4568 = vmatpush1.bf16.msra.mxu0 %v4545
        %4569 = vmatprep.subr.bf16.mxu0 0
        %4570 = vmatpush1.bf16.msra.mxu0 %v4546
        %4571 = vmatprep.subr.bf16.mxu0 0
        %4572 = vmatpush1.bf16.msra.mxu0 0
        %4573 = vmatprep.subr.bf16.mxu0 0
        %4574 = vmatpush1.bf16.msra.mxu0 0
        %4575 = vmatprep.subr.bf16.mxu0 0
        %4576 = vmatpush1.bf16.msra.mxu0 0
        %4577 = vmatprep.subr.bf16.mxu0 0
        %4578 = vmatpush1.bf16.msra.mxu0 0
        %4579 = vmatprep.subr.bf16.mxu0 0
        %4580 = vmatpush1.bf16.msra.mxu0 0
        %4581 = vmatprep.subr.bf16.mxu0 0
        %4582 = vmatpush1.bf16.msra.mxu0 0
        %4583 = vmatprep.subr.bf16.mxu0 0
        %4584 = vmatpush1.bf16.msra.mxu0 0
        %4585 = vmatprep.subr.bf16.mxu0 0
        %4586 = vmatpush1.bf16.msra.mxu0 0
        %4587 = vmatprep.mubr.bf16.mxu0 0
        %4588 = vmatmul.mubr.bf16.gmra.mrb[0].mxu0 %v4442
        %v4589 = vpop.f32.mrb[0].mxu0
        %v4590 = vadd.f32 0.0, %v4589
        %v4591 = vpop.f32.mrb[0].mxu0
        %v4592 = vpop.f32.mrb[0].mxu0
        %v4593 = vadd.f32 0.0, %v4592
        %v4594 = vpop.f32.mrb[0].mxu0
        %4595 = vmatprep.mubr.bf16.mxu0 0
        %4596 = vmatmul.mubr.bf16.gmra.mrb[0].mxu0 %v4443
        %v4597 = vpop.f32.mrb[0].mxu0
        %v4598 = vadd.f32 0.0, %v4597
        %v4599 = vpop.f32.mrb[0].mxu0
        %v4600 = vpop.f32.mrb[0].mxu0
        %v4601 = vadd.f32 0.0, %v4600
        %v4602 = vpop.f32.mrb[0].mxu0
        %4603 = vmatprep.mubr.bf16.mxu0 0
        %4604 = vmatmul.mubr.bf16.gmra.mrb[0].mxu0 %v4444
        %v4605 = vpop.f32.mrb[0].mxu0
        %v4606 = vadd.f32 0.0, %v4605
        %v4607 = vpop.f32.mrb[0].mxu0
        %v4608 = vpop.f32.mrb[0].mxu0
        %v4609 = vadd.f32 0.0, %v4608
        %v4610 = vpop.f32.mrb[0].mxu0
        %4611 = vmatprep.mubr.bf16.mxu0 0
        %4612 = vmatmul.mubr.bf16.gmra.mrb[0].mxu0 %v4445
        %v4613 = vpop.f32.mrb[0].mxu0
        %v4614 = vadd.f32 0.0, %v4613
        %v4615 = vpop.f32.mrb[0].mxu0
        %v4616 = vpop.f32.mrb[0].mxu0
        %v4617 = vadd.f32 0.0, %v4616
        %v4618 = vpop.f32.mrb[0].mxu0
        %4619 = vmatprep.mubr.bf16.mxu0 0
        %4620 = vmatmul.mubr.bf16.gmra.mrb[0].mxu0 %v4446
        %v4621 = vpop.f32.mrb[0].mxu0
        %v4622 = vadd.f32 0.0, %v4621
        %v4623 = vpop.f32.mrb[0].mxu0
        %v4624 = vpop.f32.mrb[0].mxu0
        %v4625 = vadd.f32 0.0, %v4624
        %v4626 = vpop.f32.mrb[0].mxu0
        %4627 = vmatprep.mubr.bf16.mxu0 0
        %4628 = vmatmul.mubr.bf16.gmra.mrb[0].mxu0 %v4447
        %v4629 = vpop.f32.mrb[0].mxu0
        %v4630 = vadd.f32 0.0, %v4629
        %v4631 = vpop.f32.mrb[0].mxu0
        %v4632 = vpop.f32.mrb[0].mxu0
        %v4633 = vadd.f32 0.0, %v4632
        %v4634 = vpop.f32.mrb[0].mxu0
        %4635 = vmatprep.mubr.bf16.mxu0 0
        %4636 = vmatmul.mubr.bf16.gmra.mrb[0].mxu0 %v4448
        %v4637 = vpop.f32.mrb[0].mxu0
        %v4638 = vadd.f32 0.0, %v4637
        %v4639 = vpop.f32.mrb[0].mxu0
        %v4640 = vpop.f32.mrb[0].mxu0
        %v4641 = vadd.f32 0.0, %v4640
        %v4642 = vpop.f32.mrb[0].mxu0
        %4643 = vmatprep.mubr.bf16.mxu0 0
        %4644 = vmatmul.mubr.bf16.gmra.mrb[0].mxu0 %v4449
        %v4645 = vpop.f32.mrb[0].mxu0
        %v4646 = vadd.f32 0.0, %v4645
        %v4647 = vpop.f32.mrb[0].mxu0
        %v4648 = vpop.f32.mrb[0].mxu0
        %v4649 = vadd.f32 0.0, %v4648
        %v4650 = vpop.f32.mrb[0].mxu0
        %4651 = vmatprep.mubr.bf16.mxu0 0
        %4652 = vmatmul.mubr.bf16.gmra.mrb[0].mxu0 %v4450
        %v4653 = vpop.f32.mrb[0].mxu0
        %v4654 = vadd.f32 0.0, %v4653
        %v4655 = vpop.f32.mrb[0].mxu0
        %v4656 = vpop.f32.mrb[0].mxu0
        %v4657 = vadd.f32 0.0, %v4656
        %v4658 = vpop.f32.mrb[0].mxu0
        %4659 = vmatprep.mubr.bf16.mxu0 0
        %4660 = vmatmul.mubr.bf16.gmra.mrb[0].mxu0 %v4451
        %v4661 = vpop.f32.mrb[0].mxu0
        %v4662 = vadd.f32 0.0, %v4661
        %v4663 = vpop.f32.mrb[0].mxu0
        %v4664 = vpop.f32.mrb[0].mxu0
        %v4665 = vadd.f32 0.0, %v4664
        %v4666 = vpop.f32.mrb[0].mxu0
        %4667 = vmatprep.mubr.bf16.mxu0 0
        %4668 = vmatmul.mubr.bf16.gmra.mrb[0].mxu0 %v4452
        %v4669 = vpop.f32.mrb[0].mxu0
        %v4670 = vadd.f32 0.0, %v4669
        %v4671 = vpop.f32.mrb[0].mxu0
        %v4672 = vpop.f32.mrb[0].mxu0
        %v4673 = vadd.f32 0.0, %v4672
        %v4674 = vpop.f32.mrb[0].mxu0
        %4675 = vmatprep.mubr.bf16.mxu0 0
        %4676 = vmatmul.mubr.bf16.gmra.mrb[0].mxu0 %v4453
        %v4677 = vpop.f32.mrb[0].mxu0
        %v4678 = vadd.f32 0.0, %v4677
        %v4679 = vpop.f32.mrb[0].mxu0
        %v4680 = vpop.f32.mrb[0].mxu0
        %v4681 = vadd.f32 0.0, %v4680
        %v4682 = vpop.f32.mrb[0].mxu0
        %4683 = vmatprep.mubr.bf16.mxu0 0
        %4684 = vmatmul.mubr.bf16.gmra.mrb[0].mxu0 %v4454
        %v4685 = vpop.f32.mrb[0].mxu0
        %v4686 = vadd.f32 0.0, %v4685
        %v4687 = vpop.f32.mrb[0].mxu0
        %v4688 = vpop.f32.mrb[0].mxu0
        %v4689 = vadd.f32 0.0, %v4688
        %v4690 = vpop.f32.mrb[0].mxu0
        %4691 = vmatprep.mubr.bf16.mxu0 0
        %4692 = vmatmul.mubr.bf16.gmra.mrb[0].mxu0 %v4455
        %v4693 = vpop.f32.mrb[0].mxu0
        %v4694 = vadd.f32 0.0, %v4693
        %v4695 = vpop.f32.mrb[0].mxu0
        %v4696 = vpop.f32.mrb[0].mxu0
        %v4697 = vadd.f32 0.0, %v4696
        %v4698 = vpop.f32.mrb[0].mxu0
        %4699 = vmatprep.mubr.bf16.mxu0 0
        %4700 = vmatmul.mubr.bf16.gmra.mrb[0].mxu0 %v4456
        %v4701 = vpop.f32.mrb[0].mxu0
        %v4702 = vadd.f32 0.0, %v4701
        %v4703 = vpop.f32.mrb[0].mxu0
        %v4704 = vpop.f32.mrb[0].mxu0
        %v4705 = vadd.f32 0.0, %v4704
        %v4706 = vpop.f32.mrb[0].mxu0
        %4707 = vmatprep.mubr.bf16.mxu0 0
        %4708 = vmatmul.mubr.bf16.gmra.mrb[0].mxu0 %v4457
        %v4709 = vpop.f32.mrb[0].mxu0
        %v4710 = vadd.f32 0.0, %v4709
        %v4711 = vpop.f32.mrb[0].mxu0
        %v4712 = vpop.f32.mrb[0].mxu0
        %v4713 = vadd.f32 0.0, %v4712
        %v4714 = vpop.f32.mrb[0].mxu0
        %4715 = vmatprep.mubr.bf16.mxu0 0
        %4716 = vmatmul.mubr.bf16.gmra.mrb[0].mxu0 %v4458
        %v4717 = vpop.f32.mrb[0].mxu0
        %v4718 = vadd.f32 0.0, %v4717
        %v4719 = vpop.f32.mrb[0].mxu0
        %v4720 = vpop.f32.mrb[0].mxu0
        %v4721 = vadd.f32 0.0, %v4720
        %v4722 = vpop.f32.mrb[0].mxu0
        %4723 = vmatprep.mubr.bf16.mxu0 0
        %4724 = vmatmul.mubr.bf16.gmra.mrb[0].mxu0 %v4459
        %v4725 = vpop.f32.mrb[0].mxu0
        %v4726 = vadd.f32 0.0, %v4725
        %v4727 = vpop.f32.mrb[0].mxu0
        %v4728 = vpop.f32.mrb[0].mxu0
        %v4729 = vadd.f32 0.0, %v4728
        %v4730 = vpop.f32.mrb[0].mxu0
        %4731 = vmatprep.mubr.bf16.mxu0 0
        %4732 = vmatmul.mubr.bf16.gmra.mrb[0].mxu0 %v4460
        %v4733 = vpop.f32.mrb[0].mxu0
        %v4734 = vadd.f32 0.0, %v4733
        %v4735 = vpop.f32.mrb[0].mxu0
        %v4736 = vpop.f32.mrb[0].mxu0
        %v4737 = vadd.f32 0.0, %v4736
        %v4738 = vpop.f32.mrb[0].mxu0
        %4739 = vmatprep.mubr.bf16.mxu0 0
        %4740 = vmatmul.mubr.bf16.gmra.mrb[0].mxu0 %v4461
        %v4741 = vpop.f32.mrb[0].mxu0
        %v4742 = vadd.f32 0.0, %v4741
        %v4743 = vpop.f32.mrb[0].mxu0
        %v4744 = vpop.f32.mrb[0].mxu0
        %v4745 = vadd.f32 0.0, %v4744
        %v4746 = vpop.f32.mrb[0].mxu0
        %4747 = vmatprep.mubr.bf16.mxu0 0
        %4748 = vmatmul.mubr.bf16.gmra.mrb[0].mxu0 %v4462
        %v4749 = vpop.f32.mrb[0].mxu0
        %v4750 = vadd.f32 0.0, %v4749
        %v4751 = vpop.f32.mrb[0].mxu0
        %v4752 = vpop.f32.mrb[0].mxu0
        %v4753 = vadd.f32 0.0, %v4752
        %v4754 = vpop.f32.mrb[0].mxu0
        %4755 = vmatprep.mubr.bf16.mxu0 0
        %4756 = vmatmul.mubr.bf16.gmra.mrb[0].mxu0 %v4463
        %v4757 = vpop.f32.mrb[0].mxu0
        %v4758 = vadd.f32 0.0, %v4757
        %v4759 = vpop.f32.mrb[0].mxu0
        %v4760 = vpop.f32.mrb[0].mxu0
        %v4761 = vadd.f32 0.0, %v4760
        %v4762 = vpop.f32.mrb[0].mxu0
        %4763 = vmatprep.mubr.bf16.mxu0 0
        %4764 = vmatmul.mubr.bf16.gmra.mrb[0].mxu0 %v4464
        %v4765 = vpop.f32.mrb[0].mxu0
        %v4766 = vadd.f32 0.0, %v4765
        %v4767 = vpop.f32.mrb[0].mxu0
        %v4768 = vpop.f32.mrb[0].mxu0
        %v4769 = vadd.f32 0.0, %v4768
        %v4770 = vpop.f32.mrb[0].mxu0
        %4771 = vmatprep.mubr.bf16.mxu0 0
        %4772 = vmatmul.mubr.bf16.gmra.mrb[0].mxu0 %v4465
        %v4773 = vpop.f32.mrb[0].mxu0
        %v4774 = vadd.f32 0.0, %v4773
        %v4775 = vpop.f32.mrb[0].mxu0
        %v4776 = vpop.f32.mrb[0].mxu0
        %v4777 = vadd.f32 0.0, %v4776
        %v4778 = vpop.f32.mrb[0].mxu0
        %4779 = vmatprep.mubr.bf16.mxu0 0
        %4780 = vmatmul.mubr.bf16.gmra.mrb[0].mxu0 %v4466
        %v4781 = vpop.f32.mrb[0].mxu0
        %v4782 = vadd.f32 0.0, %v4781
        %v4783 = vpop.f32.mrb[0].mxu0
        %v4784 = vpop.f32.mrb[0].mxu0
        %v4785 = vadd.f32 0.0, %v4784
        %v4786 = vpop.f32.mrb[0].mxu0
        %4787 = vmatprep.mubr.bf16.mxu0 0
        %4788 = vmatmul.mubr.bf16.gmra.mrb[0].mxu0 %v4467
        %v4789 = vpop.f32.mrb[0].mxu0
        %v4790 = vadd.f32 0.0, %v4789
        %v4791 = vpop.f32.mrb[0].mxu0
        %v4792 = vpop.f32.mrb[0].mxu0
        %v4793 = vadd.f32 0.0, %v4792
        %v4794 = vpop.f32.mrb[0].mxu0
        %4795 = vmatprep.mubr.bf16.mxu0 0
        %4796 = vmatmul.mubr.bf16.gmra.mrb[0].mxu0 %v4468
        %v4797 = vpop.f32.mrb[0].mxu0
        %v4798 = vadd.f32 0.0, %v4797
        %v4799 = vpop.f32.mrb[0].mxu0
        %v4800 = vpop.f32.mrb[0].mxu0
        %v4801 = vadd.f32 0.0, %v4800
        %v4802 = vpop.f32.mrb[0].mxu0
        %4803 = vmatprep.mubr.bf16.mxu0 0
        %4804 = vmatmul.mubr.bf16.gmra.mrb[0].mxu0 %v4469
        %v4805 = vpop.f32.mrb[0].mxu0
        %v4806 = vadd.f32 0.0, %v4805
        %v4807 = vpop.f32.mrb[0].mxu0
        %v4808 = vpop.f32.mrb[0].mxu0
        %v4809 = vadd.f32 0.0, %v4808
        %v4810 = vpop.f32.mrb[0].mxu0
        %4811 = vmatprep.mubr.bf16.mxu0 0
        %4812 = vmatmul.mubr.bf16.gmra.mrb[0].mxu0 %v4470
        %v4813 = vpop.f32.mrb[0].mxu0
        %v4814 = vadd.f32 0.0, %v4813
        %v4815 = vpop.f32.mrb[0].mxu0
        %v4816 = vpop.f32.mrb[0].mxu0
        %v4817 = vadd.f32 0.0, %v4816
        %v4818 = vpop.f32.mrb[0].mxu0
        %4819 = vmatprep.mubr.bf16.mxu0 0
        %4820 = vmatmul.mubr.bf16.gmra.mrb[0].mxu0 %v4471
        %v4821 = vpop.f32.mrb[0].mxu0
        %v4822 = vadd.f32 0.0, %v4821
        %v4823 = vpop.f32.mrb[0].mxu0
        %v4824 = vpop.f32.mrb[0].mxu0
        %v4825 = vadd.f32 0.0, %v4824
        %v4826 = vpop.f32.mrb[0].mxu0
        %4827 = vmatprep.mubr.bf16.mxu0 0
        %4828 = vmatmul.mubr.bf16.gmra.mrb[0].mxu0 %v4472
        %v4829 = vpop.f32.mrb[0].mxu0
        %v4830 = vadd.f32 0.0, %v4829
        %v4831 = vpop.f32.mrb[0].mxu0
        %v4832 = vpop.f32.mrb[0].mxu0
        %v4833 = vadd.f32 0.0, %v4832
        %v4834 = vpop.f32.mrb[0].mxu0
        %4835 = vmatprep.mubr.bf16.mxu0 0
        %4836 = vmatmul.mubr.bf16.gmra.mrb[0].mxu0 %v4473
        %v4837 = vpop.f32.mrb[0].mxu0
        %v4838 = vadd.f32 0.0, %v4837
        %v4839 = vpop.f32.mrb[0].mxu0
        %v4840 = vpop.f32.mrb[0].mxu0
        %v4841 = vadd.f32 0.0, %v4840
        %v4842 = vpop.f32.mrb[0].mxu0
        %4843 = vmatprep.mubr.bf16.mxu0 0
        %4844 = vmatmul.mubr.bf16.gmra.mrb[0].mxu0 %v4474
        %v4845 = vpop.f32.mrb[0].mxu0
        %v4846 = vadd.f32 0.0, %v4845
        %v4847 = vpop.f32.mrb[0].mxu0
        %v4848 = vpop.f32.mrb[0].mxu0
        %v4849 = vadd.f32 0.0, %v4848
        %v4850 = vpop.f32.mrb[0].mxu0
        %4851 = vmatprep.mubr.bf16.mxu0 0
        %4852 = vmatmul.mubr.bf16.gmra.mrb[0].mxu0 %v4475
        %v4853 = vpop.f32.mrb[0].mxu0
        %v4854 = vadd.f32 0.0, %v4853
        %v4855 = vpop.f32.mrb[0].mxu0
        %v4856 = vpop.f32.mrb[0].mxu0
        %v4857 = vadd.f32 0.0, %v4856
        %v4858 = vpop.f32.mrb[0].mxu0
        %4859 = vmatprep.mubr.bf16.mxu0 0
        %4860 = vmatmul.mubr.bf16.gmra.mrb[0].mxu0 %v4476
        %v4861 = vpop.f32.mrb[0].mxu0
        %v4862 = vadd.f32 0.0, %v4861
        %v4863 = vpop.f32.mrb[0].mxu0
        %v4864 = vpop.f32.mrb[0].mxu0
        %v4865 = vadd.f32 0.0, %v4864
        %v4866 = vpop.f32.mrb[0].mxu0
        %4867 = vmatprep.mubr.bf16.mxu0 0
        %4868 = vmatmul.mubr.bf16.gmra.mrb[0].mxu0 %v4477
        %v4869 = vpop.f32.mrb[0].mxu0
        %v4870 = vadd.f32 0.0, %v4869
        %v4871 = vpop.f32.mrb[0].mxu0
        %v4872 = vpop.f32.mrb[0].mxu0
        %v4873 = vadd.f32 0.0, %v4872
        %v4874 = vpop.f32.mrb[0].mxu0
        %4875 = vmatprep.mubr.bf16.mxu0 0
        %4876 = vmatmul.mubr.bf16.gmra.mrb[0].mxu0 %v4478
        %v4877 = vpop.f32.mrb[0].mxu0
        %v4878 = vadd.f32 0.0, %v4877
        %v4879 = vpop.f32.mrb[0].mxu0
        %v4880 = vpop.f32.mrb[0].mxu0
        %v4881 = vadd.f32 0.0, %v4880
        %v4882 = vpop.f32.mrb[0].mxu0
        %4883 = vmatprep.mubr.bf16.mxu0 0
        %4884 = vmatmul.mubr.bf16.gmra.mrb[0].mxu0 %v4479
        %v4885 = vpop.f32.mrb[0].mxu0
        %v4886 = vadd.f32 0.0, %v4885
        %v4887 = vpop.f32.mrb[0].mxu0
        %v4888 = vpop.f32.mrb[0].mxu0
        %v4889 = vadd.f32 0.0, %v4888
        %v4890 = vpop.f32.mrb[0].mxu0
        %4891 = vmatprep.mubr.bf16.mxu0 0
        %4892 = vmatmul.mubr.bf16.gmra.mrb[0].mxu0 %v4480
        %v4893 = vpop.f32.mrb[0].mxu0
        %v4894 = vadd.f32 0.0, %v4893
        %v4895 = vpop.f32.mrb[0].mxu0
        %v4896 = vpop.f32.mrb[0].mxu0
        %v4897 = vadd.f32 0.0, %v4896
        %v4898 = vpop.f32.mrb[0].mxu0
        %4899 = vmatprep.mubr.bf16.mxu0 0
        %4900 = vmatmul.mubr.bf16.gmra.mrb[0].mxu0 %v4481
        %v4901 = vpop.f32.mrb[0].mxu0
        %v4902 = vadd.f32 0.0, %v4901
        %v4903 = vpop.f32.mrb[0].mxu0
        %v4904 = vpop.f32.mrb[0].mxu0
        %v4905 = vadd.f32 0.0, %v4904
        %v4906 = vpop.f32.mrb[0].mxu0
        %4907 = vmatprep.mubr.bf16.mxu0 0
        %4908 = vmatmul.mubr.bf16.gmra.mrb[0].mxu0 %v4482
        %v4909 = vpop.f32.mrb[0].mxu0
        %v4910 = vadd.f32 0.0, %v4909
        %v4911 = vpop.f32.mrb[0].mxu0
        %v4912 = vpop.f32.mrb[0].mxu0
        %v4913 = vadd.f32 0.0, %v4912
        %v4914 = vpop.f32.mrb[0].mxu0
        %4915 = vmatprep.mubr.bf16.mxu0 0
        %4916 = vmatmul.mubr.bf16.gmra.mrb[0].mxu0 %v4483
        %v4917 = vpop.f32.mrb[0].mxu0
        %v4918 = vadd.f32 0.0, %v4917
        %v4919 = vpop.f32.mrb[0].mxu0
        %v4920 = vpop.f32.mrb[0].mxu0
        %v4921 = vadd.f32 0.0, %v4920
        %v4922 = vpop.f32.mrb[0].mxu0
        %4923 = vmatprep.mubr.bf16.mxu0 0
        %4924 = vmatmul.mubr.bf16.gmra.mrb[0].mxu0 %v4484
        %v4925 = vpop.f32.mrb[0].mxu0
        %v4926 = vadd.f32 0.0, %v4925
        %v4927 = vpop.f32.mrb[0].mxu0
        %v4928 = vpop.f32.mrb[0].mxu0
        %v4929 = vadd.f32 0.0, %v4928
        %v4930 = vpop.f32.mrb[0].mxu0
        %4931 = vmatprep.mubr.bf16.mxu0 0
        %4932 = vmatmul.mubr.bf16.gmra.mrb[0].mxu0 %v4485
        %v4933 = vpop.f32.mrb[0].mxu0
        %v4934 = vadd.f32 0.0, %v4933
        %v4935 = vpop.f32.mrb[0].mxu0
        %v4936 = vpop.f32.mrb[0].mxu0
        %v4937 = vadd.f32 0.0, %v4936
        %v4938 = vpop.f32.mrb[0].mxu0
        %4939 = vmatprep.mubr.bf16.mxu0 0
        %4940 = vmatmul.mubr.bf16.gmra.mrb[0].mxu0 %v4486
        %v4941 = vpop.f32.mrb[0].mxu0
        %v4942 = vadd.f32 0.0, %v4941
        %v4943 = vpop.f32.mrb[0].mxu0
        %v4944 = vpop.f32.mrb[0].mxu0
        %v4945 = vadd.f32 0.0, %v4944
        %v4946 = vpop.f32.mrb[0].mxu0
        %4947 = vmatprep.mubr.bf16.mxu0 0
        %4948 = vmatmul.mubr.bf16.gmra.mrb[0].mxu0 %v4487
        %v4949 = vpop.f32.mrb[0].mxu0
        %v4950 = vadd.f32 0.0, %v4949
        %v4951 = vpop.f32.mrb[0].mxu0
        %v4952 = vpop.f32.mrb[0].mxu0
        %v4953 = vadd.f32 0.0, %v4952
        %v4954 = vpop.f32.mrb[0].mxu0
        %4955 = vmatprep.mubr.bf16.mxu0 0
        %4956 = vmatmul.mubr.bf16.gmra.mrb[0].mxu0 %v4488
        %v4957 = vpop.f32.mrb[0].mxu0
        %v4958 = vadd.f32 0.0, %v4957
        %v4959 = vpop.f32.mrb[0].mxu0
        %v4960 = vpop.f32.mrb[0].mxu0
        %v4961 = vadd.f32 0.0, %v4960
        %v4962 = vpop.f32.mrb[0].mxu0
        %4963 = vmatprep.mubr.bf16.mxu0 0
        %4964 = vmatmul.mubr.bf16.gmra.mrb[0].mxu0 %v4489
        %v4965 = vpop.f32.mrb[0].mxu0
        %v4966 = vadd.f32 0.0, %v4965
        %v4967 = vpop.f32.mrb[0].mxu0
        %v4968 = vpop.f32.mrb[0].mxu0
        %v4969 = vadd.f32 0.0, %v4968
        %v4970 = vpop.f32.mrb[0].mxu0
        %4971 = vmatprep.mubr.bf16.mxu0 0
        %4972 = vmatmul.mubr.bf16.gmra.mrb[0].mxu0 %v4490
        %v4973 = vpop.f32.mrb[0].mxu0
        %v4974 = vadd.f32 0.0, %v4973
        %v4975 = vpop.f32.mrb[0].mxu0
        %v4976 = vpop.f32.mrb[0].mxu0
        %v4977 = vadd.f32 0.0, %v4976
        %v4978 = vpop.f32.mrb[0].mxu0
        %4979 = vdwg.mxu0
        %4980 = vst [vmem:[#allocation7] sm:$0xff] %v4590
        %4981 = vst [vmem:[#allocation7 + $0x8] sm:$0xff] %v4593
        %4982 = vst [vmem:[#allocation7 + $0x10] sm:$0xff] %v4598
        %4983 = vst [vmem:[#allocation7 + $0x18] sm:$0xff] %v4601
        %4984 = vst [vmem:[#allocation7 + $0x20] sm:$0xff] %v4606
        %4985 = vst [vmem:[#allocation7 + $0x28] sm:$0xff] %v4609
        %4986 = vst [vmem:[#allocation7 + $0x30] sm:$0xff] %v4614
        %4987 = vst [vmem:[#allocation7 + $0x38] sm:$0xff] %v4617
        %4988 = vst [vmem:[#allocation7 + $0x40] sm:$0xff] %v4622
        %4989 = vst [vmem:[#allocation7 + $0x48] sm:$0xff] %v4625
        %4990 = vst [vmem:[#allocation7 + $0x50] sm:$0xff] %v4630
        %4991 = vst [vmem:[#allocation7 + $0x58] sm:$0xff] %v4633
        %4992 = vst [vmem:[#allocation7 + $0x60] sm:$0xff] %v4638
        %4993 = vst [vmem:[#allocation7 + $0x68] sm:$0xff] %v4641
        %4994 = vst [vmem:[#allocation7 + $0x70] sm:$0xff] %v4646
        %4995 = vst [vmem:[#allocation7 + $0x78] sm:$0xff] %v4649
        %4996 = vst [vmem:[#allocation7 + $0x80] sm:$0xff] %v4654
        %4997 = vst [vmem:[#allocation7 + $0x88] sm:$0xff] %v4657
        %4998 = vst [vmem:[#allocation7 + $0x90] sm:$0xff] %v4662
        %4999 = vst [vmem:[#allocation7 + $0x98] sm:$0xff] %v4665
        %5000 = vst [vmem:[#allocation7 + $0xa0] sm:$0xff] %v4670
        %5001 = vst [vmem:[#allocation7 + $0xa8] sm:$0xff] %v4673
        %5002 = vst [vmem:[#allocation7 + $0xb0] sm:$0xff] %v4678
        %5003 = vst [vmem:[#allocation7 + $0xb8] sm:$0xff] %v4681
        %5004 = vst [vmem:[#allocation7 + $0xc0] sm:$0xff] %v4686
        %5005 = vst [vmem:[#allocation7 + $0xc8] sm:$0xff] %v4689
        %5006 = vst [vmem:[#allocation7 + $0xd0] sm:$0xff] %v4694
        %5007 = vst [vmem:[#allocation7 + $0xd8] sm:$0xff] %v4697
        %5008 = vst [vmem:[#allocation7 + $0xe0] sm:$0xff] %v4702
        %5009 = vst [vmem:[#allocation7 + $0xe8] sm:$0xff] %v4705
        %5010 = vst [vmem:[#allocation7 + $0xf0] sm:$0xff] %v4710
        %5011 = vst [vmem:[#allocation7 + $0xf8] sm:$0xff] %v4713
        %5012 = vst [vmem:[#allocation7 + $0x100] sm:$0xff] %v4718
        %5013 = vst [vmem:[#allocation7 + $0x108] sm:$0xff] %v4721
        %5014 = vst [vmem:[#allocation7 + $0x110] sm:$0xff] %v4726
        %5015 = vst [vmem:[#allocation7 + $0x118] sm:$0xff] %v4729
        %5016 = vst [vmem:[#allocation7 + $0x120] sm:$0xff] %v4734
        %5017 = vst [vmem:[#allocation7 + $0x128] sm:$0xff] %v4737
        %5018 = vst [vmem:[#allocation7 + $0x130] sm:$0xff] %v4742
        %5019 = vst [vmem:[#allocation7 + $0x138] sm:$0xff] %v4745
        %5020 = vst [vmem:[#allocation7 + $0x140] sm:$0xff] %v4750
        %5021 = vst [vmem:[#allocation7 + $0x148] sm:$0xff] %v4753
        %5022 = vst [vmem:[#allocation7 + $0x150] sm:$0xff] %v4758
        %5023 = vst [vmem:[#allocation7 + $0x158] sm:$0xff] %v4761
        %5024 = vst [vmem:[#allocation7 + $0x160] sm:$0xff] %v4766
        %5025 = vst [vmem:[#allocation7 + $0x168] sm:$0xff] %v4769
        %5026 = vst [vmem:[#allocation7 + $0x170] sm:$0xff] %v4774
        %5027 = vst [vmem:[#allocation7 + $0x178] sm:$0xff] %v4777
        %5028 = vst [vmem:[#allocation7 + $0x180] sm:$0xff] %v4782
        %5029 = vst [vmem:[#allocation7 + $0x188] sm:$0xff] %v4785
        %5030 = vst [vmem:[#allocation7 + $0x190] sm:$0xff] %v4790
        %5031 = vst [vmem:[#allocation7 + $0x198] sm:$0xff] %v4793
        %5032 = vst [vmem:[#allocation7 + $0x1a0] sm:$0xff] %v4798
        %5033 = vst [vmem:[#allocation7 + $0x1a8] sm:$0xff] %v4801
        %5034 = vst [vmem:[#allocation7 + $0x1b0] sm:$0xff] %v4806
        %5035 = vst [vmem:[#allocation7 + $0x1b8] sm:$0xff] %v4809
        %5036 = vst [vmem:[#allocation7 + $0x1c0] sm:$0xff] %v4814
        %5037 = vst [vmem:[#allocation7 + $0x1c8] sm:$0xff] %v4817
        %5038 = vst [vmem:[#allocation7 + $0x1d0] sm:$0xff] %v4822
        %5039 = vst [vmem:[#allocation7 + $0x1d8] sm:$0xff] %v4825
        %5040 = vst [vmem:[#allocation7 + $0x1e0] sm:$0xff] %v4830
        %5041 = vst [vmem:[#allocation7 + $0x1e8] sm:$0xff] %v4833
        %5042 = vst [vmem:[#allocation7 + $0x1f0] sm:$0xff] %v4838
        %5043 = vst [vmem:[#allocation7 + $0x1f8] sm:$0xff] %v4841
        %5044 = vst [vmem:[#allocation7 + $0x200] sm:$0xff] %v4846
        %5045 = vst [vmem:[#allocation7 + $0x208] sm:$0xff] %v4849
        %5046 = vst [vmem:[#allocation7 + $0x210] sm:$0xff] %v4854
        %5047 = vst [vmem:[#allocation7 + $0x218] sm:$0xff] %v4857
        %5048 = vst [vmem:[#allocation7 + $0x220] sm:$0xff] %v4862
        %5049 = vst [vmem:[#allocation7 + $0x228] sm:$0xff] %v4865
        %5050 = vst [vmem:[#allocation7 + $0x230] sm:$0xff] %v4870
        %5051 = vst [vmem:[#allocation7 + $0x238] sm:$0xff] %v4873
        %5052 = vst [vmem:[#allocation7 + $0x240] sm:$0xff] %v4878
        %5053 = vst [vmem:[#allocation7 + $0x248] sm:$0xff] %v4881
        %5054 = vst [vmem:[#allocation7 + $0x250] sm:$0xff] %v4886
        %5055 = vst [vmem:[#allocation7 + $0x258] sm:$0xff] %v4889
        %5056 = vst [vmem:[#allocation7 + $0x260] sm:$0xff] %v4894
        %5057 = vst [vmem:[#allocation7 + $0x268] sm:$0xff] %v4897
        %5058 = vst [vmem:[#allocation7 + $0x270] sm:$0xff] %v4902
        %5059 = vst [vmem:[#allocation7 + $0x278] sm:$0xff] %v4905
        %5060 = vst [vmem:[#allocation7 + $0x280] sm:$0xff] %v4910
        %5061 = vst [vmem:[#allocation7 + $0x288] sm:$0xff] %v4913
        %5062 = vst [vmem:[#allocation7 + $0x290] sm:$0xff] %v4918
        %5063 = vst [vmem:[#allocation7 + $0x298] sm:$0xff] %v4921
        %5064 = vst [vmem:[#allocation7 + $0x2a0] sm:$0xff] %v4926
        %5065 = vst [vmem:[#allocation7 + $0x2a8] sm:$0xff] %v4929
        %5066 = vst [vmem:[#allocation7 + $0x2b0] sm:$0xff] %v4934
        %5067 = vst [vmem:[#allocation7 + $0x2b8] sm:$0xff] %v4937
        %5068 = vst [vmem:[#allocation7 + $0x2c0] sm:$0xff] %v4942
        %5069 = vst [vmem:[#allocation7 + $0x2c8] sm:$0xff] %v4945
        %5070 = vst [vmem:[#allocation7 + $0x2d0] sm:$0xff] %v4950
        %5071 = vst [vmem:[#allocation7 + $0x2d8] sm:$0xff] %v4953
        %5072 = vst [vmem:[#allocation7 + $0x2e0] sm:$0xff] %v4958
        %5073 = vst [vmem:[#allocation7 + $0x2e8] sm:$0xff] %v4961
        %5074 = vst [vmem:[#allocation7 + $0x2f0] sm:$0xff] %v4966
        %5075 = vst [vmem:[#allocation7 + $0x2f8] sm:$0xff] %v4969
        %5076 = vst [vmem:[#allocation7 + $0x300] sm:$0xff] %v4974
        %5077 = vst [vmem:[#allocation7 + $0x308] sm:$0xff] %v4977
        %v5078 = vld [vmem:[#allocation7] sm:$0xff]
        %v5079 = vld [vmem:[#allocation7 + $0x8] sm:$0xff]
        %v5080 = vld [vmem:[#allocation7 + $0x10] sm:$0xff]
        %v5081 = vld [vmem:[#allocation7 + $0x18] sm:$0xff]
        %v5082 = vmax.f32 %v5078, %v5080
        %v5083 = vmax.f32 %v5079, %v5081
        %v5084 = vld [vmem:[#allocation7 + $0x20] sm:$0xff]
        %v5085 = vld [vmem:[#allocation7 + $0x28] sm:$0xff]
        %v5086 = vmax.f32 %v5082, %v5084
        %v5087 = vmax.f32 %v5083, %v5085
        %v5088 = vld [vmem:[#allocation7 + $0x30] sm:$0xff]
        %v5089 = vld [vmem:[#allocation7 + $0x38] sm:$0xff]
        %v5090 = vmax.f32 %v5086, %v5088
        %v5091 = vmax.f32 %v5087, %v5089
        %v5092 = vld [vmem:[#allocation7 + $0x40] sm:$0xff]
        %v5093 = vld [vmem:[#allocation7 + $0x48] sm:$0xff]
        %v5094 = vmax.f32 %v5090, %v5092
        %v5095 = vmax.f32 %v5091, %v5093
        %v5096 = vld [vmem:[#allocation7 + $0x50] sm:$0xff]
        %v5097 = vld [vmem:[#allocation7 + $0x58] sm:$0xff]
        %v5098 = vmax.f32 %v5094, %v5096
        %v5099 = vmax.f32 %v5095, %v5097
        %v5100 = vld [vmem:[#allocation7 + $0x60] sm:$0xff]
        %v5101 = vld [vmem:[#allocation7 + $0x68] sm:$0xff]
        %v5102 = vmax.f32 %v5098, %v5100
        %v5103 = vmax.f32 %v5099, %v5101
        %v5104 = vld [vmem:[#allocation7 + $0x70] sm:$0xff]
        %v5105 = vld [vmem:[#allocation7 + $0x78] sm:$0xff]
        %v5106 = vmax.f32 %v5102, %v5104
        %v5107 = vmax.f32 %v5103, %v5105
        %v5108 = vld [vmem:[#allocation7 + $0x80] sm:$0xff]
        %v5109 = vld [vmem:[#allocation7 + $0x88] sm:$0xff]
        %v5110 = vmax.f32 %v5106, %v5108
        %v5111 = vmax.f32 %v5107, %v5109
        %v5112 = vld [vmem:[#allocation7 + $0x90] sm:$0xff]
        %v5113 = vld [vmem:[#allocation7 + $0x98] sm:$0xff]
        %v5114 = vmax.f32 %v5110, %v5112
        %v5115 = vmax.f32 %v5111, %v5113
        %v5116 = vld [vmem:[#allocation7 + $0xa0] sm:$0xff]
        %v5117 = vld [vmem:[#allocation7 + $0xa8] sm:$0xff]
        %v5118 = vmax.f32 %v5114, %v5116
        %v5119 = vmax.f32 %v5115, %v5117
        %v5120 = vld [vmem:[#allocation7 + $0xb0] sm:$0xff]
        %v5121 = vld [vmem:[#allocation7 + $0xb8] sm:$0xff]
        %v5122 = vmax.f32 %v5118, %v5120
        %v5123 = vmax.f32 %v5119, %v5121
        %v5124 = vld [vmem:[#allocation7 + $0xc0] sm:$0xff]
        %v5125 = vld [vmem:[#allocation7 + $0xc8] sm:$0xff]
        %v5126 = vmax.f32 %v5122, %v5124
        %v5127 = vmax.f32 %v5123, %v5125
        %v5128 = vld [vmem:[#allocation7 + $0xd0] sm:$0xff]
        %v5129 = vld [vmem:[#allocation7 + $0xd8] sm:$0xff]
        %v5130 = vmax.f32 %v5126, %v5128
        %v5131 = vmax.f32 %v5127, %v5129
        %v5132 = vld [vmem:[#allocation7 + $0xe0] sm:$0xff]
        %v5133 = vld [vmem:[#allocation7 + $0xe8] sm:$0xff]
        %v5134 = vmax.f32 %v5130, %v5132
        %v5135 = vmax.f32 %v5131, %v5133
        %v5136 = vld [vmem:[#allocation7 + $0xf0] sm:$0xff]
        %v5137 = vld [vmem:[#allocation7 + $0xf8] sm:$0xff]
        %v5138 = vmax.f32 %v5134, %v5136
        %v5139 = vmax.f32 %v5135, %v5137
        %v5140 = vld [vmem:[#allocation7 + $0x100] sm:$0xff]
        %v5141 = vld [vmem:[#allocation7 + $0x108] sm:$0xff]
        %v5142 = vmax.f32 %v5138, %v5140
        %v5143 = vmax.f32 %v5139, %v5141
        %v5144 = vld [vmem:[#allocation7 + $0x110] sm:$0xff]
        %v5145 = vld [vmem:[#allocation7 + $0x118] sm:$0xff]
        %v5146 = vmax.f32 %v5142, %v5144
        %v5147 = vmax.f32 %v5143, %v5145
        %v5148 = vld [vmem:[#allocation7 + $0x120] sm:$0xff]
        %v5149 = vld [vmem:[#allocation7 + $0x128] sm:$0xff]
        %v5150 = vmax.f32 %v5146, %v5148
        %v5151 = vmax.f32 %v5147, %v5149
        %v5152 = vld [vmem:[#allocation7 + $0x130] sm:$0xff]
        %v5153 = vld [vmem:[#allocation7 + $0x138] sm:$0xff]
        %v5154 = vmax.f32 %v5150, %v5152
        %v5155 = vmax.f32 %v5151, %v5153
        %v5156 = vld [vmem:[#allocation7 + $0x140] sm:$0xff]
        %v5157 = vld [vmem:[#allocation7 + $0x148] sm:$0xff]
        %v5158 = vmax.f32 %v5154, %v5156
        %v5159 = vmax.f32 %v5155, %v5157
        %v5160 = vld [vmem:[#allocation7 + $0x150] sm:$0xff]
        %v5161 = vld [vmem:[#allocation7 + $0x158] sm:$0xff]
        %v5162 = vmax.f32 %v5158, %v5160
        %v5163 = vmax.f32 %v5159, %v5161
        %v5164 = vld [vmem:[#allocation7 + $0x160] sm:$0xff]
        %v5165 = vld [vmem:[#allocation7 + $0x168] sm:$0xff]
        %v5166 = vmax.f32 %v5162, %v5164
        %v5167 = vmax.f32 %v5163, %v5165
        %v5168 = vld [vmem:[#allocation7 + $0x170] sm:$0xff]
        %v5169 = vld [vmem:[#allocation7 + $0x178] sm:$0xff]
        %v5170 = vmax.f32 %v5166, %v5168
        %v5171 = vmax.f32 %v5167, %v5169
        %v5172 = vld [vmem:[#allocation7 + $0x180] sm:$0xff]
        %v5173 = vld [vmem:[#allocation7 + $0x188] sm:$0xff]
        %v5174 = vmax.f32 %v5170, %v5172
        %v5175 = vmax.f32 %v5171, %v5173
        %v5176 = vld [vmem:[#allocation7 + $0x190] sm:$0xff]
        %v5177 = vld [vmem:[#allocation7 + $0x198] sm:$0xff]
        %v5178 = vmax.f32 %v5174, %v5176
        %v5179 = vmax.f32 %v5175, %v5177
        %v5180 = vld [vmem:[#allocation7 + $0x1a0] sm:$0xff]
        %v5181 = vld [vmem:[#allocation7 + $0x1a8] sm:$0xff]
        %v5182 = vmax.f32 %v5178, %v5180
        %v5183 = vmax.f32 %v5179, %v5181
        %v5184 = vld [vmem:[#allocation7 + $0x1b0] sm:$0xff]
        %v5185 = vld [vmem:[#allocation7 + $0x1b8] sm:$0xff]
        %v5186 = vmax.f32 %v5182, %v5184
        %v5187 = vmax.f32 %v5183, %v5185
        %v5188 = vld [vmem:[#allocation7 + $0x1c0] sm:$0xff]
        %v5189 = vld [vmem:[#allocation7 + $0x1c8] sm:$0xff]
        %v5190 = vmax.f32 %v5186, %v5188
        %v5191 = vmax.f32 %v5187, %v5189
        %v5192 = vld [vmem:[#allocation7 + $0x1d0] sm:$0xff]
        %v5193 = vld [vmem:[#allocation7 + $0x1d8] sm:$0xff]
        %v5194 = vmax.f32 %v5190, %v5192
        %v5195 = vmax.f32 %v5191, %v5193
        %v5196 = vld [vmem:[#allocation7 + $0x1e0] sm:$0xff]
        %v5197 = vld [vmem:[#allocation7 + $0x1e8] sm:$0xff]
        %v5198 = vmax.f32 %v5194, %v5196
        %v5199 = vmax.f32 %v5195, %v5197
        %v5200 = vld [vmem:[#allocation7 + $0x1f0] sm:$0xff]
        %v5201 = vld [vmem:[#allocation7 + $0x1f8] sm:$0xff]
        %v5202 = vmax.f32 %v5198, %v5200
        %v5203 = vmax.f32 %v5199, %v5201
        %v5204 = vld [vmem:[#allocation7 + $0x200] sm:$0xff]
        %v5205 = vld [vmem:[#allocation7 + $0x208] sm:$0xff]
        %v5206 = vmax.f32 %v5202, %v5204
        %v5207 = vmax.f32 %v5203, %v5205
        %v5208 = vld [vmem:[#allocation7 + $0x210] sm:$0xff]
        %v5209 = vld [vmem:[#allocation7 + $0x218] sm:$0xff]
        %v5210 = vmax.f32 %v5206, %v5208
        %v5211 = vmax.f32 %v5207, %v5209
        %v5212 = vld [vmem:[#allocation7 + $0x220] sm:$0xff]
        %v5213 = vld [vmem:[#allocation7 + $0x228] sm:$0xff]
        %v5214 = vmax.f32 %v5210, %v5212
        %v5215 = vmax.f32 %v5211, %v5213
        %v5216 = vld [vmem:[#allocation7 + $0x230] sm:$0xff]
        %v5217 = vld [vmem:[#allocation7 + $0x238] sm:$0xff]
        %v5218 = vmax.f32 %v5214, %v5216
        %v5219 = vmax.f32 %v5215, %v5217
        %v5220 = vld [vmem:[#allocation7 + $0x240] sm:$0xff]
        %v5221 = vld [vmem:[#allocation7 + $0x248] sm:$0xff]
        %v5222 = vmax.f32 %v5218, %v5220
        %v5223 = vmax.f32 %v5219, %v5221
        %v5224 = vld [vmem:[#allocation7 + $0x250] sm:$0xff]
        %v5225 = vld [vmem:[#allocation7 + $0x258] sm:$0xff]
        %v5226 = vmax.f32 %v5222, %v5224
        %v5227 = vmax.f32 %v5223, %v5225
        %v5228 = vld [vmem:[#allocation7 + $0x260] sm:$0xff]
        %v5229 = vld [vmem:[#allocation7 + $0x268] sm:$0xff]
        %v5230 = vmax.f32 %v5226, %v5228
        %v5231 = vmax.f32 %v5227, %v5229
        %v5232 = vld [vmem:[#allocation7 + $0x270] sm:$0xff]
        %v5233 = vld [vmem:[#allocation7 + $0x278] sm:$0xff]
        %v5234 = vmax.f32 %v5230, %v5232
        %v5235 = vmax.f32 %v5231, %v5233
        %v5236 = vld [vmem:[#allocation7 + $0x280] sm:$0xff]
        %v5237 = vld [vmem:[#allocation7 + $0x288] sm:$0xff]
        %v5238 = vmax.f32 %v5234, %v5236
        %v5239 = vmax.f32 %v5235, %v5237
        %v5240 = vld [vmem:[#allocation7 + $0x290] sm:$0xff]
        %v5241 = vld [vmem:[#allocation7 + $0x298] sm:$0xff]
        %v5242 = vmax.f32 %v5238, %v5240
        %v5243 = vmax.f32 %v5239, %v5241
        %v5244 = vld [vmem:[#allocation7 + $0x2a0] sm:$0xff]
        %v5245 = vld [vmem:[#allocation7 + $0x2a8] sm:$0xff]
        %v5246 = vmax.f32 %v5242, %v5244
        %v5247 = vmax.f32 %v5243, %v5245
        %v5248 = vld [vmem:[#allocation7 + $0x2b0] sm:$0xff]
        %v5249 = vld [vmem:[#allocation7 + $0x2b8] sm:$0xff]
        %v5250 = vmax.f32 %v5246, %v5248
        %v5251 = vmax.f32 %v5247, %v5249
        %v5252 = vld [vmem:[#allocation7 + $0x2c0] sm:$0xff]
        %v5253 = vld [vmem:[#allocation7 + $0x2c8] sm:$0xff]
        %v5254 = vmax.f32 %v5250, %v5252
        %v5255 = vmax.f32 %v5251, %v5253
        %v5256 = vld [vmem:[#allocation7 + $0x2d0] sm:$0xff]
        %v5257 = vld [vmem:[#allocation7 + $0x2d8] sm:$0xff]
        %v5258 = vmax.f32 %v5254, %v5256
        %v5259 = vmax.f32 %v5255, %v5257
        %v5260 = vld [vmem:[#allocation7 + $0x2e0] sm:$0xff]
        %v5261 = vld [vmem:[#allocation7 + $0x2e8] sm:$0xff]
        %v5262 = vmax.f32 %v5258, %v5260
        %v5263 = vmax.f32 %v5259, %v5261
        %v5264 = vld [vmem:[#allocation7 + $0x2f0] sm:$0xff]
        %v5265 = vld [vmem:[#allocation7 + $0x2f8] sm:$0xff]
        %v5266 = vmax.f32 %v5262, %v5264
        %v5267 = vmax.f32 %v5263, %v5265
        %v5268 = vld [vmem:[#allocation7 + $0x300] sm:$0xff]
        %v5269 = vld [vmem:[#allocation7 + $0x308] sm:$0xff]
        %v5270 = vmax.f32 %v5266, %v5268
        %v5271 = vmax.f32 %v5267, %v5269
        %v5272 = vsub.f32 %v5078, %v5270
        %v5273 = vsub.f32 %v5079, %v5271
        %v5274 = vmul.f32 %v5272, 1.442695
        %v5275 = vpow.pop %v5274
        %v5276 = vmul.f32 %v5273, 1.442695
        %v5277 = vpow.pop %v5276
        %v5278 = vadd.f32 %v5275, 0.0
        %v5279 = vadd.f32 %v5277, 0.0
        %v5280 = vld [vmem:[#allocation3] sm:$0xff]
        %v5281 = vld [vmem:[#allocation3 + $0x10] sm:$0xff]
        %v5282 = vmul.f32 %v5275, %v5280
        %v5283 = vmul.f32 %v5277, %v5281
        %v5284 = vadd.f32 %v5282, 0.0
        %v5285 = vadd.f32 %v5283, 0.0
        %v5286 = vsub.f32 %v5080, %v5270
        %v5287 = vsub.f32 %v5081, %v5271
        %v5288 = vmul.f32 %v5286, 1.442695
        %v5289 = vpow.pop %v5288
        %v5290 = vmul.f32 %v5287, 1.442695
        %v5291 = vpow.pop %v5290
        %v5292 = vadd.f32 %v5278, %v5289
        %v5293 = vadd.f32 %v5279, %v5291
        %v5294 = vld [vmem:[#allocation3 + $0x8] sm:$0xff]
        %v5295 = vld [vmem:[#allocation3 + $0x18] sm:$0xff]
        %5300 = vrot.lane.b32.xlu0 %v5280, 120
        %v5301 = vpop.permute.xlu0 %5300
        %5302 = vrot.lane.b32.xlu0 %v5294, 120
        %v5303 = vpop.permute.xlu0 %5302
        %5304 = vrot.lane.b32.xlu0 %v5281, 120
        %v5305 = vpop.permute.xlu0 %5304
        %5306 = vrot.lane.b32.xlu0 %v5295, 120
        %v5307 = vpop.permute.xlu0 %5306
        %v5308 = vsel %vm1192, %v5301, %v5303
        %v5309 = vsel %vm1192, %v5305, %v5307
        %v5312 = vmul.f32 %v5289, %v5308
        %v5313 = vmul.f32 %v5291, %v5309
        %v5314 = vadd.f32 %v5284, %v5312
        %v5315 = vadd.f32 %v5285, %v5313
        %v5316 = vsub.f32 %v5084, %v5270
        %v5317 = vsub.f32 %v5085, %v5271
        %v5318 = vmul.f32 %v5316, 1.442695
        %v5319 = vpow.pop %v5318
        %v5320 = vmul.f32 %v5317, 1.442695
        %v5321 = vpow.pop %v5320
        %v5322 = vadd.f32 %v5292, %v5319
        %v5323 = vadd.f32 %v5293, %v5321
        %5324 = vrot.lane.b32.xlu0 %v5280, 112
        %v5325 = vpop.permute.xlu0 %5324
        %5326 = vrot.lane.b32.xlu0 %v5294, 112
        %v5327 = vpop.permute.xlu0 %5326
        %5328 = vrot.lane.b32.xlu0 %v5281, 112
        %v5329 = vpop.permute.xlu0 %5328
        %5330 = vrot.lane.b32.xlu0 %v5295, 112
        %v5331 = vpop.permute.xlu0 %5330
        %v5332 = vsel %vm1165, %v5325, %v5327
        %v5333 = vsel %vm1165, %v5329, %v5331
        %v5336 = vmul.f32 %v5319, %v5332
        %v5337 = vmul.f32 %v5321, %v5333
        %v5338 = vadd.f32 %v5314, %v5336
        %v5339 = vadd.f32 %v5315, %v5337
        %v5340 = vsub.f32 %v5088, %v5270
        %v5341 = vsub.f32 %v5089, %v5271
        %v5342 = vmul.f32 %v5340, 1.442695
        %v5343 = vpow.pop %v5342
        %v5344 = vmul.f32 %v5341, 1.442695
        %v5345 = vpow.pop %v5344
        %v5346 = vadd.f32 %v5322, %v5343
        %v5347 = vadd.f32 %v5323, %v5345
        %5348 = vrot.lane.b32.xlu0 %v5280, 104
        %v5349 = vpop.permute.xlu0 %5348
        %5350 = vrot.lane.b32.xlu0 %v5294, 104
        %v5351 = vpop.permute.xlu0 %5350
        %5352 = vrot.lane.b32.xlu0 %v5281, 104
        %v5353 = vpop.permute.xlu0 %5352
        %5354 = vrot.lane.b32.xlu0 %v5295, 104
        %v5355 = vpop.permute.xlu0 %5354
        %v5356 = vsel %vm1136, %v5349, %v5351
        %v5357 = vsel %vm1136, %v5353, %v5355
        %v5360 = vmul.f32 %v5343, %v5356
        %v5361 = vmul.f32 %v5345, %v5357
        %v5362 = vadd.f32 %v5338, %v5360
        %v5363 = vadd.f32 %v5339, %v5361
        %v5364 = vsub.f32 %v5092, %v5270
        %v5365 = vsub.f32 %v5093, %v5271
        %v5366 = vmul.f32 %v5364, 1.442695
        %v5367 = vpow.pop %v5366
        %v5368 = vmul.f32 %v5365, 1.442695
        %v5369 = vpow.pop %v5368
        %v5370 = vadd.f32 %v5346, %v5367
        %v5371 = vadd.f32 %v5347, %v5369
        %5372 = vrot.lane.b32.xlu0 %v5280, 96
        %v5373 = vpop.permute.xlu0 %5372
        %5374 = vrot.lane.b32.xlu0 %v5294, 96
        %v5375 = vpop.permute.xlu0 %5374
        %5376 = vrot.lane.b32.xlu0 %v5281, 96
        %v5377 = vpop.permute.xlu0 %5376
        %5378 = vrot.lane.b32.xlu0 %v5295, 96
        %v5379 = vpop.permute.xlu0 %5378
        %v5380 = vsel %vm1334, %v5373, %v5375
        %v5381 = vsel %vm1334, %v5377, %v5379
        %v5384 = vmul.f32 %v5367, %v5380
        %v5385 = vmul.f32 %v5369, %v5381
        %v5386 = vadd.f32 %v5362, %v5384
        %v5387 = vadd.f32 %v5363, %v5385
        %v5388 = vsub.f32 %v5096, %v5270
        %v5389 = vsub.f32 %v5097, %v5271
        %v5390 = vmul.f32 %v5388, 1.442695
        %v5391 = vpow.pop %v5390
        %v5392 = vmul.f32 %v5389, 1.442695
        %v5393 = vpow.pop %v5392
        %v5394 = vadd.f32 %v5370, %v5391
        %v5395 = vadd.f32 %v5371, %v5393
        %5396 = vrot.lane.b32.xlu0 %v5280, 88
        %v5397 = vpop.permute.xlu0 %5396
        %5398 = vrot.lane.b32.xlu0 %v5294, 88
        %v5399 = vpop.permute.xlu0 %5398
        %5400 = vrot.lane.b32.xlu0 %v5281, 88
        %v5401 = vpop.permute.xlu0 %5400
        %5402 = vrot.lane.b32.xlu0 %v5295, 88
        %v5403 = vpop.permute.xlu0 %5402
        %v5404 = vsel %vm1386, %v5397, %v5399
        %v5405 = vsel %vm1386, %v5401, %v5403
        %v5408 = vmul.f32 %v5391, %v5404
        %v5409 = vmul.f32 %v5393, %v5405
        %v5410 = vadd.f32 %v5386, %v5408
        %v5411 = vadd.f32 %v5387, %v5409
        %v5412 = vsub.f32 %v5100, %v5270
        %v5413 = vsub.f32 %v5101, %v5271
        %v5414 = vmul.f32 %v5412, 1.442695
        %v5415 = vpow.pop %v5414
        %v5416 = vmul.f32 %v5413, 1.442695
        %v5417 = vpow.pop %v5416
        %v5418 = vadd.f32 %v5394, %v5415
        %v5419 = vadd.f32 %v5395, %v5417
        %5420 = vrot.lane.b32.xlu0 %v5280, 80
        %v5421 = vpop.permute.xlu0 %5420
        %5422 = vrot.lane.b32.xlu0 %v5294, 80
        %v5423 = vpop.permute.xlu0 %5422
        %5424 = vrot.lane.b32.xlu0 %v5281, 80
        %v5425 = vpop.permute.xlu0 %5424
        %5426 = vrot.lane.b32.xlu0 %v5295, 80
        %v5427 = vpop.permute.xlu0 %5426
        %v5428 = vsel %vm1438, %v5421, %v5423
        %v5429 = vsel %vm1438, %v5425, %v5427
        %v5432 = vmul.f32 %v5415, %v5428
        %v5433 = vmul.f32 %v5417, %v5429
        %v5434 = vadd.f32 %v5410, %v5432
        %v5435 = vadd.f32 %v5411, %v5433
        %v5436 = vsub.f32 %v5104, %v5270
        %v5437 = vsub.f32 %v5105, %v5271
        %v5438 = vmul.f32 %v5436, 1.442695
        %v5439 = vpow.pop %v5438
        %v5440 = vmul.f32 %v5437, 1.442695
        %v5441 = vpow.pop %v5440
        %v5442 = vadd.f32 %v5418, %v5439
        %v5443 = vadd.f32 %v5419, %v5441
        %v5444 = vld [vmem:[#allocation3] sm:$0xfe]
        %v5445 = vld [vmem:[#allocation3 + $0x20] sm:$0x1]
        %v5448 = vrot.slane %v5444, 1
        %v5449 = vrot.slane %v5281, 1
        %v5450 = vsel %vm1491, %v5448, %v5449
        %v5451 = vrot.slane %v5445, 1
        %v5452 = vsel %vm1491, %v5449, %v5451
        %v5455 = vmul.f32 %v5439, %v5450
        %v5456 = vmul.f32 %v5441, %v5452
        %v5457 = vadd.f32 %v5434, %v5455
        %v5458 = vadd.f32 %v5435, %v5456
        %v5459 = vsub.f32 %v5108, %v5270
        %v5460 = vsub.f32 %v5109, %v5271
        %v5461 = vmul.f32 %v5459, 1.442695
        %v5462 = vpow.pop %v5461
        %v5463 = vmul.f32 %v5460, 1.442695
        %v5464 = vpow.pop %v5463
        %v5465 = vadd.f32 %v5442, %v5462
        %v5466 = vadd.f32 %v5443, %v5464
        %v5467 = vld [vmem:[#allocation3 + $0x8] sm:$0xfe]
        %v5468 = vld [vmem:[#allocation3 + $0x28] sm:$0x1]
        %v5471 = vrot.slane %v5467, 1
        %v5472 = vrot.slane %v5295, 1
        %v5473 = vsel %vm1491, %v5471, %v5472
        %v5474 = vrot.slane %v5468, 1
        %v5475 = vsel %vm1491, %v5472, %v5474
        %5476 = vrot.lane.b32.xlu0 %v5450, 120
        %v5477 = vpop.permute.xlu0 %5476
        %5478 = vrot.lane.b32.xlu0 %v5473, 120
        %v5479 = vpop.permute.xlu0 %5478
        %5480 = vrot.lane.b32.xlu0 %v5452, 120
        %v5481 = vpop.permute.xlu0 %5480
        %5482 = vrot.lane.b32.xlu0 %v5475, 120
        %v5483 = vpop.permute.xlu0 %5482
        %v5484 = vsel %vm1192, %v5477, %v5479
        %v5485 = vsel %vm1192, %v5481, %v5483
        %v5488 = vmul.f32 %v5462, %v5484
        %v5489 = vmul.f32 %v5464, %v5485
        %v5490 = vadd.f32 %v5457, %v5488
        %v5491 = vadd.f32 %v5458, %v5489
        %v5492 = vsub.f32 %v5112, %v5270
        %v5493 = vsub.f32 %v5113, %v5271
        %v5494 = vmul.f32 %v5492, 1.442695
        %v5495 = vpow.pop %v5494
        %v5496 = vmul.f32 %v5493, 1.442695
        %v5497 = vpow.pop %v5496
        %v5498 = vadd.f32 %v5465, %v5495
        %v5499 = vadd.f32 %v5466, %v5497
        %5500 = vrot.lane.b32.xlu0 %v5450, 112
        %v5501 = vpop.permute.xlu0 %5500
        %5502 = vrot.lane.b32.xlu0 %v5473, 112
        %v5503 = vpop.permute.xlu0 %5502
        %5504 = vrot.lane.b32.xlu0 %v5452, 112
        %v5505 = vpop.permute.xlu0 %5504
        %5506 = vrot.lane.b32.xlu0 %v5475, 112
        %v5507 = vpop.permute.xlu0 %5506
        %v5508 = vsel %vm1165, %v5501, %v5503
        %v5509 = vsel %vm1165, %v5505, %v5507
        %v5512 = vmul.f32 %v5495, %v5508
        %v5513 = vmul.f32 %v5497, %v5509
        %v5514 = vadd.f32 %v5490, %v5512
        %v5515 = vadd.f32 %v5491, %v5513
        %v5516 = vsub.f32 %v5116, %v5270
        %v5517 = vsub.f32 %v5117, %v5271
        %v5518 = vmul.f32 %v5516, 1.442695
        %v5519 = vpow.pop %v5518
        %v5520 = vmul.f32 %v5517, 1.442695
        %v5521 = vpow.pop %v5520
        %v5522 = vadd.f32 %v5498, %v5519
        %v5523 = vadd.f32 %v5499, %v5521
        %5524 = vrot.lane.b32.xlu0 %v5450, 104
        %v5525 = vpop.permute.xlu0 %5524
        %5526 = vrot.lane.b32.xlu0 %v5473, 104
        %v5527 = vpop.permute.xlu0 %5526
        %5528 = vrot.lane.b32.xlu0 %v5452, 104
        %v5529 = vpop.permute.xlu0 %5528
        %5530 = vrot.lane.b32.xlu0 %v5475, 104
        %v5531 = vpop.permute.xlu0 %5530
        %v5532 = vsel %vm1136, %v5525, %v5527
        %v5533 = vsel %vm1136, %v5529, %v5531
        %v5536 = vmul.f32 %v5519, %v5532
        %v5537 = vmul.f32 %v5521, %v5533
        %v5538 = vadd.f32 %v5514, %v5536
        %v5539 = vadd.f32 %v5515, %v5537
        %v5540 = vsub.f32 %v5120, %v5270
        %v5541 = vsub.f32 %v5121, %v5271
        %v5542 = vmul.f32 %v5540, 1.442695
        %v5543 = vpow.pop %v5542
        %v5544 = vmul.f32 %v5541, 1.442695
        %v5545 = vpow.pop %v5544
        %v5546 = vadd.f32 %v5522, %v5543
        %v5547 = vadd.f32 %v5523, %v5545
        %5548 = vrot.lane.b32.xlu0 %v5450, 96
        %v5549 = vpop.permute.xlu0 %5548
        %5550 = vrot.lane.b32.xlu0 %v5473, 96
        %v5551 = vpop.permute.xlu0 %5550
        %5552 = vrot.lane.b32.xlu0 %v5452, 96
        %v5553 = vpop.permute.xlu0 %5552
        %5554 = vrot.lane.b32.xlu0 %v5475, 96
        %v5555 = vpop.permute.xlu0 %5554
        %v5556 = vsel %vm1334, %v5549, %v5551
        %v5557 = vsel %vm1334, %v5553, %v5555
        %v5560 = vmul.f32 %v5543, %v5556
        %v5561 = vmul.f32 %v5545, %v5557
        %v5562 = vadd.f32 %v5538, %v5560
        %v5563 = vadd.f32 %v5539, %v5561
        %v5564 = vsub.f32 %v5124, %v5270
        %v5565 = vsub.f32 %v5125, %v5271
        %v5566 = vmul.f32 %v5564, 1.442695
        %v5567 = vpow.pop %v5566
        %v5568 = vmul.f32 %v5565, 1.442695
        %v5569 = vpow.pop %v5568
        %v5570 = vadd.f32 %v5546, %v5567
        %v5571 = vadd.f32 %v5547, %v5569
        %5572 = vrot.lane.b32.xlu0 %v5450, 88
        %v5573 = vpop.permute.xlu0 %5572
        %5574 = vrot.lane.b32.xlu0 %v5473, 88
        %v5575 = vpop.permute.xlu0 %5574
        %5576 = vrot.lane.b32.xlu0 %v5452, 88
        %v5577 = vpop.permute.xlu0 %5576
        %5578 = vrot.lane.b32.xlu0 %v5475, 88
        %v5579 = vpop.permute.xlu0 %5578
        %v5580 = vsel %vm1386, %v5573, %v5575
        %v5581 = vsel %vm1386, %v5577, %v5579
        %v5584 = vmul.f32 %v5567, %v5580
        %v5585 = vmul.f32 %v5569, %v5581
        %v5586 = vadd.f32 %v5562, %v5584
        %v5587 = vadd.f32 %v5563, %v5585
        %v5588 = vsub.f32 %v5128, %v5270
        %v5589 = vsub.f32 %v5129, %v5271
        %v5590 = vmul.f32 %v5588, 1.442695
        %v5591 = vpow.pop %v5590
        %v5592 = vmul.f32 %v5589, 1.442695
        %v5593 = vpow.pop %v5592
        %v5594 = vadd.f32 %v5570, %v5591
        %v5595 = vadd.f32 %v5571, %v5593
        %5596 = vrot.lane.b32.xlu0 %v5450, 80
        %v5597 = vpop.permute.xlu0 %5596
        %5598 = vrot.lane.b32.xlu0 %v5473, 80
        %v5599 = vpop.permute.xlu0 %5598
        %5600 = vrot.lane.b32.xlu0 %v5452, 80
        %v5601 = vpop.permute.xlu0 %5600
        %5602 = vrot.lane.b32.xlu0 %v5475, 80
        %v5603 = vpop.permute.xlu0 %5602
        %v5604 = vsel %vm1438, %v5597, %v5599
        %v5605 = vsel %vm1438, %v5601, %v5603
        %v5608 = vmul.f32 %v5591, %v5604
        %v5609 = vmul.f32 %v5593, %v5605
        %v5610 = vadd.f32 %v5586, %v5608
        %v5611 = vadd.f32 %v5587, %v5609
        %v5612 = vsub.f32 %v5132, %v5270
        %v5613 = vsub.f32 %v5133, %v5271
        %v5614 = vmul.f32 %v5612, 1.442695
        %v5615 = vpow.pop %v5614
        %v5616 = vmul.f32 %v5613, 1.442695
        %v5617 = vpow.pop %v5616
        %v5618 = vadd.f32 %v5594, %v5615
        %v5619 = vadd.f32 %v5595, %v5617
        %v5620 = vld [vmem:[#allocation3] sm:$0xfc]
        %v5621 = vld [vmem:[#allocation3 + $0x20] sm:$0x3]
        %v5624 = vrot.slane %v5620, 2
        %v5625 = vrot.slane %v5281, 2
        %v5626 = vsel %vm1453, %v5624, %v5625
        %v5627 = vrot.slane %v5621, 2
        %v5628 = vsel %vm1453, %v5625, %v5627
        %v5631 = vmul.f32 %v5615, %v5626
        %v5632 = vmul.f32 %v5617, %v5628
        %v5633 = vadd.f32 %v5610, %v5631
        %v5634 = vadd.f32 %v5611, %v5632
        %v5635 = vsub.f32 %v5136, %v5270
        %v5636 = vsub.f32 %v5137, %v5271
        %v5637 = vmul.f32 %v5635, 1.442695
        %v5638 = vpow.pop %v5637
        %v5639 = vmul.f32 %v5636, 1.442695
        %v5640 = vpow.pop %v5639
        %v5641 = vadd.f32 %v5618, %v5638
        %v5642 = vadd.f32 %v5619, %v5640
        %v5643 = vld [vmem:[#allocation3 + $0x8] sm:$0xfc]
        %v5644 = vld [vmem:[#allocation3 + $0x28] sm:$0x3]
        %v5647 = vrot.slane %v5643, 2
        %v5648 = vrot.slane %v5295, 2
        %v5649 = vsel %vm1453, %v5647, %v5648
        %v5650 = vrot.slane %v5644, 2
        %v5651 = vsel %vm1453, %v5648, %v5650
        %5652 = vrot.lane.b32.xlu0 %v5626, 120
        %v5653 = vpop.permute.xlu0 %5652
        %5654 = vrot.lane.b32.xlu0 %v5649, 120
        %v5655 = vpop.permute.xlu0 %5654
        %5656 = vrot.lane.b32.xlu0 %v5628, 120
        %v5657 = vpop.permute.xlu0 %5656
        %5658 = vrot.lane.b32.xlu0 %v5651, 120
        %v5659 = vpop.permute.xlu0 %5658
        %v5660 = vsel %vm1192, %v5653, %v5655
        %v5661 = vsel %vm1192, %v5657, %v5659
        %v5664 = vmul.f32 %v5638, %v5660
        %v5665 = vmul.f32 %v5640, %v5661
        %v5666 = vadd.f32 %v5633, %v5664
        %v5667 = vadd.f32 %v5634, %v5665
        %v5668 = vsub.f32 %v5140, %v5270
        %v5669 = vsub.f32 %v5141, %v5271
        %v5670 = vmul.f32 %v5668, 1.442695
        %v5671 = vpow.pop %v5670
        %v5672 = vmul.f32 %v5669, 1.442695
        %v5673 = vpow.pop %v5672
        %v5674 = vadd.f32 %v5641, %v5671
        %v5675 = vadd.f32 %v5642, %v5673
        %5676 = vrot.lane.b32.xlu0 %v5626, 112
        %v5677 = vpop.permute.xlu0 %5676
        %5678 = vrot.lane.b32.xlu0 %v5649, 112
        %v5679 = vpop.permute.xlu0 %5678
        %5680 = vrot.lane.b32.xlu0 %v5628, 112
        %v5681 = vpop.permute.xlu0 %5680
        %5682 = vrot.lane.b32.xlu0 %v5651, 112
        %v5683 = vpop.permute.xlu0 %5682
        %v5684 = vsel %vm1165, %v5677, %v5679
        %v5685 = vsel %vm1165, %v5681, %v5683
        %v5688 = vmul.f32 %v5671, %v5684
        %v5689 = vmul.f32 %v5673, %v5685
        %v5690 = vadd.f32 %v5666, %v5688
        %v5691 = vadd.f32 %v5667, %v5689
        %v5692 = vsub.f32 %v5144, %v5270
        %v5693 = vsub.f32 %v5145, %v5271
        %v5694 = vmul.f32 %v5692, 1.442695
        %v5695 = vpow.pop %v5694
        %v5696 = vmul.f32 %v5693, 1.442695
        %v5697 = vpow.pop %v5696
        %v5698 = vadd.f32 %v5674, %v5695
        %v5699 = vadd.f32 %v5675, %v5697
        %5700 = vrot.lane.b32.xlu0 %v5626, 104
        %v5701 = vpop.permute.xlu0 %5700
        %5702 = vrot.lane.b32.xlu0 %v5649, 104
        %v5703 = vpop.permute.xlu0 %5702
        %5704 = vrot.lane.b32.xlu0 %v5628, 104
        %v5705 = vpop.permute.xlu0 %5704
        %5706 = vrot.lane.b32.xlu0 %v5651, 104
        %v5707 = vpop.permute.xlu0 %5706
        %v5708 = vsel %vm1136, %v5701, %v5703
        %v5709 = vsel %vm1136, %v5705, %v5707
        %v5712 = vmul.f32 %v5695, %v5708
        %v5713 = vmul.f32 %v5697, %v5709
        %v5714 = vadd.f32 %v5690, %v5712
        %v5715 = vadd.f32 %v5691, %v5713
        %v5716 = vsub.f32 %v5148, %v5270
        %v5717 = vsub.f32 %v5149, %v5271
        %v5718 = vmul.f32 %v5716, 1.442695
        %v5719 = vpow.pop %v5718
        %v5720 = vmul.f32 %v5717, 1.442695
        %v5721 = vpow.pop %v5720
        %v5722 = vadd.f32 %v5698, %v5719
        %v5723 = vadd.f32 %v5699, %v5721
        %5724 = vrot.lane.b32.xlu0 %v5626, 96
        %v5725 = vpop.permute.xlu0 %5724
        %5726 = vrot.lane.b32.xlu0 %v5649, 96
        %v5727 = vpop.permute.xlu0 %5726
        %5728 = vrot.lane.b32.xlu0 %v5628, 96
        %v5729 = vpop.permute.xlu0 %5728
        %5730 = vrot.lane.b32.xlu0 %v5651, 96
        %v5731 = vpop.permute.xlu0 %5730
        %v5732 = vsel %vm1334, %v5725, %v5727
        %v5733 = vsel %vm1334, %v5729, %v5731
        %v5736 = vmul.f32 %v5719, %v5732
        %v5737 = vmul.f32 %v5721, %v5733
        %v5738 = vadd.f32 %v5714, %v5736
        %v5739 = vadd.f32 %v5715, %v5737
        %v5740 = vsub.f32 %v5152, %v5270
        %v5741 = vsub.f32 %v5153, %v5271
        %v5742 = vmul.f32 %v5740, 1.442695
        %v5743 = vpow.pop %v5742
        %v5744 = vmul.f32 %v5741, 1.442695
        %v5745 = vpow.pop %v5744
        %v5746 = vadd.f32 %v5722, %v5743
        %v5747 = vadd.f32 %v5723, %v5745
        %5748 = vrot.lane.b32.xlu0 %v5626, 88
        %v5749 = vpop.permute.xlu0 %5748
        %5750 = vrot.lane.b32.xlu0 %v5649, 88
        %v5751 = vpop.permute.xlu0 %5750
        %5752 = vrot.lane.b32.xlu0 %v5628, 88
        %v5753 = vpop.permute.xlu0 %5752
        %5754 = vrot.lane.b32.xlu0 %v5651, 88
        %v5755 = vpop.permute.xlu0 %5754
        %v5756 = vsel %vm1386, %v5749, %v5751
        %v5757 = vsel %vm1386, %v5753, %v5755
        %v5760 = vmul.f32 %v5743, %v5756
        %v5761 = vmul.f32 %v5745, %v5757
        %v5762 = vadd.f32 %v5738, %v5760
        %v5763 = vadd.f32 %v5739, %v5761
        %v5764 = vsub.f32 %v5156, %v5270
        %v5765 = vsub.f32 %v5157, %v5271
        %v5766 = vmul.f32 %v5764, 1.442695
        %v5767 = vpow.pop %v5766
        %v5768 = vmul.f32 %v5765, 1.442695
        %v5769 = vpow.pop %v5768
        %v5770 = vadd.f32 %v5746, %v5767
        %v5771 = vadd.f32 %v5747, %v5769
        %5772 = vrot.lane.b32.xlu0 %v5626, 80
        %v5773 = vpop.permute.xlu0 %5772
        %5774 = vrot.lane.b32.xlu0 %v5649, 80
        %v5775 = vpop.permute.xlu0 %5774
        %5776 = vrot.lane.b32.xlu0 %v5628, 80
        %v5777 = vpop.permute.xlu0 %5776
        %5778 = vrot.lane.b32.xlu0 %v5651, 80
        %v5779 = vpop.permute.xlu0 %5778
        %v5780 = vsel %vm1438, %v5773, %v5775
        %v5781 = vsel %vm1438, %v5777, %v5779
        %v5784 = vmul.f32 %v5767, %v5780
        %v5785 = vmul.f32 %v5769, %v5781
        %v5786 = vadd.f32 %v5762, %v5784
        %v5787 = vadd.f32 %v5763, %v5785
        %v5788 = vsub.f32 %v5160, %v5270
        %v5789 = vsub.f32 %v5161, %v5271
        %v5790 = vmul.f32 %v5788, 1.442695
        %v5791 = vpow.pop %v5790
        %v5792 = vmul.f32 %v5789, 1.442695
        %v5793 = vpow.pop %v5792
        %v5794 = vadd.f32 %v5770, %v5791
        %v5795 = vadd.f32 %v5771, %v5793
        %v5796 = vld [vmem:[#allocation3] sm:$0xf8]
        %v5797 = vld [vmem:[#allocation3 + $0x20] sm:$0x7]
        %v5800 = vrot.slane %v5796, 3
        %v5801 = vrot.slane %v5281, 3
        %v5802 = vsel %vm1117, %v5800, %v5801
        %v5803 = vrot.slane %v5797, 3
        %v5804 = vsel %vm1117, %v5801, %v5803
        %v5807 = vmul.f32 %v5791, %v5802
        %v5808 = vmul.f32 %v5793, %v5804
        %v5809 = vadd.f32 %v5786, %v5807
        %v5810 = vadd.f32 %v5787, %v5808
        %v5811 = vsub.f32 %v5164, %v5270
        %v5812 = vsub.f32 %v5165, %v5271
        %v5813 = vmul.f32 %v5811, 1.442695
        %v5814 = vpow.pop %v5813
        %v5815 = vmul.f32 %v5812, 1.442695
        %v5816 = vpow.pop %v5815
        %v5817 = vadd.f32 %v5794, %v5814
        %v5818 = vadd.f32 %v5795, %v5816
        %v5819 = vld [vmem:[#allocation3 + $0x8] sm:$0xf8]
        %v5820 = vld [vmem:[#allocation3 + $0x28] sm:$0x7]
        %v5823 = vrot.slane %v5819, 3
        %v5824 = vrot.slane %v5295, 3
        %v5825 = vsel %vm1117, %v5823, %v5824
        %v5826 = vrot.slane %v5820, 3
        %v5827 = vsel %vm1117, %v5824, %v5826
        %5828 = vrot.lane.b32.xlu0 %v5802, 120
        %v5829 = vpop.permute.xlu0 %5828
        %5830 = vrot.lane.b32.xlu0 %v5825, 120
        %v5831 = vpop.permute.xlu0 %5830
        %5832 = vrot.lane.b32.xlu0 %v5804, 120
        %v5833 = vpop.permute.xlu0 %5832
        %5834 = vrot.lane.b32.xlu0 %v5827, 120
        %v5835 = vpop.permute.xlu0 %5834
        %v5836 = vsel %vm1192, %v5829, %v5831
        %v5837 = vsel %vm1192, %v5833, %v5835
        %v5840 = vmul.f32 %v5814, %v5836
        %v5841 = vmul.f32 %v5816, %v5837
        %v5842 = vadd.f32 %v5809, %v5840
        %v5843 = vadd.f32 %v5810, %v5841
        %v5844 = vsub.f32 %v5168, %v5270
        %v5845 = vsub.f32 %v5169, %v5271
        %v5846 = vmul.f32 %v5844, 1.442695
        %v5847 = vpow.pop %v5846
        %v5848 = vmul.f32 %v5845, 1.442695
        %v5849 = vpow.pop %v5848
        %v5850 = vadd.f32 %v5817, %v5847
        %v5851 = vadd.f32 %v5818, %v5849
        %5852 = vrot.lane.b32.xlu0 %v5802, 112
        %v5853 = vpop.permute.xlu0 %5852
        %5854 = vrot.lane.b32.xlu0 %v5825, 112
        %v5855 = vpop.permute.xlu0 %5854
        %5856 = vrot.lane.b32.xlu0 %v5804, 112
        %v5857 = vpop.permute.xlu0 %5856
        %5858 = vrot.lane.b32.xlu0 %v5827, 112
        %v5859 = vpop.permute.xlu0 %5858
        %v5860 = vsel %vm1165, %v5853, %v5855
        %v5861 = vsel %vm1165, %v5857, %v5859
        %v5864 = vmul.f32 %v5847, %v5860
        %v5865 = vmul.f32 %v5849, %v5861
        %v5866 = vadd.f32 %v5842, %v5864
        %v5867 = vadd.f32 %v5843, %v5865
        %v5868 = vsub.f32 %v5172, %v5270
        %v5869 = vsub.f32 %v5173, %v5271
        %v5870 = vmul.f32 %v5868, 1.442695
        %v5871 = vpow.pop %v5870
        %v5872 = vmul.f32 %v5869, 1.442695
        %v5873 = vpow.pop %v5872
        %v5874 = vadd.f32 %v5850, %v5871
        %v5875 = vadd.f32 %v5851, %v5873
        %5876 = vrot.lane.b32.xlu0 %v5802, 104
        %v5877 = vpop.permute.xlu0 %5876
        %5878 = vrot.lane.b32.xlu0 %v5825, 104
        %v5879 = vpop.permute.xlu0 %5878
        %5880 = vrot.lane.b32.xlu0 %v5804, 104
        %v5881 = vpop.permute.xlu0 %5880
        %5882 = vrot.lane.b32.xlu0 %v5827, 104
        %v5883 = vpop.permute.xlu0 %5882
        %v5884 = vsel %vm1136, %v5877, %v5879
        %v5885 = vsel %vm1136, %v5881, %v5883
        %v5888 = vmul.f32 %v5871, %v5884
        %v5889 = vmul.f32 %v5873, %v5885
        %v5890 = vadd.f32 %v5866, %v5888
        %v5891 = vadd.f32 %v5867, %v5889
        %v5892 = vsub.f32 %v5176, %v5270
        %v5893 = vsub.f32 %v5177, %v5271
        %v5894 = vmul.f32 %v5892, 1.442695
        %v5895 = vpow.pop %v5894
        %v5896 = vmul.f32 %v5893, 1.442695
        %v5897 = vpow.pop %v5896
        %v5898 = vadd.f32 %v5874, %v5895
        %v5899 = vadd.f32 %v5875, %v5897
        %5900 = vrot.lane.b32.xlu0 %v5802, 96
        %v5901 = vpop.permute.xlu0 %5900
        %5902 = vrot.lane.b32.xlu0 %v5825, 96
        %v5903 = vpop.permute.xlu0 %5902
        %5904 = vrot.lane.b32.xlu0 %v5804, 96
        %v5905 = vpop.permute.xlu0 %5904
        %5906 = vrot.lane.b32.xlu0 %v5827, 96
        %v5907 = vpop.permute.xlu0 %5906
        %v5908 = vsel %vm1334, %v5901, %v5903
        %v5909 = vsel %vm1334, %v5905, %v5907
        %v5912 = vmul.f32 %v5895, %v5908
        %v5913 = vmul.f32 %v5897, %v5909
        %v5914 = vadd.f32 %v5890, %v5912
        %v5915 = vadd.f32 %v5891, %v5913
        %v5916 = vsub.f32 %v5180, %v5270
        %v5917 = vsub.f32 %v5181, %v5271
        %v5918 = vmul.f32 %v5916, 1.442695
        %v5919 = vpow.pop %v5918
        %v5920 = vmul.f32 %v5917, 1.442695
        %v5921 = vpow.pop %v5920
        %v5922 = vadd.f32 %v5898, %v5919
        %v5923 = vadd.f32 %v5899, %v5921
        %5924 = vrot.lane.b32.xlu0 %v5802, 88
        %v5925 = vpop.permute.xlu0 %5924
        %5926 = vrot.lane.b32.xlu0 %v5825, 88
        %v5927 = vpop.permute.xlu0 %5926
        %5928 = vrot.lane.b32.xlu0 %v5804, 88
        %v5929 = vpop.permute.xlu0 %5928
        %5930 = vrot.lane.b32.xlu0 %v5827, 88
        %v5931 = vpop.permute.xlu0 %5930
        %v5932 = vsel %vm1386, %v5925, %v5927
        %v5933 = vsel %vm1386, %v5929, %v5931
        %v5936 = vmul.f32 %v5919, %v5932
        %v5937 = vmul.f32 %v5921, %v5933
        %v5938 = vadd.f32 %v5914, %v5936
        %v5939 = vadd.f32 %v5915, %v5937
        %v5940 = vsub.f32 %v5184, %v5270
        %v5941 = vsub.f32 %v5185, %v5271
        %v5942 = vmul.f32 %v5940, 1.442695
        %v5943 = vpow.pop %v5942
        %v5944 = vmul.f32 %v5941, 1.442695
        %v5945 = vpow.pop %v5944
        %v5946 = vadd.f32 %v5922, %v5943
        %v5947 = vadd.f32 %v5923, %v5945
        %5948 = vrot.lane.b32.xlu0 %v5802, 80
        %v5949 = vpop.permute.xlu0 %5948
        %5950 = vrot.lane.b32.xlu0 %v5825, 80
        %v5951 = vpop.permute.xlu0 %5950
        %5952 = vrot.lane.b32.xlu0 %v5804, 80
        %v5953 = vpop.permute.xlu0 %5952
        %5954 = vrot.lane.b32.xlu0 %v5827, 80
        %v5955 = vpop.permute.xlu0 %5954
        %v5956 = vsel %vm1438, %v5949, %v5951
        %v5957 = vsel %vm1438, %v5953, %v5955
        %v5960 = vmul.f32 %v5943, %v5956
        %v5961 = vmul.f32 %v5945, %v5957
        %v5962 = vadd.f32 %v5938, %v5960
        %v5963 = vadd.f32 %v5939, %v5961
        %v5964 = vsub.f32 %v5188, %v5270
        %v5965 = vsub.f32 %v5189, %v5271
        %v5966 = vmul.f32 %v5964, 1.442695
        %v5967 = vpow.pop %v5966
        %v5968 = vmul.f32 %v5965, 1.442695
        %v5969 = vpow.pop %v5968
        %v5970 = vadd.f32 %v5946, %v5967
        %v5971 = vadd.f32 %v5947, %v5969
        %v5972 = vld [vmem:[#allocation3] sm:$0xf0]
        %v5973 = vld [vmem:[#allocation3 + $0x20] sm:$0xf]
        %v5976 = vrot.slane %v5972, 4
        %v5977 = vrot.slane %v5281, 4
        %v5978 = vsel %vm2980, %v5976, %v5977
        %v5979 = vrot.slane %v5973, 4
        %v5980 = vsel %vm2980, %v5977, %v5979
        %v5983 = vmul.f32 %v5967, %v5978
        %v5984 = vmul.f32 %v5969, %v5980
        %v5985 = vadd.f32 %v5962, %v5983
        %v5986 = vadd.f32 %v5963, %v5984
        %v5987 = vsub.f32 %v5192, %v5270
        %v5988 = vsub.f32 %v5193, %v5271
        %v5989 = vmul.f32 %v5987, 1.442695
        %v5990 = vpow.pop %v5989
        %v5991 = vmul.f32 %v5988, 1.442695
        %v5992 = vpow.pop %v5991
        %v5993 = vadd.f32 %v5970, %v5990
        %v5994 = vadd.f32 %v5971, %v5992
        %v5995 = vld [vmem:[#allocation3 + $0x8] sm:$0xf0]
        %v5996 = vld [vmem:[#allocation3 + $0x28] sm:$0xf]
        %v5999 = vrot.slane %v5995, 4
        %v6000 = vrot.slane %v5295, 4
        %v6001 = vsel %vm2980, %v5999, %v6000
        %v6002 = vrot.slane %v5996, 4
        %v6003 = vsel %vm2980, %v6000, %v6002
        %6004 = vrot.lane.b32.xlu0 %v5978, 120
        %v6005 = vpop.permute.xlu0 %6004
        %6006 = vrot.lane.b32.xlu0 %v6001, 120
        %v6007 = vpop.permute.xlu0 %6006
        %6008 = vrot.lane.b32.xlu0 %v5980, 120
        %v6009 = vpop.permute.xlu0 %6008
        %6010 = vrot.lane.b32.xlu0 %v6003, 120
        %v6011 = vpop.permute.xlu0 %6010
        %v6012 = vsel %vm1192, %v6005, %v6007
        %v6013 = vsel %vm1192, %v6009, %v6011
        %v6016 = vmul.f32 %v5990, %v6012
        %v6017 = vmul.f32 %v5992, %v6013
        %v6018 = vadd.f32 %v5985, %v6016
        %v6019 = vadd.f32 %v5986, %v6017
        %v6020 = vsub.f32 %v5196, %v5270
        %v6021 = vsub.f32 %v5197, %v5271
        %v6022 = vmul.f32 %v6020, 1.442695
        %v6023 = vpow.pop %v6022
        %v6024 = vmul.f32 %v6021, 1.442695
        %v6025 = vpow.pop %v6024
        %v6026 = vadd.f32 %v5993, %v6023
        %v6027 = vadd.f32 %v5994, %v6025
        %6028 = vrot.lane.b32.xlu0 %v5978, 112
        %v6029 = vpop.permute.xlu0 %6028
        %6030 = vrot.lane.b32.xlu0 %v6001, 112
        %v6031 = vpop.permute.xlu0 %6030
        %6032 = vrot.lane.b32.xlu0 %v5980, 112
        %v6033 = vpop.permute.xlu0 %6032
        %6034 = vrot.lane.b32.xlu0 %v6003, 112
        %v6035 = vpop.permute.xlu0 %6034
        %v6036 = vsel %vm1165, %v6029, %v6031
        %v6037 = vsel %vm1165, %v6033, %v6035
        %v6040 = vmul.f32 %v6023, %v6036
        %v6041 = vmul.f32 %v6025, %v6037
        %v6042 = vadd.f32 %v6018, %v6040
        %v6043 = vadd.f32 %v6019, %v6041
        %v6044 = vsub.f32 %v5200, %v5270
        %v6045 = vsub.f32 %v5201, %v5271
        %v6046 = vmul.f32 %v6044, 1.442695
        %v6047 = vpow.pop %v6046
        %v6048 = vmul.f32 %v6045, 1.442695
        %v6049 = vpow.pop %v6048
        %v6050 = vadd.f32 %v6026, %v6047
        %v6051 = vadd.f32 %v6027, %v6049
        %6052 = vrot.lane.b32.xlu0 %v5978, 104
        %v6053 = vpop.permute.xlu0 %6052
        %6054 = vrot.lane.b32.xlu0 %v6001, 104
        %v6055 = vpop.permute.xlu0 %6054
        %6056 = vrot.lane.b32.xlu0 %v5980, 104
        %v6057 = vpop.permute.xlu0 %6056
        %6058 = vrot.lane.b32.xlu0 %v6003, 104
        %v6059 = vpop.permute.xlu0 %6058
        %v6060 = vsel %vm1136, %v6053, %v6055
        %v6061 = vsel %vm1136, %v6057, %v6059
        %v6064 = vmul.f32 %v6047, %v6060
        %v6065 = vmul.f32 %v6049, %v6061
        %v6066 = vadd.f32 %v6042, %v6064
        %v6067 = vadd.f32 %v6043, %v6065
        %v6068 = vsub.f32 %v5204, %v5270
        %v6069 = vsub.f32 %v5205, %v5271
        %v6070 = vmul.f32 %v6068, 1.442695
        %v6071 = vpow.pop %v6070
        %v6072 = vmul.f32 %v6069, 1.442695
        %v6073 = vpow.pop %v6072
        %v6074 = vadd.f32 %v6050, %v6071
        %v6075 = vadd.f32 %v6051, %v6073
        %6076 = vrot.lane.b32.xlu0 %v5978, 96
        %v6077 = vpop.permute.xlu0 %6076
        %6078 = vrot.lane.b32.xlu0 %v6001, 96
        %v6079 = vpop.permute.xlu0 %6078
        %6080 = vrot.lane.b32.xlu0 %v5980, 96
        %v6081 = vpop.permute.xlu0 %6080
        %6082 = vrot.lane.b32.xlu0 %v6003, 96
        %v6083 = vpop.permute.xlu0 %6082
        %v6084 = vsel %vm1334, %v6077, %v6079
        %v6085 = vsel %vm1334, %v6081, %v6083
        %v6088 = vmul.f32 %v6071, %v6084
        %v6089 = vmul.f32 %v6073, %v6085
        %v6090 = vadd.f32 %v6066, %v6088
        %v6091 = vadd.f32 %v6067, %v6089
        %v6092 = vsub.f32 %v5208, %v5270
        %v6093 = vsub.f32 %v5209, %v5271
        %v6094 = vmul.f32 %v6092, 1.442695
        %v6095 = vpow.pop %v6094
        %v6096 = vmul.f32 %v6093, 1.442695
        %v6097 = vpow.pop %v6096
        %v6098 = vadd.f32 %v6074, %v6095
        %v6099 = vadd.f32 %v6075, %v6097
        %6100 = vrot.lane.b32.xlu0 %v5978, 88
        %v6101 = vpop.permute.xlu0 %6100
        %6102 = vrot.lane.b32.xlu0 %v6001, 88
        %v6103 = vpop.permute.xlu0 %6102
        %6104 = vrot.lane.b32.xlu0 %v5980, 88
        %v6105 = vpop.permute.xlu0 %6104
        %6106 = vrot.lane.b32.xlu0 %v6003, 88
        %v6107 = vpop.permute.xlu0 %6106
        %v6108 = vsel %vm1386, %v6101, %v6103
        %v6109 = vsel %vm1386, %v6105, %v6107
        %v6112 = vmul.f32 %v6095, %v6108
        %v6113 = vmul.f32 %v6097, %v6109
        %v6114 = vadd.f32 %v6090, %v6112
        %v6115 = vadd.f32 %v6091, %v6113
        %v6116 = vsub.f32 %v5212, %v5270
        %v6117 = vsub.f32 %v5213, %v5271
        %v6118 = vmul.f32 %v6116, 1.442695
        %v6119 = vpow.pop %v6118
        %v6120 = vmul.f32 %v6117, 1.442695
        %v6121 = vpow.pop %v6120
        %v6122 = vadd.f32 %v6098, %v6119
        %v6123 = vadd.f32 %v6099, %v6121
        %6124 = vrot.lane.b32.xlu0 %v5978, 80
        %v6125 = vpop.permute.xlu0 %6124
        %6126 = vrot.lane.b32.xlu0 %v6001, 80
        %v6127 = vpop.permute.xlu0 %6126
        %6128 = vrot.lane.b32.xlu0 %v5980, 80
        %v6129 = vpop.permute.xlu0 %6128
        %6130 = vrot.lane.b32.xlu0 %v6003, 80
        %v6131 = vpop.permute.xlu0 %6130
        %v6132 = vsel %vm1438, %v6125, %v6127
        %v6133 = vsel %vm1438, %v6129, %v6131
        %v6136 = vmul.f32 %v6119, %v6132
        %v6137 = vmul.f32 %v6121, %v6133
        %v6138 = vadd.f32 %v6114, %v6136
        %v6139 = vadd.f32 %v6115, %v6137
        %v6140 = vsub.f32 %v5216, %v5270
        %v6141 = vsub.f32 %v5217, %v5271
        %v6142 = vmul.f32 %v6140, 1.442695
        %v6143 = vpow.pop %v6142
        %v6144 = vmul.f32 %v6141, 1.442695
        %v6145 = vpow.pop %v6144
        %v6146 = vadd.f32 %v6122, %v6143
        %v6147 = vadd.f32 %v6123, %v6145
        %v6148 = vld [vmem:[#allocation3] sm:$0xe0]
        %v6149 = vld [vmem:[#allocation3 + $0x20] sm:$0x1f]
        %v6152 = vrot.slane %v6148, 5
        %v6153 = vrot.slane %v5281, 5
        %v6154 = vsel %vm910, %v6152, %v6153
        %v6155 = vrot.slane %v6149, 5
        %v6156 = vsel %vm910, %v6153, %v6155
        %v6159 = vmul.f32 %v6143, %v6154
        %v6160 = vmul.f32 %v6145, %v6156
        %v6161 = vadd.f32 %v6138, %v6159
        %v6162 = vadd.f32 %v6139, %v6160
        %v6163 = vsub.f32 %v5220, %v5270
        %v6164 = vsub.f32 %v5221, %v5271
        %v6165 = vmul.f32 %v6163, 1.442695
        %v6166 = vpow.pop %v6165
        %v6167 = vmul.f32 %v6164, 1.442695
        %v6168 = vpow.pop %v6167
        %v6169 = vadd.f32 %v6146, %v6166
        %v6170 = vadd.f32 %v6147, %v6168
        %v6171 = vld [vmem:[#allocation3 + $0x8] sm:$0xe0]
        %v6172 = vld [vmem:[#allocation3 + $0x28] sm:$0x1f]
        %v6175 = vrot.slane %v6171, 5
        %v6176 = vrot.slane %v5295, 5
        %v6177 = vsel %vm910, %v6175, %v6176
        %v6178 = vrot.slane %v6172, 5
        %v6179 = vsel %vm910, %v6176, %v6178
        %6180 = vrot.lane.b32.xlu0 %v6154, 120
        %v6181 = vpop.permute.xlu0 %6180
        %6182 = vrot.lane.b32.xlu0 %v6177, 120
        %v6183 = vpop.permute.xlu0 %6182
        %6184 = vrot.lane.b32.xlu0 %v6156, 120
        %v6185 = vpop.permute.xlu0 %6184
        %6186 = vrot.lane.b32.xlu0 %v6179, 120
        %v6187 = vpop.permute.xlu0 %6186
        %v6188 = vsel %vm1192, %v6181, %v6183
        %v6189 = vsel %vm1192, %v6185, %v6187
        %v6192 = vmul.f32 %v6166, %v6188
        %v6193 = vmul.f32 %v6168, %v6189
        %v6194 = vadd.f32 %v6161, %v6192
        %v6195 = vadd.f32 %v6162, %v6193
        %v6196 = vsub.f32 %v5224, %v5270
        %v6197 = vsub.f32 %v5225, %v5271
        %v6198 = vmul.f32 %v6196, 1.442695
        %v6199 = vpow.pop %v6198
        %v6200 = vmul.f32 %v6197, 1.442695
        %v6201 = vpow.pop %v6200
        %v6202 = vadd.f32 %v6169, %v6199
        %v6203 = vadd.f32 %v6170, %v6201
        %6204 = vrot.lane.b32.xlu0 %v6154, 112
        %v6205 = vpop.permute.xlu0 %6204
        %6206 = vrot.lane.b32.xlu0 %v6177, 112
        %v6207 = vpop.permute.xlu0 %6206
        %6208 = vrot.lane.b32.xlu0 %v6156, 112
        %v6209 = vpop.permute.xlu0 %6208
        %6210 = vrot.lane.b32.xlu0 %v6179, 112
        %v6211 = vpop.permute.xlu0 %6210
        %v6212 = vsel %vm1165, %v6205, %v6207
        %v6213 = vsel %vm1165, %v6209, %v6211
        %v6216 = vmul.f32 %v6199, %v6212
        %v6217 = vmul.f32 %v6201, %v6213
        %v6218 = vadd.f32 %v6194, %v6216
        %v6219 = vadd.f32 %v6195, %v6217
        %v6220 = vsub.f32 %v5228, %v5270
        %v6221 = vsub.f32 %v5229, %v5271
        %v6222 = vmul.f32 %v6220, 1.442695
        %v6223 = vpow.pop %v6222
        %v6224 = vmul.f32 %v6221, 1.442695
        %v6225 = vpow.pop %v6224
        %v6226 = vadd.f32 %v6202, %v6223
        %v6227 = vadd.f32 %v6203, %v6225
        %6228 = vrot.lane.b32.xlu0 %v6154, 104
        %v6229 = vpop.permute.xlu0 %6228
        %6230 = vrot.lane.b32.xlu0 %v6177, 104
        %v6231 = vpop.permute.xlu0 %6230
        %6232 = vrot.lane.b32.xlu0 %v6156, 104
        %v6233 = vpop.permute.xlu0 %6232
        %6234 = vrot.lane.b32.xlu0 %v6179, 104
        %v6235 = vpop.permute.xlu0 %6234
        %v6236 = vsel %vm1136, %v6229, %v6231
        %v6237 = vsel %vm1136, %v6233, %v6235
        %v6240 = vmul.f32 %v6223, %v6236
        %v6241 = vmul.f32 %v6225, %v6237
        %v6242 = vadd.f32 %v6218, %v6240
        %v6243 = vadd.f32 %v6219, %v6241
        %v6244 = vsub.f32 %v5232, %v5270
        %v6245 = vsub.f32 %v5233, %v5271
        %v6246 = vmul.f32 %v6244, 1.442695
        %v6247 = vpow.pop %v6246
        %v6248 = vmul.f32 %v6245, 1.442695
        %v6249 = vpow.pop %v6248
        %v6250 = vadd.f32 %v6226, %v6247
        %v6251 = vadd.f32 %v6227, %v6249
        %6252 = vrot.lane.b32.xlu0 %v6154, 96
        %v6253 = vpop.permute.xlu0 %6252
        %6254 = vrot.lane.b32.xlu0 %v6177, 96
        %v6255 = vpop.permute.xlu0 %6254
        %6256 = vrot.lane.b32.xlu0 %v6156, 96
        %v6257 = vpop.permute.xlu0 %6256
        %6258 = vrot.lane.b32.xlu0 %v6179, 96
        %v6259 = vpop.permute.xlu0 %6258
        %v6260 = vsel %vm1334, %v6253, %v6255
        %v6261 = vsel %vm1334, %v6257, %v6259
        %v6264 = vmul.f32 %v6247, %v6260
        %v6265 = vmul.f32 %v6249, %v6261
        %v6266 = vadd.f32 %v6242, %v6264
        %v6267 = vadd.f32 %v6243, %v6265
        %v6268 = vsub.f32 %v5236, %v5270
        %v6269 = vsub.f32 %v5237, %v5271
        %v6270 = vmul.f32 %v6268, 1.442695
        %v6271 = vpow.pop %v6270
        %v6272 = vmul.f32 %v6269, 1.442695
        %v6273 = vpow.pop %v6272
        %v6274 = vadd.f32 %v6250, %v6271
        %v6275 = vadd.f32 %v6251, %v6273
        %6276 = vrot.lane.b32.xlu0 %v6154, 88
        %v6277 = vpop.permute.xlu0 %6276
        %6278 = vrot.lane.b32.xlu0 %v6177, 88
        %v6279 = vpop.permute.xlu0 %6278
        %6280 = vrot.lane.b32.xlu0 %v6156, 88
        %v6281 = vpop.permute.xlu0 %6280
        %6282 = vrot.lane.b32.xlu0 %v6179, 88
        %v6283 = vpop.permute.xlu0 %6282
        %v6284 = vsel %vm1386, %v6277, %v6279
        %v6285 = vsel %vm1386, %v6281, %v6283
        %v6288 = vmul.f32 %v6271, %v6284
        %v6289 = vmul.f32 %v6273, %v6285
        %v6290 = vadd.f32 %v6266, %v6288
        %v6291 = vadd.f32 %v6267, %v6289
        %v6292 = vsub.f32 %v5240, %v5270
        %v6293 = vsub.f32 %v5241, %v5271
        %v6294 = vmul.f32 %v6292, 1.442695
        %v6295 = vpow.pop %v6294
        %v6296 = vmul.f32 %v6293, 1.442695
        %v6297 = vpow.pop %v6296
        %v6298 = vadd.f32 %v6274, %v6295
        %v6299 = vadd.f32 %v6275, %v6297
        %6300 = vrot.lane.b32.xlu0 %v6154, 80
        %v6301 = vpop.permute.xlu0 %6300
        %6302 = vrot.lane.b32.xlu0 %v6177, 80
        %v6303 = vpop.permute.xlu0 %6302
        %6304 = vrot.lane.b32.xlu0 %v6156, 80
        %v6305 = vpop.permute.xlu0 %6304
        %6306 = vrot.lane.b32.xlu0 %v6179, 80
        %v6307 = vpop.permute.xlu0 %6306
        %v6308 = vsel %vm1438, %v6301, %v6303
        %v6309 = vsel %vm1438, %v6305, %v6307
        %v6312 = vmul.f32 %v6295, %v6308
        %v6313 = vmul.f32 %v6297, %v6309
        %v6314 = vadd.f32 %v6290, %v6312
        %v6315 = vadd.f32 %v6291, %v6313
        %v6316 = vsub.f32 %v5244, %v5270
        %v6317 = vsub.f32 %v5245, %v5271
        %v6318 = vmul.f32 %v6316, 1.442695
        %v6319 = vpow.pop %v6318
        %v6320 = vmul.f32 %v6317, 1.442695
        %v6321 = vpow.pop %v6320
        %v6322 = vadd.f32 %v6298, %v6319
        %v6323 = vadd.f32 %v6299, %v6321
        %v6324 = vld [vmem:[#allocation3] sm:$0xc0]
        %v6325 = vld [vmem:[#allocation3 + $0x20] sm:$0x3f]
        %v6328 = vrot.slane %v6324, 6
        %v6329 = vrot.slane %v5281, 6
        %v6330 = vsel %vm3445, %v6328, %v6329
        %v6331 = vrot.slane %v6325, 6
        %v6332 = vsel %vm3445, %v6329, %v6331
        %v6335 = vmul.f32 %v6319, %v6330
        %v6336 = vmul.f32 %v6321, %v6332
        %v6337 = vadd.f32 %v6314, %v6335
        %v6338 = vadd.f32 %v6315, %v6336
        %v6339 = vsub.f32 %v5248, %v5270
        %v6340 = vsub.f32 %v5249, %v5271
        %v6341 = vmul.f32 %v6339, 1.442695
        %v6342 = vpow.pop %v6341
        %v6343 = vmul.f32 %v6340, 1.442695
        %v6344 = vpow.pop %v6343
        %v6345 = vadd.f32 %v6322, %v6342
        %v6346 = vadd.f32 %v6323, %v6344
        %v6347 = vld [vmem:[#allocation3 + $0x8] sm:$0xc0]
        %v6348 = vld [vmem:[#allocation3 + $0x28] sm:$0x3f]
        %v6351 = vrot.slane %v6347, 6
        %v6352 = vrot.slane %v5295, 6
        %v6353 = vsel %vm3445, %v6351, %v6352
        %v6354 = vrot.slane %v6348, 6
        %v6355 = vsel %vm3445, %v6352, %v6354
        %6356 = vrot.lane.b32.xlu0 %v6330, 120
        %v6357 = vpop.permute.xlu0 %6356
        %6358 = vrot.lane.b32.xlu0 %v6353, 120
        %v6359 = vpop.permute.xlu0 %6358
        %6360 = vrot.lane.b32.xlu0 %v6332, 120
        %v6361 = vpop.permute.xlu0 %6360
        %6362 = vrot.lane.b32.xlu0 %v6355, 120
        %v6363 = vpop.permute.xlu0 %6362
        %v6364 = vsel %vm1192, %v6357, %v6359
        %v6365 = vsel %vm1192, %v6361, %v6363
        %v6368 = vmul.f32 %v6342, %v6364
        %v6369 = vmul.f32 %v6344, %v6365
        %v6370 = vadd.f32 %v6337, %v6368
        %v6371 = vadd.f32 %v6338, %v6369
        %v6372 = vsub.f32 %v5252, %v5270
        %v6373 = vsub.f32 %v5253, %v5271
        %v6374 = vmul.f32 %v6372, 1.442695
        %v6375 = vpow.pop %v6374
        %v6376 = vmul.f32 %v6373, 1.442695
        %v6377 = vpow.pop %v6376
        %v6378 = vadd.f32 %v6345, %v6375
        %v6379 = vadd.f32 %v6346, %v6377
        %6380 = vrot.lane.b32.xlu0 %v6330, 112
        %v6381 = vpop.permute.xlu0 %6380
        %6382 = vrot.lane.b32.xlu0 %v6353, 112
        %v6383 = vpop.permute.xlu0 %6382
        %6384 = vrot.lane.b32.xlu0 %v6332, 112
        %v6385 = vpop.permute.xlu0 %6384
        %6386 = vrot.lane.b32.xlu0 %v6355, 112
        %v6387 = vpop.permute.xlu0 %6386
        %v6388 = vsel %vm1165, %v6381, %v6383
        %v6389 = vsel %vm1165, %v6385, %v6387
        %v6392 = vmul.f32 %v6375, %v6388
        %v6393 = vmul.f32 %v6377, %v6389
        %v6394 = vadd.f32 %v6370, %v6392
        %v6395 = vadd.f32 %v6371, %v6393
        %v6396 = vsub.f32 %v5256, %v5270
        %v6397 = vsub.f32 %v5257, %v5271
        %v6398 = vmul.f32 %v6396, 1.442695
        %v6399 = vpow.pop %v6398
        %v6400 = vmul.f32 %v6397, 1.442695
        %v6401 = vpow.pop %v6400
        %v6402 = vadd.f32 %v6378, %v6399
        %v6403 = vadd.f32 %v6379, %v6401
        %6404 = vrot.lane.b32.xlu0 %v6330, 104
        %v6405 = vpop.permute.xlu0 %6404
        %6406 = vrot.lane.b32.xlu0 %v6353, 104
        %v6407 = vpop.permute.xlu0 %6406
        %6408 = vrot.lane.b32.xlu0 %v6332, 104
        %v6409 = vpop.permute.xlu0 %6408
        %6410 = vrot.lane.b32.xlu0 %v6355, 104
        %v6411 = vpop.permute.xlu0 %6410
        %v6412 = vsel %vm1136, %v6405, %v6407
        %v6413 = vsel %vm1136, %v6409, %v6411
        %v6416 = vmul.f32 %v6399, %v6412
        %v6417 = vmul.f32 %v6401, %v6413
        %v6418 = vadd.f32 %v6394, %v6416
        %v6419 = vadd.f32 %v6395, %v6417
        %v6420 = vsub.f32 %v5260, %v5270
        %v6421 = vsub.f32 %v5261, %v5271
        %v6422 = vmul.f32 %v6420, 1.442695
        %v6423 = vpow.pop %v6422
        %v6424 = vmul.f32 %v6421, 1.442695
        %v6425 = vpow.pop %v6424
        %v6426 = vadd.f32 %v6402, %v6423
        %v6427 = vadd.f32 %v6403, %v6425
        %6428 = vrot.lane.b32.xlu0 %v6330, 96
        %v6429 = vpop.permute.xlu0 %6428
        %6430 = vrot.lane.b32.xlu0 %v6353, 96
        %v6431 = vpop.permute.xlu0 %6430
        %6432 = vrot.lane.b32.xlu0 %v6332, 96
        %v6433 = vpop.permute.xlu0 %6432
        %6434 = vrot.lane.b32.xlu0 %v6355, 96
        %v6435 = vpop.permute.xlu0 %6434
        %v6436 = vsel %vm1334, %v6429, %v6431
        %v6437 = vsel %vm1334, %v6433, %v6435
        %v6440 = vmul.f32 %v6423, %v6436
        %v6441 = vmul.f32 %v6425, %v6437
        %v6442 = vadd.f32 %v6418, %v6440
        %v6443 = vadd.f32 %v6419, %v6441
        %v6444 = vsub.f32 %v5264, %v5270
        %v6445 = vsub.f32 %v5265, %v5271
        %v6446 = vmul.f32 %v6444, 1.442695
        %v6447 = vpow.pop %v6446
        %v6448 = vmul.f32 %v6445, 1.442695
        %v6449 = vpow.pop %v6448
        %v6450 = vadd.f32 %v6426, %v6447
        %v6451 = vadd.f32 %v6427, %v6449
        %6452 = vrot.lane.b32.xlu0 %v6330, 88
        %v6453 = vpop.permute.xlu0 %6452
        %6454 = vrot.lane.b32.xlu0 %v6353, 88
        %v6455 = vpop.permute.xlu0 %6454
        %6456 = vrot.lane.b32.xlu0 %v6332, 88
        %v6457 = vpop.permute.xlu0 %6456
        %6458 = vrot.lane.b32.xlu0 %v6355, 88
        %v6459 = vpop.permute.xlu0 %6458
        %v6460 = vsel %vm1386, %v6453, %v6455
        %v6461 = vsel %vm1386, %v6457, %v6459
        %v6464 = vmul.f32 %v6447, %v6460
        %v6465 = vmul.f32 %v6449, %v6461
        %v6466 = vadd.f32 %v6442, %v6464
        %v6467 = vadd.f32 %v6443, %v6465
        %v6468 = vsub.f32 %v5268, %v5270
        %v6469 = vsub.f32 %v5269, %v5271
        %v6470 = vmul.f32 %v6468, 1.442695
        %v6471 = vpow.pop %v6470
        %v6472 = vmul.f32 %v6469, 1.442695
        %v6473 = vpow.pop %v6472
        %v6474 = vadd.f32 %v6450, %v6471
        %v6475 = vadd.f32 %v6451, %v6473
        %6476 = vrot.lane.b32.xlu0 %v6330, 80
        %v6477 = vpop.permute.xlu0 %6476
        %6478 = vrot.lane.b32.xlu0 %v6353, 80
        %v6479 = vpop.permute.xlu0 %6478
        %6480 = vrot.lane.b32.xlu0 %v6332, 80
        %v6481 = vpop.permute.xlu0 %6480
        %6482 = vrot.lane.b32.xlu0 %v6355, 80
        %v6483 = vpop.permute.xlu0 %6482
        %v6484 = vsel %vm1438, %v6477, %v6479
        %v6485 = vsel %vm1438, %v6481, %v6483
        %v6488 = vmul.f32 %v6471, %v6484
        %v6489 = vmul.f32 %v6473, %v6485
        %v6490 = vadd.f32 %v6466, %v6488
        %v6491 = vadd.f32 %v6467, %v6489
        %v6492 = vrcp.pop %v6474
        %v6493 = vrcp.pop %v6475
        %v6494 = vmul.f32 %v6490, %v6492
        %v6495 = vmul.f32 %v6491, %v6493
        %6496 = vst [vmem:[#allocation4] sm:$0xff] 0
        %vm6497 = vcmask 551936
        %6498 = vst.msk [vmem:[#allocation4 + $0x8] sm:$0xf] %vm6497, 0
        %6499 = vst [vmem:[#allocation4 + $0xc] sm:$0xff] 0
        %6500 = vst.msk [vmem:[#allocation4 + $0x14] sm:$0xf] %vm6497, 0
        %6501 = vst [vmem:[#allocation4 + $0x18] sm:$0x11] 0
        %vm6502 = vcmask 548864
        %6503 = vst.msk [vmem:[#allocation4 + $0x20] sm:$0x1] %vm6502, 0
        %v6504 = vpack.c.bf16 %v861, %v857
        %v6505 = vpack.c.bf16 %v863, %v859
        %v6506 = vpack.c.bf16 %v903, %v900
        %v6510 = vunpack.c.l.b16 %v6504
        %v6511 = vunpack.c.l.b16 %v6505
        %v6512 = vunpack.c.l.b16 %v6506
        %v6513 = vunpack.c.h.b16 %v6504
        %v6514 = vunpack.c.h.b16 %v6505
        %v6515 = vunpack.c.h.b16 %v6506
        %v6516 = vpack.c.b16 %v6511, %v6510
        %v6517 = vpack.c.b16 %v6512, %v6512
        %v6518 = vpack.c.b16 %v6514, %v6513
        %v6519 = vpack.c.b16 %v6515, %v6515
        %vm6520 = vsmask.f32 256
        %vm6521 = vsmask.f32 4368
        %vm6522 = vmor %vm6520, %vm6521
        %v6524 = vshrl.u32 %v6516, 16
        %v6526 = vrot.slane %v6524, 7
        %v6527 = vshll.u32 %v6516, 16
        %v6529 = vor.u32 %v6526, %v6527
        %v6531 = vshrl.u32 %v6517, 16
        %v6533 = vrot.slane %v6531, 7
        %v6534 = vshll.u32 %v6517, 16
        %v6536 = vor.u32 %v6533, %v6534
        %v6537 = vrot.slane %v6526, 4
        %v6539 = vshrl.u32 %v6518, 16
        %v6541 = vrot.slane %v6539, 7
        %v6542 = vshll.u32 %v6518, 16
        %v6544 = vor.u32 %v6541, %v6542
        %v6545 = vsel %vm6522, %v6537, %v6544
        %v6546 = vrot.slane %v6533, 4
        %v6548 = vshrl.u32 %v6519, 16
        %v6550 = vrot.slane %v6548, 7
        %v6551 = vshll.u32 %v6519, 16
        %v6553 = vor.u32 %v6550, %v6551
        %v6554 = vsel %vm6522, %v6546, %v6553
        %v6555 = vrot.slane %v6541, 4
        %v6556 = vrot.slane %v6550, 4
        %6557 = vrot.lane.b32.xlu0 %v6529, 18
        %v6558 = vpop.permute.xlu0 %6557
        %6559 = vrot.lane.b32.xlu0 %v6536, 18
        %v6560 = vpop.permute.xlu0 %6559
        %6561 = vrot.lane.b32.xlu0 %v6545, 18
        %v6562 = vpop.permute.xlu0 %6561
        %6563 = vrot.lane.b32.xlu0 %v6554, 18
        %v6564 = vpop.permute.xlu0 %6563
        %6565 = vrot.lane.b32.xlu0 %v6555, 18
        %v6566 = vpop.permute.xlu0 %6565
        %6567 = vrot.lane.b32.xlu0 %v6556, 18
        %v6568 = vpop.permute.xlu0 %6567
        %v6569 = vrot.slane %v6558, 4
        %v6570 = vrot.slane %v6562, 4
        %v6571 = vrot.slane %v6566, 4
        %vm6572 = vcmask 146432
        %v6573 = vsel %vm6572, %v6569, %v6558
        %v6574 = vsel %vm6572, %v6569, %v6560
        %v6575 = vsel %vm6572, %v6570, %v6562
        %v6576 = vsel %vm6572, %v6570, %v6564
        %v6577 = vsel %vm6572, %v6571, %v6566
        %v6578 = vsel %vm6572, %v6571, %v6568
        %vm6585 = vcmask 1043600
        %vm6586 = vsmask.f32 7938
        %vm6587 = vmand %vm6585, %vm6586
        %vm6588 = vcmask 1047556
        %vm6589 = vsmask.f32 7954
        %vm6590 = vmand %vm6588, %vm6589
        %vm6591 = vmor %vm6590, %vm6587
        %v6592 = vld [vmem:[#allocation4] sm:$0xff]
        %v6593 = vsel %vm6591, %v6573, %v6592
        %6594 = vst [vmem:[#allocation4] sm:$0xff] %v6593
        %vm6595 = vcmask 404480
        %vm6596 = vmand %vm6595, %vm6586
        %v6597 = vld [vmem:[#allocation4 + $0x8] sm:$0xf]
        %v6598 = vsel %vm6596, %v6574, %v6597
        %6599 = vst [vmem:[#allocation4 + $0x8] sm:$0xf] %v6598
        %vm6600 = vcmask 1043600
        %vm6601 = vcmask 1047556
        %vm6602 = vmor %vm6601, %vm6600
        %6603 = vst.msk [vmem:[#allocation4 + $0xc] sm:$0xff] %vm6602, %v6575
        %vm6604 = vcmask 404480
        %6605 = vst.msk [vmem:[#allocation4 + $0x14] sm:$0xf] %vm6604, %v6576
        %vm6606 = vcmask 1040528
        %vm6607 = vmand %vm6606, %vm6520
        %vm6608 = vcmask 1044484
        %vm6609 = vsmask.f32 4352
        %vm6610 = vmand %vm6608, %vm6609
        %vm6611 = vmor %vm6610, %vm6607
        %v6612 = vld [vmem:[#allocation4 + $0x18] sm:$0x11]
        %v6613 = vsel %vm6611, %v6577, %v6612
        %6614 = vst [vmem:[#allocation4 + $0x18] sm:$0x11] %v6613
        %vm6615 = vcmask 401408
        %vm6616 = vmand %vm6615, %vm6520
        %v6617 = vld [vmem:[#allocation4 + $0x20] sm:$0x1]
        %v6618 = vsel %vm6616, %v6578, %v6617
        %6619 = vst [vmem:[#allocation4 + $0x20] sm:$0x1] %v6618
        %v6620 = vld [vmem:[#allocation4] sm:$0xff]
        %v6621 = vld [vmem:[#allocation4 + $0x8] sm:$0xf]
        %v6622 = vld [vmem:[#allocation4 + $0xc] sm:$0xff]
        %v6623 = vld [vmem:[#allocation4 + $0x14] sm:$0xf]
        %v6628 = vunpack.c.l.b16 %v6620
        %v6629 = vunpack.c.h.b16 %v6620
        %v6630 = vunpack.c.l.b16 %v6621
        %v6631 = vunpack.c.l.b16 %v6622
        %v6632 = vunpack.c.h.b16 %v6622
        %v6633 = vunpack.c.l.b16 %v6623
        %v6634 = vpack.c.b16 %v6631, %v6628
        %v6635 = vpack.c.b16 %v6632, %v6629
        %v6636 = vpack.c.b16 %v6633, %v6630
        %6640 = vst [vmem:[#allocation5] sm:$0xff] %v6634
        %6641 = vst [vmem:[#allocation5 + $0x8] sm:$0xff] %v6635
        %vm6642 = vcmask 261120
        %6643 = vst.msk [vmem:[#allocation5 + $0x10] sm:$0xff] %vm6642, %v6636
        %v6644 = vld [vmem:[#allocation4] sm:$0xff]
        %v6645 = vld [vmem:[#allocation4 + $0x8] sm:$0xf]
        %v6646 = vld [vmem:[#allocation4 + $0xc] sm:$0xff]
        %v6647 = vld [vmem:[#allocation4 + $0x14] sm:$0xf]
        %v6652 = vunpack.c.l.b16 %v6644
        %v6653 = vunpack.c.h.b16 %v6644
        %v6654 = vunpack.c.l.b16 %v6645
        %v6655 = vunpack.c.l.b16 %v6646
        %v6656 = vunpack.c.h.b16 %v6646
        %v6657 = vunpack.c.l.b16 %v6647
        %v6658 = vpack.c.b16 %v6655, %v6652
        %v6659 = vpack.c.b16 %v6656, %v6653
        %v6660 = vpack.c.b16 %v6657, %v6654
        %6661 = vrot.lane.b32.xlu0 %v6658, 14
        %v6662 = vpop.permute.xlu0 %6661
        %6663 = vrot.lane.b32.xlu0 %v6659, 14
        %v6664 = vpop.permute.xlu0 %6663
        %6665 = vrot.lane.b32.xlu0 %v6660, 14
        %v6666 = vpop.permute.xlu0 %6665
        %vm6667 = vcmask 113664
        %v6668 = vsel %vm6667, %v6662, %v6664
        %v6669 = vsel %vm6667, %v6664, %v6666
        %vm6673 = vcmask 1047808
        %6674 = vst.msk [vmem:[#allocation5 + $0x10] sm:$0xff] %vm6673, %v6662
        %6675 = vst [vmem:[#allocation5 + $0x18] sm:$0xff] %v6668
        %6676 = vst.msk [vmem:[#allocation5 + $0x20] sm:$0xff] %vm689, %v6669
        %v6677 = vld [vmem:[#allocation4] sm:$0xff]
        %v6678 = vld [vmem:[#allocation4 + $0x8] sm:$0xf]
        %v6679 = vld [vmem:[#allocation4 + $0xc] sm:$0xff]
        %v6680 = vld [vmem:[#allocation4 + $0x14] sm:$0xf]
        %v6685 = vunpack.c.l.b16 %v6677
        %v6686 = vunpack.c.h.b16 %v6677
        %v6687 = vunpack.c.l.b16 %v6678
        %v6688 = vunpack.c.l.b16 %v6679
        %v6689 = vunpack.c.h.b16 %v6679
        %v6690 = vunpack.c.l.b16 %v6680
        %v6691 = vpack.c.b16 %v6688, %v6685
        %v6692 = vpack.c.b16 %v6689, %v6686
        %v6693 = vpack.c.b16 %v6690, %v6687
        %6694 = vrot.lane.b32.xlu0 %v6691, 28
        %v6695 = vpop.permute.xlu0 %6694
        %6696 = vrot.lane.b32.xlu0 %v6692, 28
        %v6697 = vpop.permute.xlu0 %6696
        %6698 = vrot.lane.b32.xlu0 %v6693, 28
        %v6699 = vpop.permute.xlu0 %6698
        %vm6700 = vcmask 228352
        %v6701 = vsel %vm6700, %v6695, %v6697
        %v6702 = vsel %vm6700, %v6697, %v6699
        %vm6706 = vcmask 1048064
        %6707 = vst.msk [vmem:[#allocation5 + $0x20] sm:$0xff] %vm6706, %v6695
        %6708 = vst [vmem:[#allocation5 + $0x28] sm:$0xff] %v6701
        %6709 = vst.msk [vmem:[#allocation5 + $0x30] sm:$0xff] %vm1334, %v6702
        %v6710 = vld [vmem:[#allocation4] sm:$0xff]
        %v6711 = vld [vmem:[#allocation4 + $0x8] sm:$0xf]
        %v6712 = vld [vmem:[#allocation4 + $0xc] sm:$0xff]
        %v6713 = vld [vmem:[#allocation4 + $0x14] sm:$0xf]
        %v6714 = vld [vmem:[#allocation4 + $0x18] sm:$0x11]
        %v6715 = vld [vmem:[#allocation4 + $0x20] sm:$0x1]
        %v6722 = vunpack.c.l.b16 %v6710
        %v6723 = vunpack.c.h.b16 %v6710
        %v6724 = vunpack.c.l.b16 %v6711
        %v6725 = vunpack.c.l.b16 %v6712
        %v6726 = vunpack.c.h.b16 %v6712
        %v6727 = vunpack.c.l.b16 %v6713
        %v6728 = vunpack.c.l.b16 %v6714
        %v6729 = vunpack.c.h.b16 %v6714
        %v6730 = vunpack.c.l.b16 %v6715
        %v6731 = vpack.c.b16 %v6725, %v6722
        %v6732 = vpack.c.b16 %v6726, %v6723
        %v6733 = vpack.c.b16 %v6727, %v6724
        %v6734 = vpack.c.b16 %v6728, %v6728
        %v6735 = vpack.c.b16 %v6729, %v6729
        %v6736 = vpack.c.b16 %v6730, %v6730
        %vm6737 = vsmask.f32 7424
        %v6739 = vshrl.u32 %v6731, 16
        %v6741 = vshll.u32 %v6731, 16
        %v6743 = vrot.slane %v6741, 1
        %v6744 = vor.u32 %v6739, %v6743
        %v6746 = vshll.u32 %v6734, 16
        %v6748 = vrot.slane %v6746, 1
        %v6749 = vsel %vm6737, %v6744, %v6748
        %v6751 = vshrl.u32 %v6732, 16
        %v6753 = vshll.u32 %v6732, 16
        %v6755 = vrot.slane %v6753, 1
        %v6756 = vor.u32 %v6751, %v6755
        %v6758 = vshll.u32 %v6735, 16
        %v6760 = vrot.slane %v6758, 1
        %v6761 = vsel %vm6737, %v6756, %v6760
        %v6763 = vshrl.u32 %v6733, 16
        %v6765 = vshll.u32 %v6733, 16
        %v6767 = vrot.slane %v6765, 1
        %v6768 = vor.u32 %v6763, %v6767
        %v6770 = vshll.u32 %v6736, 16
        %v6772 = vrot.slane %v6770, 1
        %v6773 = vsel %vm6737, %v6768, %v6772
        %6774 = vrot.lane.b32.xlu0 %v6749, 96
        %v6775 = vpop.permute.xlu0 %6774
        %6776 = vrot.lane.b32.xlu0 %v6761, 96
        %v6777 = vpop.permute.xlu0 %6776
        %6778 = vrot.lane.b32.xlu0 %v6773, 96
        %v6779 = vpop.permute.xlu0 %6778
        %vm6780 = vcmask 785408
        %v6781 = vsel %vm6780, %v6775, %v6777
        %v6782 = vsel %vm6780, %v6777, %v6779
        %vm6786 = vcmask 1048320
        %6787 = vst.msk [vmem:[#allocation5 + $0x30] sm:$0xff] %vm6786, %v6775
        %6788 = vst [vmem:[#allocation5 + $0x38] sm:$0xff] %v6781
        %6789 = vst [vmem:[#allocation5 + $0x40] sm:$0xff] %v6782
        %v6790 = vld [vmem:[#allocation4] sm:$0xff]
        %v6791 = vld [vmem:[#allocation4 + $0x8] sm:$0xf]
        %v6792 = vld [vmem:[#allocation4 + $0xc] sm:$0xff]
        %v6793 = vld [vmem:[#allocation4 + $0x14] sm:$0xf]
        %v6794 = vld [vmem:[#allocation4 + $0x18] sm:$0x11]
        %v6795 = vld [vmem:[#allocation4 + $0x20] sm:$0x1]
        %v6802 = vunpack.c.l.b16 %v6790
        %v6803 = vunpack.c.h.b16 %v6790
        %v6804 = vunpack.c.l.b16 %v6791
        %v6805 = vunpack.c.l.b16 %v6792
        %v6806 = vunpack.c.h.b16 %v6792
        %v6807 = vunpack.c.l.b16 %v6793
        %v6808 = vunpack.c.l.b16 %v6794
        %v6809 = vunpack.c.h.b16 %v6794
        %v6810 = vunpack.c.l.b16 %v6795
        %v6811 = vpack.c.b16 %v6805, %v6802
        %v6812 = vpack.c.b16 %v6806, %v6803
        %v6813 = vpack.c.b16 %v6807, %v6804
        %v6814 = vpack.c.b16 %v6808, %v6808
        %v6815 = vpack.c.b16 %v6809, %v6809
        %v6816 = vpack.c.b16 %v6810, %v6810
        %v6818 = vshrl.u32 %v6811, 16
        %v6820 = vshll.u32 %v6811, 16
        %v6822 = vrot.slane %v6820, 1
        %v6823 = vor.u32 %v6818, %v6822
        %v6825 = vshll.u32 %v6814, 16
        %v6827 = vrot.slane %v6825, 1
        %v6828 = vsel %vm6737, %v6823, %v6827
        %v6830 = vshrl.u32 %v6812, 16
        %v6832 = vshll.u32 %v6812, 16
        %v6834 = vrot.slane %v6832, 1
        %v6835 = vor.u32 %v6830, %v6834
        %v6837 = vshll.u32 %v6815, 16
        %v6839 = vrot.slane %v6837, 1
        %v6840 = vsel %vm6737, %v6835, %v6839
        %v6842 = vshrl.u32 %v6813, 16
        %v6844 = vshll.u32 %v6813, 16
        %v6846 = vrot.slane %v6844, 1
        %v6847 = vor.u32 %v6842, %v6846
        %v6849 = vshll.u32 %v6816, 16
        %v6851 = vrot.slane %v6849, 1
        %v6852 = vsel %vm6737, %v6847, %v6851
        %6853 = vrot.lane.b32.xlu0 %v6828, 110
        %v6854 = vpop.permute.xlu0 %6853
        %6855 = vrot.lane.b32.xlu0 %v6840, 110
        %v6856 = vpop.permute.xlu0 %6855
        %6857 = vrot.lane.b32.xlu0 %v6852, 110
        %v6858 = vpop.permute.xlu0 %6857
        %vm6859 = vcmask 900096
        %v6860 = vsel %vm6859, %v6854, %v6856
        %v6861 = vsel %vm6859, %v6856, %v6858
        %6865 = vst [vmem:[#allocation5 + $0x48] sm:$0xff] %v6860
        %6866 = vst [vmem:[#allocation5 + $0x50] sm:$0xff] %v6861
        %6867 = vst.msk [vmem:[#allocation5 + $0x58] sm:$0xff] %vm6642, %v6858
        %v6868 = vld [vmem:[#allocation4] sm:$0xff]
        %v6869 = vld [vmem:[#allocation4 + $0x8] sm:$0xf]
        %v6870 = vld [vmem:[#allocation4 + $0xc] sm:$0xff]
        %v6871 = vld [vmem:[#allocation4 + $0x14] sm:$0xf]
        %v6872 = vld [vmem:[#allocation4 + $0x18] sm:$0x11]
        %v6873 = vld [vmem:[#allocation4 + $0x20] sm:$0x1]
        %v6880 = vunpack.c.l.b16 %v6868
        %v6881 = vunpack.c.h.b16 %v6868
        %v6882 = vunpack.c.l.b16 %v6869
        %v6883 = vunpack.c.l.b16 %v6870
        %v6884 = vunpack.c.h.b16 %v6870
        %v6885 = vunpack.c.l.b16 %v6871
        %v6886 = vunpack.c.l.b16 %v6872
        %v6887 = vunpack.c.h.b16 %v6872
        %v6888 = vunpack.c.l.b16 %v6873
        %v6889 = vpack.c.b16 %v6883, %v6880
        %v6890 = vpack.c.b16 %v6884, %v6881
        %v6891 = vpack.c.b16 %v6885, %v6882
        %v6892 = vpack.c.b16 %v6886, %v6886
        %v6893 = vpack.c.b16 %v6887, %v6887
        %v6894 = vpack.c.b16 %v6888, %v6888
        %v6896 = vshrl.u32 %v6889, 16
        %v6898 = vshll.u32 %v6889, 16
        %v6900 = vrot.slane %v6898, 1
        %v6901 = vor.u32 %v6896, %v6900
        %v6903 = vshll.u32 %v6892, 16
        %v6905 = vrot.slane %v6903, 1
        %v6906 = vsel %vm6737, %v6901, %v6905
        %v6908 = vshrl.u32 %v6890, 16
        %v6910 = vshll.u32 %v6890, 16
        %v6912 = vrot.slane %v6910, 1
        %v6913 = vor.u32 %v6908, %v6912
        %v6915 = vshll.u32 %v6893, 16
        %v6917 = vrot.slane %v6915, 1
        %v6918 = vsel %vm6737, %v6913, %v6917
        %v6920 = vshrl.u32 %v6891, 16
        %v6922 = vshll.u32 %v6891, 16
        %v6924 = vrot.slane %v6922, 1
        %v6925 = vor.u32 %v6920, %v6924
        %v6927 = vshll.u32 %v6894, 16
        %v6929 = vrot.slane %v6927, 1
        %v6930 = vsel %vm6737, %v6925, %v6929
        %6931 = vrot.lane.b32.xlu0 %v6906, 124
        %v6932 = vpop.permute.xlu0 %6931
        %6933 = vrot.lane.b32.xlu0 %v6918, 124
        %v6934 = vpop.permute.xlu0 %6933
        %6935 = vrot.lane.b32.xlu0 %v6930, 124
        %v6936 = vpop.permute.xlu0 %6935
        %vm6937 = vcmask 1014784
        %v6938 = vsel %vm6937, %v6932, %v6934
        %v6939 = vsel %vm6937, %v6934, %v6936
        %6943 = vst.msk [vmem:[#allocation5 + $0x58] sm:$0xff] %vm6673, %v6938
        %6944 = vst [vmem:[#allocation5 + $0x60] sm:$0xff] %v6939
        %6945 = vst.msk [vmem:[#allocation5 + $0x68] sm:$0xff] %vm689, %v6936
        %v6946 = vld [vmem:[#allocation4] sm:$0xee]
        %v6947 = vld [vmem:[#allocation4 + $0x8] sm:$0xe]
        %v6948 = vld [vmem:[#allocation4 + $0xc] sm:$0xff]
        %v6949 = vld [vmem:[#allocation4 + $0x14] sm:$0xf]
        %v6950 = vld [vmem:[#allocation4 + $0x18] sm:$0x11]
        %v6951 = vld [vmem:[#allocation4 + $0x20] sm:$0x1]
        %v6958 = vunpack.c.l.b16 %v6946
        %v6959 = vunpack.c.h.b16 %v6946
        %v6960 = vunpack.c.l.b16 %v6947
        %v6961 = vunpack.c.l.b16 %v6948
        %v6962 = vunpack.c.h.b16 %v6948
        %v6963 = vunpack.c.l.b16 %v6949
        %v6964 = vunpack.c.l.b16 %v6950
        %v6965 = vunpack.c.h.b16 %v6950
        %v6966 = vunpack.c.l.b16 %v6951
        %v6967 = vpack.c.b16 %v6961, %v6958
        %v6968 = vpack.c.b16 %v6962, %v6959
        %v6969 = vpack.c.b16 %v6963, %v6960
        %v6970 = vpack.c.b16 %v6964, %v6964
        %v6971 = vpack.c.b16 %v6965, %v6965
        %v6972 = vpack.c.b16 %v6966, %v6966
        %vm6973 = vcmask 1046528
        %v6974 = vrot.slane %v6967, 1
        %v6975 = vrot.slane %v6970, 1
        %v6976 = vsel %vm6973, %v6974, %v6975
        %v6977 = vrot.slane %v6968, 1
        %v6978 = vrot.slane %v6971, 1
        %v6979 = vsel %vm6973, %v6977, %v6978
        %v6980 = vrot.slane %v6969, 1
        %v6981 = vrot.slane %v6972, 1
        %v6982 = vsel %vm6973, %v6980, %v6981
        %6983 = vrot.lane.b32.xlu0 %v6976, 64
        %v6984 = vpop.permute.xlu0 %6983
        %6985 = vrot.lane.b32.xlu0 %v6979, 64
        %v6986 = vpop.permute.xlu0 %6985
        %6987 = vrot.lane.b32.xlu0 %v6982, 64
        %v6988 = vpop.permute.xlu0 %6987
        %vm6989 = vcmask 523264
        %v6990 = vsel %vm6989, %v6984, %v6986
        %v6991 = vsel %vm6989, %v6986, %v6988
        %6995 = vst.msk [vmem:[#allocation5 + $0x68] sm:$0xff] %vm6706, %v6984
        %6996 = vst [vmem:[#allocation5 + $0x70] sm:$0xff] %v6990
        %6997 = vst.msk [vmem:[#allocation5 + $0x78] sm:$0xff] %vm1334, %v6991
        %v6998 = vld [vmem:[#allocation4] sm:$0xee]
        %v6999 = vld [vmem:[#allocation4 + $0x8] sm:$0xe]
        %v7000 = vld [vmem:[#allocation4 + $0xc] sm:$0xff]
        %v7001 = vld [vmem:[#allocation4 + $0x14] sm:$0xf]
        %v7002 = vld [vmem:[#allocation4 + $0x18] sm:$0x11]
        %v7003 = vld [vmem:[#allocation4 + $0x20] sm:$0x1]
        %v7010 = vunpack.c.l.b16 %v6998
        %v7011 = vunpack.c.h.b16 %v6998
        %v7012 = vunpack.c.l.b16 %v6999
        %v7013 = vunpack.c.l.b16 %v7000
        %v7014 = vunpack.c.h.b16 %v7000
        %v7015 = vunpack.c.l.b16 %v7001
        %v7016 = vunpack.c.l.b16 %v7002
        %v7017 = vunpack.c.h.b16 %v7002
        %v7018 = vunpack.c.l.b16 %v7003
        %v7019 = vpack.c.b16 %v7013, %v7010
        %v7020 = vpack.c.b16 %v7014, %v7011
        %v7021 = vpack.c.b16 %v7015, %v7012
        %v7022 = vpack.c.b16 %v7016, %v7016
        %v7023 = vpack.c.b16 %v7017, %v7017
        %v7024 = vpack.c.b16 %v7018, %v7018
        %v7025 = vrot.slane %v7019, 1
        %v7026 = vrot.slane %v7022, 1
        %v7027 = vsel %vm6973, %v7025, %v7026
        %v7028 = vrot.slane %v7020, 1
        %v7029 = vrot.slane %v7023, 1
        %v7030 = vsel %vm6973, %v7028, %v7029
        %v7031 = vrot.slane %v7021, 1
        %v7032 = vrot.slane %v7024, 1
        %v7033 = vsel %vm6973, %v7031, %v7032
        %7034 = vrot.lane.b32.xlu0 %v7027, 78
        %v7035 = vpop.permute.xlu0 %7034
        %7036 = vrot.lane.b32.xlu0 %v7030, 78
        %v7037 = vpop.permute.xlu0 %7036
        %7038 = vrot.lane.b32.xlu0 %v7033, 78
        %v7039 = vpop.permute.xlu0 %7038
        %vm7040 = vcmask 637952
        %v7041 = vsel %vm7040, %v7035, %v7037
        %v7042 = vsel %vm7040, %v7037, %v7039
        %7046 = vst.msk [vmem:[#allocation5 + $0x78] sm:$0xff] %vm6786, %v7035
        %7047 = vst [vmem:[#allocation5 + $0x80] sm:$0xff] %v7041
        %7048 = vst [vmem:[#allocation5 + $0x88] sm:$0xff] %v7042
        %v7049 = vld [vmem:[#allocation4] sm:$0xee]
        %v7050 = vld [vmem:[#allocation4 + $0x8] sm:$0xe]
        %v7051 = vld [vmem:[#allocation4 + $0xc] sm:$0xff]
        %v7052 = vld [vmem:[#allocation4 + $0x14] sm:$0xf]
        %v7053 = vld [vmem:[#allocation4 + $0x18] sm:$0x11]
        %v7054 = vld [vmem:[#allocation4 + $0x20] sm:$0x1]
        %v7061 = vunpack.c.l.b16 %v7049
        %v7062 = vunpack.c.h.b16 %v7049
        %v7063 = vunpack.c.l.b16 %v7050
        %v7064 = vunpack.c.l.b16 %v7051
        %v7065 = vunpack.c.h.b16 %v7051
        %v7066 = vunpack.c.l.b16 %v7052
        %v7067 = vunpack.c.l.b16 %v7053
        %v7068 = vunpack.c.h.b16 %v7053
        %v7069 = vunpack.c.l.b16 %v7054
        %v7070 = vpack.c.b16 %v7064, %v7061
        %v7071 = vpack.c.b16 %v7065, %v7062
        %v7072 = vpack.c.b16 %v7066, %v7063
        %v7073 = vpack.c.b16 %v7067, %v7067
        %v7074 = vpack.c.b16 %v7068, %v7068
        %v7075 = vpack.c.b16 %v7069, %v7069
        %v7076 = vrot.slane %v7070, 1
        %v7077 = vrot.slane %v7073, 1
        %v7078 = vsel %vm6973, %v7076, %v7077
        %v7079 = vrot.slane %v7071, 1
        %v7080 = vrot.slane %v7074, 1
        %v7081 = vsel %vm6973, %v7079, %v7080
        %v7082 = vrot.slane %v7072, 1
        %v7083 = vrot.slane %v7075, 1
        %v7084 = vsel %vm6973, %v7082, %v7083
        %7085 = vrot.lane.b32.xlu0 %v7078, 92
        %v7086 = vpop.permute.xlu0 %7085
        %7087 = vrot.lane.b32.xlu0 %v7081, 92
        %v7088 = vpop.permute.xlu0 %7087
        %7089 = vrot.lane.b32.xlu0 %v7084, 92
        %v7090 = vpop.permute.xlu0 %7089
        %vm7091 = vcmask 752640
        %v7092 = vsel %vm7091, %v7086, %v7088
        %v7093 = vsel %vm7091, %v7088, %v7090
        %7097 = vst [vmem:[#allocation5 + $0x90] sm:$0xff] %v7092
        %7098 = vst [vmem:[#allocation5 + $0x98] sm:$0xff] %v7093
        %7099 = vst.msk [vmem:[#allocation5 + $0xa0] sm:$0xff] %vm6642, %v7090
        %v7100 = vld [vmem:[#allocation5] sm:$0xff]
        %v7101 = vld [vmem:[#allocation5 + $0x8] sm:$0xff]
        %v7102 = vld [vmem:[#allocation5 + $0x10] sm:$0xff]
        %v7103 = vld [vmem:[#allocation5 + $0x18] sm:$0xff]
        %v7104 = vld [vmem:[#allocation5 + $0x20] sm:$0xff]
        %v7105 = vld [vmem:[#allocation5 + $0x28] sm:$0xff]
        %v7106 = vld [vmem:[#allocation5 + $0x30] sm:$0xff]
        %v7107 = vld [vmem:[#allocation5 + $0x38] sm:$0xff]
        %v7108 = vld [vmem:[#allocation5 + $0x40] sm:$0xff]
        %v7109 = vld [vmem:[#allocation5 + $0x48] sm:$0xff]
        %v7110 = vld [vmem:[#allocation5 + $0x50] sm:$0xff]
        %v7111 = vld [vmem:[#allocation5 + $0x58] sm:$0xff]
        %v7112 = vld [vmem:[#allocation5 + $0x60] sm:$0xff]
        %v7113 = vld [vmem:[#allocation5 + $0x68] sm:$0xff]
        %v7114 = vld [vmem:[#allocation5 + $0x70] sm:$0xff]
        %v7115 = vld [vmem:[#allocation5 + $0x78] sm:$0xff]
        %v7116 = vld [vmem:[#allocation5 + $0x80] sm:$0xff]
        %v7117 = vld [vmem:[#allocation5 + $0x88] sm:$0xff]
        %v7118 = vld [vmem:[#allocation5 + $0x90] sm:$0xff]
        %v7119 = vld [vmem:[#allocation5 + $0x98] sm:$0xff]
        %v7120 = vld [vmem:[#allocation5 + $0xa0] sm:$0xff]
        %v7121 = vld [vmem:[#allocation17] sm:$0xf]
        %v7122 = vld [vmem:[#allocation17 + $0x4] sm:$0xf]
        %v7123 = vld [vmem:[#allocation17 + $0x8] sm:$0xf]
        %v7124 = vld [vmem:[#allocation17 + $0xc] sm:$0xf]
        %v7125 = vld [vmem:[#allocation17 + $0x10] sm:$0xf]
        %v7126 = vld [vmem:[#allocation17 + $0x14] sm:$0xf]
        %v7127 = vld [vmem:[#allocation17 + $0x18] sm:$0xf]
        %v7128 = vld [vmem:[#allocation17 + $0x1c] sm:$0xf]
        %v7129 = vld [vmem:[#allocation17 + $0x20] sm:$0xf]
        %v7130 = vld [vmem:[#allocation17 + $0x24] sm:$0xf]
        %v7131 = vld [vmem:[#allocation17 + $0x28] sm:$0xf]
        %v7132 = vld [vmem:[#allocation17 + $0x2c] sm:$0xf]
        %v7133 = vld [vmem:[#allocation17 + $0x30] sm:$0xf]
        %v7134 = vld [vmem:[#allocation17 + $0x34] sm:$0xf]
        %v7135 = vld [vmem:[#allocation17 + $0x38] sm:$0xf]
        %v7136 = vld [vmem:[#allocation17 + $0x3c] sm:$0xf]
        %v7137 = vld [vmem:[#allocation17 + $0x40] sm:$0xf]
        %v7138 = vld [vmem:[#allocation17 + $0x44] sm:$0xf]
        %v7139 = vld [vmem:[#allocation17 + $0x48] sm:$0xf]
        %v7140 = vld [vmem:[#allocation17 + $0x4c] sm:$0xf]
        %v7141 = vld [vmem:[#allocation17 + $0x50] sm:$0xf]
        %v7142 = vld [vmem:[#allocation17 + $0x54] sm:$0xf]
        %v7143 = vld [vmem:[#allocation17 + $0x58] sm:$0xf]
        %v7144 = vld [vmem:[#allocation17 + $0x5c] sm:$0xf]
        %v7145 = vld [vmem:[#allocation17 + $0x60] sm:$0xf]
        %v7146 = vld [vmem:[#allocation17 + $0x64] sm:$0xf]
        %v7147 = vld [vmem:[#allocation17 + $0x68] sm:$0xf]
        %v7148 = vld [vmem:[#allocation17 + $0x6c] sm:$0xf]
        %v7149 = vld [vmem:[#allocation17 + $0x70] sm:$0xf]
        %v7150 = vld [vmem:[#allocation17 + $0x74] sm:$0xf]
        %v7151 = vld [vmem:[#allocation17 + $0x78] sm:$0xf]
        %v7152 = vld [vmem:[#allocation17 + $0x7c] sm:$0xf]
        %v7153 = vld [vmem:[#allocation17 + $0x80] sm:$0xf]
        %v7154 = vld [vmem:[#allocation17 + $0x84] sm:$0xf]
        %v7155 = vld [vmem:[#allocation17 + $0x88] sm:$0xf]
        %v7156 = vld [vmem:[#allocation17 + $0x8c] sm:$0xf]
        %v7157 = vld [vmem:[#allocation17 + $0x90] sm:$0xf]
        %v7158 = vld [vmem:[#allocation17 + $0x94] sm:$0xf]
        %v7159 = vld [vmem:[#allocation17 + $0x98] sm:$0xf]
        %v7160 = vld [vmem:[#allocation17 + $0x9c] sm:$0xf]
        %v7161 = vld [vmem:[#allocation17 + $0xa0] sm:$0xf]
        %v7162 = vld [vmem:[#allocation17 + $0xa4] sm:$0xf]
        %v7163 = vld [vmem:[#allocation17 + $0xa8] sm:$0xf]
        %v7164 = vld [vmem:[#allocation17 + $0xac] sm:$0xf]
        %v7165 = vld [vmem:[#allocation17 + $0xb0] sm:$0xf]
        %v7166 = vld [vmem:[#allocation17 + $0xb4] sm:$0xf]
        %v7167 = vld [vmem:[#allocation17 + $0xb8] sm:$0xf]
        %v7168 = vld [vmem:[#allocation17 + $0xbc] sm:$0xf]
        %v7169 = vld [vmem:[#allocation17 + $0xc0] sm:$0xf]
        %v7170 = vld [vmem:[#allocation17 + $0xc4] sm:$0xf]
        %v7171 = vld [vmem:[#allocation17 + $0xc8] sm:$0xf]
        %v7172 = vld [vmem:[#allocation17 + $0xcc] sm:$0xf]
        %v7173 = vld [vmem:[#allocation17 + $0xd0] sm:$0xf]
        %v7174 = vld [vmem:[#allocation17 + $0xd4] sm:$0xf]
        %v7175 = vld [vmem:[#allocation17 + $0xd8] sm:$0xf]
        %v7176 = vld [vmem:[#allocation17 + $0xdc] sm:$0xf]
        %v7177 = vld [vmem:[#allocation17 + $0xe0] sm:$0xf]
        %v7178 = vld [vmem:[#allocation17 + $0xe4] sm:$0xf]
        %v7179 = vld [vmem:[#allocation17 + $0xe8] sm:$0xf]
        %v7180 = vld [vmem:[#allocation17 + $0xec] sm:$0xf]
        %v7181 = vld [vmem:[#allocation17 + $0xf0] sm:$0xf]
        %v7182 = vld [vmem:[#allocation17 + $0xf4] sm:$0xf]
        %v7183 = vld [vmem:[#allocation17 + $0xf8] sm:$0xf]
        %v7184 = vld [vmem:[#allocation17 + $0xfc] sm:$0xf]
        %v7185 = vld [vmem:[#allocation17 + $0x100] sm:$0xf]
        %v7186 = vld [vmem:[#allocation17 + $0x104] sm:$0xf]
        %v7187 = vld [vmem:[#allocation17 + $0x108] sm:$0xf]
        %v7188 = vld [vmem:[#allocation17 + $0x10c] sm:$0xf]
        %v7189 = vld [vmem:[#allocation17 + $0x110] sm:$0xf]
        %v7190 = vld [vmem:[#allocation17 + $0x114] sm:$0xf]
        %v7191 = vld [vmem:[#allocation17 + $0x118] sm:$0xf]
        %v7192 = vld [vmem:[#allocation17 + $0x11c] sm:$0xf]
        %v7193 = vld [vmem:[#allocation17 + $0x120] sm:$0xf]
        %v7194 = vld [vmem:[#allocation17 + $0x124] sm:$0xf]
        %v7195 = vld [vmem:[#allocation17 + $0x128] sm:$0xf]
        %v7196 = vld [vmem:[#allocation17 + $0x12c] sm:$0xf]
        %v7197 = vld [vmem:[#allocation17 + $0x130] sm:$0xf]
        %v7198 = vld [vmem:[#allocation17 + $0x134] sm:$0xf]
        %v7199 = vld [vmem:[#allocation17 + $0x138] sm:$0xf]
        %v7200 = vld [vmem:[#allocation17 + $0x13c] sm:$0xf]
        %v7201 = vld [vmem:[#allocation17 + $0x140] sm:$0xf]
        %v7202 = vld [vmem:[#allocation17 + $0x144] sm:$0xf]
        %v7203 = vld [vmem:[#allocation17 + $0x148] sm:$0xf]
        %v7204 = vld [vmem:[#allocation17 + $0x14c] sm:$0xf]
        %v7205 = vld [vmem:[#allocation17 + $0x150] sm:$0xf]
        %v7206 = vld [vmem:[#allocation17 + $0x154] sm:$0xf]
        %v7207 = vld [vmem:[#allocation17 + $0x158] sm:$0xf]
        %v7208 = vld [vmem:[#allocation17 + $0x15c] sm:$0xf]
        %v7209 = vld [vmem:[#allocation17 + $0x160] sm:$0xf]
        %v7210 = vld [vmem:[#allocation17 + $0x164] sm:$0xf]
        %v7211 = vld [vmem:[#allocation17 + $0x168] sm:$0xf]
        %v7212 = vld [vmem:[#allocation17 + $0x16c] sm:$0xf]
        %v7213 = vld [vmem:[#allocation17 + $0x170] sm:$0xf]
        %v7214 = vld [vmem:[#allocation17 + $0x174] sm:$0xf]
        %v7215 = vld [vmem:[#allocation17 + $0x178] sm:$0xf]
        %v7216 = vld [vmem:[#allocation17 + $0x17c] sm:$0xf]
        %v7217 = vld [vmem:[#allocation17 + $0x180] sm:$0xf]
        %v7218 = vld [vmem:[#allocation17 + $0x184] sm:$0xf]
        %v7219 = vld [vmem:[#allocation17 + $0x188] sm:$0xf]
        %v7220 = vld [vmem:[#allocation17 + $0x18c] sm:$0xf]
        %v7221 = vld [vmem:[#allocation17 + $0x190] sm:$0xf]
        %v7222 = vld [vmem:[#allocation17 + $0x194] sm:$0xf]
        %v7223 = vld [vmem:[#allocation17 + $0x198] sm:$0xf]
        %v7224 = vld [vmem:[#allocation17 + $0x19c] sm:$0xf]
        %v7225 = vld [vmem:[#allocation17 + $0x1a0] sm:$0xf]
        %v7226 = vld [vmem:[#allocation17 + $0x1a4] sm:$0xf]
        %v7227 = vld [vmem:[#allocation17 + $0x1a8] sm:$0xf]
        %v7228 = vld [vmem:[#allocation17 + $0x1ac] sm:$0xf]
        %v7229 = vld [vmem:[#allocation17 + $0x1b0] sm:$0xf]
        %v7230 = vld [vmem:[#allocation17 + $0x1b4] sm:$0xf]
        %v7231 = vld [vmem:[#allocation17 + $0x1b8] sm:$0xf]
        %v7232 = vld [vmem:[#allocation17 + $0x1bc] sm:$0xf]
        %v7233 = vld [vmem:[#allocation17 + $0x1c0] sm:$0xf]
        %v7234 = vld [vmem:[#allocation17 + $0x1c4] sm:$0xf]
        %v7235 = vld [vmem:[#allocation17 + $0x1c8] sm:$0xf]
        %v7236 = vld [vmem:[#allocation17 + $0x1cc] sm:$0xf]
        %v7237 = vld [vmem:[#allocation17 + $0x1d0] sm:$0xf]
        %v7238 = vld [vmem:[#allocation17 + $0x1d4] sm:$0xf]
        %v7239 = vld [vmem:[#allocation17 + $0x1d8] sm:$0xf]
        %v7240 = vld [vmem:[#allocation17 + $0x1dc] sm:$0xf]
        %v7241 = vld [vmem:[#allocation17 + $0x1e0] sm:$0xf]
        %v7242 = vld [vmem:[#allocation17 + $0x1e4] sm:$0xf]
        %v7243 = vld [vmem:[#allocation17 + $0x1e8] sm:$0xf]
        %v7244 = vld [vmem:[#allocation17 + $0x1ec] sm:$0xf]
        %v7245 = vld [vmem:[#allocation17 + $0x1f0] sm:$0xf]
        %v7246 = vld [vmem:[#allocation17 + $0x1f4] sm:$0xf]
        %v7247 = vld [vmem:[#allocation17 + $0x1f8] sm:$0xf]
        %v7248 = vld [vmem:[#allocation17 + $0x1fc] sm:$0xf]
        %v7249 = vld [vmem:[#allocation17 + $0x200] sm:$0xf]
        %v7250 = vld [vmem:[#allocation17 + $0x204] sm:$0xf]
        %v7251 = vld [vmem:[#allocation17 + $0x208] sm:$0xf]
        %v7252 = vld [vmem:[#allocation17 + $0x20c] sm:$0xf]
        %v7253 = vld [vmem:[#allocation17 + $0x210] sm:$0xf]
        %v7254 = vld [vmem:[#allocation17 + $0x214] sm:$0xf]
        %v7255 = vld [vmem:[#allocation17 + $0x218] sm:$0xf]
        %v7256 = vld [vmem:[#allocation17 + $0x21c] sm:$0xf]
        %v7257 = vld [vmem:[#allocation17 + $0x220] sm:$0xf]
        %v7258 = vld [vmem:[#allocation17 + $0x224] sm:$0xf]
        %v7259 = vld [vmem:[#allocation17 + $0x228] sm:$0xf]
        %v7260 = vld [vmem:[#allocation17 + $0x22c] sm:$0xf]
        %v7261 = vld [vmem:[#allocation17 + $0x230] sm:$0xf]
        %v7262 = vld [vmem:[#allocation17 + $0x234] sm:$0xf]
        %v7263 = vld [vmem:[#allocation17 + $0x238] sm:$0xf]
        %v7264 = vld [vmem:[#allocation17 + $0x23c] sm:$0xf]
        %v7265 = vld [vmem:[#allocation17 + $0x240] sm:$0xf]
        %v7266 = vld [vmem:[#allocation17 + $0x244] sm:$0xf]
        %v7267 = vld [vmem:[#allocation17 + $0x248] sm:$0xf]
        %v7268 = vld [vmem:[#allocation17 + $0x24c] sm:$0xf]
        %v7269 = vld [vmem:[#allocation17 + $0x250] sm:$0xf]
        %v7270 = vld [vmem:[#allocation17 + $0x254] sm:$0xf]
        %v7271 = vld [vmem:[#allocation17 + $0x258] sm:$0xf]
        %v7272 = vld [vmem:[#allocation17 + $0x25c] sm:$0xf]
        %v7273 = vld [vmem:[#allocation17 + $0x260] sm:$0xf]
        %v7274 = vld [vmem:[#allocation17 + $0x264] sm:$0xf]
        %v7275 = vld [vmem:[#allocation17 + $0x268] sm:$0xf]
        %v7276 = vld [vmem:[#allocation17 + $0x26c] sm:$0xf]
        %v7277 = vld [vmem:[#allocation17 + $0x270] sm:$0xf]
        %v7278 = vld [vmem:[#allocation17 + $0x274] sm:$0xf]
        %v7279 = vld [vmem:[#allocation17 + $0x278] sm:$0xf]
        %v7280 = vld [vmem:[#allocation17 + $0x27c] sm:$0xf]
        %v7281 = vld [vmem:[#allocation17 + $0x280] sm:$0xf]
        %v7282 = vld [vmem:[#allocation17 + $0x284] sm:$0xf]
        %v7283 = vld [vmem:[#allocation17 + $0x288] sm:$0xf]
        %v7284 = vld [vmem:[#allocation17 + $0x28c] sm:$0xf]
        %v7285 = vld [vmem:[#allocation17 + $0x290] sm:$0xf]
        %v7286 = vld [vmem:[#allocation17 + $0x294] sm:$0xf]
        %v7287 = vld [vmem:[#allocation17 + $0x298] sm:$0xf]
        %v7288 = vld [vmem:[#allocation17 + $0x29c] sm:$0xf]
        %v7289 = vld [vmem:[#allocation17 + $0x2a0] sm:$0xf]
        %v7290 = vld [vmem:[#allocation17 + $0x2a4] sm:$0xf]
        %v7291 = vld [vmem:[#allocation17 + $0x2a8] sm:$0xf]
        %v7292 = vld [vmem:[#allocation17 + $0x2ac] sm:$0xf]
        %v7293 = vld [vmem:[#allocation17 + $0x2b0] sm:$0xf]
        %v7294 = vld [vmem:[#allocation17 + $0x2b4] sm:$0xf]
        %v7295 = vld [vmem:[#allocation17 + $0x2b8] sm:$0xf]
        %v7296 = vld [vmem:[#allocation17 + $0x2bc] sm:$0xf]
        %v7297 = vld [vmem:[#allocation17 + $0x2c0] sm:$0xf]
        %v7298 = vld [vmem:[#allocation17 + $0x2c4] sm:$0xf]
        %v7299 = vld [vmem:[#allocation17 + $0x2c8] sm:$0xf]
        %v7300 = vld [vmem:[#allocation17 + $0x2cc] sm:$0xf]
        %v7301 = vld [vmem:[#allocation17 + $0x2d0] sm:$0xf]
        %v7302 = vld [vmem:[#allocation17 + $0x2d4] sm:$0xf]
        %v7303 = vld [vmem:[#allocation17 + $0x2d8] sm:$0xf]
        %v7304 = vld [vmem:[#allocation17 + $0x2dc] sm:$0xf]
        %v7305 = vld [vmem:[#allocation17 + $0x2e0] sm:$0xf]
        %v7306 = vld [vmem:[#allocation17 + $0x2e4] sm:$0xf]
        %v7307 = vld [vmem:[#allocation17 + $0x2e8] sm:$0xf]
        %v7308 = vld [vmem:[#allocation17 + $0x2ec] sm:$0xf]
        %v7309 = vld [vmem:[#allocation17 + $0x2f0] sm:$0xf]
        %v7310 = vld [vmem:[#allocation17 + $0x2f4] sm:$0xf]
        %v7311 = vld [vmem:[#allocation17 + $0x2f8] sm:$0xf]
        %v7312 = vld [vmem:[#allocation17 + $0x2fc] sm:$0xf]
        %v7313 = vld [vmem:[#allocation17 + $0x300] sm:$0xf]
        %v7314 = vld [vmem:[#allocation17 + $0x304] sm:$0xf]
        %v7315 = vld [vmem:[#allocation17 + $0x308] sm:$0xf]
        %v7316 = vld [vmem:[#allocation17 + $0x30c] sm:$0xf]
        %v7317 = vld [vmem:[#allocation17 + $0x310] sm:$0xf]
        %v7318 = vld [vmem:[#allocation17 + $0x314] sm:$0xf]
        %v7319 = vld [vmem:[#allocation17 + $0x318] sm:$0xf]
        %v7320 = vld [vmem:[#allocation17 + $0x31c] sm:$0xf]
        %v7321 = vld [vmem:[#allocation17 + $0x320] sm:$0xf]
        %v7322 = vld [vmem:[#allocation17 + $0x324] sm:$0xf]
        %v7323 = vld [vmem:[#allocation17 + $0x328] sm:$0xf]
        %v7324 = vld [vmem:[#allocation17 + $0x32c] sm:$0xf]
        %v7325 = vld [vmem:[#allocation17 + $0x330] sm:$0xf]
        %v7326 = vld [vmem:[#allocation17 + $0x334] sm:$0xf]
        %v7327 = vld [vmem:[#allocation17 + $0x338] sm:$0xf]
        %v7328 = vld [vmem:[#allocation17 + $0x33c] sm:$0xf]
        %v7329 = vld [vmem:[#allocation17 + $0x340] sm:$0xf]
        %v7330 = vld [vmem:[#allocation17 + $0x344] sm:$0xf]
        %v7331 = vld [vmem:[#allocation17 + $0x348] sm:$0xf]
        %v7332 = vld [vmem:[#allocation17 + $0x34c] sm:$0xf]
        %v7333 = vld [vmem:[#allocation17 + $0x350] sm:$0xf]
        %v7334 = vld [vmem:[#allocation17 + $0x354] sm:$0xf]
        %v7335 = vld [vmem:[#allocation17 + $0x358] sm:$0xf]
        %v7336 = vld [vmem:[#allocation17 + $0x35c] sm:$0xf]
        %v7337 = vld [vmem:[#allocation17 + $0x360] sm:$0xf]
        %v7338 = vld [vmem:[#allocation17 + $0x364] sm:$0xf]
        %v7339 = vld [vmem:[#allocation17 + $0x368] sm:$0xf]
        %v7340 = vld [vmem:[#allocation17 + $0x36c] sm:$0xf]
        %v7341 = vld [vmem:[#allocation17 + $0x370] sm:$0xf]
        %v7342 = vld [vmem:[#allocation17 + $0x374] sm:$0xf]
        %v7343 = vld [vmem:[#allocation17 + $0x378] sm:$0xf]
        %v7344 = vld [vmem:[#allocation17 + $0x37c] sm:$0xf]
        %v7345 = vld [vmem:[#allocation17 + $0x380] sm:$0xf]
        %v7346 = vld [vmem:[#allocation17 + $0x384] sm:$0xf]
        %v7347 = vld [vmem:[#allocation17 + $0x388] sm:$0xf]
        %v7348 = vld [vmem:[#allocation17 + $0x38c] sm:$0xf]
        %v7349 = vld [vmem:[#allocation17 + $0x390] sm:$0xf]
        %v7350 = vld [vmem:[#allocation17 + $0x394] sm:$0xf]
        %v7351 = vld [vmem:[#allocation17 + $0x398] sm:$0xf]
        %v7352 = vld [vmem:[#allocation17 + $0x39c] sm:$0xf]
        %v7353 = vld [vmem:[#allocation17 + $0x3a0] sm:$0xf]
        %v7354 = vld [vmem:[#allocation17 + $0x3a4] sm:$0xf]
        %v7355 = vld [vmem:[#allocation17 + $0x3a8] sm:$0xf]
        %v7356 = vld [vmem:[#allocation17 + $0x3ac] sm:$0xf]
        %v7357 = vld [vmem:[#allocation17 + $0x3b0] sm:$0xf]
        %v7358 = vld [vmem:[#allocation17 + $0x3b4] sm:$0xf]
        %v7359 = vld [vmem:[#allocation17 + $0x3b8] sm:$0xf]
        %v7360 = vld [vmem:[#allocation17 + $0x3bc] sm:$0xf]
        %v7361 = vld [vmem:[#allocation17 + $0x3c0] sm:$0xf]
        %v7362 = vld [vmem:[#allocation17 + $0x3c4] sm:$0xf]
        %v7363 = vld [vmem:[#allocation17 + $0x3c8] sm:$0xf]
        %v7364 = vld [vmem:[#allocation17 + $0x3cc] sm:$0xf]
        %v7365 = vld [vmem:[#allocation17 + $0x3d0] sm:$0xf]
        %v7366 = vld [vmem:[#allocation17 + $0x3d4] sm:$0xf]
        %v7367 = vld [vmem:[#allocation17 + $0x3d8] sm:$0xf]
        %v7368 = vld [vmem:[#allocation17 + $0x3dc] sm:$0xf]
        %v7369 = vld [vmem:[#allocation17 + $0x3e0] sm:$0xf]
        %v7370 = vld [vmem:[#allocation17 + $0x3e4] sm:$0xf]
        %v7371 = vld [vmem:[#allocation17 + $0x3e8] sm:$0xf]
        %v7372 = vld [vmem:[#allocation17 + $0x3ec] sm:$0xf]
        %v7373 = vld [vmem:[#allocation17 + $0x3f0] sm:$0xf]
        %v7374 = vld [vmem:[#allocation17 + $0x3f4] sm:$0xf]
        %v7375 = vld [vmem:[#allocation17 + $0x3f8] sm:$0xf]
        %v7376 = vld [vmem:[#allocation17 + $0x3fc] sm:$0xf]
        %v7377 = vld [vmem:[#allocation17 + $0x400] sm:$0xf]
        %v7378 = vld [vmem:[#allocation17 + $0x404] sm:$0xf]
        %v7379 = vld [vmem:[#allocation17 + $0x408] sm:$0xf]
        %v7380 = vld [vmem:[#allocation17 + $0x40c] sm:$0xf]
        %v7381 = vld [vmem:[#allocation17 + $0x410] sm:$0xf]
        %v7382 = vld [vmem:[#allocation17 + $0x414] sm:$0xf]
        %v7383 = vld [vmem:[#allocation17 + $0x418] sm:$0xf]
        %v7384 = vld [vmem:[#allocation17 + $0x41c] sm:$0xf]
        %v7385 = vld [vmem:[#allocation17 + $0x420] sm:$0xf]
        %v7386 = vld [vmem:[#allocation17 + $0x424] sm:$0xf]
        %v7387 = vld [vmem:[#allocation17 + $0x428] sm:$0xf]
        %v7388 = vld [vmem:[#allocation17 + $0x42c] sm:$0xf]
        %v7389 = vld [vmem:[#allocation17 + $0x430] sm:$0xf]
        %v7390 = vld [vmem:[#allocation17 + $0x434] sm:$0xf]
        %v7391 = vld [vmem:[#allocation17 + $0x438] sm:$0xf]
        %v7392 = vld [vmem:[#allocation17 + $0x43c] sm:$0xf]
        %v7393 = vld [vmem:[#allocation17 + $0x440] sm:$0xf]
        %v7394 = vld [vmem:[#allocation17 + $0x444] sm:$0xf]
        %v7395 = vld [vmem:[#allocation17 + $0x448] sm:$0xf]
        %v7396 = vld [vmem:[#allocation17 + $0x44c] sm:$0xf]
        %v7397 = vld [vmem:[#allocation17 + $0x450] sm:$0xf]
        %v7398 = vld [vmem:[#allocation17 + $0x454] sm:$0xf]
        %v7399 = vld [vmem:[#allocation17 + $0x458] sm:$0xf]
        %v7400 = vld [vmem:[#allocation17 + $0x45c] sm:$0xf]
        %v7401 = vld [vmem:[#allocation17 + $0x460] sm:$0xf]
        %v7402 = vld [vmem:[#allocation17 + $0x464] sm:$0xf]
        %v7403 = vld [vmem:[#allocation17 + $0x468] sm:$0xf]
        %v7404 = vld [vmem:[#allocation17 + $0x46c] sm:$0xf]
        %v7405 = vld [vmem:[#allocation17 + $0x470] sm:$0xf]
        %v7406 = vld [vmem:[#allocation17 + $0x474] sm:$0xf]
        %v7407 = vld [vmem:[#allocation17 + $0x478] sm:$0xf]
        %v7408 = vld [vmem:[#allocation17 + $0x47c] sm:$0xf]
        %v7409 = vld [vmem:[#allocation17 + $0x480] sm:$0xf]
        %v7410 = vld [vmem:[#allocation17 + $0x484] sm:$0xf]
        %v7411 = vld [vmem:[#allocation17 + $0x488] sm:$0xf]
        %v7412 = vld [vmem:[#allocation17 + $0x48c] sm:$0xf]
        %v7413 = vld [vmem:[#allocation17 + $0x490] sm:$0xf]
        %v7414 = vld [vmem:[#allocation17 + $0x494] sm:$0xf]
        %v7415 = vld [vmem:[#allocation17 + $0x498] sm:$0xf]
        %v7416 = vld [vmem:[#allocation17 + $0x49c] sm:$0xf]
        %v7417 = vld [vmem:[#allocation17 + $0x4a0] sm:$0xf]
        %v7418 = vld [vmem:[#allocation17 + $0x4a4] sm:$0xf]
        %v7419 = vld [vmem:[#allocation17 + $0x4a8] sm:$0xf]
        %v7420 = vld [vmem:[#allocation17 + $0x4ac] sm:$0xf]
        %v7421 = vld [vmem:[#allocation17 + $0x4b0] sm:$0xf]
        %v7422 = vld [vmem:[#allocation17 + $0x4b4] sm:$0xf]
        %v7423 = vld [vmem:[#allocation17 + $0x4b8] sm:$0xf]
        %v7424 = vld [vmem:[#allocation17 + $0x4bc] sm:$0xf]
        %v7425 = vld [vmem:[#allocation17 + $0x4c0] sm:$0xf]
        %v7426 = vld [vmem:[#allocation17 + $0x4c4] sm:$0xf]
        %v7427 = vld [vmem:[#allocation17 + $0x4c8] sm:$0xf]
        %v7428 = vld [vmem:[#allocation17 + $0x4cc] sm:$0xf]
        %v7429 = vld [vmem:[#allocation17 + $0x4d0] sm:$0xf]
        %v7430 = vld [vmem:[#allocation17 + $0x4d4] sm:$0xf]
        %v7431 = vld [vmem:[#allocation17 + $0x4d8] sm:$0xf]
        %v7432 = vld [vmem:[#allocation17 + $0x4dc] sm:$0xf]
        %v7433 = vld [vmem:[#allocation17 + $0x4e0] sm:$0xf]
        %v7434 = vld [vmem:[#allocation17 + $0x4e4] sm:$0xf]
        %v7435 = vld [vmem:[#allocation17 + $0x4e8] sm:$0xf]
        %v7436 = vld [vmem:[#allocation17 + $0x4ec] sm:$0xf]
        %v7437 = vld [vmem:[#allocation17 + $0x4f0] sm:$0xf]
        %v7438 = vld [vmem:[#allocation17 + $0x4f4] sm:$0xf]
        %v7439 = vld [vmem:[#allocation17 + $0x4f8] sm:$0xf]
        %v7440 = vld [vmem:[#allocation17 + $0x4fc] sm:$0xf]
        %v7441 = vld [vmem:[#allocation17 + $0x500] sm:$0xf]
        %v7442 = vld [vmem:[#allocation17 + $0x504] sm:$0xf]
        %v7443 = vld [vmem:[#allocation17 + $0x508] sm:$0xf]
        %v7444 = vld [vmem:[#allocation17 + $0x50c] sm:$0xf]
        %v7445 = vld [vmem:[%s6 + $0x3] sm:$0x1]
        %v7446 = vlaneseq
        %v7447 = vshrl.u32 %v7446, 7
        %v7448 = vsub.s32 0, %v7447
        %v7449 = vrot.slane %v7445, %v7448
        %v7774 = vunpack.c.l.b16 %v7121
        %v7775 = vunpack.c.l.b16 %v7122
        %v7776 = vunpack.c.l.b16 %v7123
        %v7777 = vunpack.c.l.b16 %v7124
        %v7778 = vunpack.c.l.b16 %v7125
        %v7779 = vunpack.c.l.b16 %v7126
        %v7780 = vunpack.c.l.b16 %v7127
        %v7781 = vunpack.c.l.b16 %v7128
        %v7782 = vunpack.c.l.b16 %v7129
        %v7783 = vunpack.c.l.b16 %v7130
        %v7784 = vunpack.c.l.b16 %v7131
        %v7785 = vunpack.c.l.b16 %v7132
        %v7786 = vunpack.c.l.b16 %v7133
        %v7787 = vunpack.c.l.b16 %v7134
        %v7788 = vunpack.c.l.b16 %v7135
        %v7789 = vunpack.c.l.b16 %v7136
        %v7790 = vunpack.c.l.b16 %v7137
        %v7791 = vunpack.c.l.b16 %v7138
        %v7792 = vunpack.c.l.b16 %v7139
        %v7793 = vunpack.c.l.b16 %v7140
        %v7794 = vunpack.c.l.b16 %v7141
        %v7795 = vunpack.c.l.b16 %v7142
        %v7796 = vunpack.c.l.b16 %v7143
        %v7797 = vunpack.c.l.b16 %v7144
        %v7798 = vunpack.c.l.b16 %v7145
        %v7799 = vunpack.c.l.b16 %v7146
        %v7800 = vunpack.c.l.b16 %v7147
        %v7801 = vunpack.c.l.b16 %v7148
        %v7802 = vunpack.c.l.b16 %v7149
        %v7803 = vunpack.c.l.b16 %v7150
        %v7804 = vunpack.c.l.b16 %v7151
        %v7805 = vunpack.c.l.b16 %v7152
        %v7806 = vunpack.c.l.b16 %v7153
        %v7807 = vunpack.c.l.b16 %v7154
        %v7808 = vunpack.c.l.b16 %v7155
        %v7809 = vunpack.c.l.b16 %v7156
        %v7810 = vunpack.c.l.b16 %v7157
        %v7811 = vunpack.c.l.b16 %v7158
        %v7812 = vunpack.c.l.b16 %v7159
        %v7813 = vunpack.c.l.b16 %v7160
        %v7814 = vunpack.c.l.b16 %v7161
        %v7815 = vunpack.c.l.b16 %v7162
        %v7816 = vunpack.c.l.b16 %v7163
        %v7817 = vunpack.c.l.b16 %v7164
        %v7818 = vunpack.c.l.b16 %v7165
        %v7819 = vunpack.c.l.b16 %v7166
        %v7820 = vunpack.c.l.b16 %v7167
        %v7821 = vunpack.c.l.b16 %v7168
        %v7822 = vunpack.c.l.b16 %v7169
        %v7823 = vunpack.c.l.b16 %v7170
        %v7824 = vunpack.c.l.b16 %v7171
        %v7825 = vunpack.c.l.b16 %v7172
        %v7826 = vunpack.c.l.b16 %v7173
        %v7827 = vunpack.c.l.b16 %v7174
        %v7828 = vunpack.c.l.b16 %v7175
        %v7829 = vunpack.c.l.b16 %v7176
        %v7830 = vunpack.c.l.b16 %v7177
        %v7831 = vunpack.c.l.b16 %v7178
        %v7832 = vunpack.c.l.b16 %v7179
        %v7833 = vunpack.c.l.b16 %v7180
        %v7834 = vunpack.c.l.b16 %v7181
        %v7835 = vunpack.c.l.b16 %v7182
        %v7836 = vunpack.c.l.b16 %v7183
        %v7837 = vunpack.c.l.b16 %v7184
        %v7838 = vunpack.c.l.b16 %v7185
        %v7839 = vunpack.c.l.b16 %v7186
        %v7840 = vunpack.c.l.b16 %v7187
        %v7841 = vunpack.c.l.b16 %v7188
        %v7842 = vunpack.c.l.b16 %v7189
        %v7843 = vunpack.c.l.b16 %v7190
        %v7844 = vunpack.c.l.b16 %v7191
        %v7845 = vunpack.c.l.b16 %v7192
        %v7846 = vunpack.c.l.b16 %v7193
        %v7847 = vunpack.c.l.b16 %v7194
        %v7848 = vunpack.c.l.b16 %v7195
        %v7849 = vunpack.c.l.b16 %v7196
        %v7850 = vunpack.c.l.b16 %v7197
        %v7851 = vunpack.c.l.b16 %v7198
        %v7852 = vunpack.c.l.b16 %v7199
        %v7853 = vunpack.c.l.b16 %v7200
        %v7854 = vunpack.c.l.b16 %v7201
        %v7855 = vunpack.c.l.b16 %v7202
        %v7856 = vunpack.c.l.b16 %v7203
        %v7857 = vunpack.c.l.b16 %v7204
        %v7858 = vunpack.c.l.b16 %v7205
        %v7859 = vunpack.c.l.b16 %v7206
        %v7860 = vunpack.c.l.b16 %v7207
        %v7861 = vunpack.c.l.b16 %v7208
        %v7862 = vunpack.c.l.b16 %v7209
        %v7863 = vunpack.c.l.b16 %v7210
        %v7864 = vunpack.c.l.b16 %v7211
        %v7865 = vunpack.c.l.b16 %v7212
        %v7866 = vunpack.c.l.b16 %v7213
        %v7867 = vunpack.c.l.b16 %v7214
        %v7868 = vunpack.c.l.b16 %v7215
        %v7869 = vunpack.c.l.b16 %v7216
        %v7870 = vunpack.c.l.b16 %v7217
        %v7871 = vunpack.c.l.b16 %v7218
        %v7872 = vunpack.c.l.b16 %v7219
        %v7873 = vunpack.c.l.b16 %v7220
        %v7874 = vunpack.c.l.b16 %v7221
        %v7875 = vunpack.c.l.b16 %v7222
        %v7876 = vunpack.c.l.b16 %v7223
        %v7877 = vunpack.c.l.b16 %v7224
        %v7878 = vunpack.c.l.b16 %v7225
        %v7879 = vunpack.c.l.b16 %v7226
        %v7880 = vunpack.c.l.b16 %v7227
        %v7881 = vunpack.c.l.b16 %v7228
        %v7882 = vunpack.c.l.b16 %v7229
        %v7883 = vunpack.c.l.b16 %v7230
        %v7884 = vunpack.c.l.b16 %v7231
        %v7885 = vunpack.c.l.b16 %v7232
        %v7886 = vunpack.c.l.b16 %v7233
        %v7887 = vunpack.c.l.b16 %v7234
        %v7888 = vunpack.c.l.b16 %v7235
        %v7889 = vunpack.c.l.b16 %v7236
        %v7890 = vunpack.c.l.b16 %v7237
        %v7891 = vunpack.c.l.b16 %v7238
        %v7892 = vunpack.c.l.b16 %v7239
        %v7893 = vunpack.c.l.b16 %v7240
        %v7894 = vunpack.c.l.b16 %v7241
        %v7895 = vunpack.c.l.b16 %v7242
        %v7896 = vunpack.c.l.b16 %v7243
        %v7897 = vunpack.c.l.b16 %v7244
        %v7898 = vunpack.c.l.b16 %v7245
        %v7899 = vunpack.c.l.b16 %v7246
        %v7900 = vunpack.c.l.b16 %v7247
        %v7901 = vunpack.c.l.b16 %v7248
        %v7902 = vunpack.c.l.b16 %v7249
        %v7903 = vunpack.c.l.b16 %v7250
        %v7904 = vunpack.c.l.b16 %v7251
        %v7905 = vunpack.c.l.b16 %v7252
        %v7906 = vunpack.c.l.b16 %v7253
        %v7907 = vunpack.c.l.b16 %v7254
        %v7908 = vunpack.c.l.b16 %v7255
        %v7909 = vunpack.c.l.b16 %v7256
        %v7910 = vunpack.c.l.b16 %v7257
        %v7911 = vunpack.c.l.b16 %v7258
        %v7912 = vunpack.c.l.b16 %v7259
        %v7913 = vunpack.c.l.b16 %v7260
        %v7914 = vunpack.c.l.b16 %v7261
        %v7915 = vunpack.c.l.b16 %v7262
        %v7916 = vunpack.c.l.b16 %v7263
        %v7917 = vunpack.c.l.b16 %v7264
        %v7918 = vunpack.c.l.b16 %v7265
        %v7919 = vunpack.c.l.b16 %v7266
        %v7920 = vunpack.c.l.b16 %v7267
        %v7921 = vunpack.c.l.b16 %v7268
        %v7922 = vunpack.c.l.b16 %v7269
        %v7923 = vunpack.c.l.b16 %v7270
        %v7924 = vunpack.c.l.b16 %v7271
        %v7925 = vunpack.c.l.b16 %v7272
        %v7926 = vunpack.c.l.b16 %v7273
        %v7927 = vunpack.c.l.b16 %v7274
        %v7928 = vunpack.c.l.b16 %v7275
        %v7929 = vunpack.c.l.b16 %v7276
        %v7930 = vunpack.c.l.b16 %v7277
        %v7931 = vunpack.c.l.b16 %v7278
        %v7932 = vunpack.c.l.b16 %v7279
        %v7933 = vunpack.c.l.b16 %v7280
        %v7934 = vunpack.c.l.b16 %v7281
        %v7935 = vunpack.c.l.b16 %v7282
        %v7936 = vunpack.c.l.b16 %v7283
        %v7937 = vunpack.c.l.b16 %v7284
        %v7938 = vunpack.c.l.b16 %v7285
        %v7939 = vunpack.c.l.b16 %v7286
        %v7940 = vunpack.c.l.b16 %v7287
        %v7941 = vunpack.c.l.b16 %v7288
        %v7942 = vunpack.c.l.b16 %v7289
        %v7943 = vunpack.c.l.b16 %v7290
        %v7944 = vunpack.c.l.b16 %v7291
        %v7945 = vunpack.c.l.b16 %v7292
        %v7946 = vunpack.c.l.b16 %v7293
        %v7947 = vunpack.c.l.b16 %v7294
        %v7948 = vunpack.c.l.b16 %v7295
        %v7949 = vunpack.c.l.b16 %v7296
        %v7950 = vunpack.c.l.b16 %v7297
        %v7951 = vunpack.c.l.b16 %v7298
        %v7952 = vunpack.c.l.b16 %v7299
        %v7953 = vunpack.c.l.b16 %v7300
        %v7954 = vunpack.c.l.b16 %v7301
        %v7955 = vunpack.c.l.b16 %v7302
        %v7956 = vunpack.c.l.b16 %v7303
        %v7957 = vunpack.c.l.b16 %v7304
        %v7958 = vunpack.c.l.b16 %v7305
        %v7959 = vunpack.c.l.b16 %v7306
        %v7960 = vunpack.c.l.b16 %v7307
        %v7961 = vunpack.c.l.b16 %v7308
        %v7962 = vunpack.c.l.b16 %v7309
        %v7963 = vunpack.c.l.b16 %v7310
        %v7964 = vunpack.c.l.b16 %v7311
        %v7965 = vunpack.c.l.b16 %v7312
        %v7966 = vunpack.c.l.b16 %v7313
        %v7967 = vunpack.c.l.b16 %v7314
        %v7968 = vunpack.c.l.b16 %v7315
        %v7969 = vunpack.c.l.b16 %v7316
        %v7970 = vunpack.c.l.b16 %v7317
        %v7971 = vunpack.c.l.b16 %v7318
        %v7972 = vunpack.c.l.b16 %v7319
        %v7973 = vunpack.c.l.b16 %v7320
        %v7974 = vunpack.c.l.b16 %v7321
        %v7975 = vunpack.c.l.b16 %v7322
        %v7976 = vunpack.c.l.b16 %v7323
        %v7977 = vunpack.c.l.b16 %v7324
        %v7978 = vunpack.c.l.b16 %v7325
        %v7979 = vunpack.c.l.b16 %v7326
        %v7980 = vunpack.c.l.b16 %v7327
        %v7981 = vunpack.c.l.b16 %v7328
        %v7982 = vunpack.c.l.b16 %v7329
        %v7983 = vunpack.c.l.b16 %v7330
        %v7984 = vunpack.c.l.b16 %v7331
        %v7985 = vunpack.c.l.b16 %v7332
        %v7986 = vunpack.c.l.b16 %v7333
        %v7987 = vunpack.c.l.b16 %v7334
        %v7988 = vunpack.c.l.b16 %v7335
        %v7989 = vunpack.c.l.b16 %v7336
        %v7990 = vunpack.c.l.b16 %v7337
        %v7991 = vunpack.c.l.b16 %v7338
        %v7992 = vunpack.c.l.b16 %v7339
        %v7993 = vunpack.c.l.b16 %v7340
        %v7994 = vunpack.c.l.b16 %v7341
        %v7995 = vunpack.c.l.b16 %v7342
        %v7996 = vunpack.c.l.b16 %v7343
        %v7997 = vunpack.c.l.b16 %v7344
        %v7998 = vunpack.c.l.b16 %v7345
        %v7999 = vunpack.c.l.b16 %v7346
        %v8000 = vunpack.c.l.b16 %v7347
        %v8001 = vunpack.c.l.b16 %v7348
        %v8002 = vunpack.c.l.b16 %v7349
        %v8003 = vunpack.c.l.b16 %v7350
        %v8004 = vunpack.c.l.b16 %v7351
        %v8005 = vunpack.c.l.b16 %v7352
        %v8006 = vunpack.c.l.b16 %v7353
        %v8007 = vunpack.c.l.b16 %v7354
        %v8008 = vunpack.c.l.b16 %v7355
        %v8009 = vunpack.c.l.b16 %v7356
        %v8010 = vunpack.c.l.b16 %v7357
        %v8011 = vunpack.c.l.b16 %v7358
        %v8012 = vunpack.c.l.b16 %v7359
        %v8013 = vunpack.c.l.b16 %v7360
        %v8014 = vunpack.c.l.b16 %v7361
        %v8015 = vunpack.c.l.b16 %v7362
        %v8016 = vunpack.c.l.b16 %v7363
        %v8017 = vunpack.c.l.b16 %v7364
        %v8018 = vunpack.c.l.b16 %v7365
        %v8019 = vunpack.c.l.b16 %v7366
        %v8020 = vunpack.c.l.b16 %v7367
        %v8021 = vunpack.c.l.b16 %v7368
        %v8022 = vunpack.c.l.b16 %v7369
        %v8023 = vunpack.c.l.b16 %v7370
        %v8024 = vunpack.c.l.b16 %v7371
        %v8025 = vunpack.c.l.b16 %v7372
        %v8026 = vunpack.c.l.b16 %v7373
        %v8027 = vunpack.c.l.b16 %v7374
        %v8028 = vunpack.c.l.b16 %v7375
        %v8029 = vunpack.c.l.b16 %v7376
        %v8030 = vunpack.c.l.b16 %v7377
        %v8031 = vunpack.c.l.b16 %v7378
        %v8032 = vunpack.c.l.b16 %v7379
        %v8033 = vunpack.c.l.b16 %v7380
        %v8034 = vunpack.c.l.b16 %v7381
        %v8035 = vunpack.c.l.b16 %v7382
        %v8036 = vunpack.c.l.b16 %v7383
        %v8037 = vunpack.c.l.b16 %v7384
        %v8038 = vunpack.c.l.b16 %v7385
        %v8039 = vunpack.c.l.b16 %v7386
        %v8040 = vunpack.c.l.b16 %v7387
        %v8041 = vunpack.c.l.b16 %v7388
        %v8042 = vunpack.c.l.b16 %v7389
        %v8043 = vunpack.c.l.b16 %v7390
        %v8044 = vunpack.c.l.b16 %v7391
        %v8045 = vunpack.c.l.b16 %v7392
        %v8046 = vunpack.c.l.b16 %v7393
        %v8047 = vunpack.c.l.b16 %v7394
        %v8048 = vunpack.c.l.b16 %v7395
        %v8049 = vunpack.c.l.b16 %v7396
        %v8050 = vunpack.c.l.b16 %v7397
        %v8051 = vunpack.c.l.b16 %v7398
        %v8052 = vunpack.c.l.b16 %v7399
        %v8053 = vunpack.c.l.b16 %v7400
        %v8054 = vunpack.c.l.b16 %v7401
        %v8055 = vunpack.c.l.b16 %v7402
        %v8056 = vunpack.c.l.b16 %v7403
        %v8057 = vunpack.c.l.b16 %v7404
        %v8058 = vunpack.c.l.b16 %v7405
        %v8059 = vunpack.c.l.b16 %v7406
        %v8060 = vunpack.c.l.b16 %v7407
        %v8061 = vunpack.c.l.b16 %v7408
        %v8062 = vunpack.c.l.b16 %v7409
        %v8063 = vunpack.c.l.b16 %v7410
        %v8064 = vunpack.c.l.b16 %v7411
        %v8065 = vunpack.c.l.b16 %v7412
        %v8066 = vunpack.c.l.b16 %v7413
        %v8067 = vunpack.c.l.b16 %v7414
        %v8068 = vunpack.c.l.b16 %v7415
        %v8069 = vunpack.c.l.b16 %v7416
        %v8070 = vunpack.c.l.b16 %v7417
        %v8071 = vunpack.c.l.b16 %v7418
        %v8072 = vunpack.c.l.b16 %v7419
        %v8073 = vunpack.c.l.b16 %v7420
        %v8074 = vunpack.c.l.b16 %v7421
        %v8075 = vunpack.c.l.b16 %v7422
        %v8076 = vunpack.c.l.b16 %v7423
        %v8077 = vunpack.c.l.b16 %v7424
        %v8078 = vunpack.c.l.b16 %v7425
        %v8079 = vunpack.c.l.b16 %v7426
        %v8080 = vunpack.c.l.b16 %v7427
        %v8081 = vunpack.c.l.b16 %v7428
        %v8082 = vunpack.c.l.b16 %v7429
        %v8083 = vunpack.c.l.b16 %v7430
        %v8084 = vunpack.c.l.b16 %v7431
        %v8085 = vunpack.c.l.b16 %v7432
        %v8086 = vunpack.c.l.b16 %v7433
        %v8087 = vunpack.c.l.b16 %v7434
        %v8088 = vunpack.c.l.b16 %v7435
        %v8089 = vunpack.c.l.b16 %v7436
        %v8090 = vunpack.c.l.b16 %v7437
        %v8091 = vunpack.c.l.b16 %v7438
        %v8092 = vunpack.c.l.b16 %v7439
        %v8093 = vunpack.c.l.b16 %v7440
        %v8094 = vunpack.c.l.b16 %v7441
        %v8095 = vunpack.c.l.b16 %v7442
        %v8096 = vunpack.c.l.b16 %v7443
        %v8097 = vunpack.c.l.b16 %v7444
        %v8098 = vpack.c.b16 %v7775, %v7774
        %v8099 = vpack.c.b16 %v7777, %v7776
        %v8100 = vpack.c.b16 %v7779, %v7778
        %v8101 = vpack.c.b16 %v7781, %v7780
        %v8102 = vpack.c.b16 %v7783, %v7782
        %v8103 = vpack.c.b16 %v7785, %v7784
        %v8104 = vpack.c.b16 %v7787, %v7786
        %v8105 = vpack.c.b16 %v7789, %v7788
        %v8106 = vpack.c.b16 %v7791, %v7790
        %v8107 = vpack.c.b16 %v7793, %v7792
        %v8108 = vpack.c.b16 %v7795, %v7794
        %v8109 = vpack.c.b16 %v7797, %v7796
        %v8110 = vpack.c.b16 %v7799, %v7798
        %v8111 = vpack.c.b16 %v7801, %v7800
        %v8112 = vpack.c.b16 %v7803, %v7802
        %v8113 = vpack.c.b16 %v7805, %v7804
        %v8114 = vpack.c.b16 %v7807, %v7806
        %v8115 = vpack.c.b16 %v7809, %v7808
        %v8116 = vpack.c.b16 %v7811, %v7810
        %v8117 = vpack.c.b16 %v7813, %v7812
        %v8118 = vpack.c.b16 %v7815, %v7814
        %v8119 = vpack.c.b16 %v7817, %v7816
        %v8120 = vpack.c.b16 %v7819, %v7818
        %v8121 = vpack.c.b16 %v7821, %v7820
        %v8122 = vpack.c.b16 %v7823, %v7822
        %v8123 = vpack.c.b16 %v7825, %v7824
        %v8124 = vpack.c.b16 %v7827, %v7826
        %v8125 = vpack.c.b16 %v7829, %v7828
        %v8126 = vpack.c.b16 %v7831, %v7830
        %v8127 = vpack.c.b16 %v7833, %v7832
        %v8128 = vpack.c.b16 %v7835, %v7834
        %v8129 = vpack.c.b16 %v7837, %v7836
        %v8130 = vpack.c.b16 %v7839, %v7838
        %v8131 = vpack.c.b16 %v7841, %v7840
        %v8132 = vpack.c.b16 %v7843, %v7842
        %v8133 = vpack.c.b16 %v7845, %v7844
        %v8134 = vpack.c.b16 %v7847, %v7846
        %v8135 = vpack.c.b16 %v7849, %v7848
        %v8136 = vpack.c.b16 %v7851, %v7850
        %v8137 = vpack.c.b16 %v7853, %v7852
        %v8138 = vpack.c.b16 %v7855, %v7854
        %v8139 = vpack.c.b16 %v7857, %v7856
        %v8140 = vpack.c.b16 %v7859, %v7858
        %v8141 = vpack.c.b16 %v7861, %v7860
        %v8142 = vpack.c.b16 %v7863, %v7862
        %v8143 = vpack.c.b16 %v7865, %v7864
        %v8144 = vpack.c.b16 %v7867, %v7866
        %v8145 = vpack.c.b16 %v7869, %v7868
        %v8146 = vpack.c.b16 %v7871, %v7870
        %v8147 = vpack.c.b16 %v7873, %v7872
        %v8148 = vpack.c.b16 %v7875, %v7874
        %v8149 = vpack.c.b16 %v7877, %v7876
        %v8150 = vpack.c.b16 %v7879, %v7878
        %v8151 = vpack.c.b16 %v7881, %v7880
        %v8152 = vpack.c.b16 %v7883, %v7882
        %v8153 = vpack.c.b16 %v7885, %v7884
        %v8154 = vpack.c.b16 %v7887, %v7886
        %v8155 = vpack.c.b16 %v7889, %v7888
        %v8156 = vpack.c.b16 %v7891, %v7890
        %v8157 = vpack.c.b16 %v7893, %v7892
        %v8158 = vpack.c.b16 %v7895, %v7894
        %v8159 = vpack.c.b16 %v7897, %v7896
        %v8160 = vpack.c.b16 %v7899, %v7898
        %v8161 = vpack.c.b16 %v7901, %v7900
        %v8162 = vpack.c.b16 %v7903, %v7902
        %v8163 = vpack.c.b16 %v7905, %v7904
        %v8164 = vpack.c.b16 %v7907, %v7906
        %v8165 = vpack.c.b16 %v7909, %v7908
        %v8166 = vpack.c.b16 %v7911, %v7910
        %v8167 = vpack.c.b16 %v7913, %v7912
        %v8168 = vpack.c.b16 %v7915, %v7914
        %v8169 = vpack.c.b16 %v7917, %v7916
        %v8170 = vpack.c.b16 %v7919, %v7918
        %v8171 = vpack.c.b16 %v7921, %v7920
        %v8172 = vpack.c.b16 %v7923, %v7922
        %v8173 = vpack.c.b16 %v7925, %v7924
        %v8174 = vpack.c.b16 %v7927, %v7926
        %v8175 = vpack.c.b16 %v7929, %v7928
        %v8176 = vpack.c.b16 %v7931, %v7930
        %v8177 = vpack.c.b16 %v7933, %v7932
        %v8178 = vpack.c.b16 %v7935, %v7934
        %v8179 = vpack.c.b16 %v7937, %v7936
        %v8180 = vpack.c.b16 %v7939, %v7938
        %v8181 = vpack.c.b16 %v7941, %v7940
        %v8182 = vpack.c.b16 %v7943, %v7942
        %v8183 = vpack.c.b16 %v7945, %v7944
        %v8184 = vpack.c.b16 %v7947, %v7946
        %v8185 = vpack.c.b16 %v7949, %v7948
        %v8186 = vpack.c.b16 %v7951, %v7950
        %v8187 = vpack.c.b16 %v7953, %v7952
        %v8188 = vpack.c.b16 %v7955, %v7954
        %v8189 = vpack.c.b16 %v7957, %v7956
        %v8190 = vpack.c.b16 %v7959, %v7958
        %v8191 = vpack.c.b16 %v7961, %v7960
        %v8192 = vpack.c.b16 %v7963, %v7962
        %v8193 = vpack.c.b16 %v7965, %v7964
        %v8194 = vpack.c.b16 %v7967, %v7966
        %v8195 = vpack.c.b16 %v7969, %v7968
        %v8196 = vpack.c.b16 %v7971, %v7970
        %v8197 = vpack.c.b16 %v7973, %v7972
        %v8198 = vpack.c.b16 %v7975, %v7974
        %v8199 = vpack.c.b16 %v7977, %v7976
        %v8200 = vpack.c.b16 %v7979, %v7978
        %v8201 = vpack.c.b16 %v7981, %v7980
        %v8202 = vpack.c.b16 %v7983, %v7982
        %v8203 = vpack.c.b16 %v7985, %v7984
        %v8204 = vpack.c.b16 %v7987, %v7986
        %v8205 = vpack.c.b16 %v7989, %v7988
        %v8206 = vpack.c.b16 %v7991, %v7990
        %v8207 = vpack.c.b16 %v7993, %v7992
        %v8208 = vpack.c.b16 %v7995, %v7994
        %v8209 = vpack.c.b16 %v7997, %v7996
        %v8210 = vpack.c.b16 %v7999, %v7998
        %v8211 = vpack.c.b16 %v8001, %v8000
        %v8212 = vpack.c.b16 %v8003, %v8002
        %v8213 = vpack.c.b16 %v8005, %v8004
        %v8214 = vpack.c.b16 %v8007, %v8006
        %v8215 = vpack.c.b16 %v8009, %v8008
        %v8216 = vpack.c.b16 %v8011, %v8010
        %v8217 = vpack.c.b16 %v8013, %v8012
        %v8218 = vpack.c.b16 %v8015, %v8014
        %v8219 = vpack.c.b16 %v8017, %v8016
        %v8220 = vpack.c.b16 %v8019, %v8018
        %v8221 = vpack.c.b16 %v8021, %v8020
        %v8222 = vpack.c.b16 %v8023, %v8022
        %v8223 = vpack.c.b16 %v8025, %v8024
        %v8224 = vpack.c.b16 %v8027, %v8026
        %v8225 = vpack.c.b16 %v8029, %v8028
        %v8226 = vpack.c.b16 %v8031, %v8030
        %v8227 = vpack.c.b16 %v8033, %v8032
        %v8228 = vpack.c.b16 %v8035, %v8034
        %v8229 = vpack.c.b16 %v8037, %v8036
        %v8230 = vpack.c.b16 %v8039, %v8038
        %v8231 = vpack.c.b16 %v8041, %v8040
        %v8232 = vpack.c.b16 %v8043, %v8042
        %v8233 = vpack.c.b16 %v8045, %v8044
        %v8234 = vpack.c.b16 %v8047, %v8046
        %v8235 = vpack.c.b16 %v8049, %v8048
        %v8236 = vpack.c.b16 %v8051, %v8050
        %v8237 = vpack.c.b16 %v8053, %v8052
        %v8238 = vpack.c.b16 %v8055, %v8054
        %v8239 = vpack.c.b16 %v8057, %v8056
        %v8240 = vpack.c.b16 %v8059, %v8058
        %v8241 = vpack.c.b16 %v8061, %v8060
        %v8242 = vpack.c.b16 %v8063, %v8062
        %v8243 = vpack.c.b16 %v8065, %v8064
        %v8244 = vpack.c.b16 %v8067, %v8066
        %v8245 = vpack.c.b16 %v8069, %v8068
        %v8246 = vpack.c.b16 %v8071, %v8070
        %v8247 = vpack.c.b16 %v8073, %v8072
        %v8248 = vpack.c.b16 %v8075, %v8074
        %v8249 = vpack.c.b16 %v8077, %v8076
        %v8250 = vpack.c.b16 %v8079, %v8078
        %v8251 = vpack.c.b16 %v8081, %v8080
        %v8252 = vpack.c.b16 %v8083, %v8082
        %v8253 = vpack.c.b16 %v8085, %v8084
        %v8254 = vpack.c.b16 %v8087, %v8086
        %v8255 = vpack.c.b16 %v8089, %v8088
        %v8256 = vpack.c.b16 %v8091, %v8090
        %v8257 = vpack.c.b16 %v8093, %v8092
        %v8258 = vpack.c.b16 %v8095, %v8094
        %v8259 = vpack.c.b16 %v8097, %v8096
        %v8423 = vsel %vm6642, %v7120, 0
        %8425 = vmatprep.subr.bf16.mxu0 0
        %8426 = vmatpush1.bf16.msra.mxu0 %v8098
        %8427 = vmatprep.subr.bf16.mxu0 0
        %8428 = vmatpush1.bf16.msra.mxu0 %v8099
        %8429 = vmatprep.subr.bf16.mxu0 0
        %8430 = vmatpush1.bf16.msra.mxu0 %v8100
        %8431 = vmatprep.subr.bf16.mxu0 0
        %8432 = vmatpush1.bf16.msra.mxu0 %v8101
        %8433 = vmatprep.subr.bf16.mxu0 0
        %8434 = vmatpush1.bf16.msra.mxu0 %v8102
        %8435 = vmatprep.subr.bf16.mxu0 0
        %8436 = vmatpush1.bf16.msra.mxu0 %v8103
        %8437 = vmatprep.subr.bf16.mxu0 0
        %8438 = vmatpush1.bf16.msra.mxu0 %v8104
        %8439 = vmatprep.subr.bf16.mxu0 0
        %8440 = vmatpush1.bf16.msra.mxu0 %v8105
        %8441 = vmatprep.subr.bf16.mxu0 0
        %8442 = vmatpush1.bf16.msra.mxu0 %v8106
        %8443 = vmatprep.subr.bf16.mxu0 0
        %8444 = vmatpush1.bf16.msra.mxu0 %v8107
        %8445 = vmatprep.subr.bf16.mxu0 0
        %8446 = vmatpush1.bf16.msra.mxu0 %v8108
        %8447 = vmatprep.subr.bf16.mxu0 0
        %8448 = vmatpush1.bf16.msra.mxu0 %v8109
        %8449 = vmatprep.subr.bf16.mxu0 0
        %8450 = vmatpush1.bf16.msra.mxu0 %v8110
        %8451 = vmatprep.subr.bf16.mxu0 0
        %8452 = vmatpush1.bf16.msra.mxu0 %v8111
        %8453 = vmatprep.subr.bf16.mxu0 0
        %8454 = vmatpush1.bf16.msra.mxu0 %v8112
        %8455 = vmatprep.subr.bf16.mxu0 0
        %8456 = vmatpush1.bf16.msra.mxu0 %v8113
        %8457 = vmatprep.mubr.bf16.mxu0 %v7101
        %8458 = vmatmul.mubr.bf16.gmra.mrb[0].mxu0 %v7100
        %v8459 = vpop.f32.mrb[0].mxu0
        %v8460 = vadd.f32 %v7449, %v8459
        %v8461 = vpop.f32.mrb[0].mxu0
        %v8462 = vpop.f32.mrb[0].mxu0
        %v8463 = vadd.f32 %v7449, %v8462
        %v8464 = vpop.f32.mrb[0].mxu0
        %8465 = vdwg.mxu0
        %8466 = vmatprep.subr.bf16.mxu0 0
        %8467 = vmatpush1.bf16.msra.mxu0 %v8114
        %8468 = vmatprep.subr.bf16.mxu0 0
        %8469 = vmatpush1.bf16.msra.mxu0 %v8115
        %8470 = vmatprep.subr.bf16.mxu0 0
        %8471 = vmatpush1.bf16.msra.mxu0 %v8116
        %8472 = vmatprep.subr.bf16.mxu0 0
        %8473 = vmatpush1.bf16.msra.mxu0 %v8117
        %8474 = vmatprep.subr.bf16.mxu0 0
        %8475 = vmatpush1.bf16.msra.mxu0 %v8118
        %8476 = vmatprep.subr.bf16.mxu0 0
        %8477 = vmatpush1.bf16.msra.mxu0 %v8119
        %8478 = vmatprep.subr.bf16.mxu0 0
        %8479 = vmatpush1.bf16.msra.mxu0 %v8120
        %8480 = vmatprep.subr.bf16.mxu0 0
        %8481 = vmatpush1.bf16.msra.mxu0 %v8121
        %8482 = vmatprep.subr.bf16.mxu0 0
        %8483 = vmatpush1.bf16.msra.mxu0 %v8122
        %8484 = vmatprep.subr.bf16.mxu0 0
        %8485 = vmatpush1.bf16.msra.mxu0 %v8123
        %8486 = vmatprep.subr.bf16.mxu0 0
        %8487 = vmatpush1.bf16.msra.mxu0 %v8124
        %8488 = vmatprep.subr.bf16.mxu0 0
        %8489 = vmatpush1.bf16.msra.mxu0 %v8125
        %8490 = vmatprep.subr.bf16.mxu0 0
        %8491 = vmatpush1.bf16.msra.mxu0 %v8126
        %8492 = vmatprep.subr.bf16.mxu0 0
        %8493 = vmatpush1.bf16.msra.mxu0 %v8127
        %8494 = vmatprep.subr.bf16.mxu0 0
        %8495 = vmatpush1.bf16.msra.mxu0 %v8128
        %8496 = vmatprep.subr.bf16.mxu0 0
        %8497 = vmatpush1.bf16.msra.mxu0 %v8129
        %8498 = vmatprep.mubr.bf16.mxu0 %v7103
        %8499 = vmatmul.mubr.bf16.gmra.mrb[0].mxu0 %v7102
        %v8500 = vpop.f32.mrb[0].mxu0
        %v8501 = vadd.f32 %v8460, %v8500
        %v8502 = vpop.f32.mrb[0].mxu0
        %v8503 = vpop.f32.mrb[0].mxu0
        %v8504 = vadd.f32 %v8463, %v8503
        %v8505 = vpop.f32.mrb[0].mxu0
        %8506 = vdwg.mxu0
        %8507 = vmatprep.subr.bf16.mxu0 0
        %8508 = vmatpush1.bf16.msra.mxu0 %v8130
        %8509 = vmatprep.subr.bf16.mxu0 0
        %8510 = vmatpush1.bf16.msra.mxu0 %v8131
        %8511 = vmatprep.subr.bf16.mxu0 0
        %8512 = vmatpush1.bf16.msra.mxu0 %v8132
        %8513 = vmatprep.subr.bf16.mxu0 0
        %8514 = vmatpush1.bf16.msra.mxu0 %v8133
        %8515 = vmatprep.subr.bf16.mxu0 0
        %8516 = vmatpush1.bf16.msra.mxu0 %v8134
        %8517 = vmatprep.subr.bf16.mxu0 0
        %8518 = vmatpush1.bf16.msra.mxu0 %v8135
        %8519 = vmatprep.subr.bf16.mxu0 0
        %8520 = vmatpush1.bf16.msra.mxu0 %v8136
        %8521 = vmatprep.subr.bf16.mxu0 0
        %8522 = vmatpush1.bf16.msra.mxu0 %v8137
        %8523 = vmatprep.subr.bf16.mxu0 0
        %8524 = vmatpush1.bf16.msra.mxu0 %v8138
        %8525 = vmatprep.subr.bf16.mxu0 0
        %8526 = vmatpush1.bf16.msra.mxu0 %v8139
        %8527 = vmatprep.subr.bf16.mxu0 0
        %8528 = vmatpush1.bf16.msra.mxu0 %v8140
        %8529 = vmatprep.subr.bf16.mxu0 0
        %8530 = vmatpush1.bf16.msra.mxu0 %v8141
        %8531 = vmatprep.subr.bf16.mxu0 0
        %8532 = vmatpush1.bf16.msra.mxu0 %v8142
        %8533 = vmatprep.subr.bf16.mxu0 0
        %8534 = vmatpush1.bf16.msra.mxu0 %v8143
        %8535 = vmatprep.subr.bf16.mxu0 0
        %8536 = vmatpush1.bf16.msra.mxu0 %v8144
        %8537 = vmatprep.subr.bf16.mxu0 0
        %8538 = vmatpush1.bf16.msra.mxu0 %v8145
        %8539 = vmatprep.mubr.bf16.mxu0 %v7105
        %8540 = vmatmul.mubr.bf16.gmra.mrb[0].mxu0 %v7104
        %v8541 = vpop.f32.mrb[0].mxu0
        %v8542 = vadd.f32 %v8501, %v8541
        %v8543 = vpop.f32.mrb[0].mxu0
        %v8544 = vpop.f32.mrb[0].mxu0
        %v8545 = vadd.f32 %v8504, %v8544
        %v8546 = vpop.f32.mrb[0].mxu0
        %8547 = vdwg.mxu0
        %8548 = vmatprep.subr.bf16.mxu0 0
        %8549 = vmatpush1.bf16.msra.mxu0 %v8146
        %8550 = vmatprep.subr.bf16.mxu0 0
        %8551 = vmatpush1.bf16.msra.mxu0 %v8147
        %8552 = vmatprep.subr.bf16.mxu0 0
        %8553 = vmatpush1.bf16.msra.mxu0 %v8148
        %8554 = vmatprep.subr.bf16.mxu0 0
        %8555 = vmatpush1.bf16.msra.mxu0 %v8149
        %8556 = vmatprep.subr.bf16.mxu0 0
        %8557 = vmatpush1.bf16.msra.mxu0 %v8150
        %8558 = vmatprep.subr.bf16.mxu0 0
        %8559 = vmatpush1.bf16.msra.mxu0 %v8151
        %8560 = vmatprep.subr.bf16.mxu0 0
        %8561 = vmatpush1.bf16.msra.mxu0 %v8152
        %8562 = vmatprep.subr.bf16.mxu0 0
        %8563 = vmatpush1.bf16.msra.mxu0 %v8153
        %8564 = vmatprep.subr.bf16.mxu0 0
        %8565 = vmatpush1.bf16.msra.mxu0 %v8154
        %8566 = vmatprep.subr.bf16.mxu0 0
        %8567 = vmatpush1.bf16.msra.mxu0 %v8155
        %8568 = vmatprep.subr.bf16.mxu0 0
        %8569 = vmatpush1.bf16.msra.mxu0 %v8156
        %8570 = vmatprep.subr.bf16.mxu0 0
        %8571 = vmatpush1.bf16.msra.mxu0 %v8157
        %8572 = vmatprep.subr.bf16.mxu0 0
        %8573 = vmatpush1.bf16.msra.mxu0 %v8158
        %8574 = vmatprep.subr.bf16.mxu0 0
        %8575 = vmatpush1.bf16.msra.mxu0 %v8159
        %8576 = vmatprep.subr.bf16.mxu0 0
        %8577 = vmatpush1.bf16.msra.mxu0 %v8160
        %8578 = vmatprep.subr.bf16.mxu0 0
        %8579 = vmatpush1.bf16.msra.mxu0 %v8161
        %8580 = vmatprep.mubr.bf16.mxu0 %v7107
        %8581 = vmatmul.mubr.bf16.gmra.mrb[0].mxu0 %v7106
        %v8582 = vpop.f32.mrb[0].mxu0
        %v8583 = vadd.f32 %v8542, %v8582
        %v8584 = vpop.f32.mrb[0].mxu0
        %v8585 = vpop.f32.mrb[0].mxu0
        %v8586 = vadd.f32 %v8545, %v8585
        %v8587 = vpop.f32.mrb[0].mxu0
        %8588 = vdwg.mxu0
        %8589 = vmatprep.subr.bf16.mxu0 0
        %8590 = vmatpush1.bf16.msra.mxu0 %v8162
        %8591 = vmatprep.subr.bf16.mxu0 0
        %8592 = vmatpush1.bf16.msra.mxu0 %v8163
        %8593 = vmatprep.subr.bf16.mxu0 0
        %8594 = vmatpush1.bf16.msra.mxu0 %v8164
        %8595 = vmatprep.subr.bf16.mxu0 0
        %8596 = vmatpush1.bf16.msra.mxu0 %v8165
        %8597 = vmatprep.subr.bf16.mxu0 0
        %8598 = vmatpush1.bf16.msra.mxu0 %v8166
        %8599 = vmatprep.subr.bf16.mxu0 0
        %8600 = vmatpush1.bf16.msra.mxu0 %v8167
        %8601 = vmatprep.subr.bf16.mxu0 0
        %8602 = vmatpush1.bf16.msra.mxu0 %v8168
        %8603 = vmatprep.subr.bf16.mxu0 0
        %8604 = vmatpush1.bf16.msra.mxu0 %v8169
        %8605 = vmatprep.subr.bf16.mxu0 0
        %8606 = vmatpush1.bf16.msra.mxu0 %v8170
        %8607 = vmatprep.subr.bf16.mxu0 0
        %8608 = vmatpush1.bf16.msra.mxu0 %v8171
        %8609 = vmatprep.subr.bf16.mxu0 0
        %8610 = vmatpush1.bf16.msra.mxu0 %v8172
        %8611 = vmatprep.subr.bf16.mxu0 0
        %8612 = vmatpush1.bf16.msra.mxu0 %v8173
        %8613 = vmatprep.subr.bf16.mxu0 0
        %8614 = vmatpush1.bf16.msra.mxu0 %v8174
        %8615 = vmatprep.subr.bf16.mxu0 0
        %8616 = vmatpush1.bf16.msra.mxu0 %v8175
        %8617 = vmatprep.subr.bf16.mxu0 0
        %8618 = vmatpush1.bf16.msra.mxu0 %v8176
        %8619 = vmatprep.subr.bf16.mxu0 0
        %8620 = vmatpush1.bf16.msra.mxu0 %v8177
        %8621 = vmatprep.mubr.bf16.mxu0 %v7109
        %8622 = vmatmul.mubr.bf16.gmra.mrb[0].mxu0 %v7108
        %v8623 = vpop.f32.mrb[0].mxu0
        %v8624 = vadd.f32 %v8583, %v8623
        %v8625 = vpop.f32.mrb[0].mxu0
        %v8626 = vpop.f32.mrb[0].mxu0
        %v8627 = vadd.f32 %v8586, %v8626
        %v8628 = vpop.f32.mrb[0].mxu0
        %8629 = vdwg.mxu0
        %8630 = vmatprep.subr.bf16.mxu0 0
        %8631 = vmatpush1.bf16.msra.mxu0 %v8178
        %8632 = vmatprep.subr.bf16.mxu0 0
        %8633 = vmatpush1.bf16.msra.mxu0 %v8179
        %8634 = vmatprep.subr.bf16.mxu0 0
        %8635 = vmatpush1.bf16.msra.mxu0 %v8180
        %8636 = vmatprep.subr.bf16.mxu0 0
        %8637 = vmatpush1.bf16.msra.mxu0 %v8181
        %8638 = vmatprep.subr.bf16.mxu0 0
        %8639 = vmatpush1.bf16.msra.mxu0 %v8182
        %8640 = vmatprep.subr.bf16.mxu0 0
        %8641 = vmatpush1.bf16.msra.mxu0 %v8183
        %8642 = vmatprep.subr.bf16.mxu0 0
        %8643 = vmatpush1.bf16.msra.mxu0 %v8184
        %8644 = vmatprep.subr.bf16.mxu0 0
        %8645 = vmatpush1.bf16.msra.mxu0 %v8185
        %8646 = vmatprep.subr.bf16.mxu0 0
        %8647 = vmatpush1.bf16.msra.mxu0 %v8186
        %8648 = vmatprep.subr.bf16.mxu0 0
        %8649 = vmatpush1.bf16.msra.mxu0 %v8187
        %8650 = vmatprep.subr.bf16.mxu0 0
        %8651 = vmatpush1.bf16.msra.mxu0 %v8188
        %8652 = vmatprep.subr.bf16.mxu0 0
        %8653 = vmatpush1.bf16.msra.mxu0 %v8189
        %8654 = vmatprep.subr.bf16.mxu0 0
        %8655 = vmatpush1.bf16.msra.mxu0 %v8190
        %8656 = vmatprep.subr.bf16.mxu0 0
        %8657 = vmatpush1.bf16.msra.mxu0 %v8191
        %8658 = vmatprep.subr.bf16.mxu0 0
        %8659 = vmatpush1.bf16.msra.mxu0 %v8192
        %8660 = vmatprep.subr.bf16.mxu0 0
        %8661 = vmatpush1.bf16.msra.mxu0 %v8193
        %8662 = vmatprep.mubr.bf16.mxu0 %v7111
        %8663 = vmatmul.mubr.bf16.gmra.mrb[0].mxu0 %v7110
        %v8664 = vpop.f32.mrb[0].mxu0
        %v8665 = vadd.f32 %v8624, %v8664
        %v8666 = vpop.f32.mrb[0].mxu0
        %v8667 = vpop.f32.mrb[0].mxu0
        %v8668 = vadd.f32 %v8627, %v8667
        %v8669 = vpop.f32.mrb[0].mxu0
        %8670 = vdwg.mxu0
        %8671 = vmatprep.subr.bf16.mxu0 0
        %8672 = vmatpush1.bf16.msra.mxu0 %v8194
        %8673 = vmatprep.subr.bf16.mxu0 0
        %8674 = vmatpush1.bf16.msra.mxu0 %v8195
        %8675 = vmatprep.subr.bf16.mxu0 0
        %8676 = vmatpush1.bf16.msra.mxu0 %v8196
        %8677 = vmatprep.subr.bf16.mxu0 0
        %8678 = vmatpush1.bf16.msra.mxu0 %v8197
        %8679 = vmatprep.subr.bf16.mxu0 0
        %8680 = vmatpush1.bf16.msra.mxu0 %v8198
        %8681 = vmatprep.subr.bf16.mxu0 0
        %8682 = vmatpush1.bf16.msra.mxu0 %v8199
        %8683 = vmatprep.subr.bf16.mxu0 0
        %8684 = vmatpush1.bf16.msra.mxu0 %v8200
        %8685 = vmatprep.subr.bf16.mxu0 0
        %8686 = vmatpush1.bf16.msra.mxu0 %v8201
        %8687 = vmatprep.subr.bf16.mxu0 0
        %8688 = vmatpush1.bf16.msra.mxu0 %v8202
        %8689 = vmatprep.subr.bf16.mxu0 0
        %8690 = vmatpush1.bf16.msra.mxu0 %v8203
        %8691 = vmatprep.subr.bf16.mxu0 0
        %8692 = vmatpush1.bf16.msra.mxu0 %v8204
        %8693 = vmatprep.subr.bf16.mxu0 0
        %8694 = vmatpush1.bf16.msra.mxu0 %v8205
        %8695 = vmatprep.subr.bf16.mxu0 0
        %8696 = vmatpush1.bf16.msra.mxu0 %v8206
        %8697 = vmatprep.subr.bf16.mxu0 0
        %8698 = vmatpush1.bf16.msra.mxu0 %v8207
        %8699 = vmatprep.subr.bf16.mxu0 0
        %8700 = vmatpush1.bf16.msra.mxu0 %v8208
        %8701 = vmatprep.subr.bf16.mxu0 0
        %8702 = vmatpush1.bf16.msra.mxu0 %v8209
        %8703 = vmatprep.mubr.bf16.mxu0 %v7113
        %8704 = vmatmul.mubr.bf16.gmra.mrb[0].mxu0 %v7112
        %v8705 = vpop.f32.mrb[0].mxu0
        %v8706 = vadd.f32 %v8665, %v8705
        %v8707 = vpop.f32.mrb[0].mxu0
        %v8708 = vpop.f32.mrb[0].mxu0
        %v8709 = vadd.f32 %v8668, %v8708
        %v8710 = vpop.f32.mrb[0].mxu0
        %8711 = vdwg.mxu0
        %8712 = vmatprep.subr.bf16.mxu0 0
        %8713 = vmatpush1.bf16.msra.mxu0 %v8210
        %8714 = vmatprep.subr.bf16.mxu0 0
        %8715 = vmatpush1.bf16.msra.mxu0 %v8211
        %8716 = vmatprep.subr.bf16.mxu0 0
        %8717 = vmatpush1.bf16.msra.mxu0 %v8212
        %8718 = vmatprep.subr.bf16.mxu0 0
        %8719 = vmatpush1.bf16.msra.mxu0 %v8213
        %8720 = vmatprep.subr.bf16.mxu0 0
        %8721 = vmatpush1.bf16.msra.mxu0 %v8214
        %8722 = vmatprep.subr.bf16.mxu0 0
        %8723 = vmatpush1.bf16.msra.mxu0 %v8215
        %8724 = vmatprep.subr.bf16.mxu0 0
        %8725 = vmatpush1.bf16.msra.mxu0 %v8216
        %8726 = vmatprep.subr.bf16.mxu0 0
        %8727 = vmatpush1.bf16.msra.mxu0 %v8217
        %8728 = vmatprep.subr.bf16.mxu0 0
        %8729 = vmatpush1.bf16.msra.mxu0 %v8218
        %8730 = vmatprep.subr.bf16.mxu0 0
        %8731 = vmatpush1.bf16.msra.mxu0 %v8219
        %8732 = vmatprep.subr.bf16.mxu0 0
        %8733 = vmatpush1.bf16.msra.mxu0 %v8220
        %8734 = vmatprep.subr.bf16.mxu0 0
        %8735 = vmatpush1.bf16.msra.mxu0 %v8221
        %8736 = vmatprep.subr.bf16.mxu0 0
        %8737 = vmatpush1.bf16.msra.mxu0 %v8222
        %8738 = vmatprep.subr.bf16.mxu0 0
        %8739 = vmatpush1.bf16.msra.mxu0 %v8223
        %8740 = vmatprep.subr.bf16.mxu0 0
        %8741 = vmatpush1.bf16.msra.mxu0 %v8224
        %8742 = vmatprep.subr.bf16.mxu0 0
        %8743 = vmatpush1.bf16.msra.mxu0 %v8225
        %8744 = vmatprep.mubr.bf16.mxu0 %v7115
        %8745 = vmatmul.mubr.bf16.gmra.mrb[0].mxu0 %v7114
        %v8746 = vpop.f32.mrb[0].mxu0
        %v8747 = vadd.f32 %v8706, %v8746
        %v8748 = vpop.f32.mrb[0].mxu0
        %v8749 = vpop.f32.mrb[0].mxu0
        %v8750 = vadd.f32 %v8709, %v8749
        %v8751 = vpop.f32.mrb[0].mxu0
        %8752 = vdwg.mxu0
        %8753 = vmatprep.subr.bf16.mxu0 0
        %8754 = vmatpush1.bf16.msra.mxu0 %v8226
        %8755 = vmatprep.subr.bf16.mxu0 0
        %8756 = vmatpush1.bf16.msra.mxu0 %v8227
        %8757 = vmatprep.subr.bf16.mxu0 0
        %8758 = vmatpush1.bf16.msra.mxu0 %v8228
        %8759 = vmatprep.subr.bf16.mxu0 0
        %8760 = vmatpush1.bf16.msra.mxu0 %v8229
        %8761 = vmatprep.subr.bf16.mxu0 0
        %8762 = vmatpush1.bf16.msra.mxu0 %v8230
        %8763 = vmatprep.subr.bf16.mxu0 0
        %8764 = vmatpush1.bf16.msra.mxu0 %v8231
        %8765 = vmatprep.subr.bf16.mxu0 0
        %8766 = vmatpush1.bf16.msra.mxu0 %v8232
        %8767 = vmatprep.subr.bf16.mxu0 0
        %8768 = vmatpush1.bf16.msra.mxu0 %v8233
        %8769 = vmatprep.subr.bf16.mxu0 0
        %8770 = vmatpush1.bf16.msra.mxu0 %v8234
        %8771 = vmatprep.subr.bf16.mxu0 0
        %8772 = vmatpush1.bf16.msra.mxu0 %v8235
        %8773 = vmatprep.subr.bf16.mxu0 0
        %8774 = vmatpush1.bf16.msra.mxu0 %v8236
        %8775 = vmatprep.subr.bf16.mxu0 0
        %8776 = vmatpush1.bf16.msra.mxu0 %v8237
        %8777 = vmatprep.subr.bf16.mxu0 0
        %8778 = vmatpush1.bf16.msra.mxu0 %v8238
        %8779 = vmatprep.subr.bf16.mxu0 0
        %8780 = vmatpush1.bf16.msra.mxu0 %v8239
        %8781 = vmatprep.subr.bf16.mxu0 0
        %8782 = vmatpush1.bf16.msra.mxu0 %v8240
        %8783 = vmatprep.subr.bf16.mxu0 0
        %8784 = vmatpush1.bf16.msra.mxu0 %v8241
        %8785 = vmatprep.mubr.bf16.mxu0 %v7117
        %8786 = vmatmul.mubr.bf16.gmra.mrb[0].mxu0 %v7116
        %v8787 = vpop.f32.mrb[0].mxu0
        %v8788 = vadd.f32 %v8747, %v8787
        %v8789 = vpop.f32.mrb[0].mxu0
        %v8790 = vpop.f32.mrb[0].mxu0
        %v8791 = vadd.f32 %v8750, %v8790
        %v8792 = vpop.f32.mrb[0].mxu0
        %8793 = vdwg.mxu0
        %8794 = vmatprep.subr.bf16.mxu0 0
        %8795 = vmatpush1.bf16.msra.mxu0 %v8242
        %8796 = vmatprep.subr.bf16.mxu0 0
        %8797 = vmatpush1.bf16.msra.mxu0 %v8243
        %8798 = vmatprep.subr.bf16.mxu0 0
        %8799 = vmatpush1.bf16.msra.mxu0 %v8244
        %8800 = vmatprep.subr.bf16.mxu0 0
        %8801 = vmatpush1.bf16.msra.mxu0 %v8245
        %8802 = vmatprep.subr.bf16.mxu0 0
        %8803 = vmatpush1.bf16.msra.mxu0 %v8246
        %8804 = vmatprep.subr.bf16.mxu0 0
        %8805 = vmatpush1.bf16.msra.mxu0 %v8247
        %8806 = vmatprep.subr.bf16.mxu0 0
        %8807 = vmatpush1.bf16.msra.mxu0 %v8248
        %8808 = vmatprep.subr.bf16.mxu0 0
        %8809 = vmatpush1.bf16.msra.mxu0 %v8249
        %8810 = vmatprep.subr.bf16.mxu0 0
        %8811 = vmatpush1.bf16.msra.mxu0 %v8250
        %8812 = vmatprep.subr.bf16.mxu0 0
        %8813 = vmatpush1.bf16.msra.mxu0 %v8251
        %8814 = vmatprep.subr.bf16.mxu0 0
        %8815 = vmatpush1.bf16.msra.mxu0 %v8252
        %8816 = vmatprep.subr.bf16.mxu0 0
        %8817 = vmatpush1.bf16.msra.mxu0 %v8253
        %8818 = vmatprep.subr.bf16.mxu0 0
        %8819 = vmatpush1.bf16.msra.mxu0 %v8254
        %8820 = vmatprep.subr.bf16.mxu0 0
        %8821 = vmatpush1.bf16.msra.mxu0 %v8255
        %8822 = vmatprep.subr.bf16.mxu0 0
        %8823 = vmatpush1.bf16.msra.mxu0 %v8256
        %8824 = vmatprep.subr.bf16.mxu0 0
        %8825 = vmatpush1.bf16.msra.mxu0 %v8257
        %8826 = vmatprep.mubr.bf16.mxu0 %v7119
        %8827 = vmatmul.mubr.bf16.gmra.mrb[0].mxu0 %v7118
        %v8828 = vpop.f32.mrb[0].mxu0
        %v8829 = vadd.f32 %v8788, %v8828
        %v8830 = vpop.f32.mrb[0].mxu0
        %v8831 = vpop.f32.mrb[0].mxu0
        %v8832 = vadd.f32 %v8791, %v8831
        %v8833 = vpop.f32.mrb[0].mxu0
        %8834 = vdwg.mxu0
        %8835 = vmatprep.subr.bf16.mxu0 0
        %8836 = vmatpush1.bf16.msra.mxu0 %v8258
        %8837 = vmatprep.subr.bf16.mxu0 0
        %8838 = vmatpush1.bf16.msra.mxu0 %v8259
        %8839 = vmatprep.subr.bf16.mxu0 0
        %8840 = vmatpush1.bf16.msra.mxu0 0
        %8841 = vmatprep.subr.bf16.mxu0 0
        %8842 = vmatpush1.bf16.msra.mxu0 0
        %8843 = vmatprep.subr.bf16.mxu0 0
        %8844 = vmatpush1.bf16.msra.mxu0 0
        %8845 = vmatprep.subr.bf16.mxu0 0
        %8846 = vmatpush1.bf16.msra.mxu0 0
        %8847 = vmatprep.subr.bf16.mxu0 0
        %8848 = vmatpush1.bf16.msra.mxu0 0
        %8849 = vmatprep.subr.bf16.mxu0 0
        %8850 = vmatpush1.bf16.msra.mxu0 0
        %8851 = vmatprep.subr.bf16.mxu0 0
        %8852 = vmatpush1.bf16.msra.mxu0 0
        %8853 = vmatprep.subr.bf16.mxu0 0
        %8854 = vmatpush1.bf16.msra.mxu0 0
        %8855 = vmatprep.subr.bf16.mxu0 0
        %8856 = vmatpush1.bf16.msra.mxu0 0
        %8857 = vmatprep.subr.bf16.mxu0 0
        %8858 = vmatpush1.bf16.msra.mxu0 0
        %8859 = vmatprep.subr.bf16.mxu0 0
        %8860 = vmatpush1.bf16.msra.mxu0 0
        %8861 = vmatprep.subr.bf16.mxu0 0
        %8862 = vmatpush1.bf16.msra.mxu0 0
        %8863 = vmatprep.subr.bf16.mxu0 0
        %8864 = vmatpush1.bf16.msra.mxu0 0
        %8865 = vmatprep.subr.bf16.mxu0 0
        %8866 = vmatpush1.bf16.msra.mxu0 0
        %8867 = vmatprep.mubr.bf16.mxu0 0
        %8868 = vmatmul.mubr.bf16.gmra.mrb[0].mxu0 %v8423
        %v8869 = vpop.f32.mrb[0].mxu0
        %v8870 = vadd.f32 %v8829, %v8869
        %v8871 = vpop.f32.mrb[0].mxu0
        %v8872 = vpop.f32.mrb[0].mxu0
        %v8873 = vadd.f32 %v8832, %v8872
        %v8874 = vpop.f32.mrb[0].mxu0
        %8875 = vdwg.mxu0
        %s8876 = sld [smem:[#allocation20]]
        %s8877 = sld [smem:[#allocation20 + $0x1]]
        %s8878 = sld [smem:[#allocation20 + $0x2]]
        %v8879 = vstv %s8876
        %v8880 = vmul.f32 %v8879, %v6494
        %v8881 = vmul.f32 %v8879, %v6495
        %v8882 = vstv %s8877
        %v8883 = vmul.f32 %v8882, %v8870
        %v8884 = vmul.f32 %v8882, %v8873
        %v8885 = vadd.f32 %v8880, %v8883
        %v8886 = vadd.f32 %v8881, %v8884
        %v8887 = vld [vmem:[#allocation18] sm:$0xff]
        %v8888 = vld [vmem:[#allocation18 + $0x8] sm:$0xff]
        %v8889 = vld [vmem:[#allocation18 + $0x10] sm:$0xff]
        %v8890 = vld [vmem:[#allocation18 + $0x18] sm:$0xff]
        %v8891 = vld [vmem:[#allocation18 + $0x20] sm:$0xff]
        %v8892 = vld [vmem:[#allocation18 + $0x28] sm:$0xff]
        %v8893 = vld [vmem:[#allocation18 + $0x30] sm:$0xff]
        %v8894 = vld [vmem:[#allocation18 + $0x38] sm:$0xff]
        %v8895 = vld [vmem:[#allocation18 + $0x40] sm:$0xff]
        %v8896 = vld [vmem:[#allocation18 + $0x48] sm:$0xff]
        %v8897 = vld [vmem:[#allocation18 + $0x50] sm:$0xff]
        %v8898 = vld [vmem:[#allocation18 + $0x58] sm:$0xff]
        %v8899 = vld [vmem:[#allocation18 + $0x60] sm:$0xff]
        %v8900 = vld [vmem:[#allocation18 + $0x68] sm:$0xff]
        %v8901 = vld [vmem:[#allocation18 + $0x70] sm:$0xff]
        %v8902 = vld [vmem:[#allocation18 + $0x78] sm:$0xff]
        %v8903 = vld [vmem:[#allocation18 + $0x80] sm:$0xff]
        %v8904 = vld [vmem:[#allocation18 + $0x88] sm:$0xff]
        %v8905 = vld [vmem:[#allocation18 + $0x90] sm:$0xff]
        %v8906 = vld [vmem:[#allocation18 + $0x98] sm:$0xff]
        %v8907 = vld [vmem:[#allocation18 + $0xa0] sm:$0xff]
        %v8908 = vld [vmem:[#allocation18 + $0xa8] sm:$0xff]
        %v8909 = vld [vmem:[#allocation18 + $0xb0] sm:$0xff]
        %v8910 = vld [vmem:[#allocation18 + $0xb8] sm:$0xff]
        %v8911 = vld [vmem:[#allocation18 + $0xc0] sm:$0xff]
        %v8912 = vld [vmem:[#allocation18 + $0xc8] sm:$0xff]
        %v8913 = vld [vmem:[#allocation18 + $0xd0] sm:$0xff]
        %v8914 = vld [vmem:[#allocation18 + $0xd8] sm:$0xff]
        %v8915 = vld [vmem:[#allocation18 + $0xe0] sm:$0xff]
        %v8916 = vld [vmem:[#allocation18 + $0xe8] sm:$0xff]
        %v8917 = vld [vmem:[#allocation18 + $0xf0] sm:$0xff]
        %v8918 = vld [vmem:[#allocation18 + $0xf8] sm:$0xff]
        %v8919 = vld [vmem:[#allocation18 + $0x100] sm:$0xff]
        %v8920 = vld [vmem:[#allocation18 + $0x108] sm:$0xff]
        %v8921 = vld [vmem:[#allocation18 + $0x110] sm:$0xff]
        %v8922 = vld [vmem:[#allocation18 + $0x118] sm:$0xff]
        %v8923 = vld [vmem:[#allocation18 + $0x120] sm:$0xff]
        %v8924 = vld [vmem:[#allocation18 + $0x128] sm:$0xff]
        %v8925 = vld [vmem:[#allocation18 + $0x130] sm:$0xff]
        %v8926 = vld [vmem:[#allocation18 + $0x138] sm:$0xff]
        %v8927 = vld [vmem:[#allocation18 + $0x140] sm:$0xff]
        %v8928 = vld [vmem:[#allocation18 + $0x148] sm:$0xff]
        %v8929 = vld [vmem:[#allocation18 + $0x150] sm:$0xff]
        %v8930 = vld [vmem:[#allocation18 + $0x158] sm:$0xff]
        %v8931 = vld [vmem:[#allocation18 + $0x160] sm:$0xff]
        %v8932 = vld [vmem:[#allocation18 + $0x168] sm:$0xff]
        %v8933 = vld [vmem:[#allocation18 + $0x170] sm:$0xff]
        %v8934 = vld [vmem:[#allocation18 + $0x178] sm:$0xff]
        %v8935 = vmul.f32 %v8885, %v8885
        %v8936 = vmul.f32 %v8886, %v8886
        %v8937 = vld [vmem:[%s6] sm:$0x1]
        %v8938 = vlaneseq
        %v8939 = vshrl.u32 %v8938, 7
        %v8940 = vsub.s32 0, %v8939
        %v8941 = vrot.slane %v8937, %v8940
        %8942 = vmatprep.subr.mxu0 0.0
        %8943 = vmatpush1.msra.mxu0 %v8887
        %8944 = vmatprep.subr.mxu0 0.0
        %8945 = vmatpush1.msra.mxu0 %v8888
        %8946 = vmatprep.subr.mxu0 0.0
        %8947 = vmatpush1.msra.mxu0 %v8889
        %8948 = vmatprep.subr.mxu0 0.0
        %8949 = vmatpush1.msra.mxu0 %v8890
        %8950 = vmatprep.subr.mxu0 0.0
        %8951 = vmatpush1.msra.mxu0 %v8891
        %8952 = vmatprep.subr.mxu0 0.0
        %8953 = vmatpush1.msra.mxu0 %v8892
        %8954 = vmatprep.subr.mxu0 0.0
        %8955 = vmatpush1.msra.mxu0 %v8893
        %8956 = vmatprep.subr.mxu0 0.0
        %8957 = vmatpush1.msra.mxu0 %v8894
        %8958 = vmatprep.subr.mxu0 0.0
        %8959 = vmatpush1.msra.mxu0 %v8895
        %8960 = vmatprep.subr.mxu0 0.0
        %8961 = vmatpush1.msra.mxu0 %v8896
        %8962 = vmatprep.subr.mxu0 0.0
        %8963 = vmatpush1.msra.mxu0 %v8897
        %8964 = vmatprep.subr.mxu0 0.0
        %8965 = vmatpush1.msra.mxu0 %v8898
        %8966 = vmatprep.subr.mxu0 0.0
        %8967 = vmatpush1.msra.mxu0 %v8899
        %8968 = vmatprep.subr.mxu0 0.0
        %8969 = vmatpush1.msra.mxu0 %v8900
        %8970 = vmatprep.subr.mxu0 0.0
        %8971 = vmatpush1.msra.mxu0 %v8901
        %8972 = vmatprep.subr.mxu0 0.0
        %8973 = vmatpush1.msra.mxu0 %v8902
        %8974 = vmatprep.subr.mxu0 0.0
        %8975 = vmatpush1.msra.mxu0 0.0
        %8976 = vmatprep.subr.mxu0 0.0
        %8977 = vmatpush1.msra.mxu0 0.0
        %8978 = vmatprep.subr.mxu0 0.0
        %8979 = vmatpush1.msra.mxu0 0.0
        %8980 = vmatprep.subr.mxu0 0.0
        %8981 = vmatpush1.msra.mxu0 0.0
        %8982 = vmatprep.subr.mxu0 0.0
        %8983 = vmatpush1.msra.mxu0 0.0
        %8984 = vmatprep.subr.mxu0 0.0
        %8985 = vmatpush1.msra.mxu0 0.0
        %8986 = vmatprep.subr.mxu0 0.0
        %8987 = vmatpush1.msra.mxu0 0.0
        %8988 = vmatprep.subr.mxu0 0.0
        %8989 = vmatpush1.msra.mxu0 0.0
        %8990 = vmatprep.subr.mxu0 0.0
        %8991 = vmatpush1.msra.mxu0 0.0
        %8992 = vmatprep.subr.mxu0 0.0
        %8993 = vmatpush1.msra.mxu0 0.0
        %8994 = vmatprep.subr.mxu0 0.0
        %8995 = vmatpush1.msra.mxu0 0.0
        %8996 = vmatprep.subr.mxu0 0.0
        %8997 = vmatpush1.msra.mxu0 0.0
        %8998 = vmatprep.subr.mxu0 0.0
        %8999 = vmatpush1.msra.mxu0 0.0
        %9000 = vmatprep.subr.mxu0 0.0
        %9001 = vmatpush1.msra.mxu0 0.0
        %9002 = vmatprep.subr.mxu0 0.0
        %9003 = vmatpush1.msra.mxu0 0.0
        %9004 = vmatprep.subr.mxu0 0.0
        %9005 = vmatpush1.msra.mxu0 0.0
        %9006 = vmatprep.mubr.f32.mxu0 0.0
        %9007 = vmatmul.mubr.f32.gmra.mrb[0].mxu0 %v8935
        %v9008 = vpop.f32.mrb[0].mxu0
        %v9009 = vadd.f32 %v8941, %v9008
        %v9010 = vpop.f32.mrb[0].mxu0
        %9011 = vmatprep.mubr.f32.mxu0 0.0
        %9012 = vmatmul.mubr.f32.gmra.mrb[0].mxu0 %v8936
        %v9013 = vpop.f32.mrb[0].mxu0
        %v9014 = vadd.f32 %v8941, %v9013
        %v9015 = vpop.f32.mrb[0].mxu0
        %9016 = vdwg.mxu0
        %v9017 = vmax.f32 %v9009, 1e-09
        %v9018 = vmax.f32 %v9014, 1e-09
        %v9019 = vrsqrt.pop %v9017
        %v9020 = vrsqrt.pop %v9018
        %v9021 = vmul.f32 %v8885, %v9019
        %v9022 = vmul.f32 %v8886, %v9020
        %vm9023 = vcmp.gt.f32.partialorder %v9021, 0.0
        %vm9024 = vcmp.gt.f32.partialorder %v9022, 0.0
        %v9025 = vstv %s8878
        %v9026 = vmul.f32 %v9025, %v9021
        %v9027 = vmul.f32 %v9025, %v9022
        %v9028 = vsel %vm9023, %v9021, %v9026
        %v9029 = vsel %vm9024, %v9022, %v9027
        %v9030 = vld [vmem:[%s6 + $0x1] sm:$0x1]
        %v9031 = vlaneseq
        %v9032 = vshrl.u32 %v9031, 7
        %v9033 = vsub.s32 0, %v9032
        %v9034 = vrot.slane %v9030, %v9033
        %9035 = vmatprep.subr.mxu0 0.0
        %9036 = vmatpush1.msra.mxu0 %v8903
        %9037 = vmatprep.subr.mxu0 0.0
        %9038 = vmatpush1.msra.mxu0 %v8904
        %9039 = vmatprep.subr.mxu0 0.0
        %9040 = vmatpush1.msra.mxu0 %v8905
        %9041 = vmatprep.subr.mxu0 0.0
        %9042 = vmatpush1.msra.mxu0 %v8906
        %9043 = vmatprep.subr.mxu0 0.0
        %9044 = vmatpush1.msra.mxu0 %v8907
        %9045 = vmatprep.subr.mxu0 0.0
        %9046 = vmatpush1.msra.mxu0 %v8908
        %9047 = vmatprep.subr.mxu0 0.0
        %9048 = vmatpush1.msra.mxu0 %v8909
        %9049 = vmatprep.subr.mxu0 0.0
        %9050 = vmatpush1.msra.mxu0 %v8910
        %9051 = vmatprep.subr.mxu0 0.0
        %9052 = vmatpush1.msra.mxu0 %v8911
        %9053 = vmatprep.subr.mxu0 0.0
        %9054 = vmatpush1.msra.mxu0 %v8912
        %9055 = vmatprep.subr.mxu0 0.0
        %9056 = vmatpush1.msra.mxu0 %v8913
        %9057 = vmatprep.subr.mxu0 0.0
        %9058 = vmatpush1.msra.mxu0 %v8914
        %9059 = vmatprep.subr.mxu0 0.0
        %9060 = vmatpush1.msra.mxu0 %v8915
        %9061 = vmatprep.subr.mxu0 0.0
        %9062 = vmatpush1.msra.mxu0 %v8916
        %9063 = vmatprep.subr.mxu0 0.0
        %9064 = vmatpush1.msra.mxu0 %v8917
        %9065 = vmatprep.subr.mxu0 0.0
        %9066 = vmatpush1.msra.mxu0 %v8918
        %9067 = vmatprep.subr.mxu0 0.0
        %9068 = vmatpush1.msra.mxu0 0.0
        %9069 = vmatprep.subr.mxu0 0.0
        %9070 = vmatpush1.msra.mxu0 0.0
        %9071 = vmatprep.subr.mxu0 0.0
        %9072 = vmatpush1.msra.mxu0 0.0
        %9073 = vmatprep.subr.mxu0 0.0
        %9074 = vmatpush1.msra.mxu0 0.0
        %9075 = vmatprep.subr.mxu0 0.0
        %9076 = vmatpush1.msra.mxu0 0.0
        %9077 = vmatprep.subr.mxu0 0.0
        %9078 = vmatpush1.msra.mxu0 0.0
        %9079 = vmatprep.subr.mxu0 0.0
        %9080 = vmatpush1.msra.mxu0 0.0
        %9081 = vmatprep.subr.mxu0 0.0
        %9082 = vmatpush1.msra.mxu0 0.0
        %9083 = vmatprep.subr.mxu0 0.0
        %9084 = vmatpush1.msra.mxu0 0.0
        %9085 = vmatprep.subr.mxu0 0.0
        %9086 = vmatpush1.msra.mxu0 0.0
        %9087 = vmatprep.subr.mxu0 0.0
        %9088 = vmatpush1.msra.mxu0 0.0
        %9089 = vmatprep.subr.mxu0 0.0
        %9090 = vmatpush1.msra.mxu0 0.0
        %9091 = vmatprep.subr.mxu0 0.0
        %9092 = vmatpush1.msra.mxu0 0.0
        %9093 = vmatprep.subr.mxu0 0.0
        %9094 = vmatpush1.msra.mxu0 0.0
        %9095 = vmatprep.subr.mxu0 0.0
        %9096 = vmatpush1.msra.mxu0 0.0
        %9097 = vmatprep.subr.mxu0 0.0
        %9098 = vmatpush1.msra.mxu0 0.0
        %9099 = vmatprep.mubr.f32.mxu0 0.0
        %9100 = vmatmul.mubr.f32.gmra.mrb[0].mxu0 %v9028
        %v9101 = vpop.f32.mrb[0].mxu0
        %v9102 = vadd.f32 %v9034, %v9101
        %v9103 = vpop.f32.mrb[0].mxu0
        %9104 = vmatprep.mubr.f32.mxu0 0.0
        %9105 = vmatmul.mubr.f32.gmra.mrb[0].mxu0 %v9029
        %v9106 = vpop.f32.mrb[0].mxu0
        %v9107 = vadd.f32 %v9034, %v9106
        %v9108 = vpop.f32.mrb[0].mxu0
        %9109 = vdwg.mxu0
        %v9110 = vmul.f32 %v9102, %v9102
        %v9111 = vmul.f32 %v9107, %v9107
        %v9112 = vld [vmem:[%s6 + $0x2] sm:$0x1]
        %v9113 = vlaneseq
        %v9114 = vshrl.u32 %v9113, 7
        %v9115 = vsub.s32 0, %v9114
        %v9116 = vrot.slane %v9112, %v9115
        %9117 = vmatprep.subr.mxu0 0.0
        %9118 = vmatpush1.msra.mxu0 %v8919
        %9119 = vmatprep.subr.mxu0 0.0
        %9120 = vmatpush1.msra.mxu0 %v8920
        %9121 = vmatprep.subr.mxu0 0.0
        %9122 = vmatpush1.msra.mxu0 %v8921
        %9123 = vmatprep.subr.mxu0 0.0
        %9124 = vmatpush1.msra.mxu0 %v8922
        %9125 = vmatprep.subr.mxu0 0.0
        %9126 = vmatpush1.msra.mxu0 %v8923
        %9127 = vmatprep.subr.mxu0 0.0
        %9128 = vmatpush1.msra.mxu0 %v8924
        %9129 = vmatprep.subr.mxu0 0.0
        %9130 = vmatpush1.msra.mxu0 %v8925
        %9131 = vmatprep.subr.mxu0 0.0
        %9132 = vmatpush1.msra.mxu0 %v8926
        %9133 = vmatprep.subr.mxu0 0.0
        %9134 = vmatpush1.msra.mxu0 %v8927
        %9135 = vmatprep.subr.mxu0 0.0
        %9136 = vmatpush1.msra.mxu0 %v8928
        %9137 = vmatprep.subr.mxu0 0.0
        %9138 = vmatpush1.msra.mxu0 %v8929
        %9139 = vmatprep.subr.mxu0 0.0
        %9140 = vmatpush1.msra.mxu0 %v8930
        %9141 = vmatprep.subr.mxu0 0.0
        %9142 = vmatpush1.msra.mxu0 %v8931
        %9143 = vmatprep.subr.mxu0 0.0
        %9144 = vmatpush1.msra.mxu0 %v8932
        %9145 = vmatprep.subr.mxu0 0.0
        %9146 = vmatpush1.msra.mxu0 %v8933
        %9147 = vmatprep.subr.mxu0 0.0
        %9148 = vmatpush1.msra.mxu0 %v8934
        %9149 = vmatprep.subr.mxu0 0.0
        %9150 = vmatpush1.msra.mxu0 0.0
        %9151 = vmatprep.subr.mxu0 0.0
        %9152 = vmatpush1.msra.mxu0 0.0
        %9153 = vmatprep.subr.mxu0 0.0
        %9154 = vmatpush1.msra.mxu0 0.0
        %9155 = vmatprep.subr.mxu0 0.0
        %9156 = vmatpush1.msra.mxu0 0.0
        %9157 = vmatprep.subr.mxu0 0.0
        %9158 = vmatpush1.msra.mxu0 0.0
        %9159 = vmatprep.subr.mxu0 0.0
        %9160 = vmatpush1.msra.mxu0 0.0
        %9161 = vmatprep.subr.mxu0 0.0
        %9162 = vmatpush1.msra.mxu0 0.0
        %9163 = vmatprep.subr.mxu0 0.0
        %9164 = vmatpush1.msra.mxu0 0.0
        %9165 = vmatprep.subr.mxu0 0.0
        %9166 = vmatpush1.msra.mxu0 0.0
        %9167 = vmatprep.subr.mxu0 0.0
        %9168 = vmatpush1.msra.mxu0 0.0
        %9169 = vmatprep.subr.mxu0 0.0
        %9170 = vmatpush1.msra.mxu0 0.0
        %9171 = vmatprep.subr.mxu0 0.0
        %9172 = vmatpush1.msra.mxu0 0.0
        %9173 = vmatprep.subr.mxu0 0.0
        %9174 = vmatpush1.msra.mxu0 0.0
        %9175 = vmatprep.subr.mxu0 0.0
        %9176 = vmatpush1.msra.mxu0 0.0
        %9177 = vmatprep.subr.mxu0 0.0
        %9178 = vmatpush1.msra.mxu0 0.0
        %9179 = vmatprep.subr.mxu0 0.0
        %9180 = vmatpush1.msra.mxu0 0.0
        %9181 = vmatprep.mubr.f32.mxu0 0.0
        %9182 = vmatmul.mubr.f32.gmra.mrb[0].mxu0 %v9110
        %v9183 = vpop.f32.mrb[0].mxu0
        %v9184 = vadd.f32 %v9116, %v9183
        %v9185 = vpop.f32.mrb[0].mxu0
        %9186 = vmatprep.mubr.f32.mxu0 0.0
        %9187 = vmatmul.mubr.f32.gmra.mrb[0].mxu0 %v9111
        %v9188 = vpop.f32.mrb[0].mxu0
        %v9189 = vadd.f32 %v9116, %v9188
        %v9190 = vpop.f32.mrb[0].mxu0
        %9191 = vdwg.mxu0
        %v9192 = vmax.f32 %v9184, 1e-09
        %v9193 = vmax.f32 %v9189, 1e-09
        %v9194 = vrsqrt.pop %v9192
        %v9195 = vrsqrt.pop %v9193
        %v9196 = vmul.f32 %v9102, %v9194
        %v9197 = vmul.f32 %v9107, %v9195
        %v9198 = vadd.f32 %v9196, %v816
        %v9199 = vadd.f32 %v9197, %v820
        %vm9200 = vcmp.gt.f32.partialorder %v9198, 0.0
        %vm9201 = vcmp.gt.f32.partialorder %v9199, 0.0
        %v9202 = vmul.f32 %v9025, %v9198
        %v9203 = vmul.f32 %v9025, %v9199
        %v9204 = vsel %vm9200, %v9198, %v9202
        %v9205 = vsel %vm9201, %v9199, %v9203
        %9206 = vst [vmem:[%s410] sm:$0xff] %v9204
        %9207 = vst [vmem:[%s410 + $0x8] sm:$0xff] %v9205
        %s9208 = sand.u32 %s210, 1
        %s9209 = scalar_lea.sflag [#allocation10], %s9208
        %s9210 = sand.u32 %s210, 1
        %s9211 = smul.addr %s9210, 16
        %s9212 = scalar_lea.vmem [#allocation21], %s9211
        // Predicated region
        $region81: #{tpu_custom_call.1} parent=51 // pred_check
          %p9213 = pneg %p220
        $region82: #{tpu_custom_call.1} parent=51 // pred_check_branch
          %9215 = sbr.rel (%p9213) target = $region84
        $region83: #{tpu_custom_call.1} parent=51 // pred_region
          %s9217 = ssub.s32 256, 256
          %9218 = vsyncadd %s9209, %s9217
          %s9219 = smul.addr %s29, 2
          %s9220 = smul.addr %s9219, 128
          %s9221 = scalar_lea.hbm %s8, %s9220
          %s9222 = sshll.u32 %s9212, 4
          %s9223 = int_to_ptr.vmem [resolvable:$true] %s9222
          %9228 = dma.vmem_to_hbm [thread:$0]  %s9223, 256, %s9221, %s9209, 128, 128, 8
        $region84: #{tpu_custom_call.1} parent=51 // pred_fallthru
          _
      $region52: #{tpu_custom_call.1} parent=5 // pred_fallthru
        _
      %p9229 = scmp.le.s32.totalorder 2, %s24
      // Predicated region
      $region85: #{tpu_custom_call.1} parent=5 // pred_check
        %p9230 = pneg %p9229
      $region86: #{tpu_custom_call.1} parent=5 // pred_check_branch
        %9232 = sbr.rel (%p9230) target = $region88
      $region87: #{tpu_custom_call.1} parent=5 // pred_region
        %s9233 = ssub.s32 %s24, 2
        // Predicated region
        $region89: #{tpu_custom_call.1} parent=87 // pred_check
          %p9234 = pneg %p226
        $region90: #{tpu_custom_call.1} parent=87 // pred_check_branch
          %9236 = sbr.rel (%p9234) target = $region92
        $region91: #{tpu_custom_call.1} parent=87 // pred_region
          %s9237 = sand.u32 %s211, 1
          %s9238 = scalar_lea.sflag [#allocation10], %s9237
          %s9239 = sand.u32 %s211, 1
          %s9240 = smul.addr %s9239, 16
          %s9241 = scalar_lea.vmem [#allocation21], %s9240
          %9242 = dma.done %s9238, 256
        $region92: #{tpu_custom_call.1} parent=87 // pred_fallthru
          _
      $region88: #{tpu_custom_call.1} parent=5 // pred_fallthru
        _
    $region6: #{tpu_custom_call.1} parent=1 // loop_footer
      %s28 = sadd.s32 1, %s24
    $region7: #{tpu_custom_call.1} parent=1 // loop_footer_branch
      %23 = sbr.rel target = $region3
    $region8: #{tpu_custom_call.1} parent=1 // loop_exit
      _
    %9243 = vsyncpa [#allocation9], 1
    %s9244 = scalar_lea.sflag [#allocation9], 1
    %9245 = vsyncpa %s9244, 1
    %9246 = vsyncpa [#allocation13], 1
    %9247 = vsyncpa [#allocation16], 1
    %9248 = vsyncpa [#allocation19], 1
    %9249 = vsyncpa [#allocation10], 1
    %s9250 = scalar_lea.sflag [#allocation10], 1
    %9251 = vsyncpa %s9250, 1
    %9252 = vsyncpa [#allocation11], 1
    %s9253 = scalar_lea.sflag [#allocation11], 1
    %9254 = vsyncpa %s9253, 1

</llo_original>
